<compile_context>
chip_gen: v5e
topology: v5e:2x2
jax: 0.10.0
libtpu: 0.0.40
codegen_flags: <defaults>
</compile_context>

<pallas_src>
import math
import numpy as np

import jax
import jax.numpy as jnp
from jax.experimental import pallas as pl
from jax.experimental.pallas import tpu as pltpu

NHID = 32                       # args.nhid
NUM_HEADS = 4
OUT_FEATS = NHID // NUM_HEADS   # args.nhid // 4
PROP = 2                        # args.prop
LN_EPS = 1e-5                   # torch.nn.LayerNorm default


# ----------------------------------------------------------------------------
# Pallas kernel: ONE GAT(trans=True) layer for one dst-row tile, heads batched.
# ----------------------------------------------------------------------------
def make_gat_layer_kernel(num_heads, out_feats, softmax_dtype):
    hd = num_heads * out_feats

    def kernel(feat_all_ref, feat_tile_ref, adj_ref, wq_ref, wkv_ref,
               ln_g_ref, ln_b_ref, w1_ref, b1_ref, alpha_ref, w2_ref, b2_ref,
               out_ref):
        tdst = out_ref.shape[0]
        n = feat_all_ref.shape[0]

        feat_all = feat_all_ref[...]            # [N, F] f32  (k/v sources)
        feat_tile = feat_tile_ref[...]          # [T, F] f32  (q + residual)

        # projections, bias=False (feat_c == feat: clone/detach is values-only).
        # 1/sqrt(H*D) is pre-folded into wq at param-prep time.
        q = jnp.dot(feat_tile.astype(jnp.bfloat16), wq_ref[...],
                    preferred_element_type=jnp.float32).astype(jnp.bfloat16)
        kv = jnp.dot(feat_all.astype(jnp.bfloat16), wkv_ref[...],
                     preferred_element_type=jnp.float32).astype(jnp.bfloat16)

        # head-major layouts (small [*,4,8] shuffles).
        # TODO(synk): replace with pltpu.einshape once grouping syntax is
        #             verified to lower on all target chips.
        qh = jnp.transpose(q.reshape(tdst, num_heads, out_feats), (1, 0, 2))
        kh = jnp.transpose(kv[:, :hd].reshape(n, num_heads, out_feats), (1, 0, 2))
        vh = jnp.transpose(kv[:, hd:].reshape(n, num_heads, out_feats), (1, 0, 2))
        # appended ones column: row-sum (softmax denom) falls out of the same
        # MXU aggregation matmul (no O(H*N^2) XLU sum-reduction).
        v_aug = jnp.concatenate([vh, jnp.ones_like(vh[:, :, :1])], axis=-1)

        # u_dot_v('el','er'): s[h, dst, src] = q[dst,h] . k[src,h]
        s = jax.lax.dot_general(
            qh, kh, dimension_numbers=(((2,), (2,)), ((0,), (0,))),
            preferred_element_type=jnp.float32)                 # [H, T, N]

        # edge softmax over incoming edges (src axis): additive mask straight
        # off the bf16 adj tile; masked entries underflow to exactly 0 in exp.
        edge = (adj_ref[...] != 0)[None, :, :]                  # [1, T, N] bool
        s = jnp.where(edge, s, jnp.float32(-1e30))
        m = jnp.max(s, axis=-1, keepdims=True)                  # f32
        p = jnp.exp((s - m).astype(softmax_dtype)).astype(jnp.bfloat16)

        # update_all(u_mul_e('ft','a'), sum) with deferred normalisation:
        # one batched MXU call gives both sum_src p*v and sum_src p (denom).
        agg = jax.lax.dot_general(
            p, v_aug, dimension_numbers=(((2,), (1,)), ((0,), (0,))),
            preferred_element_type=jnp.float32)                 # [H, T, D+1]
        denom = agg[:, :, out_feats:]                           # [H, T, 1]
        inv = pl.reciprocal(jnp.maximum(denom, jnp.float32(1e-30)), approx=True)
        ft2_h = agg[:, :, :out_feats] * inv                     # [H, T, D]
        ft2 = jnp.transpose(ft2_h, (1, 0, 2)).reshape(tdst, hd)

        rst = ft2 + feat_tile                                   # residual

        ln_g = ln_g_ref[...]
        ln_b = ln_b_ref[...]

        def layernorm(x):
            mu = jnp.mean(x, axis=-1, keepdims=True)
            var = jnp.mean((x - mu) ** 2, axis=-1, keepdims=True)
            return (x - mu) * jax.lax.rsqrt(var + LN_EPS) * ln_g + ln_b

        # trans branch: rst = ln1(rst); rst = ln1(rst + FFN(rst))
        # (the reference reuses ln1 twice; ln2 unused — reproduced on purpose)
        rst = layernorm(rst)
        h1 = jnp.dot(rst.astype(jnp.bfloat16), w1_ref[...],
                     preferred_element_type=jnp.float32) + b1_ref[...]
        h1 = jnp.where(h1 >= 0, h1, alpha_ref[...] * h1)        # PReLU per-chan
        ffn = jnp.dot(h1.astype(jnp.bfloat16), w2_ref[...],
                      preferred_element_type=jnp.float32) + b2_ref[...]
        rst = layernorm(rst + ffn)                              # FFN drop: eval
        out_ref[...] = rst

    return kernel


def gat_layer(feat, adj_bf16, p, softmax_dtype):
    """One GAT layer as a dst-row-tiled ('parallel') pallas_call."""
    n_pad, f = feat.shape
    hd = NUM_HEADS * OUT_FEATS
    tdst = 256 if n_pad % 256 == 0 else 128
    grid = (n_pad // tdst,)

    def full_spec(arr):
        nd = arr.ndim
        return pl.BlockSpec(arr.shape, lambda i, _nd=nd: (0,) * _nd)

    in_specs = [
        pl.BlockSpec((n_pad, f), lambda i: (0, 0)),      # feat, full (k/v)
        pl.BlockSpec((tdst, f), lambda i: (i, 0)),       # feat, dst tile (q)
        pl.BlockSpec((tdst, n_pad), lambda i: (i, 0)),   # adj dst-row tile
        full_spec(p["wq"]), full_spec(p["wkv"]),
        full_spec(p["ln_g"]), full_spec(p["ln_b"]),
        full_spec(p["w1"]), full_spec(p["b1"]), full_spec(p["alpha"]),
        full_spec(p["w2"]), full_spec(p["b2"]),
    ]
    out_specs = pl.BlockSpec((tdst, f), lambda i: (i, 0))

    flops = (2 * n_pad * f * 3 * hd                                 # q/k/v proj
             + 2 * NUM_HEADS * n_pad * n_pad * (2 * OUT_FEATS + 1)  # scores+agg
             + 2 * n_pad * f * 4 * f * 2)                           # FFN
    bytes_accessed = (n_pad * n_pad * 2 + 2 * n_pad * f * 4
                      + sum(int(np.prod(v.shape)) * v.dtype.itemsize
                            for v in p.values()))
    cost = pl.CostEstimate(flops=int(flops),
                           transcendentals=NUM_HEADS * n_pad * n_pad,
                           bytes_accessed=int(bytes_accessed))

    return pl.pallas_call(
        make_gat_layer_kernel(NUM_HEADS, OUT_FEATS, softmax_dtype),
        out_shape=jax.ShapeDtypeStruct((n_pad, f), jnp.float32),
        grid_spec=pltpu.PrefetchScalarGridSpec(
            num_scalar_prefetch=0, grid=grid,
            in_specs=in_specs, out_specs=out_specs),
        compiler_params=pltpu.CompilerParams(
            dimension_semantics=("parallel",),
            vmem_limit_bytes=32 * 1024 * 1024),
        cost_estimate=cost,
    )(feat, feat, adj_bf16, p["wq"], p["wkv"], p["ln_g"], p["ln_b"],
      p["w1"], p["b1"], p["alpha"], p["w2"], p["b2"])


def pick_softmax_dtype():
    """bf16 softmax elementwise chain on v6e/v7x (bf16 VPU/EUP); f32 elsewhere."""
    try:
        kind = jax.devices()[0].device_kind.lower()
    except Exception:
        return jnp.float32
    if ("v6" in kind) or ("v7" in kind) or ("7x" in kind):
        return jnp.bfloat16
    return jnp.float32


# ----------------------------------------------------------------------------
# Deterministic parameter init (shapes from GAT.__init__, PyTorch-style ranges)
# ----------------------------------------------------------------------------
def init_gat_params(key):
    ks = jax.random.split(key, 7)
    f = NHID
    hd = NUM_HEADS * OUT_FEATS

    def lin(k, fan_in, fan_out):
        bound = 1.0 / math.sqrt(fan_in)
        return jax.random.uniform(k, (fan_in, fan_out), jnp.float32, -bound, bound)

    return dict(
        wq=lin(ks[0], f, hd),
        wk=lin(ks[1], f, hd),
        wv=lin(ks[2], f, hd),
        ln_g=jnp.ones((1, f), jnp.float32),
        ln_b=jnp.zeros((1, f), jnp.float32),
        w1=lin(ks[3], f, 4 * f),
        b1=jax.random.uniform(ks[4], (1, 4 * f), jnp.float32,
                              -1.0 / math.sqrt(f), 1.0 / math.sqrt(f)),
        alpha=jnp.full((1, 4 * f), 0.25, jnp.float32),   # PReLU default init
        w2=lin(ks[5], 4 * f, f),
        b2=jax.random.uniform(ks[6], (1, f), jnp.float32,
                              -1.0 / math.sqrt(4 * f), 1.0 / math.sqrt(4 * f)),
    )


def prep_layer_params(p):
    """Fold the attention scale into Wq; fuse k/v weights; bf16 matmul weights."""
    hd = NUM_HEADS * OUT_FEATS
    inv_scale = jnp.float32(1.0 / math.sqrt(hd))
    return dict(
        wq=(p["wq"] * inv_scale).astype(jnp.bfloat16),
        wkv=jnp.concatenate([p["wk"], p["wv"]], axis=1).astype(jnp.bfloat16),
        ln_g=p["ln_g"], ln_b=p["ln_b"],
        w1=p["w1"].astype(jnp.bfloat16), b1=p["b1"], alpha=p["alpha"],
        w2=p["w2"].astype(jnp.bfloat16), b2=p["b2"],
    )


# ----------------------------------------------------------------------------
# Synthetic batched graph (stands in for the DGL batched graph)
# node order per graph: [entities...] + [root, relations...]
# NODE_TYPE: entity=0, root=1, relation=2
# ----------------------------------------------------------------------------
def build_graph(ent_len, rel_len):
    types, edges = [], []
    offset = 0
    for ne, nr in zip(ent_len, rel_len):
        e_ids = list(range(offset, offset + ne))
        r_ids = list(range(offset + ne, offset + ne + nr))
        types += [0] * ne + [1] + [2] * (nr - 1)
        for nd in e_ids + r_ids:
            edges.append((nd, nd))                    # self loops
        for e in e_ids:
            for r in r_ids:
                edges.append((e, r))                  # entity -> relation
                edges.append((r, e))                  # relation -> entity
        offset += ne + nr
    n = offset
    n_pad = ((n + 127) // 128) * 128                  # lane-dense padding (128)
    adj = np.zeros((n_pad, n_pad), np.float32)
    for src, dst in edges:
        adj[dst, src] = 1.0
    node_type = np.full((n_pad,), -1, np.int64)
    node_type[:n] = np.array(types)
    return adj, node_type, n


# ----------------------------------------------------------------------------
# GraphTrans.forward
# ----------------------------------------------------------------------------
def graph_trans_forward(ent, ent_mask, ent_len, rel, rel_mask, adj, node_type,
                        layer_params, softmax_dtype=None):
    if softmax_dtype is None:
        softmax_dtype = pick_softmax_dtype()
    # TODO(synk): DGL-style masked-select / filter_nodes / pad glue stays
    # host-side (data-dependent gather; no clean BlockSpec form at these sizes).
    ent_np = np.asarray(ent)
    rel_np = np.asarray(rel)
    ent_sel = np.asarray(ent_mask) == 0
    rel_sel = np.asarray(rel_mask) == 0
    bsz = ent_np.shape[0]
    init_h = []
    for i in range(bsz):
        init_h.append(ent_np[i][ent_sel[i]])
        init_h.append(rel_np[i][rel_sel[i]])
    init_h = np.concatenate(init_h, axis=0).astype(np.float32)

    n_pad = adj.shape[0]
    feats_np = np.zeros((n_pad, NHID), np.float32)
    feats_np[: init_h.shape[0]] = init_h
    feats = jnp.asarray(feats_np)

    # PROP GAT layers — each one dst-row-tiled Pallas kernel (the hot path)
    for p in layer_params:
        feats = gat_layer(feats, adj, p, softmax_dtype)

    # glue: filter_nodes(type==root / type==entity), split by ent_len, pad
    root_idx = np.nonzero(node_type == 1)[0]
    ent_idx = np.nonzero(node_type == 0)[0]
    g_root = feats[jnp.asarray(root_idx)]             # [B, F]
    ent_feats = feats[jnp.asarray(ent_idx)]
    max_len = int(max(ent_len))
    g_ent = jnp.zeros((bsz, max_len, NHID), jnp.float32)
    off = 0
    for i, L in enumerate(ent_len):
        g_ent = g_ent.at[i, :L].set(ent_feats[off:off + L])
        off += L
    return g_ent, g_root


if __name__ == "__main__":
    key = jax.random.PRNGKey(0)
    B = 2
    ent_len = [4, 5]
    rel_len = [3, 3]          # per graph: 1 root + 2 relations
    max_ent, max_rel = 6, 4

    k_ent, k_rel, k_par = jax.random.split(key, 3)
    ent = jax.random.normal(k_ent, (B, max_ent, NHID), jnp.float32)
    rel = jax.random.normal(k_rel, (B, max_rel, NHID), jnp.float32)

    # mask convention of the reference: 0 == valid (selected), nonzero == pad
    ent_mask = np.ones((B, max_ent), np.int32)
    rel_mask = np.ones((B, max_rel), np.int32)
    for i in range(B):
        ent_mask[i, : ent_len[i]] = 0
        rel_mask[i, : rel_len[i]] = 0

    adj_np, node_type, _ = build_graph(ent_len, rel_len)
    adj = jnp.asarray(adj_np).astype(jnp.bfloat16)    # 0/1 exact in bf16

    layer_params = [prep_layer_params(init_gat_params(k))
                    for k in jax.random.split(k_par, PROP)]

    g_ent, g_root = graph_trans_forward(ent, ent_mask, ent_len,
                                        rel, rel_mask, adj, node_type,
                                        layer_params)
    jax.block_until_ready((g_ent, g_root))
    assert g_ent.shape == (B, max(ent_len), NHID)
    assert g_root.shape == (B, NHID)
    assert bool(jnp.all(jnp.isfinite(g_ent))) and bool(jnp.all(jnp.isfinite(g_root)))
    print("KERNEL_OK")
</pallas_src>

<mosaic_0001>
module attributes {stable_mosaic.version = 11 : i64} {
  func.func @kernel(%arg0: i32, %arg1: memref<128x32xf32, #tpu.memory_space<vmem>>, %arg2: memref<128x32xf32, #tpu.memory_space<vmem>>, %arg3: memref<128x128xbf16, #tpu.memory_space<vmem>>, %arg4: memref<32x32xbf16, #tpu.memory_space<vmem>>, %arg5: memref<32x64xbf16, #tpu.memory_space<vmem>>, %arg6: memref<1x32xf32, #tpu.memory_space<vmem>>, %arg7: memref<1x32xf32, #tpu.memory_space<vmem>>, %arg8: memref<32x128xbf16, #tpu.memory_space<vmem>>, %arg9: memref<1x128xf32, #tpu.memory_space<vmem>>, %arg10: memref<1x128xf32, #tpu.memory_space<vmem>>, %arg11: memref<128x32xbf16, #tpu.memory_space<vmem>>, %arg12: memref<1x32xf32, #tpu.memory_space<vmem>>, %arg13: memref<128x32xf32, #tpu.memory_space<vmem>>) attributes {dimension_semantics = [#tpu.dimension_semantics<parallel>], iteration_bounds = array<i64: 1>, scalar_prefetch = 0 : i64, scratch_operands = 0 : i64, tpu.core_type = #tpu.core_type<tc>, window_params = [{pipeline_mode = #tpu.pipeline_mode<synchronous>, transform_indices = @transform_0, window_bounds = array<i64: 128, 32>}, {transform_indices = @transform_1, window_bounds = array<i64: 128, 32>}, {transform_indices = @transform_2, window_bounds = array<i64: 128, 128>}, {pipeline_mode = #tpu.pipeline_mode<synchronous>, transform_indices = @transform_3, window_bounds = array<i64: 32, 32>}, {pipeline_mode = #tpu.pipeline_mode<synchronous>, transform_indices = @transform_4, window_bounds = array<i64: 32, 64>}, {pipeline_mode = #tpu.pipeline_mode<synchronous>, transform_indices = @transform_5, window_bounds = array<i64: 1, 32>}, {pipeline_mode = #tpu.pipeline_mode<synchronous>, transform_indices = @transform_6, window_bounds = array<i64: 1, 32>}, {pipeline_mode = #tpu.pipeline_mode<synchronous>, transform_indices = @transform_7, window_bounds = array<i64: 32, 128>}, {pipeline_mode = #tpu.pipeline_mode<synchronous>, transform_indices = @transform_8, window_bounds = array<i64: 1, 128>}, {pipeline_mode = #tpu.pipeline_mode<synchronous>, transform_indices = @transform_9, window_bounds = array<i64: 1, 128>}, {pipeline_mode = #tpu.pipeline_mode<synchronous>, transform_indices = @transform_10, window_bounds = array<i64: 128, 32>}, {pipeline_mode = #tpu.pipeline_mode<synchronous>, transform_indices = @transform_11, window_bounds = array<i64: 1, 32>}, {transform_indices = @transform_12, window_bounds = array<i64: 128, 32>}]} {
    %c0 = arith.constant 0 : index
    %c0_0 = arith.constant 0 : index
    %0 = vector.load %arg1[%c0, %c0_0] : memref<128x32xf32, #tpu.memory_space<vmem>>, vector<128x32xf32>
    %c0_1 = arith.constant 0 : index
    %c0_2 = arith.constant 0 : index
    %1 = vector.load %arg2[%c0_1, %c0_2] : memref<128x32xf32, #tpu.memory_space<vmem>>, vector<128x32xf32>
    %2 = arith.truncf %1 : vector<128x32xf32> to vector<128x32xbf16>
    %c0_3 = arith.constant 0 : index
    %c0_4 = arith.constant 0 : index
    %3 = vector.load %arg4[%c0_3, %c0_4] : memref<32x32xbf16, #tpu.memory_space<vmem>>, vector<32x32xbf16>
    %cst = arith.constant dense<0.000000e+00> : vector<128x32xf32>
    %4 = tpu.matmul %2, %3, %cst {dimension_numbers = #tpu.dot_dimension_numbers<[1], [0], [0], [1], [0, 0, 1, 1], [], []>} : vector<128x32xbf16>, vector<32x32xbf16>, vector<128x32xf32> -> vector<128x32xf32>
    %5 = arith.truncf %4 : vector<128x32xf32> to vector<128x32xbf16>
    %6 = arith.truncf %0 : vector<128x32xf32> to vector<128x32xbf16>
    %c0_5 = arith.constant 0 : index
    %c0_6 = arith.constant 0 : index
    %7 = vector.load %arg5[%c0_5, %c0_6] : memref<32x64xbf16, #tpu.memory_space<vmem>>, vector<32x64xbf16>
    %cst_7 = arith.constant dense<0.000000e+00> : vector<128x64xf32>
    %8 = tpu.matmul %6, %7, %cst_7 {dimension_numbers = #tpu.dot_dimension_numbers<[1], [0], [0], [1], [0, 0, 1, 1], [], []>} : vector<128x32xbf16>, vector<32x64xbf16>, vector<128x64xf32> -> vector<128x64xf32>
    %9 = arith.truncf %8 : vector<128x64xf32> to vector<128x64xbf16>
    %10 = vector.shape_cast %5 : vector<128x32xbf16> to vector<128x4x8xbf16>
    %11 = tpu.transpose %10, [1, 0, 2] : vector<128x4x8xbf16> -> vector<4x128x8xbf16>
    %12 = vector.extract_strided_slice %9 {offsets = [0, 0], sizes = [128, 32], strides = [1, 1]} : vector<128x64xbf16> to vector<128x32xbf16>
    %13 = vector.shape_cast %12 : vector<128x32xbf16> to vector<128x4x8xbf16>
    %14 = tpu.transpose %13, [1, 0, 2] : vector<128x4x8xbf16> -> vector<4x128x8xbf16>
    %15 = vector.extract_strided_slice %9 {offsets = [0, 32], sizes = [128, 32], strides = [1, 1]} : vector<128x64xbf16> to vector<128x32xbf16>
    %16 = vector.shape_cast %15 : vector<128x32xbf16> to vector<128x4x8xbf16>
    %17 = tpu.transpose %16, [1, 0, 2] : vector<128x4x8xbf16> -> vector<4x128x8xbf16>
    %cst_8 = arith.constant 1.000000e+00 : bf16
    %18 = vector.broadcast %cst_8 : bf16 to vector<4x128x1xbf16>
    %19 = tpu.concatenate %17, %18 in 2 : vector<4x128x8xbf16>, vector<4x128x1xbf16> -> vector<4x128x9xbf16>
    %cst_9 = arith.constant dense<0.000000e+00> : vector<4x128x128xf32>
    %20 = tpu.matmul %11, %14, %cst_9 {dimension_numbers = #tpu.dot_dimension_numbers<[2], [2], [1], [1], [0, 0, 0, 1, 1, 1], [0], [0]>} : vector<4x128x8xbf16>, vector<4x128x8xbf16>, vector<4x128x128xf32> -> vector<4x128x128xf32>
    %c0_10 = arith.constant 0 : index
    %c0_11 = arith.constant 0 : index
    %21 = vector.load %arg3[%c0_10, %c0_11] : memref<128x128xbf16, #tpu.memory_space<vmem>>, vector<128x128xbf16>
    %cst_12 = arith.constant 0.000000e+00 : bf16
    %22 = vector.broadcast %cst_12 : bf16 to vector<128x128xbf16>
    %23 = arith.cmpf one, %21, %22 : vector<128x128xbf16>
    %24 = vector.shape_cast %23 : vector<128x128xi1> to vector<1x128x128xi1>
    %cst_13 = arith.constant -1.000000e+30 : f32
    %25 = vector.shape_cast %24 : vector<1x128x128xi1> to vector<1x128x128xi1>
    %26 = vector.broadcast %25 : vector<1x128x128xi1> to vector<4x128x128xi1>
    %27 = vector.broadcast %cst_13 : f32 to vector<4x128x128xf32>
    %28 = arith.select %26, %20, %27 : vector<4x128x128xi1>, vector<4x128x128xf32>
    %cst_14 = arith.constant dense<0xFF800000> : vector<4x128xf32>
    %29 = vector.multi_reduction <maximumf>, %28, %cst_14 [2] : vector<4x128x128xf32> to vector<4x128xf32>
    %30 = vector.shape_cast %29 : vector<4x128xf32> to vector<4x128x1xf32>
    %31 = vector.broadcast %30 : vector<4x128x1xf32> to vector<4x128x128xf32>
    %32 = arith.subf %28, %31 : vector<4x128x128xf32>
    %33 = math.exp %32 : vector<4x128x128xf32>
    %34 = arith.truncf %33 : vector<4x128x128xf32> to vector<4x128x128xbf16>
    %cst_15 = arith.constant dense<0.000000e+00> : vector<4x128x9xf32>
    %35 = tpu.matmul %34, %19, %cst_15 {dimension_numbers = #tpu.dot_dimension_numbers<[2], [1], [1], [2], [0, 0, 0, 1, 1, 2], [0], [0]>} : vector<4x128x128xbf16>, vector<4x128x9xbf16>, vector<4x128x9xf32> -> vector<4x128x9xf32>
    %36 = vector.extract_strided_slice %35 {offsets = [0, 0, 8], sizes = [4, 128, 1], strides = [1, 1, 1]} : vector<4x128x9xf32> to vector<4x128x1xf32>
    %cst_16 = arith.constant 1.000000e-30 : f32
    %37 = vector.broadcast %cst_16 : f32 to vector<4x128x1xf32>
    %38 = arith.maximumf %36, %37 : vector<4x128x1xf32>
    %39 = tpu.reciprocal %38 {approx = true} : vector<4x128x1xf32> -> vector<4x128x1xf32>
    %40 = vector.extract_strided_slice %35 {offsets = [0, 0, 0], sizes = [4, 128, 8], strides = [1, 1, 1]} : vector<4x128x9xf32> to vector<4x128x8xf32>
    %41 = vector.broadcast %39 : vector<4x128x1xf32> to vector<4x128x8xf32>
    %42 = arith.mulf %40, %41 : vector<4x128x8xf32>
    %43 = tpu.transpose %42, [1, 0, 2] : vector<4x128x8xf32> -> vector<128x4x8xf32>
    %44 = vector.shape_cast %43 : vector<128x4x8xf32> to vector<128x32xf32>
    %45 = arith.addf %44, %1 : vector<128x32xf32>
    %c0_17 = arith.constant 0 : index
    %c0_18 = arith.constant 0 : index
    %46 = vector.load %arg6[%c0_17, %c0_18] : memref<1x32xf32, #tpu.memory_space<vmem>>, vector<1x32xf32>
    %c0_19 = arith.constant 0 : index
    %c0_20 = arith.constant 0 : index
    %47 = vector.load %arg7[%c0_19, %c0_20] : memref<1x32xf32, #tpu.memory_space<vmem>>, vector<1x32xf32>
    %cst_21 = arith.constant dense<0.000000e+00> : vector<128xf32>
    %48 = vector.multi_reduction <add>, %45, %cst_21 [1] : vector<128x32xf32> to vector<128xf32>
    %49 = vector.shape_cast %48 : vector<128xf32> to vector<128x1xf32>
    %cst_22 = arith.constant 3.200000e+01 : f32
    %50 = vector.broadcast %cst_22 : f32 to vector<128x1xf32>
    %51 = arith.divf %49, %50 : vector<128x1xf32>
    %52 = vector.broadcast %51 : vector<128x1xf32> to vector<128x32xf32>
    %53 = arith.subf %45, %52 : vector<128x32xf32>
    %54 = arith.mulf %53, %53 : vector<128x32xf32>
    %cst_23 = arith.constant dense<0.000000e+00> : vector<128xf32>
    %55 = vector.multi_reduction <add>, %54, %cst_23 [1] : vector<128x32xf32> to vector<128xf32>
    %56 = vector.shape_cast %55 : vector<128xf32> to vector<128x1xf32>
    %cst_24 = arith.constant 3.200000e+01 : f32
    %57 = vector.broadcast %cst_24 : f32 to vector<128x1xf32>
    %58 = arith.divf %56, %57 : vector<128x1xf32>
    %59 = vector.broadcast %51 : vector<128x1xf32> to vector<128x32xf32>
    %60 = arith.subf %45, %59 : vector<128x32xf32>
    %cst_25 = arith.constant 9.99999974E-6 : f32
    %61 = vector.broadcast %cst_25 : f32 to vector<128x1xf32>
    %62 = arith.addf %58, %61 : vector<128x1xf32>
    %63 = math.rsqrt %62 : vector<128x1xf32>
    %64 = vector.broadcast %63 : vector<128x1xf32> to vector<128x32xf32>
    %65 = arith.mulf %60, %64 : vector<128x32xf32>
    %66 = vector.broadcast %46 : vector<1x32xf32> to vector<128x32xf32>
    %67 = arith.mulf %65, %66 : vector<128x32xf32>
    %68 = vector.broadcast %47 : vector<1x32xf32> to vector<128x32xf32>
    %69 = arith.addf %67, %68 : vector<128x32xf32>
    %70 = arith.truncf %69 : vector<128x32xf32> to vector<128x32xbf16>
    %c0_26 = arith.constant 0 : index
    %c0_27 = arith.constant 0 : index
    %71 = vector.load %arg8[%c0_26, %c0_27] : memref<32x128xbf16, #tpu.memory_space<vmem>>, vector<32x128xbf16>
    %cst_28 = arith.constant dense<0.000000e+00> : vector<128x128xf32>
    %72 = tpu.matmul %70, %71, %cst_28 {dimension_numbers = #tpu.dot_dimension_numbers<[1], [0], [0], [1], [0, 0, 1, 1], [], []>} : vector<128x32xbf16>, vector<32x128xbf16>, vector<128x128xf32> -> vector<128x128xf32>
    %c0_29 = arith.constant 0 : index
    %c0_30 = arith.constant 0 : index
    %73 = vector.load %arg9[%c0_29, %c0_30] : memref<1x128xf32, #tpu.memory_space<vmem>>, vector<1x128xf32>
    %74 = vector.broadcast %73 : vector<1x128xf32> to vector<128x128xf32>
    %75 = arith.addf %72, %74 : vector<128x128xf32>
    %cst_31 = arith.constant 0.000000e+00 : f32
    %76 = vector.broadcast %cst_31 : f32 to vector<128x128xf32>
    %77 = arith.cmpf oge, %75, %76 : vector<128x128xf32>
    %c0_32 = arith.constant 0 : index
    %c0_33 = arith.constant 0 : index
    %78 = vector.load %arg10[%c0_32, %c0_33] : memref<1x128xf32, #tpu.memory_space<vmem>>, vector<1x128xf32>
    %79 = vector.broadcast %78 : vector<1x128xf32> to vector<128x128xf32>
    %80 = arith.mulf %79, %75 : vector<128x128xf32>
    %81 = arith.select %77, %75, %80 : vector<128x128xi1>, vector<128x128xf32>
    %82 = arith.truncf %81 : vector<128x128xf32> to vector<128x128xbf16>
    %c0_34 = arith.constant 0 : index
    %c0_35 = arith.constant 0 : index
    %83 = vector.load %arg11[%c0_34, %c0_35] : memref<128x32xbf16, #tpu.memory_space<vmem>>, vector<128x32xbf16>
    %cst_36 = arith.constant dense<0.000000e+00> : vector<128x32xf32>
    %84 = tpu.matmul %82, %83, %cst_36 {dimension_numbers = #tpu.dot_dimension_numbers<[1], [0], [0], [1], [0, 0, 1, 1], [], []>} : vector<128x128xbf16>, vector<128x32xbf16>, vector<128x32xf32> -> vector<128x32xf32>
    %c0_37 = arith.constant 0 : index
    %c0_38 = arith.constant 0 : index
    %85 = vector.load %arg12[%c0_37, %c0_38] : memref<1x32xf32, #tpu.memory_space<vmem>>, vector<1x32xf32>
    %86 = vector.broadcast %85 : vector<1x32xf32> to vector<128x32xf32>
    %87 = arith.addf %84, %86 : vector<128x32xf32>
    %88 = arith.addf %69, %87 : vector<128x32xf32>
    %cst_39 = arith.constant dense<0.000000e+00> : vector<128xf32>
    %89 = vector.multi_reduction <add>, %88, %cst_39 [1] : vector<128x32xf32> to vector<128xf32>
    %90 = vector.shape_cast %89 : vector<128xf32> to vector<128x1xf32>
    %cst_40 = arith.constant 3.200000e+01 : f32
    %91 = vector.broadcast %cst_40 : f32 to vector<128x1xf32>
    %92 = arith.divf %90, %91 : vector<128x1xf32>
    %93 = vector.broadcast %92 : vector<128x1xf32> to vector<128x32xf32>
    %94 = arith.subf %88, %93 : vector<128x32xf32>
    %95 = arith.mulf %94, %94 : vector<128x32xf32>
    %cst_41 = arith.constant dense<0.000000e+00> : vector<128xf32>
    %96 = vector.multi_reduction <add>, %95, %cst_41 [1] : vector<128x32xf32> to vector<128xf32>
    %97 = vector.shape_cast %96 : vector<128xf32> to vector<128x1xf32>
    %cst_42 = arith.constant 3.200000e+01 : f32
    %98 = vector.broadcast %cst_42 : f32 to vector<128x1xf32>
    %99 = arith.divf %97, %98 : vector<128x1xf32>
    %100 = vector.broadcast %92 : vector<128x1xf32> to vector<128x32xf32>
    %101 = arith.subf %88, %100 : vector<128x32xf32>
    %cst_43 = arith.constant 9.99999974E-6 : f32
    %102 = vector.broadcast %cst_43 : f32 to vector<128x1xf32>
    %103 = arith.addf %99, %102 : vector<128x1xf32>
    %104 = math.rsqrt %103 : vector<128x1xf32>
    %105 = vector.broadcast %104 : vector<128x1xf32> to vector<128x32xf32>
    %106 = arith.mulf %101, %105 : vector<128x32xf32>
    %107 = vector.broadcast %46 : vector<1x32xf32> to vector<128x32xf32>
    %108 = arith.mulf %106, %107 : vector<128x32xf32>
    %109 = vector.broadcast %47 : vector<1x32xf32> to vector<128x32xf32>
    %110 = arith.addf %108, %109 : vector<128x32xf32>
    %c0_44 = arith.constant 0 : index
    %c0_45 = arith.constant 0 : index
    %111 = vector.load %arg13[%c0_44, %c0_45] : memref<128x32xf32, #tpu.memory_space<vmem>>, vector<128x32xf32>
    tpu.vector_store %arg13[%c0_44, %c0_45], %110 {strides = array<i32>} : memref<128x32xf32, #tpu.memory_space<vmem>>, vector<128x32xf32>,
    return
  }
  func.func @transform_0(%arg0: i32) -> (i32, i32) {
    %c0_i32 = arith.constant 0 : i32
    %c0_i32_0 = arith.constant 0 : i32
    %c0_i32_1 = arith.constant 0 : i32
    return %c0_i32, %c0_i32_0 : i32, i32
  }
  func.func @transform_1(%arg0: i32) -> (i32, i32) {
    %c0_i32 = arith.constant 0 : i32
    %c0_i32_0 = arith.constant 0 : i32
    return %arg0, %c0_i32 : i32, i32
  }
  func.func @transform_2(%arg0: i32) -> (i32, i32) {
    %c0_i32 = arith.constant 0 : i32
    %c0_i32_0 = arith.constant 0 : i32
    return %arg0, %c0_i32 : i32, i32
  }
  func.func @transform_3(%arg0: i32) -> (i32, i32) {
    %c0_i32 = arith.constant 0 : i32
    %c0_i32_0 = arith.constant 0 : i32
    %c0_i32_1 = arith.constant 0 : i32
    return %c0_i32, %c0_i32_0 : i32, i32
  }
  func.func @transform_4(%arg0: i32) -> (i32, i32) {
    %c0_i32 = arith.constant 0 : i32
    %c0_i32_0 = arith.constant 0 : i32
    %c0_i32_1 = arith.constant 0 : i32
    return %c0_i32, %c0_i32_0 : i32, i32
  }
  func.func @transform_5(%arg0: i32) -> (i32, i32) {
    %c0_i32 = arith.constant 0 : i32
    %c0_i32_0 = arith.constant 0 : i32
    %c0_i32_1 = arith.constant 0 : i32
    return %c0_i32, %c0_i32_0 : i32, i32
  }
  func.func @transform_6(%arg0: i32) -> (i32, i32) {
    %c0_i32 = arith.constant 0 : i32
    %c0_i32_0 = arith.constant 0 : i32
    %c0_i32_1 = arith.constant 0 : i32
    return %c0_i32, %c0_i32_0 : i32, i32
  }
  func.func @transform_7(%arg0: i32) -> (i32, i32) {
    %c0_i32 = arith.constant 0 : i32
    %c0_i32_0 = arith.constant 0 : i32
    %c0_i32_1 = arith.constant 0 : i32
    return %c0_i32, %c0_i32_0 : i32, i32
  }
  func.func @transform_8(%arg0: i32) -> (i32, i32) {
    %c0_i32 = arith.constant 0 : i32
    %c0_i32_0 = arith.constant 0 : i32
    %c0_i32_1 = arith.constant 0 : i32
    return %c0_i32, %c0_i32_0 : i32, i32
  }
  func.func @transform_9(%arg0: i32) -> (i32, i32) {
    %c0_i32 = arith.constant 0 : i32
    %c0_i32_0 = arith.constant 0 : i32
    %c0_i32_1 = arith.constant 0 : i32
    return %c0_i32, %c0_i32_0 : i32, i32
  }
  func.func @transform_10(%arg0: i32) -> (i32, i32) {
    %c0_i32 = arith.constant 0 : i32
    %c0_i32_0 = arith.constant 0 : i32
    %c0_i32_1 = arith.constant 0 : i32
    return %c0_i32, %c0_i32_0 : i32, i32
  }
  func.func @transform_11(%arg0: i32) -> (i32, i32) {
    %c0_i32 = arith.constant 0 : i32
    %c0_i32_0 = arith.constant 0 : i32
    %c0_i32_1 = arith.constant 0 : i32
    return %c0_i32, %c0_i32_0 : i32, i32
  }
  func.func @transform_12(%arg0: i32) -> (i32, i32) {
    %c0_i32 = arith.constant 0 : i32
    %c0_i32_0 = arith.constant 0 : i32
    return %arg0, %c0_i32 : i32, i32
  }
}

</mosaic_0001>

<llo_original>
// kernel: tpu_custom_call.1
$region0: #{tpu_custom_call.1}
  #allocation0 [shape = 'u32[]', space=smem, size = 0x4, offset = 0x4, fixed_abs, tag = 'smem constant byte address 0x4 - core index']
  #allocation1 [shape = 'u32[72,128]{1,0:T(1,128)}', space=vmem, size = 0x9000, scoped, tag = 'internal scratch']
  %s0 = inlined_call_operand.vmem [shape: f32[128,32], index: 0, kind: input, shape index: {}]
  %s1 = inlined_call_operand.vmem [shape: f32[128,32], index: 1, kind: input, shape index: {}]
  %s2 = inlined_call_operand.vmem [shape: bf16[128,128], index: 2, kind: input, shape index: {}]
  %s3 = inlined_call_operand.vmem [shape: bf16[32,32], index: 3, kind: input, shape index: {}]
  %s4 = inlined_call_operand.vmem [shape: bf16[32,64], index: 4, kind: input, shape index: {}]
  %s5 = inlined_call_operand.vmem [shape: f32[1,32], index: 5, kind: input, shape index: {}]
  %s6 = inlined_call_operand.vmem [shape: f32[1,32], index: 6, kind: input, shape index: {}]
  %s7 = inlined_call_operand.vmem [shape: bf16[32,128], index: 7, kind: input, shape index: {}]
  %s8 = inlined_call_operand.vmem [shape: f32[1,128], index: 8, kind: input, shape index: {}]
  %s9 = inlined_call_operand.vmem [shape: f32[1,128], index: 9, kind: input, shape index: {}]
  %s10 = inlined_call_operand.vmem [shape: bf16[128,32], index: 10, kind: input, shape index: {}]
  %s11 = inlined_call_operand.vmem [shape: f32[1,32], index: 11, kind: input, shape index: {}]
  %s12 = inlined_call_operand.vmem [shape: f32[128,32], index: 12, kind: output, shape index: {}]
  %s13 = sld [smem:[#allocation0]]
  $region58: #{tpu_custom_call.1} parent=0
    _
  %s15 = ssub.s32 1, %s13
  %s16 = scalar_select 0, %s15, %s13
  // Predicated region
  $region2: #{tpu_custom_call.1} parent=0 // pred_check
    _
  $region3: #{tpu_custom_call.1} parent=0 // pred_check_branch
    %18 = sbr.rel (0) target = $region5
  $region4: #{tpu_custom_call.1} parent=0 // pred_region
    _
  $region5: #{tpu_custom_call.1} parent=0 // pred_fallthru
    _
  // Predicated region
  $region6: #{tpu_custom_call.1} parent=0 // pred_check
    _
  $region7: #{tpu_custom_call.1} parent=0 // pred_check_branch
    %20 = sbr.rel (0) target = $region9
  $region8: #{tpu_custom_call.1} parent=0 // pred_region
    _
  $region9: #{tpu_custom_call.1} parent=0 // pred_fallthru
    _
  // Predicated region
  $region10: #{tpu_custom_call.1} parent=0 // pred_check
    _
  $region11: #{tpu_custom_call.1} parent=0 // pred_check_branch
    %22 = sbr.rel (0) target = $region13
  $region12: #{tpu_custom_call.1} parent=0 // pred_region
    _
  $region13: #{tpu_custom_call.1} parent=0 // pred_fallthru
    _
  // Predicated region
  $region14: #{tpu_custom_call.1} parent=0 // pred_check
    _
  $region15: #{tpu_custom_call.1} parent=0 // pred_check_branch
    %24 = sbr.rel (0) target = $region17
  $region16: #{tpu_custom_call.1} parent=0 // pred_region
    _
  $region17: #{tpu_custom_call.1} parent=0 // pred_fallthru
    _
  // Predicated region
  $region18: #{tpu_custom_call.1} parent=0 // pred_check
    _
  $region19: #{tpu_custom_call.1} parent=0 // pred_check_branch
    %26 = sbr.rel (0) target = $region21
  $region20: #{tpu_custom_call.1} parent=0 // pred_region
    _
  $region21: #{tpu_custom_call.1} parent=0 // pred_fallthru
    _
  // Predicated region
  $region22: #{tpu_custom_call.1} parent=0 // pred_check
    _
  $region23: #{tpu_custom_call.1} parent=0 // pred_check_branch
    %28 = sbr.rel (0) target = $region25
  $region24: #{tpu_custom_call.1} parent=0 // pred_region
    _
  $region25: #{tpu_custom_call.1} parent=0 // pred_fallthru
    _
  // Predicated region
  $region26: #{tpu_custom_call.1} parent=0 // pred_check
    _
  $region27: #{tpu_custom_call.1} parent=0 // pred_check_branch
    %30 = sbr.rel (0) target = $region29
  $region28: #{tpu_custom_call.1} parent=0 // pred_region
    _
  $region29: #{tpu_custom_call.1} parent=0 // pred_fallthru
    _
  // Predicated region
  $region30: #{tpu_custom_call.1} parent=0 // pred_check
    _
  $region31: #{tpu_custom_call.1} parent=0 // pred_check_branch
    %32 = sbr.rel (0) target = $region33
  $region32: #{tpu_custom_call.1} parent=0 // pred_region
    _
  $region33: #{tpu_custom_call.1} parent=0 // pred_fallthru
    _
  // Predicated region
  $region34: #{tpu_custom_call.1} parent=0 // pred_check
    _
  $region35: #{tpu_custom_call.1} parent=0 // pred_check_branch
    %34 = sbr.rel (0) target = $region37
  $region36: #{tpu_custom_call.1} parent=0 // pred_region
    _
  $region37: #{tpu_custom_call.1} parent=0 // pred_fallthru
    _
  // Predicated region
  $region38: #{tpu_custom_call.1} parent=0 // pred_check
    _
  $region39: #{tpu_custom_call.1} parent=0 // pred_check_branch
    %36 = sbr.rel (0) target = $region41
  $region40: #{tpu_custom_call.1} parent=0 // pred_region
    _
  $region41: #{tpu_custom_call.1} parent=0 // pred_fallthru
    _
  // Predicated region
  $region42: #{tpu_custom_call.1} parent=0 // pred_check
    _
  $region43: #{tpu_custom_call.1} parent=0 // pred_check_branch
    %38 = sbr.rel (0) target = $region45
  $region44: #{tpu_custom_call.1} parent=0 // pred_region
    _
  $region45: #{tpu_custom_call.1} parent=0 // pred_fallthru
    _
  // Predicated region
  $region46: #{tpu_custom_call.1} parent=0 // pred_check
    _
  $region47: #{tpu_custom_call.1} parent=0 // pred_check_branch
    %40 = sbr.rel (0) target = $region49
  $region48: #{tpu_custom_call.1} parent=0 // pred_region
    _
  $region49: #{tpu_custom_call.1} parent=0 // pred_fallthru
    _
  %v43 = vld [vmem:[%s0] sm:$0xff]
  %v44 = vld [vmem:[%s0 + $0x8] sm:$0xff]
  %v45 = vld [vmem:[%s0 + $0x10] sm:$0xff]
  %v46 = vld [vmem:[%s0 + $0x18] sm:$0xff]
  %v47 = vld [vmem:[%s0 + $0x20] sm:$0xff]
  %v48 = vld [vmem:[%s0 + $0x28] sm:$0xff]
  %v49 = vld [vmem:[%s0 + $0x30] sm:$0xff]
  %v50 = vld [vmem:[%s0 + $0x38] sm:$0xff]
  %v51 = vld [vmem:[%s0 + $0x40] sm:$0xff]
  %v52 = vld [vmem:[%s0 + $0x48] sm:$0xff]
  %v53 = vld [vmem:[%s0 + $0x50] sm:$0xff]
  %v54 = vld [vmem:[%s0 + $0x58] sm:$0xff]
  %v55 = vld [vmem:[%s0 + $0x60] sm:$0xff]
  %v56 = vld [vmem:[%s0 + $0x68] sm:$0xff]
  %v57 = vld [vmem:[%s0 + $0x70] sm:$0xff]
  %v58 = vld [vmem:[%s0 + $0x78] sm:$0xff]
  %v59 = vld [vmem:[%s1] sm:$0xff]
  %v60 = vld [vmem:[%s1 + $0x8] sm:$0xff]
  %v61 = vld [vmem:[%s1 + $0x10] sm:$0xff]
  %v62 = vld [vmem:[%s1 + $0x18] sm:$0xff]
  %v63 = vld [vmem:[%s1 + $0x20] sm:$0xff]
  %v64 = vld [vmem:[%s1 + $0x28] sm:$0xff]
  %v65 = vld [vmem:[%s1 + $0x30] sm:$0xff]
  %v66 = vld [vmem:[%s1 + $0x38] sm:$0xff]
  %v67 = vld [vmem:[%s1 + $0x40] sm:$0xff]
  %v68 = vld [vmem:[%s1 + $0x48] sm:$0xff]
  %v69 = vld [vmem:[%s1 + $0x50] sm:$0xff]
  %v70 = vld [vmem:[%s1 + $0x58] sm:$0xff]
  %v71 = vld [vmem:[%s1 + $0x60] sm:$0xff]
  %v72 = vld [vmem:[%s1 + $0x68] sm:$0xff]
  %v73 = vld [vmem:[%s1 + $0x70] sm:$0xff]
  %v74 = vld [vmem:[%s1 + $0x78] sm:$0xff]
  %v75 = vpack.c.bf16 %v60, %v59
  %v76 = vpack.c.bf16 %v62, %v61
  %v77 = vpack.c.bf16 %v64, %v63
  %v78 = vpack.c.bf16 %v66, %v65
  %v79 = vpack.c.bf16 %v68, %v67
  %v80 = vpack.c.bf16 %v70, %v69
  %v81 = vpack.c.bf16 %v72, %v71
  %v82 = vpack.c.bf16 %v74, %v73
  %v83 = vld [vmem:[%s3] sm:$0xf]
  %v84 = vld [vmem:[%s3 + $0x4] sm:$0xf]
  %v85 = vld [vmem:[%s3 + $0x8] sm:$0xf]
  %v86 = vld [vmem:[%s3 + $0xc] sm:$0xf]
  %v91 = vunpack.c.l.b16 %v83
  %v92 = vunpack.c.l.b16 %v84
  %v93 = vunpack.c.l.b16 %v85
  %v94 = vunpack.c.l.b16 %v86
  %v95 = vpack.c.b16 %v92, %v91
  %v96 = vpack.c.b16 %v94, %v93
  %vm99 = vcmask 261120
  %v101 = vsel %vm99, %v75, 0
  %v104 = vsel %vm99, %v76, 0
  %v107 = vsel %vm99, %v77, 0
  %v110 = vsel %vm99, %v78, 0
  %v113 = vsel %vm99, %v79, 0
  %v116 = vsel %vm99, %v80, 0
  %v119 = vsel %vm99, %v81, 0
  %v122 = vsel %vm99, %v82, 0
  %124 = vmatpush.bf16.msra.mxu0 0
  %125 = vmatpush.bf16.msra.mxu0 0
  %126 = vmatpush.bf16.msra.mxu0 0
  %127 = vmatpush.bf16.msra.mxu0 0
  %128 = vmatpush.bf16.msra.mxu0 0
  %129 = vmatpush.bf16.msra.mxu0 0
  %130 = vmatpush.bf16.msra.mxu0 %v96
  %131 = vmatpush.bf16.msra.mxu0 %v95
  %132 = vmatmul.bf16.gmra.mxu0 %v101
  %v133 = vpop.f32.mrf.mxu0
  %v134 = vadd.f32 0.0, %v133
  %v135 = vpop.f32.mrf.mxu0
  %v136 = vadd.f32 0.0, %v135
  %137 = vmatmul.bf16.gmra.mxu0 %v104
  %v138 = vpop.f32.mrf.mxu0
  %v139 = vadd.f32 0.0, %v138
  %v140 = vpop.f32.mrf.mxu0
  %v141 = vadd.f32 0.0, %v140
  %142 = vmatmul.bf16.gmra.mxu0 %v107
  %v143 = vpop.f32.mrf.mxu0
  %v144 = vadd.f32 0.0, %v143
  %v145 = vpop.f32.mrf.mxu0
  %v146 = vadd.f32 0.0, %v145
  %147 = vmatmul.bf16.gmra.mxu0 %v110
  %v148 = vpop.f32.mrf.mxu0
  %v149 = vadd.f32 0.0, %v148
  %v150 = vpop.f32.mrf.mxu0
  %v151 = vadd.f32 0.0, %v150
  %152 = vmatmul.bf16.gmra.mxu0 %v113
  %v153 = vpop.f32.mrf.mxu0
  %v154 = vadd.f32 0.0, %v153
  %v155 = vpop.f32.mrf.mxu0
  %v156 = vadd.f32 0.0, %v155
  %157 = vmatmul.bf16.gmra.mxu0 %v116
  %v158 = vpop.f32.mrf.mxu0
  %v159 = vadd.f32 0.0, %v158
  %v160 = vpop.f32.mrf.mxu0
  %v161 = vadd.f32 0.0, %v160
  %162 = vmatmul.bf16.gmra.mxu0 %v119
  %v163 = vpop.f32.mrf.mxu0
  %v164 = vadd.f32 0.0, %v163
  %v165 = vpop.f32.mrf.mxu0
  %v166 = vadd.f32 0.0, %v165
  %167 = vmatmul.bf16.gmra.mxu0 %v122
  %v168 = vpop.f32.mrf.mxu0
  %v169 = vadd.f32 0.0, %v168
  %v170 = vpop.f32.mrf.mxu0
  %v171 = vadd.f32 0.0, %v170
  %172 = vdwg.mxu0
  %v173 = vpack.c.bf16 %v134, %v134
  %v174 = vpack.c.bf16 %v136, %v136
  %v175 = vpack.c.bf16 %v139, %v139
  %v176 = vpack.c.bf16 %v141, %v141
  %v177 = vpack.c.bf16 %v144, %v144
  %v178 = vpack.c.bf16 %v146, %v146
  %v179 = vpack.c.bf16 %v149, %v149
  %v180 = vpack.c.bf16 %v151, %v151
  %v181 = vpack.c.bf16 %v154, %v154
  %v182 = vpack.c.bf16 %v156, %v156
  %v183 = vpack.c.bf16 %v159, %v159
  %v184 = vpack.c.bf16 %v161, %v161
  %v185 = vpack.c.bf16 %v164, %v164
  %v186 = vpack.c.bf16 %v166, %v166
  %v187 = vpack.c.bf16 %v169, %v169
  %v188 = vpack.c.bf16 %v171, %v171
  %v189 = vpack.c.bf16 %v44, %v43
  %v190 = vpack.c.bf16 %v46, %v45
  %v191 = vpack.c.bf16 %v48, %v47
  %v192 = vpack.c.bf16 %v50, %v49
  %v193 = vpack.c.bf16 %v52, %v51
  %v194 = vpack.c.bf16 %v54, %v53
  %v195 = vpack.c.bf16 %v56, %v55
  %v196 = vpack.c.bf16 %v58, %v57
  %v197 = vld [vmem:[%s4] sm:$0xf]
  %v198 = vld [vmem:[%s4 + $0x4] sm:$0xf]
  %v199 = vld [vmem:[%s4 + $0x8] sm:$0xf]
  %v200 = vld [vmem:[%s4 + $0xc] sm:$0xf]
  %v205 = vunpack.c.l.b16 %v197
  %v206 = vunpack.c.l.b16 %v198
  %v207 = vunpack.c.l.b16 %v199
  %v208 = vunpack.c.l.b16 %v200
  %v209 = vpack.c.b16 %v206, %v205
  %v210 = vpack.c.b16 %v208, %v207
  %v214 = vsel %vm99, %v189, 0
  %v217 = vsel %vm99, %v190, 0
  %v220 = vsel %vm99, %v191, 0
  %v223 = vsel %vm99, %v192, 0
  %v226 = vsel %vm99, %v193, 0
  %v229 = vsel %vm99, %v194, 0
  %v232 = vsel %vm99, %v195, 0
  %v235 = vsel %vm99, %v196, 0
  %237 = vmatpush.bf16.msra.mxu0 0
  %238 = vmatpush.bf16.msra.mxu0 0
  %239 = vmatpush.bf16.msra.mxu0 0
  %240 = vmatpush.bf16.msra.mxu0 0
  %241 = vmatpush.bf16.msra.mxu0 0
  %242 = vmatpush.bf16.msra.mxu0 0
  %243 = vmatpush.bf16.msra.mxu0 %v210
  %244 = vmatpush.bf16.msra.mxu0 %v209
  %245 = vmatmul.bf16.gmra.mxu0 %v214
  %v246 = vpop.f32.mrf.mxu0
  %v247 = vadd.f32 0.0, %v246
  %v248 = vpop.f32.mrf.mxu0
  %v249 = vadd.f32 0.0, %v248
  %250 = vmatmul.bf16.gmra.mxu0 %v217
  %v251 = vpop.f32.mrf.mxu0
  %v252 = vadd.f32 0.0, %v251
  %v253 = vpop.f32.mrf.mxu0
  %v254 = vadd.f32 0.0, %v253
  %255 = vmatmul.bf16.gmra.mxu0 %v220
  %v256 = vpop.f32.mrf.mxu0
  %v257 = vadd.f32 0.0, %v256
  %v258 = vpop.f32.mrf.mxu0
  %v259 = vadd.f32 0.0, %v258
  %260 = vmatmul.bf16.gmra.mxu0 %v223
  %v261 = vpop.f32.mrf.mxu0
  %v262 = vadd.f32 0.0, %v261
  %v263 = vpop.f32.mrf.mxu0
  %v264 = vadd.f32 0.0, %v263
  %265 = vmatmul.bf16.gmra.mxu0 %v226
  %v266 = vpop.f32.mrf.mxu0
  %v267 = vadd.f32 0.0, %v266
  %v268 = vpop.f32.mrf.mxu0
  %v269 = vadd.f32 0.0, %v268
  %270 = vmatmul.bf16.gmra.mxu0 %v229
  %v271 = vpop.f32.mrf.mxu0
  %v272 = vadd.f32 0.0, %v271
  %v273 = vpop.f32.mrf.mxu0
  %v274 = vadd.f32 0.0, %v273
  %275 = vmatmul.bf16.gmra.mxu0 %v232
  %v276 = vpop.f32.mrf.mxu0
  %v277 = vadd.f32 0.0, %v276
  %v278 = vpop.f32.mrf.mxu0
  %v279 = vadd.f32 0.0, %v278
  %280 = vmatmul.bf16.gmra.mxu0 %v235
  %v281 = vpop.f32.mrf.mxu0
  %v282 = vadd.f32 0.0, %v281
  %v283 = vpop.f32.mrf.mxu0
  %v284 = vadd.f32 0.0, %v283
  %285 = vdwg.mxu0
  %v286 = vpack.c.bf16 %v247, %v247
  %v287 = vpack.c.bf16 %v249, %v249
  %v288 = vpack.c.bf16 %v252, %v252
  %v289 = vpack.c.bf16 %v254, %v254
  %v290 = vpack.c.bf16 %v257, %v257
  %v291 = vpack.c.bf16 %v259, %v259
  %v292 = vpack.c.bf16 %v262, %v262
  %v293 = vpack.c.bf16 %v264, %v264
  %v294 = vpack.c.bf16 %v267, %v267
  %v295 = vpack.c.bf16 %v269, %v269
  %v296 = vpack.c.bf16 %v272, %v272
  %v297 = vpack.c.bf16 %v274, %v274
  %v298 = vpack.c.bf16 %v277, %v277
  %v299 = vpack.c.bf16 %v279, %v279
  %v300 = vpack.c.bf16 %v282, %v282
  %v301 = vpack.c.bf16 %v284, %v284
  %318 = vrot.lane.b32.xlu0 %v173, 120
  %v319 = vpop.permute.xlu0 %318
  %320 = vrot.lane.b32.xlu0 %v174, 120
  %v321 = vpop.permute.xlu0 %320
  %322 = vrot.lane.b32.xlu0 %v175, 120
  %v323 = vpop.permute.xlu0 %322
  %324 = vrot.lane.b32.xlu0 %v176, 120
  %v325 = vpop.permute.xlu0 %324
  %326 = vrot.lane.b32.xlu0 %v177, 120
  %v327 = vpop.permute.xlu0 %326
  %328 = vrot.lane.b32.xlu0 %v178, 120
  %v329 = vpop.permute.xlu0 %328
  %330 = vrot.lane.b32.xlu0 %v179, 120
  %v331 = vpop.permute.xlu0 %330
  %332 = vrot.lane.b32.xlu0 %v180, 120
  %v333 = vpop.permute.xlu0 %332
  %334 = vrot.lane.b32.xlu0 %v181, 120
  %v335 = vpop.permute.xlu0 %334
  %336 = vrot.lane.b32.xlu0 %v182, 120
  %v337 = vpop.permute.xlu0 %336
  %338 = vrot.lane.b32.xlu0 %v183, 120
  %v339 = vpop.permute.xlu0 %338
  %340 = vrot.lane.b32.xlu0 %v184, 120
  %v341 = vpop.permute.xlu0 %340
  %342 = vrot.lane.b32.xlu0 %v185, 120
  %v343 = vpop.permute.xlu0 %342
  %344 = vrot.lane.b32.xlu0 %v186, 120
  %v345 = vpop.permute.xlu0 %344
  %346 = vrot.lane.b32.xlu0 %v187, 120
  %v347 = vpop.permute.xlu0 %346
  %348 = vrot.lane.b32.xlu0 %v188, 120
  %v349 = vpop.permute.xlu0 %348
  %350 = vrot.lane.b32.xlu0 %v173, 112
  %v351 = vpop.permute.xlu0 %350
  %352 = vrot.lane.b32.xlu0 %v174, 112
  %v353 = vpop.permute.xlu0 %352
  %354 = vrot.lane.b32.xlu0 %v175, 112
  %v355 = vpop.permute.xlu0 %354
  %356 = vrot.lane.b32.xlu0 %v176, 112
  %v357 = vpop.permute.xlu0 %356
  %358 = vrot.lane.b32.xlu0 %v177, 112
  %v359 = vpop.permute.xlu0 %358
  %360 = vrot.lane.b32.xlu0 %v178, 112
  %v361 = vpop.permute.xlu0 %360
  %362 = vrot.lane.b32.xlu0 %v179, 112
  %v363 = vpop.permute.xlu0 %362
  %364 = vrot.lane.b32.xlu0 %v180, 112
  %v365 = vpop.permute.xlu0 %364
  %366 = vrot.lane.b32.xlu0 %v181, 112
  %v367 = vpop.permute.xlu0 %366
  %368 = vrot.lane.b32.xlu0 %v182, 112
  %v369 = vpop.permute.xlu0 %368
  %370 = vrot.lane.b32.xlu0 %v183, 112
  %v371 = vpop.permute.xlu0 %370
  %372 = vrot.lane.b32.xlu0 %v184, 112
  %v373 = vpop.permute.xlu0 %372
  %374 = vrot.lane.b32.xlu0 %v185, 112
  %v375 = vpop.permute.xlu0 %374
  %376 = vrot.lane.b32.xlu0 %v186, 112
  %v377 = vpop.permute.xlu0 %376
  %378 = vrot.lane.b32.xlu0 %v187, 112
  %v379 = vpop.permute.xlu0 %378
  %380 = vrot.lane.b32.xlu0 %v188, 112
  %v381 = vpop.permute.xlu0 %380
  %382 = vrot.lane.b32.xlu0 %v173, 104
  %v383 = vpop.permute.xlu0 %382
  %384 = vrot.lane.b32.xlu0 %v174, 104
  %v385 = vpop.permute.xlu0 %384
  %386 = vrot.lane.b32.xlu0 %v175, 104
  %v387 = vpop.permute.xlu0 %386
  %388 = vrot.lane.b32.xlu0 %v176, 104
  %v389 = vpop.permute.xlu0 %388
  %390 = vrot.lane.b32.xlu0 %v177, 104
  %v391 = vpop.permute.xlu0 %390
  %392 = vrot.lane.b32.xlu0 %v178, 104
  %v393 = vpop.permute.xlu0 %392
  %394 = vrot.lane.b32.xlu0 %v179, 104
  %v395 = vpop.permute.xlu0 %394
  %396 = vrot.lane.b32.xlu0 %v180, 104
  %v397 = vpop.permute.xlu0 %396
  %398 = vrot.lane.b32.xlu0 %v181, 104
  %v399 = vpop.permute.xlu0 %398
  %400 = vrot.lane.b32.xlu0 %v182, 104
  %v401 = vpop.permute.xlu0 %400
  %402 = vrot.lane.b32.xlu0 %v183, 104
  %v403 = vpop.permute.xlu0 %402
  %404 = vrot.lane.b32.xlu0 %v184, 104
  %v405 = vpop.permute.xlu0 %404
  %406 = vrot.lane.b32.xlu0 %v185, 104
  %v407 = vpop.permute.xlu0 %406
  %408 = vrot.lane.b32.xlu0 %v186, 104
  %v409 = vpop.permute.xlu0 %408
  %410 = vrot.lane.b32.xlu0 %v187, 104
  %v411 = vpop.permute.xlu0 %410
  %412 = vrot.lane.b32.xlu0 %v188, 104
  %v413 = vpop.permute.xlu0 %412
  %v416 = vpack.i.b16 %v319, %v173
  %v417 = vshrl.u32 %v173, 16
  %v418 = vshrl.u32 %v319, 16
  %v419 = vpack.i.b16 %v418, %v417
  %v422 = vpack.i.b16 %v383, %v351
  %v423 = vshrl.u32 %v351, 16
  %v424 = vshrl.u32 %v383, 16
  %v425 = vpack.i.b16 %v424, %v423
  %v428 = vpack.i.b16 %v321, %v174
  %v429 = vshrl.u32 %v174, 16
  %v430 = vshrl.u32 %v321, 16
  %v431 = vpack.i.b16 %v430, %v429
  %v434 = vpack.i.b16 %v385, %v353
  %v435 = vshrl.u32 %v353, 16
  %v436 = vshrl.u32 %v385, 16
  %v437 = vpack.i.b16 %v436, %v435
  %v440 = vpack.i.b16 %v323, %v175
  %v441 = vshrl.u32 %v175, 16
  %v442 = vshrl.u32 %v323, 16
  %v443 = vpack.i.b16 %v442, %v441
  %v446 = vpack.i.b16 %v387, %v355
  %v447 = vshrl.u32 %v355, 16
  %v448 = vshrl.u32 %v387, 16
  %v449 = vpack.i.b16 %v448, %v447
  %v452 = vpack.i.b16 %v325, %v176
  %v453 = vshrl.u32 %v176, 16
  %v454 = vshrl.u32 %v325, 16
  %v455 = vpack.i.b16 %v454, %v453
  %v458 = vpack.i.b16 %v389, %v357
  %v459 = vshrl.u32 %v357, 16
  %v460 = vshrl.u32 %v389, 16
  %v461 = vpack.i.b16 %v460, %v459
  %v464 = vpack.i.b16 %v327, %v177
  %v465 = vshrl.u32 %v177, 16
  %v466 = vshrl.u32 %v327, 16
  %v467 = vpack.i.b16 %v466, %v465
  %v470 = vpack.i.b16 %v391, %v359
  %v471 = vshrl.u32 %v359, 16
  %v472 = vshrl.u32 %v391, 16
  %v473 = vpack.i.b16 %v472, %v471
  %v476 = vpack.i.b16 %v329, %v178
  %v477 = vshrl.u32 %v178, 16
  %v478 = vshrl.u32 %v329, 16
  %v479 = vpack.i.b16 %v478, %v477
  %v482 = vpack.i.b16 %v393, %v361
  %v483 = vshrl.u32 %v361, 16
  %v484 = vshrl.u32 %v393, 16
  %v485 = vpack.i.b16 %v484, %v483
  %v488 = vpack.i.b16 %v331, %v179
  %v489 = vshrl.u32 %v179, 16
  %v490 = vshrl.u32 %v331, 16
  %v491 = vpack.i.b16 %v490, %v489
  %v494 = vpack.i.b16 %v395, %v363
  %v495 = vshrl.u32 %v363, 16
  %v496 = vshrl.u32 %v395, 16
  %v497 = vpack.i.b16 %v496, %v495
  %v500 = vpack.i.b16 %v333, %v180
  %v501 = vshrl.u32 %v180, 16
  %v502 = vshrl.u32 %v333, 16
  %v503 = vpack.i.b16 %v502, %v501
  %v506 = vpack.i.b16 %v397, %v365
  %v507 = vshrl.u32 %v365, 16
  %v508 = vshrl.u32 %v397, 16
  %v509 = vpack.i.b16 %v508, %v507
  %v512 = vpack.i.b16 %v335, %v181
  %v513 = vshrl.u32 %v181, 16
  %v514 = vshrl.u32 %v335, 16
  %v515 = vpack.i.b16 %v514, %v513
  %v518 = vpack.i.b16 %v399, %v367
  %v519 = vshrl.u32 %v367, 16
  %v520 = vshrl.u32 %v399, 16
  %v521 = vpack.i.b16 %v520, %v519
  %v524 = vpack.i.b16 %v337, %v182
  %v525 = vshrl.u32 %v182, 16
  %v526 = vshrl.u32 %v337, 16
  %v527 = vpack.i.b16 %v526, %v525
  %v530 = vpack.i.b16 %v401, %v369
  %v531 = vshrl.u32 %v369, 16
  %v532 = vshrl.u32 %v401, 16
  %v533 = vpack.i.b16 %v532, %v531
  %v536 = vpack.i.b16 %v339, %v183
  %v537 = vshrl.u32 %v183, 16
  %v538 = vshrl.u32 %v339, 16
  %v539 = vpack.i.b16 %v538, %v537
  %v542 = vpack.i.b16 %v403, %v371
  %v543 = vshrl.u32 %v371, 16
  %v544 = vshrl.u32 %v403, 16
  %v545 = vpack.i.b16 %v544, %v543
  %v548 = vpack.i.b16 %v341, %v184
  %v549 = vshrl.u32 %v184, 16
  %v550 = vshrl.u32 %v341, 16
  %v551 = vpack.i.b16 %v550, %v549
  %v554 = vpack.i.b16 %v405, %v373
  %v555 = vshrl.u32 %v373, 16
  %v556 = vshrl.u32 %v405, 16
  %v557 = vpack.i.b16 %v556, %v555
  %v560 = vpack.i.b16 %v343, %v185
  %v561 = vshrl.u32 %v185, 16
  %v562 = vshrl.u32 %v343, 16
  %v563 = vpack.i.b16 %v562, %v561
  %v566 = vpack.i.b16 %v407, %v375
  %v567 = vshrl.u32 %v375, 16
  %v568 = vshrl.u32 %v407, 16
  %v569 = vpack.i.b16 %v568, %v567
  %v572 = vpack.i.b16 %v345, %v186
  %v573 = vshrl.u32 %v186, 16
  %v574 = vshrl.u32 %v345, 16
  %v575 = vpack.i.b16 %v574, %v573
  %v578 = vpack.i.b16 %v409, %v377
  %v579 = vshrl.u32 %v377, 16
  %v580 = vshrl.u32 %v409, 16
  %v581 = vpack.i.b16 %v580, %v579
  %v584 = vpack.i.b16 %v347, %v187
  %v585 = vshrl.u32 %v187, 16
  %v586 = vshrl.u32 %v347, 16
  %v587 = vpack.i.b16 %v586, %v585
  %v590 = vpack.i.b16 %v411, %v379
  %v591 = vshrl.u32 %v379, 16
  %v592 = vshrl.u32 %v411, 16
  %v593 = vpack.i.b16 %v592, %v591
  %v596 = vpack.i.b16 %v349, %v188
  %v597 = vshrl.u32 %v188, 16
  %v598 = vshrl.u32 %v349, 16
  %v599 = vpack.i.b16 %v598, %v597
  %v602 = vpack.i.b16 %v413, %v381
  %v603 = vshrl.u32 %v381, 16
  %v604 = vshrl.u32 %v413, 16
  %v605 = vpack.i.b16 %v604, %v603
  %v608 = vunpack.c.l.s4 1983009808
  %v609 = vunpack.c.0.s8 %v608
  %v610 = vperm.slane %v416, %v609
  %v613 = vunpack.c.l.s4 1983009808
  %v614 = vunpack.c.0.s8 %v613
  %v615 = vperm.slane %v422, %v614
  %v616 = vrot.slane %v615, 4
  %vm617 = vcmask 1047556
  %v618 = vsel %vm617, %v616, %v610
  %v619 = vrot.slane %v610, 4
  %v620 = vsel %vm617, %v615, %v619
  %v622 = vunpack.c.l.s4 1934713408
  %v623 = vunpack.c.0.s8 %v622
  %v624 = vperm.slane %v618, %v623
  %v626 = vunpack.c.l.s4 1934713408
  %v627 = vunpack.c.0.s8 %v626
  %v628 = vperm.slane %v620, %v627
  %v629 = vrot.slane %v624, 4
  %v630 = vsel %vm617, 0, %v629
  %v631 = vrot.slane %v628, 4
  %v632 = vsel %vm617, 0, %v631
  %v635 = vunpack.c.l.s4 1983009808
  %v636 = vunpack.c.0.s8 %v635
  %v637 = vperm.slane %v419, %v636
  %v640 = vunpack.c.l.s4 1983009808
  %v641 = vunpack.c.0.s8 %v640
  %v642 = vperm.slane %v425, %v641
  %v643 = vrot.slane %v642, 4
  %v644 = vsel %vm617, %v643, %v637
  %v645 = vrot.slane %v637, 4
  %v646 = vsel %vm617, %v642, %v645
  %v648 = vunpack.c.l.s4 1934713408
  %v649 = vunpack.c.0.s8 %v648
  %v650 = vperm.slane %v644, %v649
  %v652 = vunpack.c.l.s4 1934713408
  %v653 = vunpack.c.0.s8 %v652
  %v654 = vperm.slane %v646, %v653
  %v655 = vrot.slane %v650, 4
  %v656 = vsel %vm617, 0, %v655
  %v657 = vrot.slane %v654, 4
  %v658 = vsel %vm617, 0, %v657
  %v661 = vunpack.c.l.s4 1983009808
  %v662 = vunpack.c.0.s8 %v661
  %v663 = vperm.slane %v428, %v662
  %v666 = vunpack.c.l.s4 1983009808
  %v667 = vunpack.c.0.s8 %v666
  %v668 = vperm.slane %v434, %v667
  %v669 = vrot.slane %v668, 4
  %v670 = vsel %vm617, %v669, %v663
  %v671 = vrot.slane %v663, 4
  %v672 = vsel %vm617, %v668, %v671
  %v674 = vunpack.c.l.s4 1934713408
  %v675 = vunpack.c.0.s8 %v674
  %v676 = vperm.slane %v670, %v675
  %v678 = vunpack.c.l.s4 1934713408
  %v679 = vunpack.c.0.s8 %v678
  %v680 = vperm.slane %v672, %v679
  %v681 = vrot.slane %v676, 4
  %v682 = vsel %vm617, 0, %v681
  %v683 = vrot.slane %v680, 4
  %v684 = vsel %vm617, 0, %v683
  %v687 = vunpack.c.l.s4 1983009808
  %v688 = vunpack.c.0.s8 %v687
  %v689 = vperm.slane %v431, %v688
  %v692 = vunpack.c.l.s4 1983009808
  %v693 = vunpack.c.0.s8 %v692
  %v694 = vperm.slane %v437, %v693
  %v695 = vrot.slane %v694, 4
  %v696 = vsel %vm617, %v695, %v689
  %v697 = vrot.slane %v689, 4
  %v698 = vsel %vm617, %v694, %v697
  %v700 = vunpack.c.l.s4 1934713408
  %v701 = vunpack.c.0.s8 %v700
  %v702 = vperm.slane %v696, %v701
  %v704 = vunpack.c.l.s4 1934713408
  %v705 = vunpack.c.0.s8 %v704
  %v706 = vperm.slane %v698, %v705
  %v707 = vrot.slane %v702, 4
  %v708 = vsel %vm617, 0, %v707
  %v709 = vrot.slane %v706, 4
  %v710 = vsel %vm617, 0, %v709
  %v713 = vunpack.c.l.s4 1983009808
  %v714 = vunpack.c.0.s8 %v713
  %v715 = vperm.slane %v440, %v714
  %v718 = vunpack.c.l.s4 1983009808
  %v719 = vunpack.c.0.s8 %v718
  %v720 = vperm.slane %v446, %v719
  %v721 = vrot.slane %v720, 4
  %v722 = vsel %vm617, %v721, %v715
  %v723 = vrot.slane %v715, 4
  %v724 = vsel %vm617, %v720, %v723
  %v726 = vunpack.c.l.s4 1934713408
  %v727 = vunpack.c.0.s8 %v726
  %v728 = vperm.slane %v722, %v727
  %v730 = vunpack.c.l.s4 1934713408
  %v731 = vunpack.c.0.s8 %v730
  %v732 = vperm.slane %v724, %v731
  %v733 = vrot.slane %v728, 4
  %v734 = vsel %vm617, 0, %v733
  %v735 = vrot.slane %v732, 4
  %v736 = vsel %vm617, 0, %v735
  %v739 = vunpack.c.l.s4 1983009808
  %v740 = vunpack.c.0.s8 %v739
  %v741 = vperm.slane %v443, %v740
  %v744 = vunpack.c.l.s4 1983009808
  %v745 = vunpack.c.0.s8 %v744
  %v746 = vperm.slane %v449, %v745
  %v747 = vrot.slane %v746, 4
  %v748 = vsel %vm617, %v747, %v741
  %v749 = vrot.slane %v741, 4
  %v750 = vsel %vm617, %v746, %v749
  %v752 = vunpack.c.l.s4 1934713408
  %v753 = vunpack.c.0.s8 %v752
  %v754 = vperm.slane %v748, %v753
  %v756 = vunpack.c.l.s4 1934713408
  %v757 = vunpack.c.0.s8 %v756
  %v758 = vperm.slane %v750, %v757
  %v759 = vrot.slane %v754, 4
  %v760 = vsel %vm617, 0, %v759
  %v761 = vrot.slane %v758, 4
  %v762 = vsel %vm617, 0, %v761
  %v765 = vunpack.c.l.s4 1983009808
  %v766 = vunpack.c.0.s8 %v765
  %v767 = vperm.slane %v452, %v766
  %v770 = vunpack.c.l.s4 1983009808
  %v771 = vunpack.c.0.s8 %v770
  %v772 = vperm.slane %v458, %v771
  %v773 = vrot.slane %v772, 4
  %v774 = vsel %vm617, %v773, %v767
  %v775 = vrot.slane %v767, 4
  %v776 = vsel %vm617, %v772, %v775
  %v778 = vunpack.c.l.s4 1934713408
  %v779 = vunpack.c.0.s8 %v778
  %v780 = vperm.slane %v774, %v779
  %v782 = vunpack.c.l.s4 1934713408
  %v783 = vunpack.c.0.s8 %v782
  %v784 = vperm.slane %v776, %v783
  %v785 = vrot.slane %v780, 4
  %v786 = vsel %vm617, 0, %v785
  %v787 = vrot.slane %v784, 4
  %v788 = vsel %vm617, 0, %v787
  %v791 = vunpack.c.l.s4 1983009808
  %v792 = vunpack.c.0.s8 %v791
  %v793 = vperm.slane %v455, %v792
  %v796 = vunpack.c.l.s4 1983009808
  %v797 = vunpack.c.0.s8 %v796
  %v798 = vperm.slane %v461, %v797
  %v799 = vrot.slane %v798, 4
  %v800 = vsel %vm617, %v799, %v793
  %v801 = vrot.slane %v793, 4
  %v802 = vsel %vm617, %v798, %v801
  %v804 = vunpack.c.l.s4 1934713408
  %v805 = vunpack.c.0.s8 %v804
  %v806 = vperm.slane %v800, %v805
  %v808 = vunpack.c.l.s4 1934713408
  %v809 = vunpack.c.0.s8 %v808
  %v810 = vperm.slane %v802, %v809
  %v811 = vrot.slane %v806, 4
  %v812 = vsel %vm617, 0, %v811
  %v813 = vrot.slane %v810, 4
  %v814 = vsel %vm617, 0, %v813
  %v817 = vunpack.c.l.s4 1983009808
  %v818 = vunpack.c.0.s8 %v817
  %v819 = vperm.slane %v464, %v818
  %v822 = vunpack.c.l.s4 1983009808
  %v823 = vunpack.c.0.s8 %v822
  %v824 = vperm.slane %v470, %v823
  %v825 = vrot.slane %v824, 4
  %v826 = vsel %vm617, %v825, %v819
  %v827 = vrot.slane %v819, 4
  %v828 = vsel %vm617, %v824, %v827
  %v830 = vunpack.c.l.s4 1934713408
  %v831 = vunpack.c.0.s8 %v830
  %v832 = vperm.slane %v826, %v831
  %v834 = vunpack.c.l.s4 1934713408
  %v835 = vunpack.c.0.s8 %v834
  %v836 = vperm.slane %v828, %v835
  %v837 = vrot.slane %v832, 4
  %v838 = vsel %vm617, 0, %v837
  %v839 = vrot.slane %v836, 4
  %v840 = vsel %vm617, 0, %v839
  %v843 = vunpack.c.l.s4 1983009808
  %v844 = vunpack.c.0.s8 %v843
  %v845 = vperm.slane %v467, %v844
  %v848 = vunpack.c.l.s4 1983009808
  %v849 = vunpack.c.0.s8 %v848
  %v850 = vperm.slane %v473, %v849
  %v851 = vrot.slane %v850, 4
  %v852 = vsel %vm617, %v851, %v845
  %v853 = vrot.slane %v845, 4
  %v854 = vsel %vm617, %v850, %v853
  %v856 = vunpack.c.l.s4 1934713408
  %v857 = vunpack.c.0.s8 %v856
  %v858 = vperm.slane %v852, %v857
  %v860 = vunpack.c.l.s4 1934713408
  %v861 = vunpack.c.0.s8 %v860
  %v862 = vperm.slane %v854, %v861
  %v863 = vrot.slane %v858, 4
  %v864 = vsel %vm617, 0, %v863
  %v865 = vrot.slane %v862, 4
  %v866 = vsel %vm617, 0, %v865
  %v869 = vunpack.c.l.s4 1983009808
  %v870 = vunpack.c.0.s8 %v869
  %v871 = vperm.slane %v476, %v870
  %v874 = vunpack.c.l.s4 1983009808
  %v875 = vunpack.c.0.s8 %v874
  %v876 = vperm.slane %v482, %v875
  %v877 = vrot.slane %v876, 4
  %v878 = vsel %vm617, %v877, %v871
  %v879 = vrot.slane %v871, 4
  %v880 = vsel %vm617, %v876, %v879
  %v882 = vunpack.c.l.s4 1934713408
  %v883 = vunpack.c.0.s8 %v882
  %v884 = vperm.slane %v878, %v883
  %v886 = vunpack.c.l.s4 1934713408
  %v887 = vunpack.c.0.s8 %v886
  %v888 = vperm.slane %v880, %v887
  %v889 = vrot.slane %v884, 4
  %v890 = vsel %vm617, 0, %v889
  %v891 = vrot.slane %v888, 4
  %v892 = vsel %vm617, 0, %v891
  %v895 = vunpack.c.l.s4 1983009808
  %v896 = vunpack.c.0.s8 %v895
  %v897 = vperm.slane %v479, %v896
  %v900 = vunpack.c.l.s4 1983009808
  %v901 = vunpack.c.0.s8 %v900
  %v902 = vperm.slane %v485, %v901
  %v903 = vrot.slane %v902, 4
  %v904 = vsel %vm617, %v903, %v897
  %v905 = vrot.slane %v897, 4
  %v906 = vsel %vm617, %v902, %v905
  %v908 = vunpack.c.l.s4 1934713408
  %v909 = vunpack.c.0.s8 %v908
  %v910 = vperm.slane %v904, %v909
  %v912 = vunpack.c.l.s4 1934713408
  %v913 = vunpack.c.0.s8 %v912
  %v914 = vperm.slane %v906, %v913
  %v915 = vrot.slane %v910, 4
  %v916 = vsel %vm617, 0, %v915
  %v917 = vrot.slane %v914, 4
  %v918 = vsel %vm617, 0, %v917
  %v921 = vunpack.c.l.s4 1983009808
  %v922 = vunpack.c.0.s8 %v921
  %v923 = vperm.slane %v488, %v922
  %v926 = vunpack.c.l.s4 1983009808
  %v927 = vunpack.c.0.s8 %v926
  %v928 = vperm.slane %v494, %v927
  %v929 = vrot.slane %v928, 4
  %v930 = vsel %vm617, %v929, %v923
  %v931 = vrot.slane %v923, 4
  %v932 = vsel %vm617, %v928, %v931
  %v934 = vunpack.c.l.s4 1934713408
  %v935 = vunpack.c.0.s8 %v934
  %v936 = vperm.slane %v930, %v935
  %v938 = vunpack.c.l.s4 1934713408
  %v939 = vunpack.c.0.s8 %v938
  %v940 = vperm.slane %v932, %v939
  %v941 = vrot.slane %v936, 4
  %v942 = vsel %vm617, 0, %v941
  %v943 = vrot.slane %v940, 4
  %v944 = vsel %vm617, 0, %v943
  %v947 = vunpack.c.l.s4 1983009808
  %v948 = vunpack.c.0.s8 %v947
  %v949 = vperm.slane %v491, %v948
  %v952 = vunpack.c.l.s4 1983009808
  %v953 = vunpack.c.0.s8 %v952
  %v954 = vperm.slane %v497, %v953
  %v955 = vrot.slane %v954, 4
  %v956 = vsel %vm617, %v955, %v949
  %v957 = vrot.slane %v949, 4
  %v958 = vsel %vm617, %v954, %v957
  %v960 = vunpack.c.l.s4 1934713408
  %v961 = vunpack.c.0.s8 %v960
  %v962 = vperm.slane %v956, %v961
  %v964 = vunpack.c.l.s4 1934713408
  %v965 = vunpack.c.0.s8 %v964
  %v966 = vperm.slane %v958, %v965
  %v967 = vrot.slane %v962, 4
  %v968 = vsel %vm617, 0, %v967
  %v969 = vrot.slane %v966, 4
  %v970 = vsel %vm617, 0, %v969
  %v973 = vunpack.c.l.s4 1983009808
  %v974 = vunpack.c.0.s8 %v973
  %v975 = vperm.slane %v500, %v974
  %v978 = vunpack.c.l.s4 1983009808
  %v979 = vunpack.c.0.s8 %v978
  %v980 = vperm.slane %v506, %v979
  %v981 = vrot.slane %v980, 4
  %v982 = vsel %vm617, %v981, %v975
  %v983 = vrot.slane %v975, 4
  %v984 = vsel %vm617, %v980, %v983
  %v986 = vunpack.c.l.s4 1934713408
  %v987 = vunpack.c.0.s8 %v986
  %v988 = vperm.slane %v982, %v987
  %v990 = vunpack.c.l.s4 1934713408
  %v991 = vunpack.c.0.s8 %v990
  %v992 = vperm.slane %v984, %v991
  %v993 = vrot.slane %v988, 4
  %v994 = vsel %vm617, 0, %v993
  %v995 = vrot.slane %v992, 4
  %v996 = vsel %vm617, 0, %v995
  %v999 = vunpack.c.l.s4 1983009808
  %v1000 = vunpack.c.0.s8 %v999
  %v1001 = vperm.slane %v503, %v1000
  %v1004 = vunpack.c.l.s4 1983009808
  %v1005 = vunpack.c.0.s8 %v1004
  %v1006 = vperm.slane %v509, %v1005
  %v1007 = vrot.slane %v1006, 4
  %v1008 = vsel %vm617, %v1007, %v1001
  %v1009 = vrot.slane %v1001, 4
  %v1010 = vsel %vm617, %v1006, %v1009
  %v1012 = vunpack.c.l.s4 1934713408
  %v1013 = vunpack.c.0.s8 %v1012
  %v1014 = vperm.slane %v1008, %v1013
  %v1016 = vunpack.c.l.s4 1934713408
  %v1017 = vunpack.c.0.s8 %v1016
  %v1018 = vperm.slane %v1010, %v1017
  %v1019 = vrot.slane %v1014, 4
  %v1020 = vsel %vm617, 0, %v1019
  %v1021 = vrot.slane %v1018, 4
  %v1022 = vsel %vm617, 0, %v1021
  %v1025 = vunpack.c.l.s4 1983009808
  %v1026 = vunpack.c.0.s8 %v1025
  %v1027 = vperm.slane %v512, %v1026
  %v1030 = vunpack.c.l.s4 1983009808
  %v1031 = vunpack.c.0.s8 %v1030
  %v1032 = vperm.slane %v518, %v1031
  %v1033 = vrot.slane %v1032, 4
  %v1034 = vsel %vm617, %v1033, %v1027
  %v1035 = vrot.slane %v1027, 4
  %v1036 = vsel %vm617, %v1032, %v1035
  %v1038 = vunpack.c.l.s4 1934713408
  %v1039 = vunpack.c.0.s8 %v1038
  %v1040 = vperm.slane %v1034, %v1039
  %v1042 = vunpack.c.l.s4 1934713408
  %v1043 = vunpack.c.0.s8 %v1042
  %v1044 = vperm.slane %v1036, %v1043
  %v1045 = vrot.slane %v1040, 4
  %v1046 = vsel %vm617, 0, %v1045
  %v1047 = vrot.slane %v1044, 4
  %v1048 = vsel %vm617, 0, %v1047
  %v1051 = vunpack.c.l.s4 1983009808
  %v1052 = vunpack.c.0.s8 %v1051
  %v1053 = vperm.slane %v515, %v1052
  %v1056 = vunpack.c.l.s4 1983009808
  %v1057 = vunpack.c.0.s8 %v1056
  %v1058 = vperm.slane %v521, %v1057
  %v1059 = vrot.slane %v1058, 4
  %v1060 = vsel %vm617, %v1059, %v1053
  %v1061 = vrot.slane %v1053, 4
  %v1062 = vsel %vm617, %v1058, %v1061
  %v1064 = vunpack.c.l.s4 1934713408
  %v1065 = vunpack.c.0.s8 %v1064
  %v1066 = vperm.slane %v1060, %v1065
  %v1068 = vunpack.c.l.s4 1934713408
  %v1069 = vunpack.c.0.s8 %v1068
  %v1070 = vperm.slane %v1062, %v1069
  %v1071 = vrot.slane %v1066, 4
  %v1072 = vsel %vm617, 0, %v1071
  %v1073 = vrot.slane %v1070, 4
  %v1074 = vsel %vm617, 0, %v1073
  %v1077 = vunpack.c.l.s4 1983009808
  %v1078 = vunpack.c.0.s8 %v1077
  %v1079 = vperm.slane %v524, %v1078
  %v1082 = vunpack.c.l.s4 1983009808
  %v1083 = vunpack.c.0.s8 %v1082
  %v1084 = vperm.slane %v530, %v1083
  %v1085 = vrot.slane %v1084, 4
  %v1086 = vsel %vm617, %v1085, %v1079
  %v1087 = vrot.slane %v1079, 4
  %v1088 = vsel %vm617, %v1084, %v1087
  %v1090 = vunpack.c.l.s4 1934713408
  %v1091 = vunpack.c.0.s8 %v1090
  %v1092 = vperm.slane %v1086, %v1091
  %v1094 = vunpack.c.l.s4 1934713408
  %v1095 = vunpack.c.0.s8 %v1094
  %v1096 = vperm.slane %v1088, %v1095
  %v1097 = vrot.slane %v1092, 4
  %v1098 = vsel %vm617, 0, %v1097
  %v1099 = vrot.slane %v1096, 4
  %v1100 = vsel %vm617, 0, %v1099
  %v1103 = vunpack.c.l.s4 1983009808
  %v1104 = vunpack.c.0.s8 %v1103
  %v1105 = vperm.slane %v527, %v1104
  %v1108 = vunpack.c.l.s4 1983009808
  %v1109 = vunpack.c.0.s8 %v1108
  %v1110 = vperm.slane %v533, %v1109
  %v1111 = vrot.slane %v1110, 4
  %v1112 = vsel %vm617, %v1111, %v1105
  %v1113 = vrot.slane %v1105, 4
  %v1114 = vsel %vm617, %v1110, %v1113
  %v1116 = vunpack.c.l.s4 1934713408
  %v1117 = vunpack.c.0.s8 %v1116
  %v1118 = vperm.slane %v1112, %v1117
  %v1120 = vunpack.c.l.s4 1934713408
  %v1121 = vunpack.c.0.s8 %v1120
  %v1122 = vperm.slane %v1114, %v1121
  %v1123 = vrot.slane %v1118, 4
  %v1124 = vsel %vm617, 0, %v1123
  %v1125 = vrot.slane %v1122, 4
  %v1126 = vsel %vm617, 0, %v1125
  %v1129 = vunpack.c.l.s4 1983009808
  %v1130 = vunpack.c.0.s8 %v1129
  %v1131 = vperm.slane %v536, %v1130
  %v1134 = vunpack.c.l.s4 1983009808
  %v1135 = vunpack.c.0.s8 %v1134
  %v1136 = vperm.slane %v542, %v1135
  %v1137 = vrot.slane %v1136, 4
  %v1138 = vsel %vm617, %v1137, %v1131
  %v1139 = vrot.slane %v1131, 4
  %v1140 = vsel %vm617, %v1136, %v1139
  %v1142 = vunpack.c.l.s4 1934713408
  %v1143 = vunpack.c.0.s8 %v1142
  %v1144 = vperm.slane %v1138, %v1143
  %v1146 = vunpack.c.l.s4 1934713408
  %v1147 = vunpack.c.0.s8 %v1146
  %v1148 = vperm.slane %v1140, %v1147
  %v1149 = vrot.slane %v1144, 4
  %v1150 = vsel %vm617, 0, %v1149
  %v1151 = vrot.slane %v1148, 4
  %v1152 = vsel %vm617, 0, %v1151
  %v1155 = vunpack.c.l.s4 1983009808
  %v1156 = vunpack.c.0.s8 %v1155
  %v1157 = vperm.slane %v539, %v1156
  %v1160 = vunpack.c.l.s4 1983009808
  %v1161 = vunpack.c.0.s8 %v1160
  %v1162 = vperm.slane %v545, %v1161
  %v1163 = vrot.slane %v1162, 4
  %v1164 = vsel %vm617, %v1163, %v1157
  %v1165 = vrot.slane %v1157, 4
  %v1166 = vsel %vm617, %v1162, %v1165
  %v1168 = vunpack.c.l.s4 1934713408
  %v1169 = vunpack.c.0.s8 %v1168
  %v1170 = vperm.slane %v1164, %v1169
  %v1172 = vunpack.c.l.s4 1934713408
  %v1173 = vunpack.c.0.s8 %v1172
  %v1174 = vperm.slane %v1166, %v1173
  %v1175 = vrot.slane %v1170, 4
  %v1176 = vsel %vm617, 0, %v1175
  %v1177 = vrot.slane %v1174, 4
  %v1178 = vsel %vm617, 0, %v1177
  %v1181 = vunpack.c.l.s4 1983009808
  %v1182 = vunpack.c.0.s8 %v1181
  %v1183 = vperm.slane %v548, %v1182
  %v1186 = vunpack.c.l.s4 1983009808
  %v1187 = vunpack.c.0.s8 %v1186
  %v1188 = vperm.slane %v554, %v1187
  %v1189 = vrot.slane %v1188, 4
  %v1190 = vsel %vm617, %v1189, %v1183
  %v1191 = vrot.slane %v1183, 4
  %v1192 = vsel %vm617, %v1188, %v1191
  %v1194 = vunpack.c.l.s4 1934713408
  %v1195 = vunpack.c.0.s8 %v1194
  %v1196 = vperm.slane %v1190, %v1195
  %v1198 = vunpack.c.l.s4 1934713408
  %v1199 = vunpack.c.0.s8 %v1198
  %v1200 = vperm.slane %v1192, %v1199
  %v1201 = vrot.slane %v1196, 4
  %v1202 = vsel %vm617, 0, %v1201
  %v1203 = vrot.slane %v1200, 4
  %v1204 = vsel %vm617, 0, %v1203
  %v1207 = vunpack.c.l.s4 1983009808
  %v1208 = vunpack.c.0.s8 %v1207
  %v1209 = vperm.slane %v551, %v1208
  %v1212 = vunpack.c.l.s4 1983009808
  %v1213 = vunpack.c.0.s8 %v1212
  %v1214 = vperm.slane %v557, %v1213
  %v1215 = vrot.slane %v1214, 4
  %v1216 = vsel %vm617, %v1215, %v1209
  %v1217 = vrot.slane %v1209, 4
  %v1218 = vsel %vm617, %v1214, %v1217
  %v1220 = vunpack.c.l.s4 1934713408
  %v1221 = vunpack.c.0.s8 %v1220
  %v1222 = vperm.slane %v1216, %v1221
  %v1224 = vunpack.c.l.s4 1934713408
  %v1225 = vunpack.c.0.s8 %v1224
  %v1226 = vperm.slane %v1218, %v1225
  %v1227 = vrot.slane %v1222, 4
  %v1228 = vsel %vm617, 0, %v1227
  %v1229 = vrot.slane %v1226, 4
  %v1230 = vsel %vm617, 0, %v1229
  %v1233 = vunpack.c.l.s4 1983009808
  %v1234 = vunpack.c.0.s8 %v1233
  %v1235 = vperm.slane %v560, %v1234
  %v1238 = vunpack.c.l.s4 1983009808
  %v1239 = vunpack.c.0.s8 %v1238
  %v1240 = vperm.slane %v566, %v1239
  %v1241 = vrot.slane %v1240, 4
  %v1242 = vsel %vm617, %v1241, %v1235
  %v1243 = vrot.slane %v1235, 4
  %v1244 = vsel %vm617, %v1240, %v1243
  %v1246 = vunpack.c.l.s4 1934713408
  %v1247 = vunpack.c.0.s8 %v1246
  %v1248 = vperm.slane %v1242, %v1247
  %v1250 = vunpack.c.l.s4 1934713408
  %v1251 = vunpack.c.0.s8 %v1250
  %v1252 = vperm.slane %v1244, %v1251
  %v1253 = vrot.slane %v1248, 4
  %v1254 = vsel %vm617, 0, %v1253
  %v1255 = vrot.slane %v1252, 4
  %v1256 = vsel %vm617, 0, %v1255
  %v1259 = vunpack.c.l.s4 1983009808
  %v1260 = vunpack.c.0.s8 %v1259
  %v1261 = vperm.slane %v563, %v1260
  %v1264 = vunpack.c.l.s4 1983009808
  %v1265 = vunpack.c.0.s8 %v1264
  %v1266 = vperm.slane %v569, %v1265
  %v1267 = vrot.slane %v1266, 4
  %v1268 = vsel %vm617, %v1267, %v1261
  %v1269 = vrot.slane %v1261, 4
  %v1270 = vsel %vm617, %v1266, %v1269
  %v1272 = vunpack.c.l.s4 1934713408
  %v1273 = vunpack.c.0.s8 %v1272
  %v1274 = vperm.slane %v1268, %v1273
  %v1276 = vunpack.c.l.s4 1934713408
  %v1277 = vunpack.c.0.s8 %v1276
  %v1278 = vperm.slane %v1270, %v1277
  %v1279 = vrot.slane %v1274, 4
  %v1280 = vsel %vm617, 0, %v1279
  %v1281 = vrot.slane %v1278, 4
  %v1282 = vsel %vm617, 0, %v1281
  %v1285 = vunpack.c.l.s4 1983009808
  %v1286 = vunpack.c.0.s8 %v1285
  %v1287 = vperm.slane %v572, %v1286
  %v1290 = vunpack.c.l.s4 1983009808
  %v1291 = vunpack.c.0.s8 %v1290
  %v1292 = vperm.slane %v578, %v1291
  %v1293 = vrot.slane %v1292, 4
  %v1294 = vsel %vm617, %v1293, %v1287
  %v1295 = vrot.slane %v1287, 4
  %v1296 = vsel %vm617, %v1292, %v1295
  %v1298 = vunpack.c.l.s4 1934713408
  %v1299 = vunpack.c.0.s8 %v1298
  %v1300 = vperm.slane %v1294, %v1299
  %v1302 = vunpack.c.l.s4 1934713408
  %v1303 = vunpack.c.0.s8 %v1302
  %v1304 = vperm.slane %v1296, %v1303
  %v1305 = vrot.slane %v1300, 4
  %v1306 = vsel %vm617, 0, %v1305
  %v1307 = vrot.slane %v1304, 4
  %v1308 = vsel %vm617, 0, %v1307
  %v1311 = vunpack.c.l.s4 1983009808
  %v1312 = vunpack.c.0.s8 %v1311
  %v1313 = vperm.slane %v575, %v1312
  %v1316 = vunpack.c.l.s4 1983009808
  %v1317 = vunpack.c.0.s8 %v1316
  %v1318 = vperm.slane %v581, %v1317
  %v1319 = vrot.slane %v1318, 4
  %v1320 = vsel %vm617, %v1319, %v1313
  %v1321 = vrot.slane %v1313, 4
  %v1322 = vsel %vm617, %v1318, %v1321
  %v1324 = vunpack.c.l.s4 1934713408
  %v1325 = vunpack.c.0.s8 %v1324
  %v1326 = vperm.slane %v1320, %v1325
  %v1328 = vunpack.c.l.s4 1934713408
  %v1329 = vunpack.c.0.s8 %v1328
  %v1330 = vperm.slane %v1322, %v1329
  %v1331 = vrot.slane %v1326, 4
  %v1332 = vsel %vm617, 0, %v1331
  %v1333 = vrot.slane %v1330, 4
  %v1334 = vsel %vm617, 0, %v1333
  %v1337 = vunpack.c.l.s4 1983009808
  %v1338 = vunpack.c.0.s8 %v1337
  %v1339 = vperm.slane %v584, %v1338
  %v1342 = vunpack.c.l.s4 1983009808
  %v1343 = vunpack.c.0.s8 %v1342
  %v1344 = vperm.slane %v590, %v1343
  %v1345 = vrot.slane %v1344, 4
  %v1346 = vsel %vm617, %v1345, %v1339
  %v1347 = vrot.slane %v1339, 4
  %v1348 = vsel %vm617, %v1344, %v1347
  %v1350 = vunpack.c.l.s4 1934713408
  %v1351 = vunpack.c.0.s8 %v1350
  %v1352 = vperm.slane %v1346, %v1351
  %v1354 = vunpack.c.l.s4 1934713408
  %v1355 = vunpack.c.0.s8 %v1354
  %v1356 = vperm.slane %v1348, %v1355
  %v1357 = vrot.slane %v1352, 4
  %v1358 = vsel %vm617, 0, %v1357
  %v1359 = vrot.slane %v1356, 4
  %v1360 = vsel %vm617, 0, %v1359
  %v1363 = vunpack.c.l.s4 1983009808
  %v1364 = vunpack.c.0.s8 %v1363
  %v1365 = vperm.slane %v587, %v1364
  %v1368 = vunpack.c.l.s4 1983009808
  %v1369 = vunpack.c.0.s8 %v1368
  %v1370 = vperm.slane %v593, %v1369
  %v1371 = vrot.slane %v1370, 4
  %v1372 = vsel %vm617, %v1371, %v1365
  %v1373 = vrot.slane %v1365, 4
  %v1374 = vsel %vm617, %v1370, %v1373
  %v1376 = vunpack.c.l.s4 1934713408
  %v1377 = vunpack.c.0.s8 %v1376
  %v1378 = vperm.slane %v1372, %v1377
  %v1380 = vunpack.c.l.s4 1934713408
  %v1381 = vunpack.c.0.s8 %v1380
  %v1382 = vperm.slane %v1374, %v1381
  %v1383 = vrot.slane %v1378, 4
  %v1384 = vsel %vm617, 0, %v1383
  %v1385 = vrot.slane %v1382, 4
  %v1386 = vsel %vm617, 0, %v1385
  %v1389 = vunpack.c.l.s4 1983009808
  %v1390 = vunpack.c.0.s8 %v1389
  %v1391 = vperm.slane %v596, %v1390
  %v1394 = vunpack.c.l.s4 1983009808
  %v1395 = vunpack.c.0.s8 %v1394
  %v1396 = vperm.slane %v602, %v1395
  %v1397 = vrot.slane %v1396, 4
  %v1398 = vsel %vm617, %v1397, %v1391
  %v1399 = vrot.slane %v1391, 4
  %v1400 = vsel %vm617, %v1396, %v1399
  %v1402 = vunpack.c.l.s4 1934713408
  %v1403 = vunpack.c.0.s8 %v1402
  %v1404 = vperm.slane %v1398, %v1403
  %v1406 = vunpack.c.l.s4 1934713408
  %v1407 = vunpack.c.0.s8 %v1406
  %v1408 = vperm.slane %v1400, %v1407
  %v1409 = vrot.slane %v1404, 4
  %v1410 = vsel %vm617, 0, %v1409
  %v1411 = vrot.slane %v1408, 4
  %v1412 = vsel %vm617, 0, %v1411
  %v1415 = vunpack.c.l.s4 1983009808
  %v1416 = vunpack.c.0.s8 %v1415
  %v1417 = vperm.slane %v599, %v1416
  %v1420 = vunpack.c.l.s4 1983009808
  %v1421 = vunpack.c.0.s8 %v1420
  %v1422 = vperm.slane %v605, %v1421
  %v1423 = vrot.slane %v1422, 4
  %v1424 = vsel %vm617, %v1423, %v1417
  %v1425 = vrot.slane %v1417, 4
  %v1426 = vsel %vm617, %v1422, %v1425
  %v1428 = vunpack.c.l.s4 1934713408
  %v1429 = vunpack.c.0.s8 %v1428
  %v1430 = vperm.slane %v1424, %v1429
  %v1432 = vunpack.c.l.s4 1934713408
  %v1433 = vunpack.c.0.s8 %v1432
  %v1434 = vperm.slane %v1426, %v1433
  %v1435 = vrot.slane %v1430, 4
  %v1436 = vsel %vm617, 0, %v1435
  %v1437 = vrot.slane %v1434, 4
  %v1438 = vsel %vm617, 0, %v1437
  %v1439 = vsel %vm617, %v631, %v624
  %v1441 = vunpack.c.l.s4 1983009808
  %v1442 = vunpack.c.0.s8 %v1441
  %v1443 = vperm.slane %v1439, %v1442
  %v1444 = vrot.slane %v632, 4
  %v1445 = vsel %vm617, %v1444, %v630
  %v1447 = vunpack.c.l.s4 1983009808
  %v1448 = vunpack.c.0.s8 %v1447
  %v1449 = vperm.slane %v1445, %v1448
  %v1450 = vrot.slane %v1449, 4
  %v1451 = vsel %vm617, %v1450, %v1443
  %v1453 = vunpack.c.l.s4 1934713408
  %v1454 = vunpack.c.0.s8 %v1453
  %v1455 = vperm.slane %v1451, %v1454
  %v1456 = vrot.slane %v1455, 4
  %v1457 = vsel %vm617, 0, %v1456
  %v1458 = vsel %vm617, %v657, %v650
  %v1460 = vunpack.c.l.s4 1983009808
  %v1461 = vunpack.c.0.s8 %v1460
  %v1462 = vperm.slane %v1458, %v1461
  %v1463 = vrot.slane %v658, 4
  %v1464 = vsel %vm617, %v1463, %v656
  %v1466 = vunpack.c.l.s4 1983009808
  %v1467 = vunpack.c.0.s8 %v1466
  %v1468 = vperm.slane %v1464, %v1467
  %v1469 = vrot.slane %v1468, 4
  %v1470 = vsel %vm617, %v1469, %v1462
  %v1472 = vunpack.c.l.s4 1934713408
  %v1473 = vunpack.c.0.s8 %v1472
  %v1474 = vperm.slane %v1470, %v1473
  %v1475 = vrot.slane %v1474, 4
  %v1476 = vsel %vm617, 0, %v1475
  %v1477 = vsel %vm617, %v683, %v676
  %v1479 = vunpack.c.l.s4 1983009808
  %v1480 = vunpack.c.0.s8 %v1479
  %v1481 = vperm.slane %v1477, %v1480
  %v1482 = vrot.slane %v684, 4
  %v1483 = vsel %vm617, %v1482, %v682
  %v1485 = vunpack.c.l.s4 1983009808
  %v1486 = vunpack.c.0.s8 %v1485
  %v1487 = vperm.slane %v1483, %v1486
  %v1488 = vrot.slane %v1487, 4
  %v1489 = vsel %vm617, %v1488, %v1481
  %v1491 = vunpack.c.l.s4 1934713408
  %v1492 = vunpack.c.0.s8 %v1491
  %v1493 = vperm.slane %v1489, %v1492
  %v1494 = vrot.slane %v1493, 4
  %v1495 = vsel %vm617, 0, %v1494
  %v1496 = vsel %vm617, %v709, %v702
  %v1498 = vunpack.c.l.s4 1983009808
  %v1499 = vunpack.c.0.s8 %v1498
  %v1500 = vperm.slane %v1496, %v1499
  %v1501 = vrot.slane %v710, 4
  %v1502 = vsel %vm617, %v1501, %v708
  %v1504 = vunpack.c.l.s4 1983009808
  %v1505 = vunpack.c.0.s8 %v1504
  %v1506 = vperm.slane %v1502, %v1505
  %v1507 = vrot.slane %v1506, 4
  %v1508 = vsel %vm617, %v1507, %v1500
  %v1510 = vunpack.c.l.s4 1934713408
  %v1511 = vunpack.c.0.s8 %v1510
  %v1512 = vperm.slane %v1508, %v1511
  %v1513 = vrot.slane %v1512, 4
  %v1514 = vsel %vm617, 0, %v1513
  %v1515 = vsel %vm617, %v735, %v728
  %v1517 = vunpack.c.l.s4 1983009808
  %v1518 = vunpack.c.0.s8 %v1517
  %v1519 = vperm.slane %v1515, %v1518
  %v1520 = vrot.slane %v736, 4
  %v1521 = vsel %vm617, %v1520, %v734
  %v1523 = vunpack.c.l.s4 1983009808
  %v1524 = vunpack.c.0.s8 %v1523
  %v1525 = vperm.slane %v1521, %v1524
  %v1526 = vrot.slane %v1525, 4
  %v1527 = vsel %vm617, %v1526, %v1519
  %v1529 = vunpack.c.l.s4 1934713408
  %v1530 = vunpack.c.0.s8 %v1529
  %v1531 = vperm.slane %v1527, %v1530
  %v1532 = vrot.slane %v1531, 4
  %v1533 = vsel %vm617, 0, %v1532
  %v1534 = vsel %vm617, %v761, %v754
  %v1536 = vunpack.c.l.s4 1983009808
  %v1537 = vunpack.c.0.s8 %v1536
  %v1538 = vperm.slane %v1534, %v1537
  %v1539 = vrot.slane %v762, 4
  %v1540 = vsel %vm617, %v1539, %v760
  %v1542 = vunpack.c.l.s4 1983009808
  %v1543 = vunpack.c.0.s8 %v1542
  %v1544 = vperm.slane %v1540, %v1543
  %v1545 = vrot.slane %v1544, 4
  %v1546 = vsel %vm617, %v1545, %v1538
  %v1548 = vunpack.c.l.s4 1934713408
  %v1549 = vunpack.c.0.s8 %v1548
  %v1550 = vperm.slane %v1546, %v1549
  %v1551 = vrot.slane %v1550, 4
  %v1552 = vsel %vm617, 0, %v1551
  %v1553 = vsel %vm617, %v787, %v780
  %v1555 = vunpack.c.l.s4 1983009808
  %v1556 = vunpack.c.0.s8 %v1555
  %v1557 = vperm.slane %v1553, %v1556
  %v1558 = vrot.slane %v788, 4
  %v1559 = vsel %vm617, %v1558, %v786
  %v1561 = vunpack.c.l.s4 1983009808
  %v1562 = vunpack.c.0.s8 %v1561
  %v1563 = vperm.slane %v1559, %v1562
  %v1564 = vrot.slane %v1563, 4
  %v1565 = vsel %vm617, %v1564, %v1557
  %v1567 = vunpack.c.l.s4 1934713408
  %v1568 = vunpack.c.0.s8 %v1567
  %v1569 = vperm.slane %v1565, %v1568
  %v1570 = vrot.slane %v1569, 4
  %v1571 = vsel %vm617, 0, %v1570
  %v1572 = vsel %vm617, %v813, %v806
  %v1574 = vunpack.c.l.s4 1983009808
  %v1575 = vunpack.c.0.s8 %v1574
  %v1576 = vperm.slane %v1572, %v1575
  %v1577 = vrot.slane %v814, 4
  %v1578 = vsel %vm617, %v1577, %v812
  %v1580 = vunpack.c.l.s4 1983009808
  %v1581 = vunpack.c.0.s8 %v1580
  %v1582 = vperm.slane %v1578, %v1581
  %v1583 = vrot.slane %v1582, 4
  %v1584 = vsel %vm617, %v1583, %v1576
  %v1586 = vunpack.c.l.s4 1934713408
  %v1587 = vunpack.c.0.s8 %v1586
  %v1588 = vperm.slane %v1584, %v1587
  %v1589 = vrot.slane %v1588, 4
  %v1590 = vsel %vm617, 0, %v1589
  %v1591 = vsel %vm617, %v839, %v832
  %v1593 = vunpack.c.l.s4 1983009808
  %v1594 = vunpack.c.0.s8 %v1593
  %v1595 = vperm.slane %v1591, %v1594
  %v1596 = vrot.slane %v840, 4
  %v1597 = vsel %vm617, %v1596, %v838
  %v1599 = vunpack.c.l.s4 1983009808
  %v1600 = vunpack.c.0.s8 %v1599
  %v1601 = vperm.slane %v1597, %v1600
  %v1602 = vrot.slane %v1601, 4
  %v1603 = vsel %vm617, %v1602, %v1595
  %v1605 = vunpack.c.l.s4 1934713408
  %v1606 = vunpack.c.0.s8 %v1605
  %v1607 = vperm.slane %v1603, %v1606
  %v1608 = vrot.slane %v1607, 4
  %v1609 = vsel %vm617, 0, %v1608
  %v1610 = vsel %vm617, %v865, %v858
  %v1612 = vunpack.c.l.s4 1983009808
  %v1613 = vunpack.c.0.s8 %v1612
  %v1614 = vperm.slane %v1610, %v1613
  %v1615 = vrot.slane %v866, 4
  %v1616 = vsel %vm617, %v1615, %v864
  %v1618 = vunpack.c.l.s4 1983009808
  %v1619 = vunpack.c.0.s8 %v1618
  %v1620 = vperm.slane %v1616, %v1619
  %v1621 = vrot.slane %v1620, 4
  %v1622 = vsel %vm617, %v1621, %v1614
  %v1624 = vunpack.c.l.s4 1934713408
  %v1625 = vunpack.c.0.s8 %v1624
  %v1626 = vperm.slane %v1622, %v1625
  %v1627 = vrot.slane %v1626, 4
  %v1628 = vsel %vm617, 0, %v1627
  %v1629 = vsel %vm617, %v891, %v884
  %v1631 = vunpack.c.l.s4 1983009808
  %v1632 = vunpack.c.0.s8 %v1631
  %v1633 = vperm.slane %v1629, %v1632
  %v1634 = vrot.slane %v892, 4
  %v1635 = vsel %vm617, %v1634, %v890
  %v1637 = vunpack.c.l.s4 1983009808
  %v1638 = vunpack.c.0.s8 %v1637
  %v1639 = vperm.slane %v1635, %v1638
  %v1640 = vrot.slane %v1639, 4
  %v1641 = vsel %vm617, %v1640, %v1633
  %v1643 = vunpack.c.l.s4 1934713408
  %v1644 = vunpack.c.0.s8 %v1643
  %v1645 = vperm.slane %v1641, %v1644
  %v1646 = vrot.slane %v1645, 4
  %v1647 = vsel %vm617, 0, %v1646
  %v1648 = vsel %vm617, %v917, %v910
  %v1650 = vunpack.c.l.s4 1983009808
  %v1651 = vunpack.c.0.s8 %v1650
  %v1652 = vperm.slane %v1648, %v1651
  %v1653 = vrot.slane %v918, 4
  %v1654 = vsel %vm617, %v1653, %v916
  %v1656 = vunpack.c.l.s4 1983009808
  %v1657 = vunpack.c.0.s8 %v1656
  %v1658 = vperm.slane %v1654, %v1657
  %v1659 = vrot.slane %v1658, 4
  %v1660 = vsel %vm617, %v1659, %v1652
  %v1662 = vunpack.c.l.s4 1934713408
  %v1663 = vunpack.c.0.s8 %v1662
  %v1664 = vperm.slane %v1660, %v1663
  %v1665 = vrot.slane %v1664, 4
  %v1666 = vsel %vm617, 0, %v1665
  %v1667 = vsel %vm617, %v943, %v936
  %v1669 = vunpack.c.l.s4 1983009808
  %v1670 = vunpack.c.0.s8 %v1669
  %v1671 = vperm.slane %v1667, %v1670
  %v1672 = vrot.slane %v944, 4
  %v1673 = vsel %vm617, %v1672, %v942
  %v1675 = vunpack.c.l.s4 1983009808
  %v1676 = vunpack.c.0.s8 %v1675
  %v1677 = vperm.slane %v1673, %v1676
  %v1678 = vrot.slane %v1677, 4
  %v1679 = vsel %vm617, %v1678, %v1671
  %v1681 = vunpack.c.l.s4 1934713408
  %v1682 = vunpack.c.0.s8 %v1681
  %v1683 = vperm.slane %v1679, %v1682
  %v1684 = vrot.slane %v1683, 4
  %v1685 = vsel %vm617, 0, %v1684
  %v1686 = vsel %vm617, %v969, %v962
  %v1688 = vunpack.c.l.s4 1983009808
  %v1689 = vunpack.c.0.s8 %v1688
  %v1690 = vperm.slane %v1686, %v1689
  %v1691 = vrot.slane %v970, 4
  %v1692 = vsel %vm617, %v1691, %v968
  %v1694 = vunpack.c.l.s4 1983009808
  %v1695 = vunpack.c.0.s8 %v1694
  %v1696 = vperm.slane %v1692, %v1695
  %v1697 = vrot.slane %v1696, 4
  %v1698 = vsel %vm617, %v1697, %v1690
  %v1700 = vunpack.c.l.s4 1934713408
  %v1701 = vunpack.c.0.s8 %v1700
  %v1702 = vperm.slane %v1698, %v1701
  %v1703 = vrot.slane %v1702, 4
  %v1704 = vsel %vm617, 0, %v1703
  %v1705 = vsel %vm617, %v995, %v988
  %v1707 = vunpack.c.l.s4 1983009808
  %v1708 = vunpack.c.0.s8 %v1707
  %v1709 = vperm.slane %v1705, %v1708
  %v1710 = vrot.slane %v996, 4
  %v1711 = vsel %vm617, %v1710, %v994
  %v1713 = vunpack.c.l.s4 1983009808
  %v1714 = vunpack.c.0.s8 %v1713
  %v1715 = vperm.slane %v1711, %v1714
  %v1716 = vrot.slane %v1715, 4
  %v1717 = vsel %vm617, %v1716, %v1709
  %v1719 = vunpack.c.l.s4 1934713408
  %v1720 = vunpack.c.0.s8 %v1719
  %v1721 = vperm.slane %v1717, %v1720
  %v1722 = vrot.slane %v1721, 4
  %v1723 = vsel %vm617, 0, %v1722
  %v1724 = vsel %vm617, %v1021, %v1014
  %v1726 = vunpack.c.l.s4 1983009808
  %v1727 = vunpack.c.0.s8 %v1726
  %v1728 = vperm.slane %v1724, %v1727
  %v1729 = vrot.slane %v1022, 4
  %v1730 = vsel %vm617, %v1729, %v1020
  %v1732 = vunpack.c.l.s4 1983009808
  %v1733 = vunpack.c.0.s8 %v1732
  %v1734 = vperm.slane %v1730, %v1733
  %v1735 = vrot.slane %v1734, 4
  %v1736 = vsel %vm617, %v1735, %v1728
  %v1738 = vunpack.c.l.s4 1934713408
  %v1739 = vunpack.c.0.s8 %v1738
  %v1740 = vperm.slane %v1736, %v1739
  %v1741 = vrot.slane %v1740, 4
  %v1742 = vsel %vm617, 0, %v1741
  %v1743 = vsel %vm617, %v1047, %v1040
  %v1745 = vunpack.c.l.s4 1983009808
  %v1746 = vunpack.c.0.s8 %v1745
  %v1747 = vperm.slane %v1743, %v1746
  %v1748 = vrot.slane %v1048, 4
  %v1749 = vsel %vm617, %v1748, %v1046
  %v1751 = vunpack.c.l.s4 1983009808
  %v1752 = vunpack.c.0.s8 %v1751
  %v1753 = vperm.slane %v1749, %v1752
  %v1754 = vrot.slane %v1753, 4
  %v1755 = vsel %vm617, %v1754, %v1747
  %v1757 = vunpack.c.l.s4 1934713408
  %v1758 = vunpack.c.0.s8 %v1757
  %v1759 = vperm.slane %v1755, %v1758
  %v1760 = vrot.slane %v1759, 4
  %v1761 = vsel %vm617, 0, %v1760
  %v1762 = vsel %vm617, %v1073, %v1066
  %v1764 = vunpack.c.l.s4 1983009808
  %v1765 = vunpack.c.0.s8 %v1764
  %v1766 = vperm.slane %v1762, %v1765
  %v1767 = vrot.slane %v1074, 4
  %v1768 = vsel %vm617, %v1767, %v1072
  %v1770 = vunpack.c.l.s4 1983009808
  %v1771 = vunpack.c.0.s8 %v1770
  %v1772 = vperm.slane %v1768, %v1771
  %v1773 = vrot.slane %v1772, 4
  %v1774 = vsel %vm617, %v1773, %v1766
  %v1776 = vunpack.c.l.s4 1934713408
  %v1777 = vunpack.c.0.s8 %v1776
  %v1778 = vperm.slane %v1774, %v1777
  %v1779 = vrot.slane %v1778, 4
  %v1780 = vsel %vm617, 0, %v1779
  %v1781 = vsel %vm617, %v1099, %v1092
  %v1783 = vunpack.c.l.s4 1983009808
  %v1784 = vunpack.c.0.s8 %v1783
  %v1785 = vperm.slane %v1781, %v1784
  %v1786 = vrot.slane %v1100, 4
  %v1787 = vsel %vm617, %v1786, %v1098
  %v1789 = vunpack.c.l.s4 1983009808
  %v1790 = vunpack.c.0.s8 %v1789
  %v1791 = vperm.slane %v1787, %v1790
  %v1792 = vrot.slane %v1791, 4
  %v1793 = vsel %vm617, %v1792, %v1785
  %v1795 = vunpack.c.l.s4 1934713408
  %v1796 = vunpack.c.0.s8 %v1795
  %v1797 = vperm.slane %v1793, %v1796
  %v1798 = vrot.slane %v1797, 4
  %v1799 = vsel %vm617, 0, %v1798
  %v1800 = vsel %vm617, %v1125, %v1118
  %v1802 = vunpack.c.l.s4 1983009808
  %v1803 = vunpack.c.0.s8 %v1802
  %v1804 = vperm.slane %v1800, %v1803
  %v1805 = vrot.slane %v1126, 4
  %v1806 = vsel %vm617, %v1805, %v1124
  %v1808 = vunpack.c.l.s4 1983009808
  %v1809 = vunpack.c.0.s8 %v1808
  %v1810 = vperm.slane %v1806, %v1809
  %v1811 = vrot.slane %v1810, 4
  %v1812 = vsel %vm617, %v1811, %v1804
  %v1814 = vunpack.c.l.s4 1934713408
  %v1815 = vunpack.c.0.s8 %v1814
  %v1816 = vperm.slane %v1812, %v1815
  %v1817 = vrot.slane %v1816, 4
  %v1818 = vsel %vm617, 0, %v1817
  %v1819 = vsel %vm617, %v1151, %v1144
  %v1821 = vunpack.c.l.s4 1983009808
  %v1822 = vunpack.c.0.s8 %v1821
  %v1823 = vperm.slane %v1819, %v1822
  %v1824 = vrot.slane %v1152, 4
  %v1825 = vsel %vm617, %v1824, %v1150
  %v1827 = vunpack.c.l.s4 1983009808
  %v1828 = vunpack.c.0.s8 %v1827
  %v1829 = vperm.slane %v1825, %v1828
  %v1830 = vrot.slane %v1829, 4
  %v1831 = vsel %vm617, %v1830, %v1823
  %v1833 = vunpack.c.l.s4 1934713408
  %v1834 = vunpack.c.0.s8 %v1833
  %v1835 = vperm.slane %v1831, %v1834
  %v1836 = vrot.slane %v1835, 4
  %v1837 = vsel %vm617, 0, %v1836
  %v1838 = vsel %vm617, %v1177, %v1170
  %v1840 = vunpack.c.l.s4 1983009808
  %v1841 = vunpack.c.0.s8 %v1840
  %v1842 = vperm.slane %v1838, %v1841
  %v1843 = vrot.slane %v1178, 4
  %v1844 = vsel %vm617, %v1843, %v1176
  %v1846 = vunpack.c.l.s4 1983009808
  %v1847 = vunpack.c.0.s8 %v1846
  %v1848 = vperm.slane %v1844, %v1847
  %v1849 = vrot.slane %v1848, 4
  %v1850 = vsel %vm617, %v1849, %v1842
  %v1852 = vunpack.c.l.s4 1934713408
  %v1853 = vunpack.c.0.s8 %v1852
  %v1854 = vperm.slane %v1850, %v1853
  %v1855 = vrot.slane %v1854, 4
  %v1856 = vsel %vm617, 0, %v1855
  %v1857 = vsel %vm617, %v1203, %v1196
  %v1859 = vunpack.c.l.s4 1983009808
  %v1860 = vunpack.c.0.s8 %v1859
  %v1861 = vperm.slane %v1857, %v1860
  %v1862 = vrot.slane %v1204, 4
  %v1863 = vsel %vm617, %v1862, %v1202
  %v1865 = vunpack.c.l.s4 1983009808
  %v1866 = vunpack.c.0.s8 %v1865
  %v1867 = vperm.slane %v1863, %v1866
  %v1868 = vrot.slane %v1867, 4
  %v1869 = vsel %vm617, %v1868, %v1861
  %v1871 = vunpack.c.l.s4 1934713408
  %v1872 = vunpack.c.0.s8 %v1871
  %v1873 = vperm.slane %v1869, %v1872
  %v1874 = vrot.slane %v1873, 4
  %v1875 = vsel %vm617, 0, %v1874
  %v1876 = vsel %vm617, %v1229, %v1222
  %v1878 = vunpack.c.l.s4 1983009808
  %v1879 = vunpack.c.0.s8 %v1878
  %v1880 = vperm.slane %v1876, %v1879
  %v1881 = vrot.slane %v1230, 4
  %v1882 = vsel %vm617, %v1881, %v1228
  %v1884 = vunpack.c.l.s4 1983009808
  %v1885 = vunpack.c.0.s8 %v1884
  %v1886 = vperm.slane %v1882, %v1885
  %v1887 = vrot.slane %v1886, 4
  %v1888 = vsel %vm617, %v1887, %v1880
  %v1890 = vunpack.c.l.s4 1934713408
  %v1891 = vunpack.c.0.s8 %v1890
  %v1892 = vperm.slane %v1888, %v1891
  %v1893 = vrot.slane %v1892, 4
  %v1894 = vsel %vm617, 0, %v1893
  %v1895 = vsel %vm617, %v1255, %v1248
  %v1897 = vunpack.c.l.s4 1983009808
  %v1898 = vunpack.c.0.s8 %v1897
  %v1899 = vperm.slane %v1895, %v1898
  %v1900 = vrot.slane %v1256, 4
  %v1901 = vsel %vm617, %v1900, %v1254
  %v1903 = vunpack.c.l.s4 1983009808
  %v1904 = vunpack.c.0.s8 %v1903
  %v1905 = vperm.slane %v1901, %v1904
  %v1906 = vrot.slane %v1905, 4
  %v1907 = vsel %vm617, %v1906, %v1899
  %v1909 = vunpack.c.l.s4 1934713408
  %v1910 = vunpack.c.0.s8 %v1909
  %v1911 = vperm.slane %v1907, %v1910
  %v1912 = vrot.slane %v1911, 4
  %v1913 = vsel %vm617, 0, %v1912
  %v1914 = vsel %vm617, %v1281, %v1274
  %v1916 = vunpack.c.l.s4 1983009808
  %v1917 = vunpack.c.0.s8 %v1916
  %v1918 = vperm.slane %v1914, %v1917
  %v1919 = vrot.slane %v1282, 4
  %v1920 = vsel %vm617, %v1919, %v1280
  %v1922 = vunpack.c.l.s4 1983009808
  %v1923 = vunpack.c.0.s8 %v1922
  %v1924 = vperm.slane %v1920, %v1923
  %v1925 = vrot.slane %v1924, 4
  %v1926 = vsel %vm617, %v1925, %v1918
  %v1928 = vunpack.c.l.s4 1934713408
  %v1929 = vunpack.c.0.s8 %v1928
  %v1930 = vperm.slane %v1926, %v1929
  %v1931 = vrot.slane %v1930, 4
  %v1932 = vsel %vm617, 0, %v1931
  %v1933 = vsel %vm617, %v1307, %v1300
  %v1935 = vunpack.c.l.s4 1983009808
  %v1936 = vunpack.c.0.s8 %v1935
  %v1937 = vperm.slane %v1933, %v1936
  %v1938 = vrot.slane %v1308, 4
  %v1939 = vsel %vm617, %v1938, %v1306
  %v1941 = vunpack.c.l.s4 1983009808
  %v1942 = vunpack.c.0.s8 %v1941
  %v1943 = vperm.slane %v1939, %v1942
  %v1944 = vrot.slane %v1943, 4
  %v1945 = vsel %vm617, %v1944, %v1937
  %v1947 = vunpack.c.l.s4 1934713408
  %v1948 = vunpack.c.0.s8 %v1947
  %v1949 = vperm.slane %v1945, %v1948
  %v1950 = vrot.slane %v1949, 4
  %v1951 = vsel %vm617, 0, %v1950
  %v1952 = vsel %vm617, %v1333, %v1326
  %v1954 = vunpack.c.l.s4 1983009808
  %v1955 = vunpack.c.0.s8 %v1954
  %v1956 = vperm.slane %v1952, %v1955
  %v1957 = vrot.slane %v1334, 4
  %v1958 = vsel %vm617, %v1957, %v1332
  %v1960 = vunpack.c.l.s4 1983009808
  %v1961 = vunpack.c.0.s8 %v1960
  %v1962 = vperm.slane %v1958, %v1961
  %v1963 = vrot.slane %v1962, 4
  %v1964 = vsel %vm617, %v1963, %v1956
  %v1966 = vunpack.c.l.s4 1934713408
  %v1967 = vunpack.c.0.s8 %v1966
  %v1968 = vperm.slane %v1964, %v1967
  %v1969 = vrot.slane %v1968, 4
  %v1970 = vsel %vm617, 0, %v1969
  %v1971 = vsel %vm617, %v1359, %v1352
  %v1973 = vunpack.c.l.s4 1983009808
  %v1974 = vunpack.c.0.s8 %v1973
  %v1975 = vperm.slane %v1971, %v1974
  %v1976 = vrot.slane %v1360, 4
  %v1977 = vsel %vm617, %v1976, %v1358
  %v1979 = vunpack.c.l.s4 1983009808
  %v1980 = vunpack.c.0.s8 %v1979
  %v1981 = vperm.slane %v1977, %v1980
  %v1982 = vrot.slane %v1981, 4
  %v1983 = vsel %vm617, %v1982, %v1975
  %v1985 = vunpack.c.l.s4 1934713408
  %v1986 = vunpack.c.0.s8 %v1985
  %v1987 = vperm.slane %v1983, %v1986
  %v1988 = vrot.slane %v1987, 4
  %v1989 = vsel %vm617, 0, %v1988
  %v1990 = vsel %vm617, %v1385, %v1378
  %v1992 = vunpack.c.l.s4 1983009808
  %v1993 = vunpack.c.0.s8 %v1992
  %v1994 = vperm.slane %v1990, %v1993
  %v1995 = vrot.slane %v1386, 4
  %v1996 = vsel %vm617, %v1995, %v1384
  %v1998 = vunpack.c.l.s4 1983009808
  %v1999 = vunpack.c.0.s8 %v1998
  %v2000 = vperm.slane %v1996, %v1999
  %v2001 = vrot.slane %v2000, 4
  %v2002 = vsel %vm617, %v2001, %v1994
  %v2004 = vunpack.c.l.s4 1934713408
  %v2005 = vunpack.c.0.s8 %v2004
  %v2006 = vperm.slane %v2002, %v2005
  %v2007 = vrot.slane %v2006, 4
  %v2008 = vsel %vm617, 0, %v2007
  %v2009 = vsel %vm617, %v1411, %v1404
  %v2011 = vunpack.c.l.s4 1983009808
  %v2012 = vunpack.c.0.s8 %v2011
  %v2013 = vperm.slane %v2009, %v2012
  %v2014 = vrot.slane %v1412, 4
  %v2015 = vsel %vm617, %v2014, %v1410
  %v2017 = vunpack.c.l.s4 1983009808
  %v2018 = vunpack.c.0.s8 %v2017
  %v2019 = vperm.slane %v2015, %v2018
  %v2020 = vrot.slane %v2019, 4
  %v2021 = vsel %vm617, %v2020, %v2013
  %v2023 = vunpack.c.l.s4 1934713408
  %v2024 = vunpack.c.0.s8 %v2023
  %v2025 = vperm.slane %v2021, %v2024
  %v2026 = vrot.slane %v2025, 4
  %v2027 = vsel %vm617, 0, %v2026
  %v2028 = vsel %vm617, %v1437, %v1430
  %v2030 = vunpack.c.l.s4 1983009808
  %v2031 = vunpack.c.0.s8 %v2030
  %v2032 = vperm.slane %v2028, %v2031
  %v2033 = vrot.slane %v1438, 4
  %v2034 = vsel %vm617, %v2033, %v1436
  %v2036 = vunpack.c.l.s4 1983009808
  %v2037 = vunpack.c.0.s8 %v2036
  %v2038 = vperm.slane %v2034, %v2037
  %v2039 = vrot.slane %v2038, 4
  %v2040 = vsel %vm617, %v2039, %v2032
  %v2042 = vunpack.c.l.s4 1934713408
  %v2043 = vunpack.c.0.s8 %v2042
  %v2044 = vperm.slane %v2040, %v2043
  %v2045 = vrot.slane %v2044, 4
  %v2046 = vsel %vm617, 0, %v2045
  %v2049 = vpack.i.b16 %v1474, %v1455
  %v2050 = vshrl.u32 %v1455, 16
  %v2051 = vshrl.u32 %v1474, 16
  %v2052 = vpack.i.b16 %v2051, %v2050
  %v2055 = vpack.i.b16 %v1476, %v1457
  %v2056 = vshrl.u32 %v1457, 16
  %v2057 = vshrl.u32 %v1476, 16
  %v2058 = vpack.i.b16 %v2057, %v2056
  %v2061 = vpack.i.b16 %v1512, %v1493
  %v2062 = vshrl.u32 %v1493, 16
  %v2063 = vshrl.u32 %v1512, 16
  %v2064 = vpack.i.b16 %v2063, %v2062
  %v2067 = vpack.i.b16 %v1514, %v1495
  %v2068 = vshrl.u32 %v1495, 16
  %v2069 = vshrl.u32 %v1514, 16
  %v2070 = vpack.i.b16 %v2069, %v2068
  %v2073 = vpack.i.b16 %v1550, %v1531
  %v2074 = vshrl.u32 %v1531, 16
  %v2075 = vshrl.u32 %v1550, 16
  %v2076 = vpack.i.b16 %v2075, %v2074
  %v2079 = vpack.i.b16 %v1552, %v1533
  %v2080 = vshrl.u32 %v1533, 16
  %v2081 = vshrl.u32 %v1552, 16
  %v2082 = vpack.i.b16 %v2081, %v2080
  %v2085 = vpack.i.b16 %v1588, %v1569
  %v2086 = vshrl.u32 %v1569, 16
  %v2087 = vshrl.u32 %v1588, 16
  %v2088 = vpack.i.b16 %v2087, %v2086
  %v2091 = vpack.i.b16 %v1590, %v1571
  %v2092 = vshrl.u32 %v1571, 16
  %v2093 = vshrl.u32 %v1590, 16
  %v2094 = vpack.i.b16 %v2093, %v2092
  %v2097 = vpack.i.b16 %v1626, %v1607
  %v2098 = vshrl.u32 %v1607, 16
  %v2099 = vshrl.u32 %v1626, 16
  %v2100 = vpack.i.b16 %v2099, %v2098
  %v2103 = vpack.i.b16 %v1628, %v1609
  %v2104 = vshrl.u32 %v1609, 16
  %v2105 = vshrl.u32 %v1628, 16
  %v2106 = vpack.i.b16 %v2105, %v2104
  %v2109 = vpack.i.b16 %v1664, %v1645
  %v2110 = vshrl.u32 %v1645, 16
  %v2111 = vshrl.u32 %v1664, 16
  %v2112 = vpack.i.b16 %v2111, %v2110
  %v2115 = vpack.i.b16 %v1666, %v1647
  %v2116 = vshrl.u32 %v1647, 16
  %v2117 = vshrl.u32 %v1666, 16
  %v2118 = vpack.i.b16 %v2117, %v2116
  %v2121 = vpack.i.b16 %v1702, %v1683
  %v2122 = vshrl.u32 %v1683, 16
  %v2123 = vshrl.u32 %v1702, 16
  %v2124 = vpack.i.b16 %v2123, %v2122
  %v2127 = vpack.i.b16 %v1704, %v1685
  %v2128 = vshrl.u32 %v1685, 16
  %v2129 = vshrl.u32 %v1704, 16
  %v2130 = vpack.i.b16 %v2129, %v2128
  %v2133 = vpack.i.b16 %v1740, %v1721
  %v2134 = vshrl.u32 %v1721, 16
  %v2135 = vshrl.u32 %v1740, 16
  %v2136 = vpack.i.b16 %v2135, %v2134
  %v2139 = vpack.i.b16 %v1742, %v1723
  %v2140 = vshrl.u32 %v1723, 16
  %v2141 = vshrl.u32 %v1742, 16
  %v2142 = vpack.i.b16 %v2141, %v2140
  %v2145 = vpack.i.b16 %v1778, %v1759
  %v2146 = vshrl.u32 %v1759, 16
  %v2147 = vshrl.u32 %v1778, 16
  %v2148 = vpack.i.b16 %v2147, %v2146
  %v2151 = vpack.i.b16 %v1780, %v1761
  %v2152 = vshrl.u32 %v1761, 16
  %v2153 = vshrl.u32 %v1780, 16
  %v2154 = vpack.i.b16 %v2153, %v2152
  %v2157 = vpack.i.b16 %v1816, %v1797
  %v2158 = vshrl.u32 %v1797, 16
  %v2159 = vshrl.u32 %v1816, 16
  %v2160 = vpack.i.b16 %v2159, %v2158
  %v2163 = vpack.i.b16 %v1818, %v1799
  %v2164 = vshrl.u32 %v1799, 16
  %v2165 = vshrl.u32 %v1818, 16
  %v2166 = vpack.i.b16 %v2165, %v2164
  %v2169 = vpack.i.b16 %v1854, %v1835
  %v2170 = vshrl.u32 %v1835, 16
  %v2171 = vshrl.u32 %v1854, 16
  %v2172 = vpack.i.b16 %v2171, %v2170
  %v2175 = vpack.i.b16 %v1856, %v1837
  %v2176 = vshrl.u32 %v1837, 16
  %v2177 = vshrl.u32 %v1856, 16
  %v2178 = vpack.i.b16 %v2177, %v2176
  %v2181 = vpack.i.b16 %v1892, %v1873
  %v2182 = vshrl.u32 %v1873, 16
  %v2183 = vshrl.u32 %v1892, 16
  %v2184 = vpack.i.b16 %v2183, %v2182
  %v2187 = vpack.i.b16 %v1894, %v1875
  %v2188 = vshrl.u32 %v1875, 16
  %v2189 = vshrl.u32 %v1894, 16
  %v2190 = vpack.i.b16 %v2189, %v2188
  %v2193 = vpack.i.b16 %v1930, %v1911
  %v2194 = vshrl.u32 %v1911, 16
  %v2195 = vshrl.u32 %v1930, 16
  %v2196 = vpack.i.b16 %v2195, %v2194
  %v2199 = vpack.i.b16 %v1932, %v1913
  %v2200 = vshrl.u32 %v1913, 16
  %v2201 = vshrl.u32 %v1932, 16
  %v2202 = vpack.i.b16 %v2201, %v2200
  %v2205 = vpack.i.b16 %v1968, %v1949
  %v2206 = vshrl.u32 %v1949, 16
  %v2207 = vshrl.u32 %v1968, 16
  %v2208 = vpack.i.b16 %v2207, %v2206
  %v2211 = vpack.i.b16 %v1970, %v1951
  %v2212 = vshrl.u32 %v1951, 16
  %v2213 = vshrl.u32 %v1970, 16
  %v2214 = vpack.i.b16 %v2213, %v2212
  %v2217 = vpack.i.b16 %v2006, %v1987
  %v2218 = vshrl.u32 %v1987, 16
  %v2219 = vshrl.u32 %v2006, 16
  %v2220 = vpack.i.b16 %v2219, %v2218
  %v2223 = vpack.i.b16 %v2008, %v1989
  %v2224 = vshrl.u32 %v1989, 16
  %v2225 = vshrl.u32 %v2008, 16
  %v2226 = vpack.i.b16 %v2225, %v2224
  %v2229 = vpack.i.b16 %v2044, %v2025
  %v2230 = vshrl.u32 %v2025, 16
  %v2231 = vshrl.u32 %v2044, 16
  %v2232 = vpack.i.b16 %v2231, %v2230
  %v2235 = vpack.i.b16 %v2046, %v2027
  %v2236 = vshrl.u32 %v2027, 16
  %v2237 = vshrl.u32 %v2046, 16
  %v2238 = vpack.i.b16 %v2237, %v2236
  %2255 = vrot.lane.b32.xlu0 %v286, 120
  %v2256 = vpop.permute.xlu0 %2255
  %2257 = vrot.lane.b32.xlu0 %v287, 120
  %v2258 = vpop.permute.xlu0 %2257
  %2259 = vrot.lane.b32.xlu0 %v288, 120
  %v2260 = vpop.permute.xlu0 %2259
  %2261 = vrot.lane.b32.xlu0 %v289, 120
  %v2262 = vpop.permute.xlu0 %2261
  %2263 = vrot.lane.b32.xlu0 %v290, 120
  %v2264 = vpop.permute.xlu0 %2263
  %2265 = vrot.lane.b32.xlu0 %v291, 120
  %v2266 = vpop.permute.xlu0 %2265
  %2267 = vrot.lane.b32.xlu0 %v292, 120
  %v2268 = vpop.permute.xlu0 %2267
  %2269 = vrot.lane.b32.xlu0 %v293, 120
  %v2270 = vpop.permute.xlu0 %2269
  %2271 = vrot.lane.b32.xlu0 %v294, 120
  %v2272 = vpop.permute.xlu0 %2271
  %2273 = vrot.lane.b32.xlu0 %v295, 120
  %v2274 = vpop.permute.xlu0 %2273
  %2275 = vrot.lane.b32.xlu0 %v296, 120
  %v2276 = vpop.permute.xlu0 %2275
  %2277 = vrot.lane.b32.xlu0 %v297, 120
  %v2278 = vpop.permute.xlu0 %2277
  %2279 = vrot.lane.b32.xlu0 %v298, 120
  %v2280 = vpop.permute.xlu0 %2279
  %2281 = vrot.lane.b32.xlu0 %v299, 120
  %v2282 = vpop.permute.xlu0 %2281
  %2283 = vrot.lane.b32.xlu0 %v300, 120
  %v2284 = vpop.permute.xlu0 %2283
  %2285 = vrot.lane.b32.xlu0 %v301, 120
  %v2286 = vpop.permute.xlu0 %2285
  %2287 = vrot.lane.b32.xlu0 %v286, 112
  %v2288 = vpop.permute.xlu0 %2287
  %2289 = vrot.lane.b32.xlu0 %v287, 112
  %v2290 = vpop.permute.xlu0 %2289
  %2291 = vrot.lane.b32.xlu0 %v288, 112
  %v2292 = vpop.permute.xlu0 %2291
  %2293 = vrot.lane.b32.xlu0 %v289, 112
  %v2294 = vpop.permute.xlu0 %2293
  %2295 = vrot.lane.b32.xlu0 %v290, 112
  %v2296 = vpop.permute.xlu0 %2295
  %2297 = vrot.lane.b32.xlu0 %v291, 112
  %v2298 = vpop.permute.xlu0 %2297
  %2299 = vrot.lane.b32.xlu0 %v292, 112
  %v2300 = vpop.permute.xlu0 %2299
  %2301 = vrot.lane.b32.xlu0 %v293, 112
  %v2302 = vpop.permute.xlu0 %2301
  %2303 = vrot.lane.b32.xlu0 %v294, 112
  %v2304 = vpop.permute.xlu0 %2303
  %2305 = vrot.lane.b32.xlu0 %v295, 112
  %v2306 = vpop.permute.xlu0 %2305
  %2307 = vrot.lane.b32.xlu0 %v296, 112
  %v2308 = vpop.permute.xlu0 %2307
  %2309 = vrot.lane.b32.xlu0 %v297, 112
  %v2310 = vpop.permute.xlu0 %2309
  %2311 = vrot.lane.b32.xlu0 %v298, 112
  %v2312 = vpop.permute.xlu0 %2311
  %2313 = vrot.lane.b32.xlu0 %v299, 112
  %v2314 = vpop.permute.xlu0 %2313
  %2315 = vrot.lane.b32.xlu0 %v300, 112
  %v2316 = vpop.permute.xlu0 %2315
  %2317 = vrot.lane.b32.xlu0 %v301, 112
  %v2318 = vpop.permute.xlu0 %2317
  %2319 = vrot.lane.b32.xlu0 %v286, 104
  %v2320 = vpop.permute.xlu0 %2319
  %2321 = vrot.lane.b32.xlu0 %v287, 104
  %v2322 = vpop.permute.xlu0 %2321
  %2323 = vrot.lane.b32.xlu0 %v288, 104
  %v2324 = vpop.permute.xlu0 %2323
  %2325 = vrot.lane.b32.xlu0 %v289, 104
  %v2326 = vpop.permute.xlu0 %2325
  %2327 = vrot.lane.b32.xlu0 %v290, 104
  %v2328 = vpop.permute.xlu0 %2327
  %2329 = vrot.lane.b32.xlu0 %v291, 104
  %v2330 = vpop.permute.xlu0 %2329
  %2331 = vrot.lane.b32.xlu0 %v292, 104
  %v2332 = vpop.permute.xlu0 %2331
  %2333 = vrot.lane.b32.xlu0 %v293, 104
  %v2334 = vpop.permute.xlu0 %2333
  %2335 = vrot.lane.b32.xlu0 %v294, 104
  %v2336 = vpop.permute.xlu0 %2335
  %2337 = vrot.lane.b32.xlu0 %v295, 104
  %v2338 = vpop.permute.xlu0 %2337
  %2339 = vrot.lane.b32.xlu0 %v296, 104
  %v2340 = vpop.permute.xlu0 %2339
  %2341 = vrot.lane.b32.xlu0 %v297, 104
  %v2342 = vpop.permute.xlu0 %2341
  %2343 = vrot.lane.b32.xlu0 %v298, 104
  %v2344 = vpop.permute.xlu0 %2343
  %2345 = vrot.lane.b32.xlu0 %v299, 104
  %v2346 = vpop.permute.xlu0 %2345
  %2347 = vrot.lane.b32.xlu0 %v300, 104
  %v2348 = vpop.permute.xlu0 %2347
  %2349 = vrot.lane.b32.xlu0 %v301, 104
  %v2350 = vpop.permute.xlu0 %2349
  %v2353 = vpack.i.b16 %v2256, %v286
  %v2354 = vshrl.u32 %v286, 16
  %v2355 = vshrl.u32 %v2256, 16
  %v2356 = vpack.i.b16 %v2355, %v2354
  %v2359 = vpack.i.b16 %v2320, %v2288
  %v2360 = vshrl.u32 %v2288, 16
  %v2361 = vshrl.u32 %v2320, 16
  %v2362 = vpack.i.b16 %v2361, %v2360
  %v2365 = vpack.i.b16 %v2258, %v287
  %v2366 = vshrl.u32 %v287, 16
  %v2367 = vshrl.u32 %v2258, 16
  %v2368 = vpack.i.b16 %v2367, %v2366
  %v2371 = vpack.i.b16 %v2322, %v2290
  %v2372 = vshrl.u32 %v2290, 16
  %v2373 = vshrl.u32 %v2322, 16
  %v2374 = vpack.i.b16 %v2373, %v2372
  %v2377 = vpack.i.b16 %v2260, %v288
  %v2378 = vshrl.u32 %v288, 16
  %v2379 = vshrl.u32 %v2260, 16
  %v2380 = vpack.i.b16 %v2379, %v2378
  %v2383 = vpack.i.b16 %v2324, %v2292
  %v2384 = vshrl.u32 %v2292, 16
  %v2385 = vshrl.u32 %v2324, 16
  %v2386 = vpack.i.b16 %v2385, %v2384
  %v2389 = vpack.i.b16 %v2262, %v289
  %v2390 = vshrl.u32 %v289, 16
  %v2391 = vshrl.u32 %v2262, 16
  %v2392 = vpack.i.b16 %v2391, %v2390
  %v2395 = vpack.i.b16 %v2326, %v2294
  %v2396 = vshrl.u32 %v2294, 16
  %v2397 = vshrl.u32 %v2326, 16
  %v2398 = vpack.i.b16 %v2397, %v2396
  %v2401 = vpack.i.b16 %v2264, %v290
  %v2402 = vshrl.u32 %v290, 16
  %v2403 = vshrl.u32 %v2264, 16
  %v2404 = vpack.i.b16 %v2403, %v2402
  %v2407 = vpack.i.b16 %v2328, %v2296
  %v2408 = vshrl.u32 %v2296, 16
  %v2409 = vshrl.u32 %v2328, 16
  %v2410 = vpack.i.b16 %v2409, %v2408
  %v2413 = vpack.i.b16 %v2266, %v291
  %v2414 = vshrl.u32 %v291, 16
  %v2415 = vshrl.u32 %v2266, 16
  %v2416 = vpack.i.b16 %v2415, %v2414
  %v2419 = vpack.i.b16 %v2330, %v2298
  %v2420 = vshrl.u32 %v2298, 16
  %v2421 = vshrl.u32 %v2330, 16
  %v2422 = vpack.i.b16 %v2421, %v2420
  %v2425 = vpack.i.b16 %v2268, %v292
  %v2426 = vshrl.u32 %v292, 16
  %v2427 = vshrl.u32 %v2268, 16
  %v2428 = vpack.i.b16 %v2427, %v2426
  %v2431 = vpack.i.b16 %v2332, %v2300
  %v2432 = vshrl.u32 %v2300, 16
  %v2433 = vshrl.u32 %v2332, 16
  %v2434 = vpack.i.b16 %v2433, %v2432
  %v2437 = vpack.i.b16 %v2270, %v293
  %v2438 = vshrl.u32 %v293, 16
  %v2439 = vshrl.u32 %v2270, 16
  %v2440 = vpack.i.b16 %v2439, %v2438
  %v2443 = vpack.i.b16 %v2334, %v2302
  %v2444 = vshrl.u32 %v2302, 16
  %v2445 = vshrl.u32 %v2334, 16
  %v2446 = vpack.i.b16 %v2445, %v2444
  %v2449 = vpack.i.b16 %v2272, %v294
  %v2450 = vshrl.u32 %v294, 16
  %v2451 = vshrl.u32 %v2272, 16
  %v2452 = vpack.i.b16 %v2451, %v2450
  %v2455 = vpack.i.b16 %v2336, %v2304
  %v2456 = vshrl.u32 %v2304, 16
  %v2457 = vshrl.u32 %v2336, 16
  %v2458 = vpack.i.b16 %v2457, %v2456
  %v2461 = vpack.i.b16 %v2274, %v295
  %v2462 = vshrl.u32 %v295, 16
  %v2463 = vshrl.u32 %v2274, 16
  %v2464 = vpack.i.b16 %v2463, %v2462
  %v2467 = vpack.i.b16 %v2338, %v2306
  %v2468 = vshrl.u32 %v2306, 16
  %v2469 = vshrl.u32 %v2338, 16
  %v2470 = vpack.i.b16 %v2469, %v2468
  %v2473 = vpack.i.b16 %v2276, %v296
  %v2474 = vshrl.u32 %v296, 16
  %v2475 = vshrl.u32 %v2276, 16
  %v2476 = vpack.i.b16 %v2475, %v2474
  %v2479 = vpack.i.b16 %v2340, %v2308
  %v2480 = vshrl.u32 %v2308, 16
  %v2481 = vshrl.u32 %v2340, 16
  %v2482 = vpack.i.b16 %v2481, %v2480
  %v2485 = vpack.i.b16 %v2278, %v297
  %v2486 = vshrl.u32 %v297, 16
  %v2487 = vshrl.u32 %v2278, 16
  %v2488 = vpack.i.b16 %v2487, %v2486
  %v2491 = vpack.i.b16 %v2342, %v2310
  %v2492 = vshrl.u32 %v2310, 16
  %v2493 = vshrl.u32 %v2342, 16
  %v2494 = vpack.i.b16 %v2493, %v2492
  %v2497 = vpack.i.b16 %v2280, %v298
  %v2498 = vshrl.u32 %v298, 16
  %v2499 = vshrl.u32 %v2280, 16
  %v2500 = vpack.i.b16 %v2499, %v2498
  %v2503 = vpack.i.b16 %v2344, %v2312
  %v2504 = vshrl.u32 %v2312, 16
  %v2505 = vshrl.u32 %v2344, 16
  %v2506 = vpack.i.b16 %v2505, %v2504
  %v2509 = vpack.i.b16 %v2282, %v299
  %v2510 = vshrl.u32 %v299, 16
  %v2511 = vshrl.u32 %v2282, 16
  %v2512 = vpack.i.b16 %v2511, %v2510
  %v2515 = vpack.i.b16 %v2346, %v2314
  %v2516 = vshrl.u32 %v2314, 16
  %v2517 = vshrl.u32 %v2346, 16
  %v2518 = vpack.i.b16 %v2517, %v2516
  %v2521 = vpack.i.b16 %v2284, %v300
  %v2522 = vshrl.u32 %v300, 16
  %v2523 = vshrl.u32 %v2284, 16
  %v2524 = vpack.i.b16 %v2523, %v2522
  %v2527 = vpack.i.b16 %v2348, %v2316
  %v2528 = vshrl.u32 %v2316, 16
  %v2529 = vshrl.u32 %v2348, 16
  %v2530 = vpack.i.b16 %v2529, %v2528
  %v2533 = vpack.i.b16 %v2286, %v301
  %v2534 = vshrl.u32 %v301, 16
  %v2535 = vshrl.u32 %v2286, 16
  %v2536 = vpack.i.b16 %v2535, %v2534
  %v2539 = vpack.i.b16 %v2350, %v2318
  %v2540 = vshrl.u32 %v2318, 16
  %v2541 = vshrl.u32 %v2350, 16
  %v2542 = vpack.i.b16 %v2541, %v2540
  %v2545 = vunpack.c.l.s4 1983009808
  %v2546 = vunpack.c.0.s8 %v2545
  %v2547 = vperm.slane %v2353, %v2546
  %v2550 = vunpack.c.l.s4 1983009808
  %v2551 = vunpack.c.0.s8 %v2550
  %v2552 = vperm.slane %v2359, %v2551
  %v2553 = vrot.slane %v2552, 4
  %v2554 = vsel %vm617, %v2553, %v2547
  %v2555 = vrot.slane %v2547, 4
  %v2556 = vsel %vm617, %v2552, %v2555
  %v2558 = vunpack.c.l.s4 1934713408
  %v2559 = vunpack.c.0.s8 %v2558
  %v2560 = vperm.slane %v2554, %v2559
  %v2562 = vunpack.c.l.s4 1934713408
  %v2563 = vunpack.c.0.s8 %v2562
  %v2564 = vperm.slane %v2556, %v2563
  %v2565 = vrot.slane %v2560, 4
  %v2566 = vsel %vm617, 0, %v2565
  %v2567 = vrot.slane %v2564, 4
  %v2568 = vsel %vm617, 0, %v2567
  %v2571 = vunpack.c.l.s4 1983009808
  %v2572 = vunpack.c.0.s8 %v2571
  %v2573 = vperm.slane %v2356, %v2572
  %v2576 = vunpack.c.l.s4 1983009808
  %v2577 = vunpack.c.0.s8 %v2576
  %v2578 = vperm.slane %v2362, %v2577
  %v2579 = vrot.slane %v2578, 4
  %v2580 = vsel %vm617, %v2579, %v2573
  %v2581 = vrot.slane %v2573, 4
  %v2582 = vsel %vm617, %v2578, %v2581
  %v2584 = vunpack.c.l.s4 1934713408
  %v2585 = vunpack.c.0.s8 %v2584
  %v2586 = vperm.slane %v2580, %v2585
  %v2588 = vunpack.c.l.s4 1934713408
  %v2589 = vunpack.c.0.s8 %v2588
  %v2590 = vperm.slane %v2582, %v2589
  %v2591 = vrot.slane %v2586, 4
  %v2592 = vsel %vm617, 0, %v2591
  %v2593 = vrot.slane %v2590, 4
  %v2594 = vsel %vm617, 0, %v2593
  %v2597 = vunpack.c.l.s4 1983009808
  %v2598 = vunpack.c.0.s8 %v2597
  %v2599 = vperm.slane %v2365, %v2598
  %v2602 = vunpack.c.l.s4 1983009808
  %v2603 = vunpack.c.0.s8 %v2602
  %v2604 = vperm.slane %v2371, %v2603
  %v2605 = vrot.slane %v2604, 4
  %v2606 = vsel %vm617, %v2605, %v2599
  %v2607 = vrot.slane %v2599, 4
  %v2608 = vsel %vm617, %v2604, %v2607
  %v2610 = vunpack.c.l.s4 1934713408
  %v2611 = vunpack.c.0.s8 %v2610
  %v2612 = vperm.slane %v2606, %v2611
  %v2614 = vunpack.c.l.s4 1934713408
  %v2615 = vunpack.c.0.s8 %v2614
  %v2616 = vperm.slane %v2608, %v2615
  %v2617 = vrot.slane %v2612, 4
  %v2618 = vsel %vm617, 0, %v2617
  %v2619 = vrot.slane %v2616, 4
  %v2620 = vsel %vm617, 0, %v2619
  %v2623 = vunpack.c.l.s4 1983009808
  %v2624 = vunpack.c.0.s8 %v2623
  %v2625 = vperm.slane %v2368, %v2624
  %v2628 = vunpack.c.l.s4 1983009808
  %v2629 = vunpack.c.0.s8 %v2628
  %v2630 = vperm.slane %v2374, %v2629
  %v2631 = vrot.slane %v2630, 4
  %v2632 = vsel %vm617, %v2631, %v2625
  %v2633 = vrot.slane %v2625, 4
  %v2634 = vsel %vm617, %v2630, %v2633
  %v2636 = vunpack.c.l.s4 1934713408
  %v2637 = vunpack.c.0.s8 %v2636
  %v2638 = vperm.slane %v2632, %v2637
  %v2640 = vunpack.c.l.s4 1934713408
  %v2641 = vunpack.c.0.s8 %v2640
  %v2642 = vperm.slane %v2634, %v2641
  %v2643 = vrot.slane %v2638, 4
  %v2644 = vsel %vm617, 0, %v2643
  %v2645 = vrot.slane %v2642, 4
  %v2646 = vsel %vm617, 0, %v2645
  %v2649 = vunpack.c.l.s4 1983009808
  %v2650 = vunpack.c.0.s8 %v2649
  %v2651 = vperm.slane %v2377, %v2650
  %v2654 = vunpack.c.l.s4 1983009808
  %v2655 = vunpack.c.0.s8 %v2654
  %v2656 = vperm.slane %v2383, %v2655
  %v2657 = vrot.slane %v2656, 4
  %v2658 = vsel %vm617, %v2657, %v2651
  %v2659 = vrot.slane %v2651, 4
  %v2660 = vsel %vm617, %v2656, %v2659
  %v2662 = vunpack.c.l.s4 1934713408
  %v2663 = vunpack.c.0.s8 %v2662
  %v2664 = vperm.slane %v2658, %v2663
  %v2666 = vunpack.c.l.s4 1934713408
  %v2667 = vunpack.c.0.s8 %v2666
  %v2668 = vperm.slane %v2660, %v2667
  %v2669 = vrot.slane %v2664, 4
  %v2670 = vsel %vm617, 0, %v2669
  %v2671 = vrot.slane %v2668, 4
  %v2672 = vsel %vm617, 0, %v2671
  %v2675 = vunpack.c.l.s4 1983009808
  %v2676 = vunpack.c.0.s8 %v2675
  %v2677 = vperm.slane %v2380, %v2676
  %v2680 = vunpack.c.l.s4 1983009808
  %v2681 = vunpack.c.0.s8 %v2680
  %v2682 = vperm.slane %v2386, %v2681
  %v2683 = vrot.slane %v2682, 4
  %v2684 = vsel %vm617, %v2683, %v2677
  %v2685 = vrot.slane %v2677, 4
  %v2686 = vsel %vm617, %v2682, %v2685
  %v2688 = vunpack.c.l.s4 1934713408
  %v2689 = vunpack.c.0.s8 %v2688
  %v2690 = vperm.slane %v2684, %v2689
  %v2692 = vunpack.c.l.s4 1934713408
  %v2693 = vunpack.c.0.s8 %v2692
  %v2694 = vperm.slane %v2686, %v2693
  %v2695 = vrot.slane %v2690, 4
  %v2696 = vsel %vm617, 0, %v2695
  %v2697 = vrot.slane %v2694, 4
  %v2698 = vsel %vm617, 0, %v2697
  %v2701 = vunpack.c.l.s4 1983009808
  %v2702 = vunpack.c.0.s8 %v2701
  %v2703 = vperm.slane %v2389, %v2702
  %v2706 = vunpack.c.l.s4 1983009808
  %v2707 = vunpack.c.0.s8 %v2706
  %v2708 = vperm.slane %v2395, %v2707
  %v2709 = vrot.slane %v2708, 4
  %v2710 = vsel %vm617, %v2709, %v2703
  %v2711 = vrot.slane %v2703, 4
  %v2712 = vsel %vm617, %v2708, %v2711
  %v2714 = vunpack.c.l.s4 1934713408
  %v2715 = vunpack.c.0.s8 %v2714
  %v2716 = vperm.slane %v2710, %v2715
  %v2718 = vunpack.c.l.s4 1934713408
  %v2719 = vunpack.c.0.s8 %v2718
  %v2720 = vperm.slane %v2712, %v2719
  %v2721 = vrot.slane %v2716, 4
  %v2722 = vsel %vm617, 0, %v2721
  %v2723 = vrot.slane %v2720, 4
  %v2724 = vsel %vm617, 0, %v2723
  %v2727 = vunpack.c.l.s4 1983009808
  %v2728 = vunpack.c.0.s8 %v2727
  %v2729 = vperm.slane %v2392, %v2728
  %v2732 = vunpack.c.l.s4 1983009808
  %v2733 = vunpack.c.0.s8 %v2732
  %v2734 = vperm.slane %v2398, %v2733
  %v2735 = vrot.slane %v2734, 4
  %v2736 = vsel %vm617, %v2735, %v2729
  %v2737 = vrot.slane %v2729, 4
  %v2738 = vsel %vm617, %v2734, %v2737
  %v2740 = vunpack.c.l.s4 1934713408
  %v2741 = vunpack.c.0.s8 %v2740
  %v2742 = vperm.slane %v2736, %v2741
  %v2744 = vunpack.c.l.s4 1934713408
  %v2745 = vunpack.c.0.s8 %v2744
  %v2746 = vperm.slane %v2738, %v2745
  %v2747 = vrot.slane %v2742, 4
  %v2748 = vsel %vm617, 0, %v2747
  %v2749 = vrot.slane %v2746, 4
  %v2750 = vsel %vm617, 0, %v2749
  %v2753 = vunpack.c.l.s4 1983009808
  %v2754 = vunpack.c.0.s8 %v2753
  %v2755 = vperm.slane %v2401, %v2754
  %v2758 = vunpack.c.l.s4 1983009808
  %v2759 = vunpack.c.0.s8 %v2758
  %v2760 = vperm.slane %v2407, %v2759
  %v2761 = vrot.slane %v2760, 4
  %v2762 = vsel %vm617, %v2761, %v2755
  %v2763 = vrot.slane %v2755, 4
  %v2764 = vsel %vm617, %v2760, %v2763
  %v2766 = vunpack.c.l.s4 1934713408
  %v2767 = vunpack.c.0.s8 %v2766
  %v2768 = vperm.slane %v2762, %v2767
  %v2770 = vunpack.c.l.s4 1934713408
  %v2771 = vunpack.c.0.s8 %v2770
  %v2772 = vperm.slane %v2764, %v2771
  %v2773 = vrot.slane %v2768, 4
  %v2774 = vsel %vm617, 0, %v2773
  %v2775 = vrot.slane %v2772, 4
  %v2776 = vsel %vm617, 0, %v2775
  %v2779 = vunpack.c.l.s4 1983009808
  %v2780 = vunpack.c.0.s8 %v2779
  %v2781 = vperm.slane %v2404, %v2780
  %v2784 = vunpack.c.l.s4 1983009808
  %v2785 = vunpack.c.0.s8 %v2784
  %v2786 = vperm.slane %v2410, %v2785
  %v2787 = vrot.slane %v2786, 4
  %v2788 = vsel %vm617, %v2787, %v2781
  %v2789 = vrot.slane %v2781, 4
  %v2790 = vsel %vm617, %v2786, %v2789
  %v2792 = vunpack.c.l.s4 1934713408
  %v2793 = vunpack.c.0.s8 %v2792
  %v2794 = vperm.slane %v2788, %v2793
  %v2796 = vunpack.c.l.s4 1934713408
  %v2797 = vunpack.c.0.s8 %v2796
  %v2798 = vperm.slane %v2790, %v2797
  %v2799 = vrot.slane %v2794, 4
  %v2800 = vsel %vm617, 0, %v2799
  %v2801 = vrot.slane %v2798, 4
  %v2802 = vsel %vm617, 0, %v2801
  %v2805 = vunpack.c.l.s4 1983009808
  %v2806 = vunpack.c.0.s8 %v2805
  %v2807 = vperm.slane %v2413, %v2806
  %v2810 = vunpack.c.l.s4 1983009808
  %v2811 = vunpack.c.0.s8 %v2810
  %v2812 = vperm.slane %v2419, %v2811
  %v2813 = vrot.slane %v2812, 4
  %v2814 = vsel %vm617, %v2813, %v2807
  %v2815 = vrot.slane %v2807, 4
  %v2816 = vsel %vm617, %v2812, %v2815
  %v2818 = vunpack.c.l.s4 1934713408
  %v2819 = vunpack.c.0.s8 %v2818
  %v2820 = vperm.slane %v2814, %v2819
  %v2822 = vunpack.c.l.s4 1934713408
  %v2823 = vunpack.c.0.s8 %v2822
  %v2824 = vperm.slane %v2816, %v2823
  %v2825 = vrot.slane %v2820, 4
  %v2826 = vsel %vm617, 0, %v2825
  %v2827 = vrot.slane %v2824, 4
  %v2828 = vsel %vm617, 0, %v2827
  %v2831 = vunpack.c.l.s4 1983009808
  %v2832 = vunpack.c.0.s8 %v2831
  %v2833 = vperm.slane %v2416, %v2832
  %v2836 = vunpack.c.l.s4 1983009808
  %v2837 = vunpack.c.0.s8 %v2836
  %v2838 = vperm.slane %v2422, %v2837
  %v2839 = vrot.slane %v2838, 4
  %v2840 = vsel %vm617, %v2839, %v2833
  %v2841 = vrot.slane %v2833, 4
  %v2842 = vsel %vm617, %v2838, %v2841
  %v2844 = vunpack.c.l.s4 1934713408
  %v2845 = vunpack.c.0.s8 %v2844
  %v2846 = vperm.slane %v2840, %v2845
  %v2848 = vunpack.c.l.s4 1934713408
  %v2849 = vunpack.c.0.s8 %v2848
  %v2850 = vperm.slane %v2842, %v2849
  %v2851 = vrot.slane %v2846, 4
  %v2852 = vsel %vm617, 0, %v2851
  %v2853 = vrot.slane %v2850, 4
  %v2854 = vsel %vm617, 0, %v2853
  %v2857 = vunpack.c.l.s4 1983009808
  %v2858 = vunpack.c.0.s8 %v2857
  %v2859 = vperm.slane %v2425, %v2858
  %v2862 = vunpack.c.l.s4 1983009808
  %v2863 = vunpack.c.0.s8 %v2862
  %v2864 = vperm.slane %v2431, %v2863
  %v2865 = vrot.slane %v2864, 4
  %v2866 = vsel %vm617, %v2865, %v2859
  %v2867 = vrot.slane %v2859, 4
  %v2868 = vsel %vm617, %v2864, %v2867
  %v2870 = vunpack.c.l.s4 1934713408
  %v2871 = vunpack.c.0.s8 %v2870
  %v2872 = vperm.slane %v2866, %v2871
  %v2874 = vunpack.c.l.s4 1934713408
  %v2875 = vunpack.c.0.s8 %v2874
  %v2876 = vperm.slane %v2868, %v2875
  %v2877 = vrot.slane %v2872, 4
  %v2878 = vsel %vm617, 0, %v2877
  %v2879 = vrot.slane %v2876, 4
  %v2880 = vsel %vm617, 0, %v2879
  %v2883 = vunpack.c.l.s4 1983009808
  %v2884 = vunpack.c.0.s8 %v2883
  %v2885 = vperm.slane %v2428, %v2884
  %v2888 = vunpack.c.l.s4 1983009808
  %v2889 = vunpack.c.0.s8 %v2888
  %v2890 = vperm.slane %v2434, %v2889
  %v2891 = vrot.slane %v2890, 4
  %v2892 = vsel %vm617, %v2891, %v2885
  %v2893 = vrot.slane %v2885, 4
  %v2894 = vsel %vm617, %v2890, %v2893
  %v2896 = vunpack.c.l.s4 1934713408
  %v2897 = vunpack.c.0.s8 %v2896
  %v2898 = vperm.slane %v2892, %v2897
  %v2900 = vunpack.c.l.s4 1934713408
  %v2901 = vunpack.c.0.s8 %v2900
  %v2902 = vperm.slane %v2894, %v2901
  %v2903 = vrot.slane %v2898, 4
  %v2904 = vsel %vm617, 0, %v2903
  %v2905 = vrot.slane %v2902, 4
  %v2906 = vsel %vm617, 0, %v2905
  %v2909 = vunpack.c.l.s4 1983009808
  %v2910 = vunpack.c.0.s8 %v2909
  %v2911 = vperm.slane %v2437, %v2910
  %v2914 = vunpack.c.l.s4 1983009808
  %v2915 = vunpack.c.0.s8 %v2914
  %v2916 = vperm.slane %v2443, %v2915
  %v2917 = vrot.slane %v2916, 4
  %v2918 = vsel %vm617, %v2917, %v2911
  %v2919 = vrot.slane %v2911, 4
  %v2920 = vsel %vm617, %v2916, %v2919
  %v2922 = vunpack.c.l.s4 1934713408
  %v2923 = vunpack.c.0.s8 %v2922
  %v2924 = vperm.slane %v2918, %v2923
  %v2926 = vunpack.c.l.s4 1934713408
  %v2927 = vunpack.c.0.s8 %v2926
  %v2928 = vperm.slane %v2920, %v2927
  %v2929 = vrot.slane %v2924, 4
  %v2930 = vsel %vm617, 0, %v2929
  %v2931 = vrot.slane %v2928, 4
  %v2932 = vsel %vm617, 0, %v2931
  %v2935 = vunpack.c.l.s4 1983009808
  %v2936 = vunpack.c.0.s8 %v2935
  %v2937 = vperm.slane %v2440, %v2936
  %v2940 = vunpack.c.l.s4 1983009808
  %v2941 = vunpack.c.0.s8 %v2940
  %v2942 = vperm.slane %v2446, %v2941
  %v2943 = vrot.slane %v2942, 4
  %v2944 = vsel %vm617, %v2943, %v2937
  %v2945 = vrot.slane %v2937, 4
  %v2946 = vsel %vm617, %v2942, %v2945
  %v2948 = vunpack.c.l.s4 1934713408
  %v2949 = vunpack.c.0.s8 %v2948
  %v2950 = vperm.slane %v2944, %v2949
  %v2952 = vunpack.c.l.s4 1934713408
  %v2953 = vunpack.c.0.s8 %v2952
  %v2954 = vperm.slane %v2946, %v2953
  %v2955 = vrot.slane %v2950, 4
  %v2956 = vsel %vm617, 0, %v2955
  %v2957 = vrot.slane %v2954, 4
  %v2958 = vsel %vm617, 0, %v2957
  %v2961 = vunpack.c.l.s4 1983009808
  %v2962 = vunpack.c.0.s8 %v2961
  %v2963 = vperm.slane %v2449, %v2962
  %v2966 = vunpack.c.l.s4 1983009808
  %v2967 = vunpack.c.0.s8 %v2966
  %v2968 = vperm.slane %v2455, %v2967
  %v2969 = vrot.slane %v2968, 4
  %v2970 = vsel %vm617, %v2969, %v2963
  %v2971 = vrot.slane %v2963, 4
  %v2972 = vsel %vm617, %v2968, %v2971
  %v2974 = vunpack.c.l.s4 1934713408
  %v2975 = vunpack.c.0.s8 %v2974
  %v2976 = vperm.slane %v2970, %v2975
  %v2978 = vunpack.c.l.s4 1934713408
  %v2979 = vunpack.c.0.s8 %v2978
  %v2980 = vperm.slane %v2972, %v2979
  %v2981 = vrot.slane %v2976, 4
  %v2982 = vsel %vm617, 0, %v2981
  %v2983 = vrot.slane %v2980, 4
  %v2984 = vsel %vm617, 0, %v2983
  %v2987 = vunpack.c.l.s4 1983009808
  %v2988 = vunpack.c.0.s8 %v2987
  %v2989 = vperm.slane %v2452, %v2988
  %v2992 = vunpack.c.l.s4 1983009808
  %v2993 = vunpack.c.0.s8 %v2992
  %v2994 = vperm.slane %v2458, %v2993
  %v2995 = vrot.slane %v2994, 4
  %v2996 = vsel %vm617, %v2995, %v2989
  %v2997 = vrot.slane %v2989, 4
  %v2998 = vsel %vm617, %v2994, %v2997
  %v3000 = vunpack.c.l.s4 1934713408
  %v3001 = vunpack.c.0.s8 %v3000
  %v3002 = vperm.slane %v2996, %v3001
  %v3004 = vunpack.c.l.s4 1934713408
  %v3005 = vunpack.c.0.s8 %v3004
  %v3006 = vperm.slane %v2998, %v3005
  %v3007 = vrot.slane %v3002, 4
  %v3008 = vsel %vm617, 0, %v3007
  %v3009 = vrot.slane %v3006, 4
  %v3010 = vsel %vm617, 0, %v3009
  %v3013 = vunpack.c.l.s4 1983009808
  %v3014 = vunpack.c.0.s8 %v3013
  %v3015 = vperm.slane %v2461, %v3014
  %v3018 = vunpack.c.l.s4 1983009808
  %v3019 = vunpack.c.0.s8 %v3018
  %v3020 = vperm.slane %v2467, %v3019
  %v3021 = vrot.slane %v3020, 4
  %v3022 = vsel %vm617, %v3021, %v3015
  %v3023 = vrot.slane %v3015, 4
  %v3024 = vsel %vm617, %v3020, %v3023
  %v3026 = vunpack.c.l.s4 1934713408
  %v3027 = vunpack.c.0.s8 %v3026
  %v3028 = vperm.slane %v3022, %v3027
  %v3030 = vunpack.c.l.s4 1934713408
  %v3031 = vunpack.c.0.s8 %v3030
  %v3032 = vperm.slane %v3024, %v3031
  %v3033 = vrot.slane %v3028, 4
  %v3034 = vsel %vm617, 0, %v3033
  %v3035 = vrot.slane %v3032, 4
  %v3036 = vsel %vm617, 0, %v3035
  %v3039 = vunpack.c.l.s4 1983009808
  %v3040 = vunpack.c.0.s8 %v3039
  %v3041 = vperm.slane %v2464, %v3040
  %v3044 = vunpack.c.l.s4 1983009808
  %v3045 = vunpack.c.0.s8 %v3044
  %v3046 = vperm.slane %v2470, %v3045
  %v3047 = vrot.slane %v3046, 4
  %v3048 = vsel %vm617, %v3047, %v3041
  %v3049 = vrot.slane %v3041, 4
  %v3050 = vsel %vm617, %v3046, %v3049
  %v3052 = vunpack.c.l.s4 1934713408
  %v3053 = vunpack.c.0.s8 %v3052
  %v3054 = vperm.slane %v3048, %v3053
  %v3056 = vunpack.c.l.s4 1934713408
  %v3057 = vunpack.c.0.s8 %v3056
  %v3058 = vperm.slane %v3050, %v3057
  %v3059 = vrot.slane %v3054, 4
  %v3060 = vsel %vm617, 0, %v3059
  %v3061 = vrot.slane %v3058, 4
  %v3062 = vsel %vm617, 0, %v3061
  %v3065 = vunpack.c.l.s4 1983009808
  %v3066 = vunpack.c.0.s8 %v3065
  %v3067 = vperm.slane %v2473, %v3066
  %v3070 = vunpack.c.l.s4 1983009808
  %v3071 = vunpack.c.0.s8 %v3070
  %v3072 = vperm.slane %v2479, %v3071
  %v3073 = vrot.slane %v3072, 4
  %v3074 = vsel %vm617, %v3073, %v3067
  %v3075 = vrot.slane %v3067, 4
  %v3076 = vsel %vm617, %v3072, %v3075
  %v3078 = vunpack.c.l.s4 1934713408
  %v3079 = vunpack.c.0.s8 %v3078
  %v3080 = vperm.slane %v3074, %v3079
  %v3082 = vunpack.c.l.s4 1934713408
  %v3083 = vunpack.c.0.s8 %v3082
  %v3084 = vperm.slane %v3076, %v3083
  %v3085 = vrot.slane %v3080, 4
  %v3086 = vsel %vm617, 0, %v3085
  %v3087 = vrot.slane %v3084, 4
  %v3088 = vsel %vm617, 0, %v3087
  %v3091 = vunpack.c.l.s4 1983009808
  %v3092 = vunpack.c.0.s8 %v3091
  %v3093 = vperm.slane %v2476, %v3092
  %v3096 = vunpack.c.l.s4 1983009808
  %v3097 = vunpack.c.0.s8 %v3096
  %v3098 = vperm.slane %v2482, %v3097
  %v3099 = vrot.slane %v3098, 4
  %v3100 = vsel %vm617, %v3099, %v3093
  %v3101 = vrot.slane %v3093, 4
  %v3102 = vsel %vm617, %v3098, %v3101
  %v3104 = vunpack.c.l.s4 1934713408
  %v3105 = vunpack.c.0.s8 %v3104
  %v3106 = vperm.slane %v3100, %v3105
  %v3108 = vunpack.c.l.s4 1934713408
  %v3109 = vunpack.c.0.s8 %v3108
  %v3110 = vperm.slane %v3102, %v3109
  %v3111 = vrot.slane %v3106, 4
  %v3112 = vsel %vm617, 0, %v3111
  %v3113 = vrot.slane %v3110, 4
  %v3114 = vsel %vm617, 0, %v3113
  %v3117 = vunpack.c.l.s4 1983009808
  %v3118 = vunpack.c.0.s8 %v3117
  %v3119 = vperm.slane %v2485, %v3118
  %v3122 = vunpack.c.l.s4 1983009808
  %v3123 = vunpack.c.0.s8 %v3122
  %v3124 = vperm.slane %v2491, %v3123
  %v3125 = vrot.slane %v3124, 4
  %v3126 = vsel %vm617, %v3125, %v3119
  %v3127 = vrot.slane %v3119, 4
  %v3128 = vsel %vm617, %v3124, %v3127
  %v3130 = vunpack.c.l.s4 1934713408
  %v3131 = vunpack.c.0.s8 %v3130
  %v3132 = vperm.slane %v3126, %v3131
  %v3134 = vunpack.c.l.s4 1934713408
  %v3135 = vunpack.c.0.s8 %v3134
  %v3136 = vperm.slane %v3128, %v3135
  %v3137 = vrot.slane %v3132, 4
  %v3138 = vsel %vm617, 0, %v3137
  %v3139 = vrot.slane %v3136, 4
  %v3140 = vsel %vm617, 0, %v3139
  %v3143 = vunpack.c.l.s4 1983009808
  %v3144 = vunpack.c.0.s8 %v3143
  %v3145 = vperm.slane %v2488, %v3144
  %v3148 = vunpack.c.l.s4 1983009808
  %v3149 = vunpack.c.0.s8 %v3148
  %v3150 = vperm.slane %v2494, %v3149
  %v3151 = vrot.slane %v3150, 4
  %v3152 = vsel %vm617, %v3151, %v3145
  %v3153 = vrot.slane %v3145, 4
  %v3154 = vsel %vm617, %v3150, %v3153
  %v3156 = vunpack.c.l.s4 1934713408
  %v3157 = vunpack.c.0.s8 %v3156
  %v3158 = vperm.slane %v3152, %v3157
  %v3160 = vunpack.c.l.s4 1934713408
  %v3161 = vunpack.c.0.s8 %v3160
  %v3162 = vperm.slane %v3154, %v3161
  %v3163 = vrot.slane %v3158, 4
  %v3164 = vsel %vm617, 0, %v3163
  %v3165 = vrot.slane %v3162, 4
  %v3166 = vsel %vm617, 0, %v3165
  %v3169 = vunpack.c.l.s4 1983009808
  %v3170 = vunpack.c.0.s8 %v3169
  %v3171 = vperm.slane %v2497, %v3170
  %v3174 = vunpack.c.l.s4 1983009808
  %v3175 = vunpack.c.0.s8 %v3174
  %v3176 = vperm.slane %v2503, %v3175
  %v3177 = vrot.slane %v3176, 4
  %v3178 = vsel %vm617, %v3177, %v3171
  %v3179 = vrot.slane %v3171, 4
  %v3180 = vsel %vm617, %v3176, %v3179
  %v3182 = vunpack.c.l.s4 1934713408
  %v3183 = vunpack.c.0.s8 %v3182
  %v3184 = vperm.slane %v3178, %v3183
  %v3186 = vunpack.c.l.s4 1934713408
  %v3187 = vunpack.c.0.s8 %v3186
  %v3188 = vperm.slane %v3180, %v3187
  %v3189 = vrot.slane %v3184, 4
  %v3190 = vsel %vm617, 0, %v3189
  %v3191 = vrot.slane %v3188, 4
  %v3192 = vsel %vm617, 0, %v3191
  %v3195 = vunpack.c.l.s4 1983009808
  %v3196 = vunpack.c.0.s8 %v3195
  %v3197 = vperm.slane %v2500, %v3196
  %v3200 = vunpack.c.l.s4 1983009808
  %v3201 = vunpack.c.0.s8 %v3200
  %v3202 = vperm.slane %v2506, %v3201
  %v3203 = vrot.slane %v3202, 4
  %v3204 = vsel %vm617, %v3203, %v3197
  %v3205 = vrot.slane %v3197, 4
  %v3206 = vsel %vm617, %v3202, %v3205
  %v3208 = vunpack.c.l.s4 1934713408
  %v3209 = vunpack.c.0.s8 %v3208
  %v3210 = vperm.slane %v3204, %v3209
  %v3212 = vunpack.c.l.s4 1934713408
  %v3213 = vunpack.c.0.s8 %v3212
  %v3214 = vperm.slane %v3206, %v3213
  %v3215 = vrot.slane %v3210, 4
  %v3216 = vsel %vm617, 0, %v3215
  %v3217 = vrot.slane %v3214, 4
  %v3218 = vsel %vm617, 0, %v3217
  %v3221 = vunpack.c.l.s4 1983009808
  %v3222 = vunpack.c.0.s8 %v3221
  %v3223 = vperm.slane %v2509, %v3222
  %v3226 = vunpack.c.l.s4 1983009808
  %v3227 = vunpack.c.0.s8 %v3226
  %v3228 = vperm.slane %v2515, %v3227
  %v3229 = vrot.slane %v3228, 4
  %v3230 = vsel %vm617, %v3229, %v3223
  %v3231 = vrot.slane %v3223, 4
  %v3232 = vsel %vm617, %v3228, %v3231
  %v3234 = vunpack.c.l.s4 1934713408
  %v3235 = vunpack.c.0.s8 %v3234
  %v3236 = vperm.slane %v3230, %v3235
  %v3238 = vunpack.c.l.s4 1934713408
  %v3239 = vunpack.c.0.s8 %v3238
  %v3240 = vperm.slane %v3232, %v3239
  %v3241 = vrot.slane %v3236, 4
  %v3242 = vsel %vm617, 0, %v3241
  %v3243 = vrot.slane %v3240, 4
  %v3244 = vsel %vm617, 0, %v3243
  %v3247 = vunpack.c.l.s4 1983009808
  %v3248 = vunpack.c.0.s8 %v3247
  %v3249 = vperm.slane %v2512, %v3248
  %v3252 = vunpack.c.l.s4 1983009808
  %v3253 = vunpack.c.0.s8 %v3252
  %v3254 = vperm.slane %v2518, %v3253
  %v3255 = vrot.slane %v3254, 4
  %v3256 = vsel %vm617, %v3255, %v3249
  %v3257 = vrot.slane %v3249, 4
  %v3258 = vsel %vm617, %v3254, %v3257
  %v3260 = vunpack.c.l.s4 1934713408
  %v3261 = vunpack.c.0.s8 %v3260
  %v3262 = vperm.slane %v3256, %v3261
  %v3264 = vunpack.c.l.s4 1934713408
  %v3265 = vunpack.c.0.s8 %v3264
  %v3266 = vperm.slane %v3258, %v3265
  %v3267 = vrot.slane %v3262, 4
  %v3268 = vsel %vm617, 0, %v3267
  %v3269 = vrot.slane %v3266, 4
  %v3270 = vsel %vm617, 0, %v3269
  %v3273 = vunpack.c.l.s4 1983009808
  %v3274 = vunpack.c.0.s8 %v3273
  %v3275 = vperm.slane %v2521, %v3274
  %v3278 = vunpack.c.l.s4 1983009808
  %v3279 = vunpack.c.0.s8 %v3278
  %v3280 = vperm.slane %v2527, %v3279
  %v3281 = vrot.slane %v3280, 4
  %v3282 = vsel %vm617, %v3281, %v3275
  %v3283 = vrot.slane %v3275, 4
  %v3284 = vsel %vm617, %v3280, %v3283
  %v3286 = vunpack.c.l.s4 1934713408
  %v3287 = vunpack.c.0.s8 %v3286
  %v3288 = vperm.slane %v3282, %v3287
  %v3290 = vunpack.c.l.s4 1934713408
  %v3291 = vunpack.c.0.s8 %v3290
  %v3292 = vperm.slane %v3284, %v3291
  %v3293 = vrot.slane %v3288, 4
  %v3294 = vsel %vm617, 0, %v3293
  %v3295 = vrot.slane %v3292, 4
  %v3296 = vsel %vm617, 0, %v3295
  %v3299 = vunpack.c.l.s4 1983009808
  %v3300 = vunpack.c.0.s8 %v3299
  %v3301 = vperm.slane %v2524, %v3300
  %v3304 = vunpack.c.l.s4 1983009808
  %v3305 = vunpack.c.0.s8 %v3304
  %v3306 = vperm.slane %v2530, %v3305
  %v3307 = vrot.slane %v3306, 4
  %v3308 = vsel %vm617, %v3307, %v3301
  %v3309 = vrot.slane %v3301, 4
  %v3310 = vsel %vm617, %v3306, %v3309
  %v3312 = vunpack.c.l.s4 1934713408
  %v3313 = vunpack.c.0.s8 %v3312
  %v3314 = vperm.slane %v3308, %v3313
  %v3316 = vunpack.c.l.s4 1934713408
  %v3317 = vunpack.c.0.s8 %v3316
  %v3318 = vperm.slane %v3310, %v3317
  %v3319 = vrot.slane %v3314, 4
  %v3320 = vsel %vm617, 0, %v3319
  %v3321 = vrot.slane %v3318, 4
  %v3322 = vsel %vm617, 0, %v3321
  %v3325 = vunpack.c.l.s4 1983009808
  %v3326 = vunpack.c.0.s8 %v3325
  %v3327 = vperm.slane %v2533, %v3326
  %v3330 = vunpack.c.l.s4 1983009808
  %v3331 = vunpack.c.0.s8 %v3330
  %v3332 = vperm.slane %v2539, %v3331
  %v3333 = vrot.slane %v3332, 4
  %v3334 = vsel %vm617, %v3333, %v3327
  %v3335 = vrot.slane %v3327, 4
  %v3336 = vsel %vm617, %v3332, %v3335
  %v3338 = vunpack.c.l.s4 1934713408
  %v3339 = vunpack.c.0.s8 %v3338
  %v3340 = vperm.slane %v3334, %v3339
  %v3342 = vunpack.c.l.s4 1934713408
  %v3343 = vunpack.c.0.s8 %v3342
  %v3344 = vperm.slane %v3336, %v3343
  %v3345 = vrot.slane %v3340, 4
  %v3346 = vsel %vm617, 0, %v3345
  %v3347 = vrot.slane %v3344, 4
  %v3348 = vsel %vm617, 0, %v3347
  %v3351 = vunpack.c.l.s4 1983009808
  %v3352 = vunpack.c.0.s8 %v3351
  %v3353 = vperm.slane %v2536, %v3352
  %v3356 = vunpack.c.l.s4 1983009808
  %v3357 = vunpack.c.0.s8 %v3356
  %v3358 = vperm.slane %v2542, %v3357
  %v3359 = vrot.slane %v3358, 4
  %v3360 = vsel %vm617, %v3359, %v3353
  %v3361 = vrot.slane %v3353, 4
  %v3362 = vsel %vm617, %v3358, %v3361
  %v3364 = vunpack.c.l.s4 1934713408
  %v3365 = vunpack.c.0.s8 %v3364
  %v3366 = vperm.slane %v3360, %v3365
  %v3368 = vunpack.c.l.s4 1934713408
  %v3369 = vunpack.c.0.s8 %v3368
  %v3370 = vperm.slane %v3362, %v3369
  %v3371 = vrot.slane %v3366, 4
  %v3372 = vsel %vm617, 0, %v3371
  %v3373 = vrot.slane %v3370, 4
  %v3374 = vsel %vm617, 0, %v3373
  %v3375 = vsel %vm617, %v2567, %v2560
  %v3377 = vunpack.c.l.s4 1983009808
  %v3378 = vunpack.c.0.s8 %v3377
  %v3379 = vperm.slane %v3375, %v3378
  %v3380 = vrot.slane %v2568, 4
  %v3381 = vsel %vm617, %v3380, %v2566
  %v3383 = vunpack.c.l.s4 1983009808
  %v3384 = vunpack.c.0.s8 %v3383
  %v3385 = vperm.slane %v3381, %v3384
  %v3386 = vrot.slane %v3385, 4
  %v3387 = vsel %vm617, %v3386, %v3379
  %v3389 = vunpack.c.l.s4 1934713408
  %v3390 = vunpack.c.0.s8 %v3389
  %v3391 = vperm.slane %v3387, %v3390
  %v3392 = vrot.slane %v3391, 4
  %v3393 = vsel %vm617, 0, %v3392
  %v3394 = vsel %vm617, %v2593, %v2586
  %v3396 = vunpack.c.l.s4 1983009808
  %v3397 = vunpack.c.0.s8 %v3396
  %v3398 = vperm.slane %v3394, %v3397
  %v3399 = vrot.slane %v2594, 4
  %v3400 = vsel %vm617, %v3399, %v2592
  %v3402 = vunpack.c.l.s4 1983009808
  %v3403 = vunpack.c.0.s8 %v3402
  %v3404 = vperm.slane %v3400, %v3403
  %v3405 = vrot.slane %v3404, 4
  %v3406 = vsel %vm617, %v3405, %v3398
  %v3408 = vunpack.c.l.s4 1934713408
  %v3409 = vunpack.c.0.s8 %v3408
  %v3410 = vperm.slane %v3406, %v3409
  %v3411 = vrot.slane %v3410, 4
  %v3412 = vsel %vm617, 0, %v3411
  %v3413 = vsel %vm617, %v2619, %v2612
  %v3415 = vunpack.c.l.s4 1983009808
  %v3416 = vunpack.c.0.s8 %v3415
  %v3417 = vperm.slane %v3413, %v3416
  %v3418 = vrot.slane %v2620, 4
  %v3419 = vsel %vm617, %v3418, %v2618
  %v3421 = vunpack.c.l.s4 1983009808
  %v3422 = vunpack.c.0.s8 %v3421
  %v3423 = vperm.slane %v3419, %v3422
  %v3424 = vrot.slane %v3423, 4
  %v3425 = vsel %vm617, %v3424, %v3417
  %v3427 = vunpack.c.l.s4 1934713408
  %v3428 = vunpack.c.0.s8 %v3427
  %v3429 = vperm.slane %v3425, %v3428
  %v3430 = vrot.slane %v3429, 4
  %v3431 = vsel %vm617, 0, %v3430
  %v3432 = vsel %vm617, %v2645, %v2638
  %v3434 = vunpack.c.l.s4 1983009808
  %v3435 = vunpack.c.0.s8 %v3434
  %v3436 = vperm.slane %v3432, %v3435
  %v3437 = vrot.slane %v2646, 4
  %v3438 = vsel %vm617, %v3437, %v2644
  %v3440 = vunpack.c.l.s4 1983009808
  %v3441 = vunpack.c.0.s8 %v3440
  %v3442 = vperm.slane %v3438, %v3441
  %v3443 = vrot.slane %v3442, 4
  %v3444 = vsel %vm617, %v3443, %v3436
  %v3446 = vunpack.c.l.s4 1934713408
  %v3447 = vunpack.c.0.s8 %v3446
  %v3448 = vperm.slane %v3444, %v3447
  %v3449 = vrot.slane %v3448, 4
  %v3450 = vsel %vm617, 0, %v3449
  %v3451 = vsel %vm617, %v2671, %v2664
  %v3453 = vunpack.c.l.s4 1983009808
  %v3454 = vunpack.c.0.s8 %v3453
  %v3455 = vperm.slane %v3451, %v3454
  %v3456 = vrot.slane %v2672, 4
  %v3457 = vsel %vm617, %v3456, %v2670
  %v3459 = vunpack.c.l.s4 1983009808
  %v3460 = vunpack.c.0.s8 %v3459
  %v3461 = vperm.slane %v3457, %v3460
  %v3462 = vrot.slane %v3461, 4
  %v3463 = vsel %vm617, %v3462, %v3455
  %v3465 = vunpack.c.l.s4 1934713408
  %v3466 = vunpack.c.0.s8 %v3465
  %v3467 = vperm.slane %v3463, %v3466
  %v3468 = vrot.slane %v3467, 4
  %v3469 = vsel %vm617, 0, %v3468
  %v3470 = vsel %vm617, %v2697, %v2690
  %v3472 = vunpack.c.l.s4 1983009808
  %v3473 = vunpack.c.0.s8 %v3472
  %v3474 = vperm.slane %v3470, %v3473
  %v3475 = vrot.slane %v2698, 4
  %v3476 = vsel %vm617, %v3475, %v2696
  %v3478 = vunpack.c.l.s4 1983009808
  %v3479 = vunpack.c.0.s8 %v3478
  %v3480 = vperm.slane %v3476, %v3479
  %v3481 = vrot.slane %v3480, 4
  %v3482 = vsel %vm617, %v3481, %v3474
  %v3484 = vunpack.c.l.s4 1934713408
  %v3485 = vunpack.c.0.s8 %v3484
  %v3486 = vperm.slane %v3482, %v3485
  %v3487 = vrot.slane %v3486, 4
  %v3488 = vsel %vm617, 0, %v3487
  %v3489 = vsel %vm617, %v2723, %v2716
  %v3491 = vunpack.c.l.s4 1983009808
  %v3492 = vunpack.c.0.s8 %v3491
  %v3493 = vperm.slane %v3489, %v3492
  %v3494 = vrot.slane %v2724, 4
  %v3495 = vsel %vm617, %v3494, %v2722
  %v3497 = vunpack.c.l.s4 1983009808
  %v3498 = vunpack.c.0.s8 %v3497
  %v3499 = vperm.slane %v3495, %v3498
  %v3500 = vrot.slane %v3499, 4
  %v3501 = vsel %vm617, %v3500, %v3493
  %v3503 = vunpack.c.l.s4 1934713408
  %v3504 = vunpack.c.0.s8 %v3503
  %v3505 = vperm.slane %v3501, %v3504
  %v3506 = vrot.slane %v3505, 4
  %v3507 = vsel %vm617, 0, %v3506
  %v3508 = vsel %vm617, %v2749, %v2742
  %v3510 = vunpack.c.l.s4 1983009808
  %v3511 = vunpack.c.0.s8 %v3510
  %v3512 = vperm.slane %v3508, %v3511
  %v3513 = vrot.slane %v2750, 4
  %v3514 = vsel %vm617, %v3513, %v2748
  %v3516 = vunpack.c.l.s4 1983009808
  %v3517 = vunpack.c.0.s8 %v3516
  %v3518 = vperm.slane %v3514, %v3517
  %v3519 = vrot.slane %v3518, 4
  %v3520 = vsel %vm617, %v3519, %v3512
  %v3522 = vunpack.c.l.s4 1934713408
  %v3523 = vunpack.c.0.s8 %v3522
  %v3524 = vperm.slane %v3520, %v3523
  %v3525 = vrot.slane %v3524, 4
  %v3526 = vsel %vm617, 0, %v3525
  %v3527 = vsel %vm617, %v2775, %v2768
  %v3529 = vunpack.c.l.s4 1983009808
  %v3530 = vunpack.c.0.s8 %v3529
  %v3531 = vperm.slane %v3527, %v3530
  %v3532 = vrot.slane %v2776, 4
  %v3533 = vsel %vm617, %v3532, %v2774
  %v3535 = vunpack.c.l.s4 1983009808
  %v3536 = vunpack.c.0.s8 %v3535
  %v3537 = vperm.slane %v3533, %v3536
  %v3538 = vrot.slane %v3537, 4
  %v3539 = vsel %vm617, %v3538, %v3531
  %v3541 = vunpack.c.l.s4 1934713408
  %v3542 = vunpack.c.0.s8 %v3541
  %v3543 = vperm.slane %v3539, %v3542
  %v3544 = vrot.slane %v3543, 4
  %v3545 = vsel %vm617, 0, %v3544
  %v3546 = vsel %vm617, %v2801, %v2794
  %v3548 = vunpack.c.l.s4 1983009808
  %v3549 = vunpack.c.0.s8 %v3548
  %v3550 = vperm.slane %v3546, %v3549
  %v3551 = vrot.slane %v2802, 4
  %v3552 = vsel %vm617, %v3551, %v2800
  %v3554 = vunpack.c.l.s4 1983009808
  %v3555 = vunpack.c.0.s8 %v3554
  %v3556 = vperm.slane %v3552, %v3555
  %v3557 = vrot.slane %v3556, 4
  %v3558 = vsel %vm617, %v3557, %v3550
  %v3560 = vunpack.c.l.s4 1934713408
  %v3561 = vunpack.c.0.s8 %v3560
  %v3562 = vperm.slane %v3558, %v3561
  %v3563 = vrot.slane %v3562, 4
  %v3564 = vsel %vm617, 0, %v3563
  %v3565 = vsel %vm617, %v2827, %v2820
  %v3567 = vunpack.c.l.s4 1983009808
  %v3568 = vunpack.c.0.s8 %v3567
  %v3569 = vperm.slane %v3565, %v3568
  %v3570 = vrot.slane %v2828, 4
  %v3571 = vsel %vm617, %v3570, %v2826
  %v3573 = vunpack.c.l.s4 1983009808
  %v3574 = vunpack.c.0.s8 %v3573
  %v3575 = vperm.slane %v3571, %v3574
  %v3576 = vrot.slane %v3575, 4
  %v3577 = vsel %vm617, %v3576, %v3569
  %v3579 = vunpack.c.l.s4 1934713408
  %v3580 = vunpack.c.0.s8 %v3579
  %v3581 = vperm.slane %v3577, %v3580
  %v3582 = vrot.slane %v3581, 4
  %v3583 = vsel %vm617, 0, %v3582
  %v3584 = vsel %vm617, %v2853, %v2846
  %v3586 = vunpack.c.l.s4 1983009808
  %v3587 = vunpack.c.0.s8 %v3586
  %v3588 = vperm.slane %v3584, %v3587
  %v3589 = vrot.slane %v2854, 4
  %v3590 = vsel %vm617, %v3589, %v2852
  %v3592 = vunpack.c.l.s4 1983009808
  %v3593 = vunpack.c.0.s8 %v3592
  %v3594 = vperm.slane %v3590, %v3593
  %v3595 = vrot.slane %v3594, 4
  %v3596 = vsel %vm617, %v3595, %v3588
  %v3598 = vunpack.c.l.s4 1934713408
  %v3599 = vunpack.c.0.s8 %v3598
  %v3600 = vperm.slane %v3596, %v3599
  %v3601 = vrot.slane %v3600, 4
  %v3602 = vsel %vm617, 0, %v3601
  %v3603 = vsel %vm617, %v2879, %v2872
  %v3605 = vunpack.c.l.s4 1983009808
  %v3606 = vunpack.c.0.s8 %v3605
  %v3607 = vperm.slane %v3603, %v3606
  %v3608 = vrot.slane %v2880, 4
  %v3609 = vsel %vm617, %v3608, %v2878
  %v3611 = vunpack.c.l.s4 1983009808
  %v3612 = vunpack.c.0.s8 %v3611
  %v3613 = vperm.slane %v3609, %v3612
  %v3614 = vrot.slane %v3613, 4
  %v3615 = vsel %vm617, %v3614, %v3607
  %v3617 = vunpack.c.l.s4 1934713408
  %v3618 = vunpack.c.0.s8 %v3617
  %v3619 = vperm.slane %v3615, %v3618
  %v3620 = vrot.slane %v3619, 4
  %v3621 = vsel %vm617, 0, %v3620
  %v3622 = vsel %vm617, %v2905, %v2898
  %v3624 = vunpack.c.l.s4 1983009808
  %v3625 = vunpack.c.0.s8 %v3624
  %v3626 = vperm.slane %v3622, %v3625
  %v3627 = vrot.slane %v2906, 4
  %v3628 = vsel %vm617, %v3627, %v2904
  %v3630 = vunpack.c.l.s4 1983009808
  %v3631 = vunpack.c.0.s8 %v3630
  %v3632 = vperm.slane %v3628, %v3631
  %v3633 = vrot.slane %v3632, 4
  %v3634 = vsel %vm617, %v3633, %v3626
  %v3636 = vunpack.c.l.s4 1934713408
  %v3637 = vunpack.c.0.s8 %v3636
  %v3638 = vperm.slane %v3634, %v3637
  %v3639 = vrot.slane %v3638, 4
  %v3640 = vsel %vm617, 0, %v3639
  %v3641 = vsel %vm617, %v2931, %v2924
  %v3643 = vunpack.c.l.s4 1983009808
  %v3644 = vunpack.c.0.s8 %v3643
  %v3645 = vperm.slane %v3641, %v3644
  %v3646 = vrot.slane %v2932, 4
  %v3647 = vsel %vm617, %v3646, %v2930
  %v3649 = vunpack.c.l.s4 1983009808
  %v3650 = vunpack.c.0.s8 %v3649
  %v3651 = vperm.slane %v3647, %v3650
  %v3652 = vrot.slane %v3651, 4
  %v3653 = vsel %vm617, %v3652, %v3645
  %v3655 = vunpack.c.l.s4 1934713408
  %v3656 = vunpack.c.0.s8 %v3655
  %v3657 = vperm.slane %v3653, %v3656
  %v3658 = vrot.slane %v3657, 4
  %v3659 = vsel %vm617, 0, %v3658
  %v3660 = vsel %vm617, %v2957, %v2950
  %v3662 = vunpack.c.l.s4 1983009808
  %v3663 = vunpack.c.0.s8 %v3662
  %v3664 = vperm.slane %v3660, %v3663
  %v3665 = vrot.slane %v2958, 4
  %v3666 = vsel %vm617, %v3665, %v2956
  %v3668 = vunpack.c.l.s4 1983009808
  %v3669 = vunpack.c.0.s8 %v3668
  %v3670 = vperm.slane %v3666, %v3669
  %v3671 = vrot.slane %v3670, 4
  %v3672 = vsel %vm617, %v3671, %v3664
  %v3674 = vunpack.c.l.s4 1934713408
  %v3675 = vunpack.c.0.s8 %v3674
  %v3676 = vperm.slane %v3672, %v3675
  %v3677 = vrot.slane %v3676, 4
  %v3678 = vsel %vm617, 0, %v3677
  %v3679 = vsel %vm617, %v2983, %v2976
  %v3681 = vunpack.c.l.s4 1983009808
  %v3682 = vunpack.c.0.s8 %v3681
  %v3683 = vperm.slane %v3679, %v3682
  %v3684 = vrot.slane %v2984, 4
  %v3685 = vsel %vm617, %v3684, %v2982
  %v3687 = vunpack.c.l.s4 1983009808
  %v3688 = vunpack.c.0.s8 %v3687
  %v3689 = vperm.slane %v3685, %v3688
  %v3690 = vrot.slane %v3689, 4
  %v3691 = vsel %vm617, %v3690, %v3683
  %v3693 = vunpack.c.l.s4 1934713408
  %v3694 = vunpack.c.0.s8 %v3693
  %v3695 = vperm.slane %v3691, %v3694
  %v3696 = vrot.slane %v3695, 4
  %v3697 = vsel %vm617, 0, %v3696
  %v3698 = vsel %vm617, %v3009, %v3002
  %v3700 = vunpack.c.l.s4 1983009808
  %v3701 = vunpack.c.0.s8 %v3700
  %v3702 = vperm.slane %v3698, %v3701
  %v3703 = vrot.slane %v3010, 4
  %v3704 = vsel %vm617, %v3703, %v3008
  %v3706 = vunpack.c.l.s4 1983009808
  %v3707 = vunpack.c.0.s8 %v3706
  %v3708 = vperm.slane %v3704, %v3707
  %v3709 = vrot.slane %v3708, 4
  %v3710 = vsel %vm617, %v3709, %v3702
  %v3712 = vunpack.c.l.s4 1934713408
  %v3713 = vunpack.c.0.s8 %v3712
  %v3714 = vperm.slane %v3710, %v3713
  %v3715 = vrot.slane %v3714, 4
  %v3716 = vsel %vm617, 0, %v3715
  %v3717 = vsel %vm617, %v3035, %v3028
  %v3719 = vunpack.c.l.s4 1983009808
  %v3720 = vunpack.c.0.s8 %v3719
  %v3721 = vperm.slane %v3717, %v3720
  %v3722 = vrot.slane %v3036, 4
  %v3723 = vsel %vm617, %v3722, %v3034
  %v3725 = vunpack.c.l.s4 1983009808
  %v3726 = vunpack.c.0.s8 %v3725
  %v3727 = vperm.slane %v3723, %v3726
  %v3728 = vrot.slane %v3727, 4
  %v3729 = vsel %vm617, %v3728, %v3721
  %v3731 = vunpack.c.l.s4 1934713408
  %v3732 = vunpack.c.0.s8 %v3731
  %v3733 = vperm.slane %v3729, %v3732
  %v3734 = vrot.slane %v3733, 4
  %v3735 = vsel %vm617, 0, %v3734
  %v3736 = vsel %vm617, %v3061, %v3054
  %v3738 = vunpack.c.l.s4 1983009808
  %v3739 = vunpack.c.0.s8 %v3738
  %v3740 = vperm.slane %v3736, %v3739
  %v3741 = vrot.slane %v3062, 4
  %v3742 = vsel %vm617, %v3741, %v3060
  %v3744 = vunpack.c.l.s4 1983009808
  %v3745 = vunpack.c.0.s8 %v3744
  %v3746 = vperm.slane %v3742, %v3745
  %v3747 = vrot.slane %v3746, 4
  %v3748 = vsel %vm617, %v3747, %v3740
  %v3750 = vunpack.c.l.s4 1934713408
  %v3751 = vunpack.c.0.s8 %v3750
  %v3752 = vperm.slane %v3748, %v3751
  %v3753 = vrot.slane %v3752, 4
  %v3754 = vsel %vm617, 0, %v3753
  %v3755 = vsel %vm617, %v3087, %v3080
  %v3757 = vunpack.c.l.s4 1983009808
  %v3758 = vunpack.c.0.s8 %v3757
  %v3759 = vperm.slane %v3755, %v3758
  %v3760 = vrot.slane %v3088, 4
  %v3761 = vsel %vm617, %v3760, %v3086
  %v3763 = vunpack.c.l.s4 1983009808
  %v3764 = vunpack.c.0.s8 %v3763
  %v3765 = vperm.slane %v3761, %v3764
  %v3766 = vrot.slane %v3765, 4
  %v3767 = vsel %vm617, %v3766, %v3759
  %v3769 = vunpack.c.l.s4 1934713408
  %v3770 = vunpack.c.0.s8 %v3769
  %v3771 = vperm.slane %v3767, %v3770
  %v3772 = vrot.slane %v3771, 4
  %v3773 = vsel %vm617, 0, %v3772
  %v3774 = vsel %vm617, %v3113, %v3106
  %v3776 = vunpack.c.l.s4 1983009808
  %v3777 = vunpack.c.0.s8 %v3776
  %v3778 = vperm.slane %v3774, %v3777
  %v3779 = vrot.slane %v3114, 4
  %v3780 = vsel %vm617, %v3779, %v3112
  %v3782 = vunpack.c.l.s4 1983009808
  %v3783 = vunpack.c.0.s8 %v3782
  %v3784 = vperm.slane %v3780, %v3783
  %v3785 = vrot.slane %v3784, 4
  %v3786 = vsel %vm617, %v3785, %v3778
  %v3788 = vunpack.c.l.s4 1934713408
  %v3789 = vunpack.c.0.s8 %v3788
  %v3790 = vperm.slane %v3786, %v3789
  %v3791 = vrot.slane %v3790, 4
  %v3792 = vsel %vm617, 0, %v3791
  %v3793 = vsel %vm617, %v3139, %v3132
  %v3795 = vunpack.c.l.s4 1983009808
  %v3796 = vunpack.c.0.s8 %v3795
  %v3797 = vperm.slane %v3793, %v3796
  %v3798 = vrot.slane %v3140, 4
  %v3799 = vsel %vm617, %v3798, %v3138
  %v3801 = vunpack.c.l.s4 1983009808
  %v3802 = vunpack.c.0.s8 %v3801
  %v3803 = vperm.slane %v3799, %v3802
  %v3804 = vrot.slane %v3803, 4
  %v3805 = vsel %vm617, %v3804, %v3797
  %v3807 = vunpack.c.l.s4 1934713408
  %v3808 = vunpack.c.0.s8 %v3807
  %v3809 = vperm.slane %v3805, %v3808
  %v3810 = vrot.slane %v3809, 4
  %v3811 = vsel %vm617, 0, %v3810
  %v3812 = vsel %vm617, %v3165, %v3158
  %v3814 = vunpack.c.l.s4 1983009808
  %v3815 = vunpack.c.0.s8 %v3814
  %v3816 = vperm.slane %v3812, %v3815
  %v3817 = vrot.slane %v3166, 4
  %v3818 = vsel %vm617, %v3817, %v3164
  %v3820 = vunpack.c.l.s4 1983009808
  %v3821 = vunpack.c.0.s8 %v3820
  %v3822 = vperm.slane %v3818, %v3821
  %v3823 = vrot.slane %v3822, 4
  %v3824 = vsel %vm617, %v3823, %v3816
  %v3826 = vunpack.c.l.s4 1934713408
  %v3827 = vunpack.c.0.s8 %v3826
  %v3828 = vperm.slane %v3824, %v3827
  %v3829 = vrot.slane %v3828, 4
  %v3830 = vsel %vm617, 0, %v3829
  %v3831 = vsel %vm617, %v3191, %v3184
  %v3833 = vunpack.c.l.s4 1983009808
  %v3834 = vunpack.c.0.s8 %v3833
  %v3835 = vperm.slane %v3831, %v3834
  %v3836 = vrot.slane %v3192, 4
  %v3837 = vsel %vm617, %v3836, %v3190
  %v3839 = vunpack.c.l.s4 1983009808
  %v3840 = vunpack.c.0.s8 %v3839
  %v3841 = vperm.slane %v3837, %v3840
  %v3842 = vrot.slane %v3841, 4
  %v3843 = vsel %vm617, %v3842, %v3835
  %v3845 = vunpack.c.l.s4 1934713408
  %v3846 = vunpack.c.0.s8 %v3845
  %v3847 = vperm.slane %v3843, %v3846
  %v3848 = vrot.slane %v3847, 4
  %v3849 = vsel %vm617, 0, %v3848
  %v3850 = vsel %vm617, %v3217, %v3210
  %v3852 = vunpack.c.l.s4 1983009808
  %v3853 = vunpack.c.0.s8 %v3852
  %v3854 = vperm.slane %v3850, %v3853
  %v3855 = vrot.slane %v3218, 4
  %v3856 = vsel %vm617, %v3855, %v3216
  %v3858 = vunpack.c.l.s4 1983009808
  %v3859 = vunpack.c.0.s8 %v3858
  %v3860 = vperm.slane %v3856, %v3859
  %v3861 = vrot.slane %v3860, 4
  %v3862 = vsel %vm617, %v3861, %v3854
  %v3864 = vunpack.c.l.s4 1934713408
  %v3865 = vunpack.c.0.s8 %v3864
  %v3866 = vperm.slane %v3862, %v3865
  %v3867 = vrot.slane %v3866, 4
  %v3868 = vsel %vm617, 0, %v3867
  %v3869 = vsel %vm617, %v3243, %v3236
  %v3871 = vunpack.c.l.s4 1983009808
  %v3872 = vunpack.c.0.s8 %v3871
  %v3873 = vperm.slane %v3869, %v3872
  %v3874 = vrot.slane %v3244, 4
  %v3875 = vsel %vm617, %v3874, %v3242
  %v3877 = vunpack.c.l.s4 1983009808
  %v3878 = vunpack.c.0.s8 %v3877
  %v3879 = vperm.slane %v3875, %v3878
  %v3880 = vrot.slane %v3879, 4
  %v3881 = vsel %vm617, %v3880, %v3873
  %v3883 = vunpack.c.l.s4 1934713408
  %v3884 = vunpack.c.0.s8 %v3883
  %v3885 = vperm.slane %v3881, %v3884
  %v3886 = vrot.slane %v3885, 4
  %v3887 = vsel %vm617, 0, %v3886
  %v3888 = vsel %vm617, %v3269, %v3262
  %v3890 = vunpack.c.l.s4 1983009808
  %v3891 = vunpack.c.0.s8 %v3890
  %v3892 = vperm.slane %v3888, %v3891
  %v3893 = vrot.slane %v3270, 4
  %v3894 = vsel %vm617, %v3893, %v3268
  %v3896 = vunpack.c.l.s4 1983009808
  %v3897 = vunpack.c.0.s8 %v3896
  %v3898 = vperm.slane %v3894, %v3897
  %v3899 = vrot.slane %v3898, 4
  %v3900 = vsel %vm617, %v3899, %v3892
  %v3902 = vunpack.c.l.s4 1934713408
  %v3903 = vunpack.c.0.s8 %v3902
  %v3904 = vperm.slane %v3900, %v3903
  %v3905 = vrot.slane %v3904, 4
  %v3906 = vsel %vm617, 0, %v3905
  %v3907 = vsel %vm617, %v3295, %v3288
  %v3909 = vunpack.c.l.s4 1983009808
  %v3910 = vunpack.c.0.s8 %v3909
  %v3911 = vperm.slane %v3907, %v3910
  %v3912 = vrot.slane %v3296, 4
  %v3913 = vsel %vm617, %v3912, %v3294
  %v3915 = vunpack.c.l.s4 1983009808
  %v3916 = vunpack.c.0.s8 %v3915
  %v3917 = vperm.slane %v3913, %v3916
  %v3918 = vrot.slane %v3917, 4
  %v3919 = vsel %vm617, %v3918, %v3911
  %v3921 = vunpack.c.l.s4 1934713408
  %v3922 = vunpack.c.0.s8 %v3921
  %v3923 = vperm.slane %v3919, %v3922
  %v3924 = vrot.slane %v3923, 4
  %v3925 = vsel %vm617, 0, %v3924
  %v3926 = vsel %vm617, %v3321, %v3314
  %v3928 = vunpack.c.l.s4 1983009808
  %v3929 = vunpack.c.0.s8 %v3928
  %v3930 = vperm.slane %v3926, %v3929
  %v3931 = vrot.slane %v3322, 4
  %v3932 = vsel %vm617, %v3931, %v3320
  %v3934 = vunpack.c.l.s4 1983009808
  %v3935 = vunpack.c.0.s8 %v3934
  %v3936 = vperm.slane %v3932, %v3935
  %v3937 = vrot.slane %v3936, 4
  %v3938 = vsel %vm617, %v3937, %v3930
  %v3940 = vunpack.c.l.s4 1934713408
  %v3941 = vunpack.c.0.s8 %v3940
  %v3942 = vperm.slane %v3938, %v3941
  %v3943 = vrot.slane %v3942, 4
  %v3944 = vsel %vm617, 0, %v3943
  %v3945 = vsel %vm617, %v3347, %v3340
  %v3947 = vunpack.c.l.s4 1983009808
  %v3948 = vunpack.c.0.s8 %v3947
  %v3949 = vperm.slane %v3945, %v3948
  %v3950 = vrot.slane %v3348, 4
  %v3951 = vsel %vm617, %v3950, %v3346
  %v3953 = vunpack.c.l.s4 1983009808
  %v3954 = vunpack.c.0.s8 %v3953
  %v3955 = vperm.slane %v3951, %v3954
  %v3956 = vrot.slane %v3955, 4
  %v3957 = vsel %vm617, %v3956, %v3949
  %v3959 = vunpack.c.l.s4 1934713408
  %v3960 = vunpack.c.0.s8 %v3959
  %v3961 = vperm.slane %v3957, %v3960
  %v3962 = vrot.slane %v3961, 4
  %v3963 = vsel %vm617, 0, %v3962
  %v3964 = vsel %vm617, %v3373, %v3366
  %v3966 = vunpack.c.l.s4 1983009808
  %v3967 = vunpack.c.0.s8 %v3966
  %v3968 = vperm.slane %v3964, %v3967
  %v3969 = vrot.slane %v3374, 4
  %v3970 = vsel %vm617, %v3969, %v3372
  %v3972 = vunpack.c.l.s4 1983009808
  %v3973 = vunpack.c.0.s8 %v3972
  %v3974 = vperm.slane %v3970, %v3973
  %v3975 = vrot.slane %v3974, 4
  %v3976 = vsel %vm617, %v3975, %v3968
  %v3978 = vunpack.c.l.s4 1934713408
  %v3979 = vunpack.c.0.s8 %v3978
  %v3980 = vperm.slane %v3976, %v3979
  %v3981 = vrot.slane %v3980, 4
  %v3982 = vsel %vm617, 0, %v3981
  %v3985 = vpack.i.b16 %v3410, %v3391
  %v3986 = vshrl.u32 %v3391, 16
  %v3987 = vshrl.u32 %v3410, 16
  %v3988 = vpack.i.b16 %v3987, %v3986
  %v3991 = vpack.i.b16 %v3412, %v3393
  %v3992 = vshrl.u32 %v3393, 16
  %v3993 = vshrl.u32 %v3412, 16
  %v3994 = vpack.i.b16 %v3993, %v3992
  %v3997 = vpack.i.b16 %v3448, %v3429
  %v3998 = vshrl.u32 %v3429, 16
  %v3999 = vshrl.u32 %v3448, 16
  %v4000 = vpack.i.b16 %v3999, %v3998
  %v4003 = vpack.i.b16 %v3450, %v3431
  %v4004 = vshrl.u32 %v3431, 16
  %v4005 = vshrl.u32 %v3450, 16
  %v4006 = vpack.i.b16 %v4005, %v4004
  %v4009 = vpack.i.b16 %v3486, %v3467
  %v4010 = vshrl.u32 %v3467, 16
  %v4011 = vshrl.u32 %v3486, 16
  %v4012 = vpack.i.b16 %v4011, %v4010
  %v4015 = vpack.i.b16 %v3488, %v3469
  %v4016 = vshrl.u32 %v3469, 16
  %v4017 = vshrl.u32 %v3488, 16
  %v4018 = vpack.i.b16 %v4017, %v4016
  %v4021 = vpack.i.b16 %v3524, %v3505
  %v4022 = vshrl.u32 %v3505, 16
  %v4023 = vshrl.u32 %v3524, 16
  %v4024 = vpack.i.b16 %v4023, %v4022
  %v4027 = vpack.i.b16 %v3526, %v3507
  %v4028 = vshrl.u32 %v3507, 16
  %v4029 = vshrl.u32 %v3526, 16
  %v4030 = vpack.i.b16 %v4029, %v4028
  %v4033 = vpack.i.b16 %v3562, %v3543
  %v4034 = vshrl.u32 %v3543, 16
  %v4035 = vshrl.u32 %v3562, 16
  %v4036 = vpack.i.b16 %v4035, %v4034
  %v4039 = vpack.i.b16 %v3564, %v3545
  %v4040 = vshrl.u32 %v3545, 16
  %v4041 = vshrl.u32 %v3564, 16
  %v4042 = vpack.i.b16 %v4041, %v4040
  %v4045 = vpack.i.b16 %v3600, %v3581
  %v4046 = vshrl.u32 %v3581, 16
  %v4047 = vshrl.u32 %v3600, 16
  %v4048 = vpack.i.b16 %v4047, %v4046
  %v4051 = vpack.i.b16 %v3602, %v3583
  %v4052 = vshrl.u32 %v3583, 16
  %v4053 = vshrl.u32 %v3602, 16
  %v4054 = vpack.i.b16 %v4053, %v4052
  %v4057 = vpack.i.b16 %v3638, %v3619
  %v4058 = vshrl.u32 %v3619, 16
  %v4059 = vshrl.u32 %v3638, 16
  %v4060 = vpack.i.b16 %v4059, %v4058
  %v4063 = vpack.i.b16 %v3640, %v3621
  %v4064 = vshrl.u32 %v3621, 16
  %v4065 = vshrl.u32 %v3640, 16
  %v4066 = vpack.i.b16 %v4065, %v4064
  %v4069 = vpack.i.b16 %v3676, %v3657
  %v4070 = vshrl.u32 %v3657, 16
  %v4071 = vshrl.u32 %v3676, 16
  %v4072 = vpack.i.b16 %v4071, %v4070
  %v4075 = vpack.i.b16 %v3678, %v3659
  %v4076 = vshrl.u32 %v3659, 16
  %v4077 = vshrl.u32 %v3678, 16
  %v4078 = vpack.i.b16 %v4077, %v4076
  %v4081 = vpack.i.b16 %v3714, %v3695
  %v4082 = vshrl.u32 %v3695, 16
  %v4083 = vshrl.u32 %v3714, 16
  %v4084 = vpack.i.b16 %v4083, %v4082
  %v4087 = vpack.i.b16 %v3716, %v3697
  %v4088 = vshrl.u32 %v3697, 16
  %v4089 = vshrl.u32 %v3716, 16
  %v4090 = vpack.i.b16 %v4089, %v4088
  %v4093 = vpack.i.b16 %v3752, %v3733
  %v4094 = vshrl.u32 %v3733, 16
  %v4095 = vshrl.u32 %v3752, 16
  %v4096 = vpack.i.b16 %v4095, %v4094
  %v4099 = vpack.i.b16 %v3754, %v3735
  %v4100 = vshrl.u32 %v3735, 16
  %v4101 = vshrl.u32 %v3754, 16
  %v4102 = vpack.i.b16 %v4101, %v4100
  %v4105 = vpack.i.b16 %v3790, %v3771
  %v4106 = vshrl.u32 %v3771, 16
  %v4107 = vshrl.u32 %v3790, 16
  %v4108 = vpack.i.b16 %v4107, %v4106
  %v4111 = vpack.i.b16 %v3792, %v3773
  %v4112 = vshrl.u32 %v3773, 16
  %v4113 = vshrl.u32 %v3792, 16
  %v4114 = vpack.i.b16 %v4113, %v4112
  %v4117 = vpack.i.b16 %v3828, %v3809
  %v4118 = vshrl.u32 %v3809, 16
  %v4119 = vshrl.u32 %v3828, 16
  %v4120 = vpack.i.b16 %v4119, %v4118
  %v4123 = vpack.i.b16 %v3830, %v3811
  %v4124 = vshrl.u32 %v3811, 16
  %v4125 = vshrl.u32 %v3830, 16
  %v4126 = vpack.i.b16 %v4125, %v4124
  %v4129 = vpack.i.b16 %v3866, %v3847
  %v4130 = vshrl.u32 %v3847, 16
  %v4131 = vshrl.u32 %v3866, 16
  %v4132 = vpack.i.b16 %v4131, %v4130
  %v4135 = vpack.i.b16 %v3868, %v3849
  %v4136 = vshrl.u32 %v3849, 16
  %v4137 = vshrl.u32 %v3868, 16
  %v4138 = vpack.i.b16 %v4137, %v4136
  %v4141 = vpack.i.b16 %v3904, %v3885
  %v4142 = vshrl.u32 %v3885, 16
  %v4143 = vshrl.u32 %v3904, 16
  %v4144 = vpack.i.b16 %v4143, %v4142
  %v4147 = vpack.i.b16 %v3906, %v3887
  %v4148 = vshrl.u32 %v3887, 16
  %v4149 = vshrl.u32 %v3906, 16
  %v4150 = vpack.i.b16 %v4149, %v4148
  %v4153 = vpack.i.b16 %v3942, %v3923
  %v4154 = vshrl.u32 %v3923, 16
  %v4155 = vshrl.u32 %v3942, 16
  %v4156 = vpack.i.b16 %v4155, %v4154
  %v4159 = vpack.i.b16 %v3944, %v3925
  %v4160 = vshrl.u32 %v3925, 16
  %v4161 = vshrl.u32 %v3944, 16
  %v4162 = vpack.i.b16 %v4161, %v4160
  %v4165 = vpack.i.b16 %v3980, %v3961
  %v4166 = vshrl.u32 %v3961, 16
  %v4167 = vshrl.u32 %v3980, 16
  %v4168 = vpack.i.b16 %v4167, %v4166
  %v4171 = vpack.i.b16 %v3982, %v3963
  %v4172 = vshrl.u32 %v3963, 16
  %v4173 = vshrl.u32 %v3982, 16
  %v4174 = vpack.i.b16 %v4173, %v4172
  %4175 = vrot.lane.b32.xlu0 %v286, 96
  %v4176 = vpop.permute.xlu0 %4175
  %4177 = vrot.lane.b32.xlu0 %v287, 96
  %v4178 = vpop.permute.xlu0 %4177
  %4179 = vrot.lane.b32.xlu0 %v288, 96
  %v4180 = vpop.permute.xlu0 %4179
  %4181 = vrot.lane.b32.xlu0 %v289, 96
  %v4182 = vpop.permute.xlu0 %4181
  %4183 = vrot.lane.b32.xlu0 %v290, 96
  %v4184 = vpop.permute.xlu0 %4183
  %4185 = vrot.lane.b32.xlu0 %v291, 96
  %v4186 = vpop.permute.xlu0 %4185
  %4187 = vrot.lane.b32.xlu0 %v292, 96
  %v4188 = vpop.permute.xlu0 %4187
  %4189 = vrot.lane.b32.xlu0 %v293, 96
  %v4190 = vpop.permute.xlu0 %4189
  %4191 = vrot.lane.b32.xlu0 %v294, 96
  %v4192 = vpop.permute.xlu0 %4191
  %4193 = vrot.lane.b32.xlu0 %v295, 96
  %v4194 = vpop.permute.xlu0 %4193
  %4195 = vrot.lane.b32.xlu0 %v296, 96
  %v4196 = vpop.permute.xlu0 %4195
  %4197 = vrot.lane.b32.xlu0 %v297, 96
  %v4198 = vpop.permute.xlu0 %4197
  %4199 = vrot.lane.b32.xlu0 %v298, 96
  %v4200 = vpop.permute.xlu0 %4199
  %4201 = vrot.lane.b32.xlu0 %v299, 96
  %v4202 = vpop.permute.xlu0 %4201
  %4203 = vrot.lane.b32.xlu0 %v300, 96
  %v4204 = vpop.permute.xlu0 %4203
  %4205 = vrot.lane.b32.xlu0 %v301, 96
  %v4206 = vpop.permute.xlu0 %4205
  %4207 = vrot.lane.b32.xlu0 %v2256, 96
  %v4208 = vpop.permute.xlu0 %4207
  %4209 = vrot.lane.b32.xlu0 %v2258, 96
  %v4210 = vpop.permute.xlu0 %4209
  %4211 = vrot.lane.b32.xlu0 %v2260, 96
  %v4212 = vpop.permute.xlu0 %4211
  %4213 = vrot.lane.b32.xlu0 %v2262, 96
  %v4214 = vpop.permute.xlu0 %4213
  %4215 = vrot.lane.b32.xlu0 %v2264, 96
  %v4216 = vpop.permute.xlu0 %4215
  %4217 = vrot.lane.b32.xlu0 %v2266, 96
  %v4218 = vpop.permute.xlu0 %4217
  %4219 = vrot.lane.b32.xlu0 %v2268, 96
  %v4220 = vpop.permute.xlu0 %4219
  %4221 = vrot.lane.b32.xlu0 %v2270, 96
  %v4222 = vpop.permute.xlu0 %4221
  %4223 = vrot.lane.b32.xlu0 %v2272, 96
  %v4224 = vpop.permute.xlu0 %4223
  %4225 = vrot.lane.b32.xlu0 %v2274, 96
  %v4226 = vpop.permute.xlu0 %4225
  %4227 = vrot.lane.b32.xlu0 %v2276, 96
  %v4228 = vpop.permute.xlu0 %4227
  %4229 = vrot.lane.b32.xlu0 %v2278, 96
  %v4230 = vpop.permute.xlu0 %4229
  %4231 = vrot.lane.b32.xlu0 %v2280, 96
  %v4232 = vpop.permute.xlu0 %4231
  %4233 = vrot.lane.b32.xlu0 %v2282, 96
  %v4234 = vpop.permute.xlu0 %4233
  %4235 = vrot.lane.b32.xlu0 %v2284, 96
  %v4236 = vpop.permute.xlu0 %4235
  %4237 = vrot.lane.b32.xlu0 %v2286, 96
  %v4238 = vpop.permute.xlu0 %4237
  %4239 = vrot.lane.b32.xlu0 %v2288, 96
  %v4240 = vpop.permute.xlu0 %4239
  %4241 = vrot.lane.b32.xlu0 %v2290, 96
  %v4242 = vpop.permute.xlu0 %4241
  %4243 = vrot.lane.b32.xlu0 %v2292, 96
  %v4244 = vpop.permute.xlu0 %4243
  %4245 = vrot.lane.b32.xlu0 %v2294, 96
  %v4246 = vpop.permute.xlu0 %4245
  %4247 = vrot.lane.b32.xlu0 %v2296, 96
  %v4248 = vpop.permute.xlu0 %4247
  %4249 = vrot.lane.b32.xlu0 %v2298, 96
  %v4250 = vpop.permute.xlu0 %4249
  %4251 = vrot.lane.b32.xlu0 %v2300, 96
  %v4252 = vpop.permute.xlu0 %4251
  %4253 = vrot.lane.b32.xlu0 %v2302, 96
  %v4254 = vpop.permute.xlu0 %4253
  %4255 = vrot.lane.b32.xlu0 %v2304, 96
  %v4256 = vpop.permute.xlu0 %4255
  %4257 = vrot.lane.b32.xlu0 %v2306, 96
  %v4258 = vpop.permute.xlu0 %4257
  %4259 = vrot.lane.b32.xlu0 %v2308, 96
  %v4260 = vpop.permute.xlu0 %4259
  %4261 = vrot.lane.b32.xlu0 %v2310, 96
  %v4262 = vpop.permute.xlu0 %4261
  %4263 = vrot.lane.b32.xlu0 %v2312, 96
  %v4264 = vpop.permute.xlu0 %4263
  %4265 = vrot.lane.b32.xlu0 %v2314, 96
  %v4266 = vpop.permute.xlu0 %4265
  %4267 = vrot.lane.b32.xlu0 %v2316, 96
  %v4268 = vpop.permute.xlu0 %4267
  %4269 = vrot.lane.b32.xlu0 %v2318, 96
  %v4270 = vpop.permute.xlu0 %4269
  %4271 = vrot.lane.b32.xlu0 %v2320, 96
  %v4272 = vpop.permute.xlu0 %4271
  %4273 = vrot.lane.b32.xlu0 %v2322, 96
  %v4274 = vpop.permute.xlu0 %4273
  %4275 = vrot.lane.b32.xlu0 %v2324, 96
  %v4276 = vpop.permute.xlu0 %4275
  %4277 = vrot.lane.b32.xlu0 %v2326, 96
  %v4278 = vpop.permute.xlu0 %4277
  %4279 = vrot.lane.b32.xlu0 %v2328, 96
  %v4280 = vpop.permute.xlu0 %4279
  %4281 = vrot.lane.b32.xlu0 %v2330, 96
  %v4282 = vpop.permute.xlu0 %4281
  %4283 = vrot.lane.b32.xlu0 %v2332, 96
  %v4284 = vpop.permute.xlu0 %4283
  %4285 = vrot.lane.b32.xlu0 %v2334, 96
  %v4286 = vpop.permute.xlu0 %4285
  %4287 = vrot.lane.b32.xlu0 %v2336, 96
  %v4288 = vpop.permute.xlu0 %4287
  %4289 = vrot.lane.b32.xlu0 %v2338, 96
  %v4290 = vpop.permute.xlu0 %4289
  %4291 = vrot.lane.b32.xlu0 %v2340, 96
  %v4292 = vpop.permute.xlu0 %4291
  %4293 = vrot.lane.b32.xlu0 %v2342, 96
  %v4294 = vpop.permute.xlu0 %4293
  %4295 = vrot.lane.b32.xlu0 %v2344, 96
  %v4296 = vpop.permute.xlu0 %4295
  %4297 = vrot.lane.b32.xlu0 %v2346, 96
  %v4298 = vpop.permute.xlu0 %4297
  %4299 = vrot.lane.b32.xlu0 %v2348, 96
  %v4300 = vpop.permute.xlu0 %4299
  %4301 = vrot.lane.b32.xlu0 %v2350, 96
  %v4302 = vpop.permute.xlu0 %4301
  %v4305 = vpack.i.b16 %v4208, %v4176
  %v4306 = vshrl.u32 %v4176, 16
  %v4307 = vshrl.u32 %v4208, 16
  %v4308 = vpack.i.b16 %v4307, %v4306
  %v4311 = vpack.i.b16 %v4272, %v4240
  %v4312 = vshrl.u32 %v4240, 16
  %v4313 = vshrl.u32 %v4272, 16
  %v4314 = vpack.i.b16 %v4313, %v4312
  %v4317 = vpack.i.b16 %v4210, %v4178
  %v4318 = vshrl.u32 %v4178, 16
  %v4319 = vshrl.u32 %v4210, 16
  %v4320 = vpack.i.b16 %v4319, %v4318
  %v4323 = vpack.i.b16 %v4274, %v4242
  %v4324 = vshrl.u32 %v4242, 16
  %v4325 = vshrl.u32 %v4274, 16
  %v4326 = vpack.i.b16 %v4325, %v4324
  %v4329 = vpack.i.b16 %v4212, %v4180
  %v4330 = vshrl.u32 %v4180, 16
  %v4331 = vshrl.u32 %v4212, 16
  %v4332 = vpack.i.b16 %v4331, %v4330
  %v4335 = vpack.i.b16 %v4276, %v4244
  %v4336 = vshrl.u32 %v4244, 16
  %v4337 = vshrl.u32 %v4276, 16
  %v4338 = vpack.i.b16 %v4337, %v4336
  %v4341 = vpack.i.b16 %v4214, %v4182
  %v4342 = vshrl.u32 %v4182, 16
  %v4343 = vshrl.u32 %v4214, 16
  %v4344 = vpack.i.b16 %v4343, %v4342
  %v4347 = vpack.i.b16 %v4278, %v4246
  %v4348 = vshrl.u32 %v4246, 16
  %v4349 = vshrl.u32 %v4278, 16
  %v4350 = vpack.i.b16 %v4349, %v4348
  %v4353 = vpack.i.b16 %v4216, %v4184
  %v4354 = vshrl.u32 %v4184, 16
  %v4355 = vshrl.u32 %v4216, 16
  %v4356 = vpack.i.b16 %v4355, %v4354
  %v4359 = vpack.i.b16 %v4280, %v4248
  %v4360 = vshrl.u32 %v4248, 16
  %v4361 = vshrl.u32 %v4280, 16
  %v4362 = vpack.i.b16 %v4361, %v4360
  %v4365 = vpack.i.b16 %v4218, %v4186
  %v4366 = vshrl.u32 %v4186, 16
  %v4367 = vshrl.u32 %v4218, 16
  %v4368 = vpack.i.b16 %v4367, %v4366
  %v4371 = vpack.i.b16 %v4282, %v4250
  %v4372 = vshrl.u32 %v4250, 16
  %v4373 = vshrl.u32 %v4282, 16
  %v4374 = vpack.i.b16 %v4373, %v4372
  %v4377 = vpack.i.b16 %v4220, %v4188
  %v4378 = vshrl.u32 %v4188, 16
  %v4379 = vshrl.u32 %v4220, 16
  %v4380 = vpack.i.b16 %v4379, %v4378
  %v4383 = vpack.i.b16 %v4284, %v4252
  %v4384 = vshrl.u32 %v4252, 16
  %v4385 = vshrl.u32 %v4284, 16
  %v4386 = vpack.i.b16 %v4385, %v4384
  %v4389 = vpack.i.b16 %v4222, %v4190
  %v4390 = vshrl.u32 %v4190, 16
  %v4391 = vshrl.u32 %v4222, 16
  %v4392 = vpack.i.b16 %v4391, %v4390
  %v4395 = vpack.i.b16 %v4286, %v4254
  %v4396 = vshrl.u32 %v4254, 16
  %v4397 = vshrl.u32 %v4286, 16
  %v4398 = vpack.i.b16 %v4397, %v4396
  %v4401 = vpack.i.b16 %v4224, %v4192
  %v4402 = vshrl.u32 %v4192, 16
  %v4403 = vshrl.u32 %v4224, 16
  %v4404 = vpack.i.b16 %v4403, %v4402
  %v4407 = vpack.i.b16 %v4288, %v4256
  %v4408 = vshrl.u32 %v4256, 16
  %v4409 = vshrl.u32 %v4288, 16
  %v4410 = vpack.i.b16 %v4409, %v4408
  %v4413 = vpack.i.b16 %v4226, %v4194
  %v4414 = vshrl.u32 %v4194, 16
  %v4415 = vshrl.u32 %v4226, 16
  %v4416 = vpack.i.b16 %v4415, %v4414
  %v4419 = vpack.i.b16 %v4290, %v4258
  %v4420 = vshrl.u32 %v4258, 16
  %v4421 = vshrl.u32 %v4290, 16
  %v4422 = vpack.i.b16 %v4421, %v4420
  %v4425 = vpack.i.b16 %v4228, %v4196
  %v4426 = vshrl.u32 %v4196, 16
  %v4427 = vshrl.u32 %v4228, 16
  %v4428 = vpack.i.b16 %v4427, %v4426
  %v4431 = vpack.i.b16 %v4292, %v4260
  %v4432 = vshrl.u32 %v4260, 16
  %v4433 = vshrl.u32 %v4292, 16
  %v4434 = vpack.i.b16 %v4433, %v4432
  %v4437 = vpack.i.b16 %v4230, %v4198
  %v4438 = vshrl.u32 %v4198, 16
  %v4439 = vshrl.u32 %v4230, 16
  %v4440 = vpack.i.b16 %v4439, %v4438
  %v4443 = vpack.i.b16 %v4294, %v4262
  %v4444 = vshrl.u32 %v4262, 16
  %v4445 = vshrl.u32 %v4294, 16
  %v4446 = vpack.i.b16 %v4445, %v4444
  %v4449 = vpack.i.b16 %v4232, %v4200
  %v4450 = vshrl.u32 %v4200, 16
  %v4451 = vshrl.u32 %v4232, 16
  %v4452 = vpack.i.b16 %v4451, %v4450
  %v4455 = vpack.i.b16 %v4296, %v4264
  %v4456 = vshrl.u32 %v4264, 16
  %v4457 = vshrl.u32 %v4296, 16
  %v4458 = vpack.i.b16 %v4457, %v4456
  %v4461 = vpack.i.b16 %v4234, %v4202
  %v4462 = vshrl.u32 %v4202, 16
  %v4463 = vshrl.u32 %v4234, 16
  %v4464 = vpack.i.b16 %v4463, %v4462
  %v4467 = vpack.i.b16 %v4298, %v4266
  %v4468 = vshrl.u32 %v4266, 16
  %v4469 = vshrl.u32 %v4298, 16
  %v4470 = vpack.i.b16 %v4469, %v4468
  %v4473 = vpack.i.b16 %v4236, %v4204
  %v4474 = vshrl.u32 %v4204, 16
  %v4475 = vshrl.u32 %v4236, 16
  %v4476 = vpack.i.b16 %v4475, %v4474
  %v4479 = vpack.i.b16 %v4300, %v4268
  %v4480 = vshrl.u32 %v4268, 16
  %v4481 = vshrl.u32 %v4300, 16
  %v4482 = vpack.i.b16 %v4481, %v4480
  %v4485 = vpack.i.b16 %v4238, %v4206
  %v4486 = vshrl.u32 %v4206, 16
  %v4487 = vshrl.u32 %v4238, 16
  %v4488 = vpack.i.b16 %v4487, %v4486
  %v4491 = vpack.i.b16 %v4302, %v4270
  %v4492 = vshrl.u32 %v4270, 16
  %v4493 = vshrl.u32 %v4302, 16
  %v4494 = vpack.i.b16 %v4493, %v4492
  %v4497 = vunpack.c.l.s4 1983009808
  %v4498 = vunpack.c.0.s8 %v4497
  %v4499 = vperm.slane %v4305, %v4498
  %v4502 = vunpack.c.l.s4 1983009808
  %v4503 = vunpack.c.0.s8 %v4502
  %v4504 = vperm.slane %v4311, %v4503
  %v4505 = vrot.slane %v4504, 4
  %v4506 = vsel %vm617, %v4505, %v4499
  %v4507 = vrot.slane %v4499, 4
  %v4508 = vsel %vm617, %v4504, %v4507
  %v4510 = vunpack.c.l.s4 1934713408
  %v4511 = vunpack.c.0.s8 %v4510
  %v4512 = vperm.slane %v4506, %v4511
  %v4514 = vunpack.c.l.s4 1934713408
  %v4515 = vunpack.c.0.s8 %v4514
  %v4516 = vperm.slane %v4508, %v4515
  %v4517 = vrot.slane %v4512, 4
  %v4518 = vsel %vm617, 0, %v4517
  %v4519 = vrot.slane %v4516, 4
  %v4520 = vsel %vm617, 0, %v4519
  %v4523 = vunpack.c.l.s4 1983009808
  %v4524 = vunpack.c.0.s8 %v4523
  %v4525 = vperm.slane %v4308, %v4524
  %v4528 = vunpack.c.l.s4 1983009808
  %v4529 = vunpack.c.0.s8 %v4528
  %v4530 = vperm.slane %v4314, %v4529
  %v4531 = vrot.slane %v4530, 4
  %v4532 = vsel %vm617, %v4531, %v4525
  %v4533 = vrot.slane %v4525, 4
  %v4534 = vsel %vm617, %v4530, %v4533
  %v4536 = vunpack.c.l.s4 1934713408
  %v4537 = vunpack.c.0.s8 %v4536
  %v4538 = vperm.slane %v4532, %v4537
  %v4540 = vunpack.c.l.s4 1934713408
  %v4541 = vunpack.c.0.s8 %v4540
  %v4542 = vperm.slane %v4534, %v4541
  %v4543 = vrot.slane %v4538, 4
  %v4544 = vsel %vm617, 0, %v4543
  %v4545 = vrot.slane %v4542, 4
  %v4546 = vsel %vm617, 0, %v4545
  %v4549 = vunpack.c.l.s4 1983009808
  %v4550 = vunpack.c.0.s8 %v4549
  %v4551 = vperm.slane %v4317, %v4550
  %v4554 = vunpack.c.l.s4 1983009808
  %v4555 = vunpack.c.0.s8 %v4554
  %v4556 = vperm.slane %v4323, %v4555
  %v4557 = vrot.slane %v4556, 4
  %v4558 = vsel %vm617, %v4557, %v4551
  %v4559 = vrot.slane %v4551, 4
  %v4560 = vsel %vm617, %v4556, %v4559
  %v4562 = vunpack.c.l.s4 1934713408
  %v4563 = vunpack.c.0.s8 %v4562
  %v4564 = vperm.slane %v4558, %v4563
  %v4566 = vunpack.c.l.s4 1934713408
  %v4567 = vunpack.c.0.s8 %v4566
  %v4568 = vperm.slane %v4560, %v4567
  %v4569 = vrot.slane %v4564, 4
  %v4570 = vsel %vm617, 0, %v4569
  %v4571 = vrot.slane %v4568, 4
  %v4572 = vsel %vm617, 0, %v4571
  %v4575 = vunpack.c.l.s4 1983009808
  %v4576 = vunpack.c.0.s8 %v4575
  %v4577 = vperm.slane %v4320, %v4576
  %v4580 = vunpack.c.l.s4 1983009808
  %v4581 = vunpack.c.0.s8 %v4580
  %v4582 = vperm.slane %v4326, %v4581
  %v4583 = vrot.slane %v4582, 4
  %v4584 = vsel %vm617, %v4583, %v4577
  %v4585 = vrot.slane %v4577, 4
  %v4586 = vsel %vm617, %v4582, %v4585
  %v4588 = vunpack.c.l.s4 1934713408
  %v4589 = vunpack.c.0.s8 %v4588
  %v4590 = vperm.slane %v4584, %v4589
  %v4592 = vunpack.c.l.s4 1934713408
  %v4593 = vunpack.c.0.s8 %v4592
  %v4594 = vperm.slane %v4586, %v4593
  %v4595 = vrot.slane %v4590, 4
  %v4596 = vsel %vm617, 0, %v4595
  %v4597 = vrot.slane %v4594, 4
  %v4598 = vsel %vm617, 0, %v4597
  %v4601 = vunpack.c.l.s4 1983009808
  %v4602 = vunpack.c.0.s8 %v4601
  %v4603 = vperm.slane %v4329, %v4602
  %v4606 = vunpack.c.l.s4 1983009808
  %v4607 = vunpack.c.0.s8 %v4606
  %v4608 = vperm.slane %v4335, %v4607
  %v4609 = vrot.slane %v4608, 4
  %v4610 = vsel %vm617, %v4609, %v4603
  %v4611 = vrot.slane %v4603, 4
  %v4612 = vsel %vm617, %v4608, %v4611
  %v4614 = vunpack.c.l.s4 1934713408
  %v4615 = vunpack.c.0.s8 %v4614
  %v4616 = vperm.slane %v4610, %v4615
  %v4618 = vunpack.c.l.s4 1934713408
  %v4619 = vunpack.c.0.s8 %v4618
  %v4620 = vperm.slane %v4612, %v4619
  %v4621 = vrot.slane %v4616, 4
  %v4622 = vsel %vm617, 0, %v4621
  %v4623 = vrot.slane %v4620, 4
  %v4624 = vsel %vm617, 0, %v4623
  %v4627 = vunpack.c.l.s4 1983009808
  %v4628 = vunpack.c.0.s8 %v4627
  %v4629 = vperm.slane %v4332, %v4628
  %v4632 = vunpack.c.l.s4 1983009808
  %v4633 = vunpack.c.0.s8 %v4632
  %v4634 = vperm.slane %v4338, %v4633
  %v4635 = vrot.slane %v4634, 4
  %v4636 = vsel %vm617, %v4635, %v4629
  %v4637 = vrot.slane %v4629, 4
  %v4638 = vsel %vm617, %v4634, %v4637
  %v4640 = vunpack.c.l.s4 1934713408
  %v4641 = vunpack.c.0.s8 %v4640
  %v4642 = vperm.slane %v4636, %v4641
  %v4644 = vunpack.c.l.s4 1934713408
  %v4645 = vunpack.c.0.s8 %v4644
  %v4646 = vperm.slane %v4638, %v4645
  %v4647 = vrot.slane %v4642, 4
  %v4648 = vsel %vm617, 0, %v4647
  %v4649 = vrot.slane %v4646, 4
  %v4650 = vsel %vm617, 0, %v4649
  %v4653 = vunpack.c.l.s4 1983009808
  %v4654 = vunpack.c.0.s8 %v4653
  %v4655 = vperm.slane %v4341, %v4654
  %v4658 = vunpack.c.l.s4 1983009808
  %v4659 = vunpack.c.0.s8 %v4658
  %v4660 = vperm.slane %v4347, %v4659
  %v4661 = vrot.slane %v4660, 4
  %v4662 = vsel %vm617, %v4661, %v4655
  %v4663 = vrot.slane %v4655, 4
  %v4664 = vsel %vm617, %v4660, %v4663
  %v4666 = vunpack.c.l.s4 1934713408
  %v4667 = vunpack.c.0.s8 %v4666
  %v4668 = vperm.slane %v4662, %v4667
  %v4670 = vunpack.c.l.s4 1934713408
  %v4671 = vunpack.c.0.s8 %v4670
  %v4672 = vperm.slane %v4664, %v4671
  %v4673 = vrot.slane %v4668, 4
  %v4674 = vsel %vm617, 0, %v4673
  %v4675 = vrot.slane %v4672, 4
  %v4676 = vsel %vm617, 0, %v4675
  %v4679 = vunpack.c.l.s4 1983009808
  %v4680 = vunpack.c.0.s8 %v4679
  %v4681 = vperm.slane %v4344, %v4680
  %v4684 = vunpack.c.l.s4 1983009808
  %v4685 = vunpack.c.0.s8 %v4684
  %v4686 = vperm.slane %v4350, %v4685
  %v4687 = vrot.slane %v4686, 4
  %v4688 = vsel %vm617, %v4687, %v4681
  %v4689 = vrot.slane %v4681, 4
  %v4690 = vsel %vm617, %v4686, %v4689
  %v4692 = vunpack.c.l.s4 1934713408
  %v4693 = vunpack.c.0.s8 %v4692
  %v4694 = vperm.slane %v4688, %v4693
  %v4696 = vunpack.c.l.s4 1934713408
  %v4697 = vunpack.c.0.s8 %v4696
  %v4698 = vperm.slane %v4690, %v4697
  %v4699 = vrot.slane %v4694, 4
  %v4700 = vsel %vm617, 0, %v4699
  %v4701 = vrot.slane %v4698, 4
  %v4702 = vsel %vm617, 0, %v4701
  %v4705 = vunpack.c.l.s4 1983009808
  %v4706 = vunpack.c.0.s8 %v4705
  %v4707 = vperm.slane %v4353, %v4706
  %v4710 = vunpack.c.l.s4 1983009808
  %v4711 = vunpack.c.0.s8 %v4710
  %v4712 = vperm.slane %v4359, %v4711
  %v4713 = vrot.slane %v4712, 4
  %v4714 = vsel %vm617, %v4713, %v4707
  %v4715 = vrot.slane %v4707, 4
  %v4716 = vsel %vm617, %v4712, %v4715
  %v4718 = vunpack.c.l.s4 1934713408
  %v4719 = vunpack.c.0.s8 %v4718
  %v4720 = vperm.slane %v4714, %v4719
  %v4722 = vunpack.c.l.s4 1934713408
  %v4723 = vunpack.c.0.s8 %v4722
  %v4724 = vperm.slane %v4716, %v4723
  %v4725 = vrot.slane %v4720, 4
  %v4726 = vsel %vm617, 0, %v4725
  %v4727 = vrot.slane %v4724, 4
  %v4728 = vsel %vm617, 0, %v4727
  %v4731 = vunpack.c.l.s4 1983009808
  %v4732 = vunpack.c.0.s8 %v4731
  %v4733 = vperm.slane %v4356, %v4732
  %v4736 = vunpack.c.l.s4 1983009808
  %v4737 = vunpack.c.0.s8 %v4736
  %v4738 = vperm.slane %v4362, %v4737
  %v4739 = vrot.slane %v4738, 4
  %v4740 = vsel %vm617, %v4739, %v4733
  %v4741 = vrot.slane %v4733, 4
  %v4742 = vsel %vm617, %v4738, %v4741
  %v4744 = vunpack.c.l.s4 1934713408
  %v4745 = vunpack.c.0.s8 %v4744
  %v4746 = vperm.slane %v4740, %v4745
  %v4748 = vunpack.c.l.s4 1934713408
  %v4749 = vunpack.c.0.s8 %v4748
  %v4750 = vperm.slane %v4742, %v4749
  %v4751 = vrot.slane %v4746, 4
  %v4752 = vsel %vm617, 0, %v4751
  %v4753 = vrot.slane %v4750, 4
  %v4754 = vsel %vm617, 0, %v4753
  %v4757 = vunpack.c.l.s4 1983009808
  %v4758 = vunpack.c.0.s8 %v4757
  %v4759 = vperm.slane %v4365, %v4758
  %v4762 = vunpack.c.l.s4 1983009808
  %v4763 = vunpack.c.0.s8 %v4762
  %v4764 = vperm.slane %v4371, %v4763
  %v4765 = vrot.slane %v4764, 4
  %v4766 = vsel %vm617, %v4765, %v4759
  %v4767 = vrot.slane %v4759, 4
  %v4768 = vsel %vm617, %v4764, %v4767
  %v4770 = vunpack.c.l.s4 1934713408
  %v4771 = vunpack.c.0.s8 %v4770
  %v4772 = vperm.slane %v4766, %v4771
  %v4774 = vunpack.c.l.s4 1934713408
  %v4775 = vunpack.c.0.s8 %v4774
  %v4776 = vperm.slane %v4768, %v4775
  %v4777 = vrot.slane %v4772, 4
  %v4778 = vsel %vm617, 0, %v4777
  %v4779 = vrot.slane %v4776, 4
  %v4780 = vsel %vm617, 0, %v4779
  %v4783 = vunpack.c.l.s4 1983009808
  %v4784 = vunpack.c.0.s8 %v4783
  %v4785 = vperm.slane %v4368, %v4784
  %v4788 = vunpack.c.l.s4 1983009808
  %v4789 = vunpack.c.0.s8 %v4788
  %v4790 = vperm.slane %v4374, %v4789
  %v4791 = vrot.slane %v4790, 4
  %v4792 = vsel %vm617, %v4791, %v4785
  %v4793 = vrot.slane %v4785, 4
  %v4794 = vsel %vm617, %v4790, %v4793
  %v4796 = vunpack.c.l.s4 1934713408
  %v4797 = vunpack.c.0.s8 %v4796
  %v4798 = vperm.slane %v4792, %v4797
  %v4800 = vunpack.c.l.s4 1934713408
  %v4801 = vunpack.c.0.s8 %v4800
  %v4802 = vperm.slane %v4794, %v4801
  %v4803 = vrot.slane %v4798, 4
  %v4804 = vsel %vm617, 0, %v4803
  %v4805 = vrot.slane %v4802, 4
  %v4806 = vsel %vm617, 0, %v4805
  %v4809 = vunpack.c.l.s4 1983009808
  %v4810 = vunpack.c.0.s8 %v4809
  %v4811 = vperm.slane %v4377, %v4810
  %v4814 = vunpack.c.l.s4 1983009808
  %v4815 = vunpack.c.0.s8 %v4814
  %v4816 = vperm.slane %v4383, %v4815
  %v4817 = vrot.slane %v4816, 4
  %v4818 = vsel %vm617, %v4817, %v4811
  %v4819 = vrot.slane %v4811, 4
  %v4820 = vsel %vm617, %v4816, %v4819
  %v4822 = vunpack.c.l.s4 1934713408
  %v4823 = vunpack.c.0.s8 %v4822
  %v4824 = vperm.slane %v4818, %v4823
  %v4826 = vunpack.c.l.s4 1934713408
  %v4827 = vunpack.c.0.s8 %v4826
  %v4828 = vperm.slane %v4820, %v4827
  %v4829 = vrot.slane %v4824, 4
  %v4830 = vsel %vm617, 0, %v4829
  %v4831 = vrot.slane %v4828, 4
  %v4832 = vsel %vm617, 0, %v4831
  %v4835 = vunpack.c.l.s4 1983009808
  %v4836 = vunpack.c.0.s8 %v4835
  %v4837 = vperm.slane %v4380, %v4836
  %v4840 = vunpack.c.l.s4 1983009808
  %v4841 = vunpack.c.0.s8 %v4840
  %v4842 = vperm.slane %v4386, %v4841
  %v4843 = vrot.slane %v4842, 4
  %v4844 = vsel %vm617, %v4843, %v4837
  %v4845 = vrot.slane %v4837, 4
  %v4846 = vsel %vm617, %v4842, %v4845
  %v4848 = vunpack.c.l.s4 1934713408
  %v4849 = vunpack.c.0.s8 %v4848
  %v4850 = vperm.slane %v4844, %v4849
  %v4852 = vunpack.c.l.s4 1934713408
  %v4853 = vunpack.c.0.s8 %v4852
  %v4854 = vperm.slane %v4846, %v4853
  %v4855 = vrot.slane %v4850, 4
  %v4856 = vsel %vm617, 0, %v4855
  %v4857 = vrot.slane %v4854, 4
  %v4858 = vsel %vm617, 0, %v4857
  %v4861 = vunpack.c.l.s4 1983009808
  %v4862 = vunpack.c.0.s8 %v4861
  %v4863 = vperm.slane %v4389, %v4862
  %v4866 = vunpack.c.l.s4 1983009808
  %v4867 = vunpack.c.0.s8 %v4866
  %v4868 = vperm.slane %v4395, %v4867
  %v4869 = vrot.slane %v4868, 4
  %v4870 = vsel %vm617, %v4869, %v4863
  %v4871 = vrot.slane %v4863, 4
  %v4872 = vsel %vm617, %v4868, %v4871
  %v4874 = vunpack.c.l.s4 1934713408
  %v4875 = vunpack.c.0.s8 %v4874
  %v4876 = vperm.slane %v4870, %v4875
  %v4878 = vunpack.c.l.s4 1934713408
  %v4879 = vunpack.c.0.s8 %v4878
  %v4880 = vperm.slane %v4872, %v4879
  %v4881 = vrot.slane %v4876, 4
  %v4882 = vsel %vm617, 0, %v4881
  %v4883 = vrot.slane %v4880, 4
  %v4884 = vsel %vm617, 0, %v4883
  %v4887 = vunpack.c.l.s4 1983009808
  %v4888 = vunpack.c.0.s8 %v4887
  %v4889 = vperm.slane %v4392, %v4888
  %v4892 = vunpack.c.l.s4 1983009808
  %v4893 = vunpack.c.0.s8 %v4892
  %v4894 = vperm.slane %v4398, %v4893
  %v4895 = vrot.slane %v4894, 4
  %v4896 = vsel %vm617, %v4895, %v4889
  %v4897 = vrot.slane %v4889, 4
  %v4898 = vsel %vm617, %v4894, %v4897
  %v4900 = vunpack.c.l.s4 1934713408
  %v4901 = vunpack.c.0.s8 %v4900
  %v4902 = vperm.slane %v4896, %v4901
  %v4904 = vunpack.c.l.s4 1934713408
  %v4905 = vunpack.c.0.s8 %v4904
  %v4906 = vperm.slane %v4898, %v4905
  %v4907 = vrot.slane %v4902, 4
  %v4908 = vsel %vm617, 0, %v4907
  %v4909 = vrot.slane %v4906, 4
  %v4910 = vsel %vm617, 0, %v4909
  %v4913 = vunpack.c.l.s4 1983009808
  %v4914 = vunpack.c.0.s8 %v4913
  %v4915 = vperm.slane %v4401, %v4914
  %v4918 = vunpack.c.l.s4 1983009808
  %v4919 = vunpack.c.0.s8 %v4918
  %v4920 = vperm.slane %v4407, %v4919
  %v4921 = vrot.slane %v4920, 4
  %v4922 = vsel %vm617, %v4921, %v4915
  %v4923 = vrot.slane %v4915, 4
  %v4924 = vsel %vm617, %v4920, %v4923
  %v4926 = vunpack.c.l.s4 1934713408
  %v4927 = vunpack.c.0.s8 %v4926
  %v4928 = vperm.slane %v4922, %v4927
  %v4930 = vunpack.c.l.s4 1934713408
  %v4931 = vunpack.c.0.s8 %v4930
  %v4932 = vperm.slane %v4924, %v4931
  %v4933 = vrot.slane %v4928, 4
  %v4934 = vsel %vm617, 0, %v4933
  %v4935 = vrot.slane %v4932, 4
  %v4936 = vsel %vm617, 0, %v4935
  %v4939 = vunpack.c.l.s4 1983009808
  %v4940 = vunpack.c.0.s8 %v4939
  %v4941 = vperm.slane %v4404, %v4940
  %v4944 = vunpack.c.l.s4 1983009808
  %v4945 = vunpack.c.0.s8 %v4944
  %v4946 = vperm.slane %v4410, %v4945
  %v4947 = vrot.slane %v4946, 4
  %v4948 = vsel %vm617, %v4947, %v4941
  %v4949 = vrot.slane %v4941, 4
  %v4950 = vsel %vm617, %v4946, %v4949
  %v4952 = vunpack.c.l.s4 1934713408
  %v4953 = vunpack.c.0.s8 %v4952
  %v4954 = vperm.slane %v4948, %v4953
  %v4956 = vunpack.c.l.s4 1934713408
  %v4957 = vunpack.c.0.s8 %v4956
  %v4958 = vperm.slane %v4950, %v4957
  %v4959 = vrot.slane %v4954, 4
  %v4960 = vsel %vm617, 0, %v4959
  %v4961 = vrot.slane %v4958, 4
  %v4962 = vsel %vm617, 0, %v4961
  %v4965 = vunpack.c.l.s4 1983009808
  %v4966 = vunpack.c.0.s8 %v4965
  %v4967 = vperm.slane %v4413, %v4966
  %v4970 = vunpack.c.l.s4 1983009808
  %v4971 = vunpack.c.0.s8 %v4970
  %v4972 = vperm.slane %v4419, %v4971
  %v4973 = vrot.slane %v4972, 4
  %v4974 = vsel %vm617, %v4973, %v4967
  %v4975 = vrot.slane %v4967, 4
  %v4976 = vsel %vm617, %v4972, %v4975
  %v4978 = vunpack.c.l.s4 1934713408
  %v4979 = vunpack.c.0.s8 %v4978
  %v4980 = vperm.slane %v4974, %v4979
  %v4982 = vunpack.c.l.s4 1934713408
  %v4983 = vunpack.c.0.s8 %v4982
  %v4984 = vperm.slane %v4976, %v4983
  %v4985 = vrot.slane %v4980, 4
  %v4986 = vsel %vm617, 0, %v4985
  %v4987 = vrot.slane %v4984, 4
  %v4988 = vsel %vm617, 0, %v4987
  %v4991 = vunpack.c.l.s4 1983009808
  %v4992 = vunpack.c.0.s8 %v4991
  %v4993 = vperm.slane %v4416, %v4992
  %v4996 = vunpack.c.l.s4 1983009808
  %v4997 = vunpack.c.0.s8 %v4996
  %v4998 = vperm.slane %v4422, %v4997
  %v4999 = vrot.slane %v4998, 4
  %v5000 = vsel %vm617, %v4999, %v4993
  %v5001 = vrot.slane %v4993, 4
  %v5002 = vsel %vm617, %v4998, %v5001
  %v5004 = vunpack.c.l.s4 1934713408
  %v5005 = vunpack.c.0.s8 %v5004
  %v5006 = vperm.slane %v5000, %v5005
  %v5008 = vunpack.c.l.s4 1934713408
  %v5009 = vunpack.c.0.s8 %v5008
  %v5010 = vperm.slane %v5002, %v5009
  %v5011 = vrot.slane %v5006, 4
  %v5012 = vsel %vm617, 0, %v5011
  %v5013 = vrot.slane %v5010, 4
  %v5014 = vsel %vm617, 0, %v5013
  %v5017 = vunpack.c.l.s4 1983009808
  %v5018 = vunpack.c.0.s8 %v5017
  %v5019 = vperm.slane %v4425, %v5018
  %v5022 = vunpack.c.l.s4 1983009808
  %v5023 = vunpack.c.0.s8 %v5022
  %v5024 = vperm.slane %v4431, %v5023
  %v5025 = vrot.slane %v5024, 4
  %v5026 = vsel %vm617, %v5025, %v5019
  %v5027 = vrot.slane %v5019, 4
  %v5028 = vsel %vm617, %v5024, %v5027
  %v5030 = vunpack.c.l.s4 1934713408
  %v5031 = vunpack.c.0.s8 %v5030
  %v5032 = vperm.slane %v5026, %v5031
  %v5034 = vunpack.c.l.s4 1934713408
  %v5035 = vunpack.c.0.s8 %v5034
  %v5036 = vperm.slane %v5028, %v5035
  %v5037 = vrot.slane %v5032, 4
  %v5038 = vsel %vm617, 0, %v5037
  %v5039 = vrot.slane %v5036, 4
  %v5040 = vsel %vm617, 0, %v5039
  %v5043 = vunpack.c.l.s4 1983009808
  %v5044 = vunpack.c.0.s8 %v5043
  %v5045 = vperm.slane %v4428, %v5044
  %v5048 = vunpack.c.l.s4 1983009808
  %v5049 = vunpack.c.0.s8 %v5048
  %v5050 = vperm.slane %v4434, %v5049
  %v5051 = vrot.slane %v5050, 4
  %v5052 = vsel %vm617, %v5051, %v5045
  %v5053 = vrot.slane %v5045, 4
  %v5054 = vsel %vm617, %v5050, %v5053
  %v5056 = vunpack.c.l.s4 1934713408
  %v5057 = vunpack.c.0.s8 %v5056
  %v5058 = vperm.slane %v5052, %v5057
  %v5060 = vunpack.c.l.s4 1934713408
  %v5061 = vunpack.c.0.s8 %v5060
  %v5062 = vperm.slane %v5054, %v5061
  %v5063 = vrot.slane %v5058, 4
  %v5064 = vsel %vm617, 0, %v5063
  %v5065 = vrot.slane %v5062, 4
  %v5066 = vsel %vm617, 0, %v5065
  %v5069 = vunpack.c.l.s4 1983009808
  %v5070 = vunpack.c.0.s8 %v5069
  %v5071 = vperm.slane %v4437, %v5070
  %v5074 = vunpack.c.l.s4 1983009808
  %v5075 = vunpack.c.0.s8 %v5074
  %v5076 = vperm.slane %v4443, %v5075
  %v5077 = vrot.slane %v5076, 4
  %v5078 = vsel %vm617, %v5077, %v5071
  %v5079 = vrot.slane %v5071, 4
  %v5080 = vsel %vm617, %v5076, %v5079
  %v5082 = vunpack.c.l.s4 1934713408
  %v5083 = vunpack.c.0.s8 %v5082
  %v5084 = vperm.slane %v5078, %v5083
  %v5086 = vunpack.c.l.s4 1934713408
  %v5087 = vunpack.c.0.s8 %v5086
  %v5088 = vperm.slane %v5080, %v5087
  %v5089 = vrot.slane %v5084, 4
  %v5090 = vsel %vm617, 0, %v5089
  %v5091 = vrot.slane %v5088, 4
  %v5092 = vsel %vm617, 0, %v5091
  %v5095 = vunpack.c.l.s4 1983009808
  %v5096 = vunpack.c.0.s8 %v5095
  %v5097 = vperm.slane %v4440, %v5096
  %v5100 = vunpack.c.l.s4 1983009808
  %v5101 = vunpack.c.0.s8 %v5100
  %v5102 = vperm.slane %v4446, %v5101
  %v5103 = vrot.slane %v5102, 4
  %v5104 = vsel %vm617, %v5103, %v5097
  %v5105 = vrot.slane %v5097, 4
  %v5106 = vsel %vm617, %v5102, %v5105
  %v5108 = vunpack.c.l.s4 1934713408
  %v5109 = vunpack.c.0.s8 %v5108
  %v5110 = vperm.slane %v5104, %v5109
  %v5112 = vunpack.c.l.s4 1934713408
  %v5113 = vunpack.c.0.s8 %v5112
  %v5114 = vperm.slane %v5106, %v5113
  %v5115 = vrot.slane %v5110, 4
  %v5116 = vsel %vm617, 0, %v5115
  %v5117 = vrot.slane %v5114, 4
  %v5118 = vsel %vm617, 0, %v5117
  %v5121 = vunpack.c.l.s4 1983009808
  %v5122 = vunpack.c.0.s8 %v5121
  %v5123 = vperm.slane %v4449, %v5122
  %v5126 = vunpack.c.l.s4 1983009808
  %v5127 = vunpack.c.0.s8 %v5126
  %v5128 = vperm.slane %v4455, %v5127
  %v5129 = vrot.slane %v5128, 4
  %v5130 = vsel %vm617, %v5129, %v5123
  %v5131 = vrot.slane %v5123, 4
  %v5132 = vsel %vm617, %v5128, %v5131
  %v5134 = vunpack.c.l.s4 1934713408
  %v5135 = vunpack.c.0.s8 %v5134
  %v5136 = vperm.slane %v5130, %v5135
  %v5138 = vunpack.c.l.s4 1934713408
  %v5139 = vunpack.c.0.s8 %v5138
  %v5140 = vperm.slane %v5132, %v5139
  %v5141 = vrot.slane %v5136, 4
  %v5142 = vsel %vm617, 0, %v5141
  %v5143 = vrot.slane %v5140, 4
  %v5144 = vsel %vm617, 0, %v5143
  %v5147 = vunpack.c.l.s4 1983009808
  %v5148 = vunpack.c.0.s8 %v5147
  %v5149 = vperm.slane %v4452, %v5148
  %v5152 = vunpack.c.l.s4 1983009808
  %v5153 = vunpack.c.0.s8 %v5152
  %v5154 = vperm.slane %v4458, %v5153
  %v5155 = vrot.slane %v5154, 4
  %v5156 = vsel %vm617, %v5155, %v5149
  %v5157 = vrot.slane %v5149, 4
  %v5158 = vsel %vm617, %v5154, %v5157
  %v5160 = vunpack.c.l.s4 1934713408
  %v5161 = vunpack.c.0.s8 %v5160
  %v5162 = vperm.slane %v5156, %v5161
  %v5164 = vunpack.c.l.s4 1934713408
  %v5165 = vunpack.c.0.s8 %v5164
  %v5166 = vperm.slane %v5158, %v5165
  %v5167 = vrot.slane %v5162, 4
  %v5168 = vsel %vm617, 0, %v5167
  %v5169 = vrot.slane %v5166, 4
  %v5170 = vsel %vm617, 0, %v5169
  %v5173 = vunpack.c.l.s4 1983009808
  %v5174 = vunpack.c.0.s8 %v5173
  %v5175 = vperm.slane %v4461, %v5174
  %v5178 = vunpack.c.l.s4 1983009808
  %v5179 = vunpack.c.0.s8 %v5178
  %v5180 = vperm.slane %v4467, %v5179
  %v5181 = vrot.slane %v5180, 4
  %v5182 = vsel %vm617, %v5181, %v5175
  %v5183 = vrot.slane %v5175, 4
  %v5184 = vsel %vm617, %v5180, %v5183
  %v5186 = vunpack.c.l.s4 1934713408
  %v5187 = vunpack.c.0.s8 %v5186
  %v5188 = vperm.slane %v5182, %v5187
  %v5190 = vunpack.c.l.s4 1934713408
  %v5191 = vunpack.c.0.s8 %v5190
  %v5192 = vperm.slane %v5184, %v5191
  %v5193 = vrot.slane %v5188, 4
  %v5194 = vsel %vm617, 0, %v5193
  %v5195 = vrot.slane %v5192, 4
  %v5196 = vsel %vm617, 0, %v5195
  %v5199 = vunpack.c.l.s4 1983009808
  %v5200 = vunpack.c.0.s8 %v5199
  %v5201 = vperm.slane %v4464, %v5200
  %v5204 = vunpack.c.l.s4 1983009808
  %v5205 = vunpack.c.0.s8 %v5204
  %v5206 = vperm.slane %v4470, %v5205
  %v5207 = vrot.slane %v5206, 4
  %v5208 = vsel %vm617, %v5207, %v5201
  %v5209 = vrot.slane %v5201, 4
  %v5210 = vsel %vm617, %v5206, %v5209
  %v5212 = vunpack.c.l.s4 1934713408
  %v5213 = vunpack.c.0.s8 %v5212
  %v5214 = vperm.slane %v5208, %v5213
  %v5216 = vunpack.c.l.s4 1934713408
  %v5217 = vunpack.c.0.s8 %v5216
  %v5218 = vperm.slane %v5210, %v5217
  %v5219 = vrot.slane %v5214, 4
  %v5220 = vsel %vm617, 0, %v5219
  %v5221 = vrot.slane %v5218, 4
  %v5222 = vsel %vm617, 0, %v5221
  %v5225 = vunpack.c.l.s4 1983009808
  %v5226 = vunpack.c.0.s8 %v5225
  %v5227 = vperm.slane %v4473, %v5226
  %v5230 = vunpack.c.l.s4 1983009808
  %v5231 = vunpack.c.0.s8 %v5230
  %v5232 = vperm.slane %v4479, %v5231
  %v5233 = vrot.slane %v5232, 4
  %v5234 = vsel %vm617, %v5233, %v5227
  %v5235 = vrot.slane %v5227, 4
  %v5236 = vsel %vm617, %v5232, %v5235
  %v5238 = vunpack.c.l.s4 1934713408
  %v5239 = vunpack.c.0.s8 %v5238
  %v5240 = vperm.slane %v5234, %v5239
  %v5242 = vunpack.c.l.s4 1934713408
  %v5243 = vunpack.c.0.s8 %v5242
  %v5244 = vperm.slane %v5236, %v5243
  %v5245 = vrot.slane %v5240, 4
  %v5246 = vsel %vm617, 0, %v5245
  %v5247 = vrot.slane %v5244, 4
  %v5248 = vsel %vm617, 0, %v5247
  %v5251 = vunpack.c.l.s4 1983009808
  %v5252 = vunpack.c.0.s8 %v5251
  %v5253 = vperm.slane %v4476, %v5252
  %v5256 = vunpack.c.l.s4 1983009808
  %v5257 = vunpack.c.0.s8 %v5256
  %v5258 = vperm.slane %v4482, %v5257
  %v5259 = vrot.slane %v5258, 4
  %v5260 = vsel %vm617, %v5259, %v5253
  %v5261 = vrot.slane %v5253, 4
  %v5262 = vsel %vm617, %v5258, %v5261
  %v5264 = vunpack.c.l.s4 1934713408
  %v5265 = vunpack.c.0.s8 %v5264
  %v5266 = vperm.slane %v5260, %v5265
  %v5268 = vunpack.c.l.s4 1934713408
  %v5269 = vunpack.c.0.s8 %v5268
  %v5270 = vperm.slane %v5262, %v5269
  %v5271 = vrot.slane %v5266, 4
  %v5272 = vsel %vm617, 0, %v5271
  %v5273 = vrot.slane %v5270, 4
  %v5274 = vsel %vm617, 0, %v5273
  %v5277 = vunpack.c.l.s4 1983009808
  %v5278 = vunpack.c.0.s8 %v5277
  %v5279 = vperm.slane %v4485, %v5278
  %v5282 = vunpack.c.l.s4 1983009808
  %v5283 = vunpack.c.0.s8 %v5282
  %v5284 = vperm.slane %v4491, %v5283
  %v5285 = vrot.slane %v5284, 4
  %v5286 = vsel %vm617, %v5285, %v5279
  %v5287 = vrot.slane %v5279, 4
  %v5288 = vsel %vm617, %v5284, %v5287
  %v5290 = vunpack.c.l.s4 1934713408
  %v5291 = vunpack.c.0.s8 %v5290
  %v5292 = vperm.slane %v5286, %v5291
  %v5294 = vunpack.c.l.s4 1934713408
  %v5295 = vunpack.c.0.s8 %v5294
  %v5296 = vperm.slane %v5288, %v5295
  %v5297 = vrot.slane %v5292, 4
  %v5298 = vsel %vm617, 0, %v5297
  %v5299 = vrot.slane %v5296, 4
  %v5300 = vsel %vm617, 0, %v5299
  %v5303 = vunpack.c.l.s4 1983009808
  %v5304 = vunpack.c.0.s8 %v5303
  %v5305 = vperm.slane %v4488, %v5304
  %v5308 = vunpack.c.l.s4 1983009808
  %v5309 = vunpack.c.0.s8 %v5308
  %v5310 = vperm.slane %v4494, %v5309
  %v5311 = vrot.slane %v5310, 4
  %v5312 = vsel %vm617, %v5311, %v5305
  %v5313 = vrot.slane %v5305, 4
  %v5314 = vsel %vm617, %v5310, %v5313
  %v5316 = vunpack.c.l.s4 1934713408
  %v5317 = vunpack.c.0.s8 %v5316
  %v5318 = vperm.slane %v5312, %v5317
  %v5320 = vunpack.c.l.s4 1934713408
  %v5321 = vunpack.c.0.s8 %v5320
  %v5322 = vperm.slane %v5314, %v5321
  %v5323 = vrot.slane %v5318, 4
  %v5324 = vsel %vm617, 0, %v5323
  %v5325 = vrot.slane %v5322, 4
  %v5326 = vsel %vm617, 0, %v5325
  %v5327 = vsel %vm617, %v4519, %v4512
  %v5329 = vunpack.c.l.s4 1983009808
  %v5330 = vunpack.c.0.s8 %v5329
  %v5331 = vperm.slane %v5327, %v5330
  %v5332 = vrot.slane %v4520, 4
  %v5333 = vsel %vm617, %v5332, %v4518
  %v5335 = vunpack.c.l.s4 1983009808
  %v5336 = vunpack.c.0.s8 %v5335
  %v5337 = vperm.slane %v5333, %v5336
  %v5338 = vrot.slane %v5337, 4
  %v5339 = vsel %vm617, %v5338, %v5331
  %v5341 = vunpack.c.l.s4 1934713408
  %v5342 = vunpack.c.0.s8 %v5341
  %v5343 = vperm.slane %v5339, %v5342
  %v5344 = vrot.slane %v5343, 4
  %v5345 = vsel %vm617, 0, %v5344
  %v5346 = vsel %vm617, %v4545, %v4538
  %v5348 = vunpack.c.l.s4 1983009808
  %v5349 = vunpack.c.0.s8 %v5348
  %v5350 = vperm.slane %v5346, %v5349
  %v5351 = vrot.slane %v4546, 4
  %v5352 = vsel %vm617, %v5351, %v4544
  %v5354 = vunpack.c.l.s4 1983009808
  %v5355 = vunpack.c.0.s8 %v5354
  %v5356 = vperm.slane %v5352, %v5355
  %v5357 = vrot.slane %v5356, 4
  %v5358 = vsel %vm617, %v5357, %v5350
  %v5360 = vunpack.c.l.s4 1934713408
  %v5361 = vunpack.c.0.s8 %v5360
  %v5362 = vperm.slane %v5358, %v5361
  %v5363 = vrot.slane %v5362, 4
  %v5364 = vsel %vm617, 0, %v5363
  %v5365 = vsel %vm617, %v4571, %v4564
  %v5367 = vunpack.c.l.s4 1983009808
  %v5368 = vunpack.c.0.s8 %v5367
  %v5369 = vperm.slane %v5365, %v5368
  %v5370 = vrot.slane %v4572, 4
  %v5371 = vsel %vm617, %v5370, %v4570
  %v5373 = vunpack.c.l.s4 1983009808
  %v5374 = vunpack.c.0.s8 %v5373
  %v5375 = vperm.slane %v5371, %v5374
  %v5376 = vrot.slane %v5375, 4
  %v5377 = vsel %vm617, %v5376, %v5369
  %v5379 = vunpack.c.l.s4 1934713408
  %v5380 = vunpack.c.0.s8 %v5379
  %v5381 = vperm.slane %v5377, %v5380
  %v5382 = vrot.slane %v5381, 4
  %v5383 = vsel %vm617, 0, %v5382
  %v5384 = vsel %vm617, %v4597, %v4590
  %v5386 = vunpack.c.l.s4 1983009808
  %v5387 = vunpack.c.0.s8 %v5386
  %v5388 = vperm.slane %v5384, %v5387
  %v5389 = vrot.slane %v4598, 4
  %v5390 = vsel %vm617, %v5389, %v4596
  %v5392 = vunpack.c.l.s4 1983009808
  %v5393 = vunpack.c.0.s8 %v5392
  %v5394 = vperm.slane %v5390, %v5393
  %v5395 = vrot.slane %v5394, 4
  %v5396 = vsel %vm617, %v5395, %v5388
  %v5398 = vunpack.c.l.s4 1934713408
  %v5399 = vunpack.c.0.s8 %v5398
  %v5400 = vperm.slane %v5396, %v5399
  %v5401 = vrot.slane %v5400, 4
  %v5402 = vsel %vm617, 0, %v5401
  %v5403 = vsel %vm617, %v4623, %v4616
  %v5405 = vunpack.c.l.s4 1983009808
  %v5406 = vunpack.c.0.s8 %v5405
  %v5407 = vperm.slane %v5403, %v5406
  %v5408 = vrot.slane %v4624, 4
  %v5409 = vsel %vm617, %v5408, %v4622
  %v5411 = vunpack.c.l.s4 1983009808
  %v5412 = vunpack.c.0.s8 %v5411
  %v5413 = vperm.slane %v5409, %v5412
  %v5414 = vrot.slane %v5413, 4
  %v5415 = vsel %vm617, %v5414, %v5407
  %v5417 = vunpack.c.l.s4 1934713408
  %v5418 = vunpack.c.0.s8 %v5417
  %v5419 = vperm.slane %v5415, %v5418
  %v5420 = vrot.slane %v5419, 4
  %v5421 = vsel %vm617, 0, %v5420
  %v5422 = vsel %vm617, %v4649, %v4642
  %v5424 = vunpack.c.l.s4 1983009808
  %v5425 = vunpack.c.0.s8 %v5424
  %v5426 = vperm.slane %v5422, %v5425
  %v5427 = vrot.slane %v4650, 4
  %v5428 = vsel %vm617, %v5427, %v4648
  %v5430 = vunpack.c.l.s4 1983009808
  %v5431 = vunpack.c.0.s8 %v5430
  %v5432 = vperm.slane %v5428, %v5431
  %v5433 = vrot.slane %v5432, 4
  %v5434 = vsel %vm617, %v5433, %v5426
  %v5436 = vunpack.c.l.s4 1934713408
  %v5437 = vunpack.c.0.s8 %v5436
  %v5438 = vperm.slane %v5434, %v5437
  %v5439 = vrot.slane %v5438, 4
  %v5440 = vsel %vm617, 0, %v5439
  %v5441 = vsel %vm617, %v4675, %v4668
  %v5443 = vunpack.c.l.s4 1983009808
  %v5444 = vunpack.c.0.s8 %v5443
  %v5445 = vperm.slane %v5441, %v5444
  %v5446 = vrot.slane %v4676, 4
  %v5447 = vsel %vm617, %v5446, %v4674
  %v5449 = vunpack.c.l.s4 1983009808
  %v5450 = vunpack.c.0.s8 %v5449
  %v5451 = vperm.slane %v5447, %v5450
  %v5452 = vrot.slane %v5451, 4
  %v5453 = vsel %vm617, %v5452, %v5445
  %v5455 = vunpack.c.l.s4 1934713408
  %v5456 = vunpack.c.0.s8 %v5455
  %v5457 = vperm.slane %v5453, %v5456
  %v5458 = vrot.slane %v5457, 4
  %v5459 = vsel %vm617, 0, %v5458
  %v5460 = vsel %vm617, %v4701, %v4694
  %v5462 = vunpack.c.l.s4 1983009808
  %v5463 = vunpack.c.0.s8 %v5462
  %v5464 = vperm.slane %v5460, %v5463
  %v5465 = vrot.slane %v4702, 4
  %v5466 = vsel %vm617, %v5465, %v4700
  %v5468 = vunpack.c.l.s4 1983009808
  %v5469 = vunpack.c.0.s8 %v5468
  %v5470 = vperm.slane %v5466, %v5469
  %v5471 = vrot.slane %v5470, 4
  %v5472 = vsel %vm617, %v5471, %v5464
  %v5474 = vunpack.c.l.s4 1934713408
  %v5475 = vunpack.c.0.s8 %v5474
  %v5476 = vperm.slane %v5472, %v5475
  %v5477 = vrot.slane %v5476, 4
  %v5478 = vsel %vm617, 0, %v5477
  %v5479 = vsel %vm617, %v4727, %v4720
  %v5481 = vunpack.c.l.s4 1983009808
  %v5482 = vunpack.c.0.s8 %v5481
  %v5483 = vperm.slane %v5479, %v5482
  %v5484 = vrot.slane %v4728, 4
  %v5485 = vsel %vm617, %v5484, %v4726
  %v5487 = vunpack.c.l.s4 1983009808
  %v5488 = vunpack.c.0.s8 %v5487
  %v5489 = vperm.slane %v5485, %v5488
  %v5490 = vrot.slane %v5489, 4
  %v5491 = vsel %vm617, %v5490, %v5483
  %v5493 = vunpack.c.l.s4 1934713408
  %v5494 = vunpack.c.0.s8 %v5493
  %v5495 = vperm.slane %v5491, %v5494
  %v5496 = vrot.slane %v5495, 4
  %v5497 = vsel %vm617, 0, %v5496
  %v5498 = vsel %vm617, %v4753, %v4746
  %v5500 = vunpack.c.l.s4 1983009808
  %v5501 = vunpack.c.0.s8 %v5500
  %v5502 = vperm.slane %v5498, %v5501
  %v5503 = vrot.slane %v4754, 4
  %v5504 = vsel %vm617, %v5503, %v4752
  %v5506 = vunpack.c.l.s4 1983009808
  %v5507 = vunpack.c.0.s8 %v5506
  %v5508 = vperm.slane %v5504, %v5507
  %v5509 = vrot.slane %v5508, 4
  %v5510 = vsel %vm617, %v5509, %v5502
  %v5512 = vunpack.c.l.s4 1934713408
  %v5513 = vunpack.c.0.s8 %v5512
  %v5514 = vperm.slane %v5510, %v5513
  %v5515 = vrot.slane %v5514, 4
  %v5516 = vsel %vm617, 0, %v5515
  %v5517 = vsel %vm617, %v4779, %v4772
  %v5519 = vunpack.c.l.s4 1983009808
  %v5520 = vunpack.c.0.s8 %v5519
  %v5521 = vperm.slane %v5517, %v5520
  %v5522 = vrot.slane %v4780, 4
  %v5523 = vsel %vm617, %v5522, %v4778
  %v5525 = vunpack.c.l.s4 1983009808
  %v5526 = vunpack.c.0.s8 %v5525
  %v5527 = vperm.slane %v5523, %v5526
  %v5528 = vrot.slane %v5527, 4
  %v5529 = vsel %vm617, %v5528, %v5521
  %v5531 = vunpack.c.l.s4 1934713408
  %v5532 = vunpack.c.0.s8 %v5531
  %v5533 = vperm.slane %v5529, %v5532
  %v5534 = vrot.slane %v5533, 4
  %v5535 = vsel %vm617, 0, %v5534
  %v5536 = vsel %vm617, %v4805, %v4798
  %v5538 = vunpack.c.l.s4 1983009808
  %v5539 = vunpack.c.0.s8 %v5538
  %v5540 = vperm.slane %v5536, %v5539
  %v5541 = vrot.slane %v4806, 4
  %v5542 = vsel %vm617, %v5541, %v4804
  %v5544 = vunpack.c.l.s4 1983009808
  %v5545 = vunpack.c.0.s8 %v5544
  %v5546 = vperm.slane %v5542, %v5545
  %v5547 = vrot.slane %v5546, 4
  %v5548 = vsel %vm617, %v5547, %v5540
  %v5550 = vunpack.c.l.s4 1934713408
  %v5551 = vunpack.c.0.s8 %v5550
  %v5552 = vperm.slane %v5548, %v5551
  %v5553 = vrot.slane %v5552, 4
  %v5554 = vsel %vm617, 0, %v5553
  %v5555 = vsel %vm617, %v4831, %v4824
  %v5557 = vunpack.c.l.s4 1983009808
  %v5558 = vunpack.c.0.s8 %v5557
  %v5559 = vperm.slane %v5555, %v5558
  %v5560 = vrot.slane %v4832, 4
  %v5561 = vsel %vm617, %v5560, %v4830
  %v5563 = vunpack.c.l.s4 1983009808
  %v5564 = vunpack.c.0.s8 %v5563
  %v5565 = vperm.slane %v5561, %v5564
  %v5566 = vrot.slane %v5565, 4
  %v5567 = vsel %vm617, %v5566, %v5559
  %v5569 = vunpack.c.l.s4 1934713408
  %v5570 = vunpack.c.0.s8 %v5569
  %v5571 = vperm.slane %v5567, %v5570
  %v5572 = vrot.slane %v5571, 4
  %v5573 = vsel %vm617, 0, %v5572
  %v5574 = vsel %vm617, %v4857, %v4850
  %v5576 = vunpack.c.l.s4 1983009808
  %v5577 = vunpack.c.0.s8 %v5576
  %v5578 = vperm.slane %v5574, %v5577
  %v5579 = vrot.slane %v4858, 4
  %v5580 = vsel %vm617, %v5579, %v4856
  %v5582 = vunpack.c.l.s4 1983009808
  %v5583 = vunpack.c.0.s8 %v5582
  %v5584 = vperm.slane %v5580, %v5583
  %v5585 = vrot.slane %v5584, 4
  %v5586 = vsel %vm617, %v5585, %v5578
  %v5588 = vunpack.c.l.s4 1934713408
  %v5589 = vunpack.c.0.s8 %v5588
  %v5590 = vperm.slane %v5586, %v5589
  %v5591 = vrot.slane %v5590, 4
  %v5592 = vsel %vm617, 0, %v5591
  %v5593 = vsel %vm617, %v4883, %v4876
  %v5595 = vunpack.c.l.s4 1983009808
  %v5596 = vunpack.c.0.s8 %v5595
  %v5597 = vperm.slane %v5593, %v5596
  %v5598 = vrot.slane %v4884, 4
  %v5599 = vsel %vm617, %v5598, %v4882
  %v5601 = vunpack.c.l.s4 1983009808
  %v5602 = vunpack.c.0.s8 %v5601
  %v5603 = vperm.slane %v5599, %v5602
  %v5604 = vrot.slane %v5603, 4
  %v5605 = vsel %vm617, %v5604, %v5597
  %v5607 = vunpack.c.l.s4 1934713408
  %v5608 = vunpack.c.0.s8 %v5607
  %v5609 = vperm.slane %v5605, %v5608
  %v5610 = vrot.slane %v5609, 4
  %v5611 = vsel %vm617, 0, %v5610
  %v5612 = vsel %vm617, %v4909, %v4902
  %v5614 = vunpack.c.l.s4 1983009808
  %v5615 = vunpack.c.0.s8 %v5614
  %v5616 = vperm.slane %v5612, %v5615
  %v5617 = vrot.slane %v4910, 4
  %v5618 = vsel %vm617, %v5617, %v4908
  %v5620 = vunpack.c.l.s4 1983009808
  %v5621 = vunpack.c.0.s8 %v5620
  %v5622 = vperm.slane %v5618, %v5621
  %v5623 = vrot.slane %v5622, 4
  %v5624 = vsel %vm617, %v5623, %v5616
  %v5626 = vunpack.c.l.s4 1934713408
  %v5627 = vunpack.c.0.s8 %v5626
  %v5628 = vperm.slane %v5624, %v5627
  %v5629 = vrot.slane %v5628, 4
  %v5630 = vsel %vm617, 0, %v5629
  %v5631 = vsel %vm617, %v4935, %v4928
  %v5633 = vunpack.c.l.s4 1983009808
  %v5634 = vunpack.c.0.s8 %v5633
  %v5635 = vperm.slane %v5631, %v5634
  %v5636 = vrot.slane %v4936, 4
  %v5637 = vsel %vm617, %v5636, %v4934
  %v5639 = vunpack.c.l.s4 1983009808
  %v5640 = vunpack.c.0.s8 %v5639
  %v5641 = vperm.slane %v5637, %v5640
  %v5642 = vrot.slane %v5641, 4
  %v5643 = vsel %vm617, %v5642, %v5635
  %v5645 = vunpack.c.l.s4 1934713408
  %v5646 = vunpack.c.0.s8 %v5645
  %v5647 = vperm.slane %v5643, %v5646
  %v5648 = vrot.slane %v5647, 4
  %v5649 = vsel %vm617, 0, %v5648
  %v5650 = vsel %vm617, %v4961, %v4954
  %v5652 = vunpack.c.l.s4 1983009808
  %v5653 = vunpack.c.0.s8 %v5652
  %v5654 = vperm.slane %v5650, %v5653
  %v5655 = vrot.slane %v4962, 4
  %v5656 = vsel %vm617, %v5655, %v4960
  %v5658 = vunpack.c.l.s4 1983009808
  %v5659 = vunpack.c.0.s8 %v5658
  %v5660 = vperm.slane %v5656, %v5659
  %v5661 = vrot.slane %v5660, 4
  %v5662 = vsel %vm617, %v5661, %v5654
  %v5664 = vunpack.c.l.s4 1934713408
  %v5665 = vunpack.c.0.s8 %v5664
  %v5666 = vperm.slane %v5662, %v5665
  %v5667 = vrot.slane %v5666, 4
  %v5668 = vsel %vm617, 0, %v5667
  %v5669 = vsel %vm617, %v4987, %v4980
  %v5671 = vunpack.c.l.s4 1983009808
  %v5672 = vunpack.c.0.s8 %v5671
  %v5673 = vperm.slane %v5669, %v5672
  %v5674 = vrot.slane %v4988, 4
  %v5675 = vsel %vm617, %v5674, %v4986
  %v5677 = vunpack.c.l.s4 1983009808
  %v5678 = vunpack.c.0.s8 %v5677
  %v5679 = vperm.slane %v5675, %v5678
  %v5680 = vrot.slane %v5679, 4
  %v5681 = vsel %vm617, %v5680, %v5673
  %v5683 = vunpack.c.l.s4 1934713408
  %v5684 = vunpack.c.0.s8 %v5683
  %v5685 = vperm.slane %v5681, %v5684
  %v5686 = vrot.slane %v5685, 4
  %v5687 = vsel %vm617, 0, %v5686
  %v5688 = vsel %vm617, %v5013, %v5006
  %v5690 = vunpack.c.l.s4 1983009808
  %v5691 = vunpack.c.0.s8 %v5690
  %v5692 = vperm.slane %v5688, %v5691
  %v5693 = vrot.slane %v5014, 4
  %v5694 = vsel %vm617, %v5693, %v5012
  %v5696 = vunpack.c.l.s4 1983009808
  %v5697 = vunpack.c.0.s8 %v5696
  %v5698 = vperm.slane %v5694, %v5697
  %v5699 = vrot.slane %v5698, 4
  %v5700 = vsel %vm617, %v5699, %v5692
  %v5702 = vunpack.c.l.s4 1934713408
  %v5703 = vunpack.c.0.s8 %v5702
  %v5704 = vperm.slane %v5700, %v5703
  %v5705 = vrot.slane %v5704, 4
  %v5706 = vsel %vm617, 0, %v5705
  %v5707 = vsel %vm617, %v5039, %v5032
  %v5709 = vunpack.c.l.s4 1983009808
  %v5710 = vunpack.c.0.s8 %v5709
  %v5711 = vperm.slane %v5707, %v5710
  %v5712 = vrot.slane %v5040, 4
  %v5713 = vsel %vm617, %v5712, %v5038
  %v5715 = vunpack.c.l.s4 1983009808
  %v5716 = vunpack.c.0.s8 %v5715
  %v5717 = vperm.slane %v5713, %v5716
  %v5718 = vrot.slane %v5717, 4
  %v5719 = vsel %vm617, %v5718, %v5711
  %v5721 = vunpack.c.l.s4 1934713408
  %v5722 = vunpack.c.0.s8 %v5721
  %v5723 = vperm.slane %v5719, %v5722
  %v5724 = vrot.slane %v5723, 4
  %v5725 = vsel %vm617, 0, %v5724
  %v5726 = vsel %vm617, %v5065, %v5058
  %v5728 = vunpack.c.l.s4 1983009808
  %v5729 = vunpack.c.0.s8 %v5728
  %v5730 = vperm.slane %v5726, %v5729
  %v5731 = vrot.slane %v5066, 4
  %v5732 = vsel %vm617, %v5731, %v5064
  %v5734 = vunpack.c.l.s4 1983009808
  %v5735 = vunpack.c.0.s8 %v5734
  %v5736 = vperm.slane %v5732, %v5735
  %v5737 = vrot.slane %v5736, 4
  %v5738 = vsel %vm617, %v5737, %v5730
  %v5740 = vunpack.c.l.s4 1934713408
  %v5741 = vunpack.c.0.s8 %v5740
  %v5742 = vperm.slane %v5738, %v5741
  %v5743 = vrot.slane %v5742, 4
  %v5744 = vsel %vm617, 0, %v5743
  %v5745 = vsel %vm617, %v5091, %v5084
  %v5747 = vunpack.c.l.s4 1983009808
  %v5748 = vunpack.c.0.s8 %v5747
  %v5749 = vperm.slane %v5745, %v5748
  %v5750 = vrot.slane %v5092, 4
  %v5751 = vsel %vm617, %v5750, %v5090
  %v5753 = vunpack.c.l.s4 1983009808
  %v5754 = vunpack.c.0.s8 %v5753
  %v5755 = vperm.slane %v5751, %v5754
  %v5756 = vrot.slane %v5755, 4
  %v5757 = vsel %vm617, %v5756, %v5749
  %v5759 = vunpack.c.l.s4 1934713408
  %v5760 = vunpack.c.0.s8 %v5759
  %v5761 = vperm.slane %v5757, %v5760
  %v5762 = vrot.slane %v5761, 4
  %v5763 = vsel %vm617, 0, %v5762
  %v5764 = vsel %vm617, %v5117, %v5110
  %v5766 = vunpack.c.l.s4 1983009808
  %v5767 = vunpack.c.0.s8 %v5766
  %v5768 = vperm.slane %v5764, %v5767
  %v5769 = vrot.slane %v5118, 4
  %v5770 = vsel %vm617, %v5769, %v5116
  %v5772 = vunpack.c.l.s4 1983009808
  %v5773 = vunpack.c.0.s8 %v5772
  %v5774 = vperm.slane %v5770, %v5773
  %v5775 = vrot.slane %v5774, 4
  %v5776 = vsel %vm617, %v5775, %v5768
  %v5778 = vunpack.c.l.s4 1934713408
  %v5779 = vunpack.c.0.s8 %v5778
  %v5780 = vperm.slane %v5776, %v5779
  %v5781 = vrot.slane %v5780, 4
  %v5782 = vsel %vm617, 0, %v5781
  %v5783 = vsel %vm617, %v5143, %v5136
  %v5785 = vunpack.c.l.s4 1983009808
  %v5786 = vunpack.c.0.s8 %v5785
  %v5787 = vperm.slane %v5783, %v5786
  %v5788 = vrot.slane %v5144, 4
  %v5789 = vsel %vm617, %v5788, %v5142
  %v5791 = vunpack.c.l.s4 1983009808
  %v5792 = vunpack.c.0.s8 %v5791
  %v5793 = vperm.slane %v5789, %v5792
  %v5794 = vrot.slane %v5793, 4
  %v5795 = vsel %vm617, %v5794, %v5787
  %v5797 = vunpack.c.l.s4 1934713408
  %v5798 = vunpack.c.0.s8 %v5797
  %v5799 = vperm.slane %v5795, %v5798
  %v5800 = vrot.slane %v5799, 4
  %v5801 = vsel %vm617, 0, %v5800
  %v5802 = vsel %vm617, %v5169, %v5162
  %v5804 = vunpack.c.l.s4 1983009808
  %v5805 = vunpack.c.0.s8 %v5804
  %v5806 = vperm.slane %v5802, %v5805
  %v5807 = vrot.slane %v5170, 4
  %v5808 = vsel %vm617, %v5807, %v5168
  %v5810 = vunpack.c.l.s4 1983009808
  %v5811 = vunpack.c.0.s8 %v5810
  %v5812 = vperm.slane %v5808, %v5811
  %v5813 = vrot.slane %v5812, 4
  %v5814 = vsel %vm617, %v5813, %v5806
  %v5816 = vunpack.c.l.s4 1934713408
  %v5817 = vunpack.c.0.s8 %v5816
  %v5818 = vperm.slane %v5814, %v5817
  %v5819 = vrot.slane %v5818, 4
  %v5820 = vsel %vm617, 0, %v5819
  %v5821 = vsel %vm617, %v5195, %v5188
  %v5823 = vunpack.c.l.s4 1983009808
  %v5824 = vunpack.c.0.s8 %v5823
  %v5825 = vperm.slane %v5821, %v5824
  %v5826 = vrot.slane %v5196, 4
  %v5827 = vsel %vm617, %v5826, %v5194
  %v5829 = vunpack.c.l.s4 1983009808
  %v5830 = vunpack.c.0.s8 %v5829
  %v5831 = vperm.slane %v5827, %v5830
  %v5832 = vrot.slane %v5831, 4
  %v5833 = vsel %vm617, %v5832, %v5825
  %v5835 = vunpack.c.l.s4 1934713408
  %v5836 = vunpack.c.0.s8 %v5835
  %v5837 = vperm.slane %v5833, %v5836
  %v5838 = vrot.slane %v5837, 4
  %v5839 = vsel %vm617, 0, %v5838
  %v5840 = vsel %vm617, %v5221, %v5214
  %v5842 = vunpack.c.l.s4 1983009808
  %v5843 = vunpack.c.0.s8 %v5842
  %v5844 = vperm.slane %v5840, %v5843
  %v5845 = vrot.slane %v5222, 4
  %v5846 = vsel %vm617, %v5845, %v5220
  %v5848 = vunpack.c.l.s4 1983009808
  %v5849 = vunpack.c.0.s8 %v5848
  %v5850 = vperm.slane %v5846, %v5849
  %v5851 = vrot.slane %v5850, 4
  %v5852 = vsel %vm617, %v5851, %v5844
  %v5854 = vunpack.c.l.s4 1934713408
  %v5855 = vunpack.c.0.s8 %v5854
  %v5856 = vperm.slane %v5852, %v5855
  %v5857 = vrot.slane %v5856, 4
  %v5858 = vsel %vm617, 0, %v5857
  %v5859 = vsel %vm617, %v5247, %v5240
  %v5861 = vunpack.c.l.s4 1983009808
  %v5862 = vunpack.c.0.s8 %v5861
  %v5863 = vperm.slane %v5859, %v5862
  %v5864 = vrot.slane %v5248, 4
  %v5865 = vsel %vm617, %v5864, %v5246
  %v5867 = vunpack.c.l.s4 1983009808
  %v5868 = vunpack.c.0.s8 %v5867
  %v5869 = vperm.slane %v5865, %v5868
  %v5870 = vrot.slane %v5869, 4
  %v5871 = vsel %vm617, %v5870, %v5863
  %v5873 = vunpack.c.l.s4 1934713408
  %v5874 = vunpack.c.0.s8 %v5873
  %v5875 = vperm.slane %v5871, %v5874
  %v5876 = vrot.slane %v5875, 4
  %v5877 = vsel %vm617, 0, %v5876
  %v5878 = vsel %vm617, %v5273, %v5266
  %v5880 = vunpack.c.l.s4 1983009808
  %v5881 = vunpack.c.0.s8 %v5880
  %v5882 = vperm.slane %v5878, %v5881
  %v5883 = vrot.slane %v5274, 4
  %v5884 = vsel %vm617, %v5883, %v5272
  %v5886 = vunpack.c.l.s4 1983009808
  %v5887 = vunpack.c.0.s8 %v5886
  %v5888 = vperm.slane %v5884, %v5887
  %v5889 = vrot.slane %v5888, 4
  %v5890 = vsel %vm617, %v5889, %v5882
  %v5892 = vunpack.c.l.s4 1934713408
  %v5893 = vunpack.c.0.s8 %v5892
  %v5894 = vperm.slane %v5890, %v5893
  %v5895 = vrot.slane %v5894, 4
  %v5896 = vsel %vm617, 0, %v5895
  %v5897 = vsel %vm617, %v5299, %v5292
  %v5899 = vunpack.c.l.s4 1983009808
  %v5900 = vunpack.c.0.s8 %v5899
  %v5901 = vperm.slane %v5897, %v5900
  %v5902 = vrot.slane %v5300, 4
  %v5903 = vsel %vm617, %v5902, %v5298
  %v5905 = vunpack.c.l.s4 1983009808
  %v5906 = vunpack.c.0.s8 %v5905
  %v5907 = vperm.slane %v5903, %v5906
  %v5908 = vrot.slane %v5907, 4
  %v5909 = vsel %vm617, %v5908, %v5901
  %v5911 = vunpack.c.l.s4 1934713408
  %v5912 = vunpack.c.0.s8 %v5911
  %v5913 = vperm.slane %v5909, %v5912
  %v5914 = vrot.slane %v5913, 4
  %v5915 = vsel %vm617, 0, %v5914
  %v5916 = vsel %vm617, %v5325, %v5318
  %v5918 = vunpack.c.l.s4 1983009808
  %v5919 = vunpack.c.0.s8 %v5918
  %v5920 = vperm.slane %v5916, %v5919
  %v5921 = vrot.slane %v5326, 4
  %v5922 = vsel %vm617, %v5921, %v5324
  %v5924 = vunpack.c.l.s4 1983009808
  %v5925 = vunpack.c.0.s8 %v5924
  %v5926 = vperm.slane %v5922, %v5925
  %v5927 = vrot.slane %v5926, 4
  %v5928 = vsel %vm617, %v5927, %v5920
  %v5930 = vunpack.c.l.s4 1934713408
  %v5931 = vunpack.c.0.s8 %v5930
  %v5932 = vperm.slane %v5928, %v5931
  %v5933 = vrot.slane %v5932, 4
  %v5934 = vsel %vm617, 0, %v5933
  %v5937 = vpack.i.b16 %v5362, %v5343
  %v5938 = vshrl.u32 %v5343, 16
  %v5939 = vshrl.u32 %v5362, 16
  %v5940 = vpack.i.b16 %v5939, %v5938
  %v5943 = vpack.i.b16 %v5364, %v5345
  %v5944 = vshrl.u32 %v5345, 16
  %v5945 = vshrl.u32 %v5364, 16
  %v5946 = vpack.i.b16 %v5945, %v5944
  %v5949 = vpack.i.b16 %v5400, %v5381
  %v5950 = vshrl.u32 %v5381, 16
  %v5951 = vshrl.u32 %v5400, 16
  %v5952 = vpack.i.b16 %v5951, %v5950
  %v5955 = vpack.i.b16 %v5402, %v5383
  %v5956 = vshrl.u32 %v5383, 16
  %v5957 = vshrl.u32 %v5402, 16
  %v5958 = vpack.i.b16 %v5957, %v5956
  %v5961 = vpack.i.b16 %v5438, %v5419
  %v5962 = vshrl.u32 %v5419, 16
  %v5963 = vshrl.u32 %v5438, 16
  %v5964 = vpack.i.b16 %v5963, %v5962
  %v5967 = vpack.i.b16 %v5440, %v5421
  %v5968 = vshrl.u32 %v5421, 16
  %v5969 = vshrl.u32 %v5440, 16
  %v5970 = vpack.i.b16 %v5969, %v5968
  %v5973 = vpack.i.b16 %v5476, %v5457
  %v5974 = vshrl.u32 %v5457, 16
  %v5975 = vshrl.u32 %v5476, 16
  %v5976 = vpack.i.b16 %v5975, %v5974
  %v5979 = vpack.i.b16 %v5478, %v5459
  %v5980 = vshrl.u32 %v5459, 16
  %v5981 = vshrl.u32 %v5478, 16
  %v5982 = vpack.i.b16 %v5981, %v5980
  %v5985 = vpack.i.b16 %v5514, %v5495
  %v5986 = vshrl.u32 %v5495, 16
  %v5987 = vshrl.u32 %v5514, 16
  %v5988 = vpack.i.b16 %v5987, %v5986
  %v5991 = vpack.i.b16 %v5516, %v5497
  %v5992 = vshrl.u32 %v5497, 16
  %v5993 = vshrl.u32 %v5516, 16
  %v5994 = vpack.i.b16 %v5993, %v5992
  %v5997 = vpack.i.b16 %v5552, %v5533
  %v5998 = vshrl.u32 %v5533, 16
  %v5999 = vshrl.u32 %v5552, 16
  %v6000 = vpack.i.b16 %v5999, %v5998
  %v6003 = vpack.i.b16 %v5554, %v5535
  %v6004 = vshrl.u32 %v5535, 16
  %v6005 = vshrl.u32 %v5554, 16
  %v6006 = vpack.i.b16 %v6005, %v6004
  %v6009 = vpack.i.b16 %v5590, %v5571
  %v6010 = vshrl.u32 %v5571, 16
  %v6011 = vshrl.u32 %v5590, 16
  %v6012 = vpack.i.b16 %v6011, %v6010
  %v6015 = vpack.i.b16 %v5592, %v5573
  %v6016 = vshrl.u32 %v5573, 16
  %v6017 = vshrl.u32 %v5592, 16
  %v6018 = vpack.i.b16 %v6017, %v6016
  %v6021 = vpack.i.b16 %v5628, %v5609
  %v6022 = vshrl.u32 %v5609, 16
  %v6023 = vshrl.u32 %v5628, 16
  %v6024 = vpack.i.b16 %v6023, %v6022
  %v6027 = vpack.i.b16 %v5630, %v5611
  %v6028 = vshrl.u32 %v5611, 16
  %v6029 = vshrl.u32 %v5630, 16
  %v6030 = vpack.i.b16 %v6029, %v6028
  %v6033 = vpack.i.b16 %v5666, %v5647
  %v6034 = vshrl.u32 %v5647, 16
  %v6035 = vshrl.u32 %v5666, 16
  %v6036 = vpack.i.b16 %v6035, %v6034
  %v6039 = vpack.i.b16 %v5668, %v5649
  %v6040 = vshrl.u32 %v5649, 16
  %v6041 = vshrl.u32 %v5668, 16
  %v6042 = vpack.i.b16 %v6041, %v6040
  %v6045 = vpack.i.b16 %v5704, %v5685
  %v6046 = vshrl.u32 %v5685, 16
  %v6047 = vshrl.u32 %v5704, 16
  %v6048 = vpack.i.b16 %v6047, %v6046
  %v6051 = vpack.i.b16 %v5706, %v5687
  %v6052 = vshrl.u32 %v5687, 16
  %v6053 = vshrl.u32 %v5706, 16
  %v6054 = vpack.i.b16 %v6053, %v6052
  %v6057 = vpack.i.b16 %v5742, %v5723
  %v6058 = vshrl.u32 %v5723, 16
  %v6059 = vshrl.u32 %v5742, 16
  %v6060 = vpack.i.b16 %v6059, %v6058
  %v6063 = vpack.i.b16 %v5744, %v5725
  %v6064 = vshrl.u32 %v5725, 16
  %v6065 = vshrl.u32 %v5744, 16
  %v6066 = vpack.i.b16 %v6065, %v6064
  %v6069 = vpack.i.b16 %v5780, %v5761
  %v6070 = vshrl.u32 %v5761, 16
  %v6071 = vshrl.u32 %v5780, 16
  %v6072 = vpack.i.b16 %v6071, %v6070
  %v6075 = vpack.i.b16 %v5782, %v5763
  %v6076 = vshrl.u32 %v5763, 16
  %v6077 = vshrl.u32 %v5782, 16
  %v6078 = vpack.i.b16 %v6077, %v6076
  %v6081 = vpack.i.b16 %v5818, %v5799
  %v6082 = vshrl.u32 %v5799, 16
  %v6083 = vshrl.u32 %v5818, 16
  %v6084 = vpack.i.b16 %v6083, %v6082
  %v6087 = vpack.i.b16 %v5820, %v5801
  %v6088 = vshrl.u32 %v5801, 16
  %v6089 = vshrl.u32 %v5820, 16
  %v6090 = vpack.i.b16 %v6089, %v6088
  %v6093 = vpack.i.b16 %v5856, %v5837
  %v6094 = vshrl.u32 %v5837, 16
  %v6095 = vshrl.u32 %v5856, 16
  %v6096 = vpack.i.b16 %v6095, %v6094
  %v6099 = vpack.i.b16 %v5858, %v5839
  %v6100 = vshrl.u32 %v5839, 16
  %v6101 = vshrl.u32 %v5858, 16
  %v6102 = vpack.i.b16 %v6101, %v6100
  %v6105 = vpack.i.b16 %v5894, %v5875
  %v6106 = vshrl.u32 %v5875, 16
  %v6107 = vshrl.u32 %v5894, 16
  %v6108 = vpack.i.b16 %v6107, %v6106
  %v6111 = vpack.i.b16 %v5896, %v5877
  %v6112 = vshrl.u32 %v5877, 16
  %v6113 = vshrl.u32 %v5896, 16
  %v6114 = vpack.i.b16 %v6113, %v6112
  %v6117 = vpack.i.b16 %v5932, %v5913
  %v6118 = vshrl.u32 %v5913, 16
  %v6119 = vshrl.u32 %v5932, 16
  %v6120 = vpack.i.b16 %v6119, %v6118
  %v6123 = vpack.i.b16 %v5934, %v5915
  %v6124 = vshrl.u32 %v5915, 16
  %v6125 = vshrl.u32 %v5934, 16
  %v6126 = vpack.i.b16 %v6125, %v6124
  %v6127 = vunpack.c.l.b16 %v5937
  %v6128 = vunpack.c.l.b16 %v5949
  %v6129 = vunpack.c.l.b16 %v5961
  %v6130 = vunpack.c.l.b16 %v5973
  %v6131 = vunpack.c.l.b16 %v5985
  %v6132 = vunpack.c.l.b16 %v5997
  %v6133 = vunpack.c.l.b16 %v6009
  %v6134 = vunpack.c.l.b16 %v6021
  %v6135 = vunpack.c.l.b16 %v6033
  %v6136 = vunpack.c.l.b16 %v6045
  %v6137 = vunpack.c.l.b16 %v6057
  %v6138 = vunpack.c.l.b16 %v6069
  %v6139 = vunpack.c.l.b16 %v6081
  %v6140 = vunpack.c.l.b16 %v6093
  %v6141 = vunpack.c.l.b16 %v6105
  %v6142 = vunpack.c.l.b16 %v6117
  %v6143 = vunpack.c.l.b16 %v5940
  %v6144 = vunpack.c.l.b16 %v5952
  %v6145 = vunpack.c.l.b16 %v5964
  %v6146 = vunpack.c.l.b16 %v5976
  %v6147 = vunpack.c.l.b16 %v5988
  %v6148 = vunpack.c.l.b16 %v6000
  %v6149 = vunpack.c.l.b16 %v6012
  %v6150 = vunpack.c.l.b16 %v6024
  %v6151 = vunpack.c.l.b16 %v6036
  %v6152 = vunpack.c.l.b16 %v6048
  %v6153 = vunpack.c.l.b16 %v6060
  %v6154 = vunpack.c.l.b16 %v6072
  %v6155 = vunpack.c.l.b16 %v6084
  %v6156 = vunpack.c.l.b16 %v6096
  %v6157 = vunpack.c.l.b16 %v6108
  %v6158 = vunpack.c.l.b16 %v6120
  %v6159 = vunpack.c.l.b16 %v5943
  %v6160 = vunpack.c.l.b16 %v5955
  %v6161 = vunpack.c.l.b16 %v5967
  %v6162 = vunpack.c.l.b16 %v5979
  %v6163 = vunpack.c.l.b16 %v5991
  %v6164 = vunpack.c.l.b16 %v6003
  %v6165 = vunpack.c.l.b16 %v6015
  %v6166 = vunpack.c.l.b16 %v6027
  %v6167 = vunpack.c.l.b16 %v6039
  %v6168 = vunpack.c.l.b16 %v6051
  %v6169 = vunpack.c.l.b16 %v6063
  %v6170 = vunpack.c.l.b16 %v6075
  %v6171 = vunpack.c.l.b16 %v6087
  %v6172 = vunpack.c.l.b16 %v6099
  %v6173 = vunpack.c.l.b16 %v6111
  %v6174 = vunpack.c.l.b16 %v6123
  %v6175 = vunpack.c.l.b16 %v5946
  %v6176 = vunpack.c.l.b16 %v5958
  %v6177 = vunpack.c.l.b16 %v5970
  %v6178 = vunpack.c.l.b16 %v5982
  %v6179 = vunpack.c.l.b16 %v5994
  %v6180 = vunpack.c.l.b16 %v6006
  %v6181 = vunpack.c.l.b16 %v6018
  %v6182 = vunpack.c.l.b16 %v6030
  %v6183 = vunpack.c.l.b16 %v6042
  %v6184 = vunpack.c.l.b16 %v6054
  %v6185 = vunpack.c.l.b16 %v6066
  %v6186 = vunpack.c.l.b16 %v6078
  %v6187 = vunpack.c.l.b16 %v6090
  %v6188 = vunpack.c.l.b16 %v6102
  %v6189 = vunpack.c.l.b16 %v6114
  %v6190 = vunpack.c.l.b16 %v6126
  %v6191 = vpack.c.b16 %v6128, %v6127
  %v6192 = vpack.c.b16 %v6130, %v6129
  %v6193 = vpack.c.b16 %v6132, %v6131
  %v6194 = vpack.c.b16 %v6134, %v6133
  %v6195 = vpack.c.b16 %v6136, %v6135
  %v6196 = vpack.c.b16 %v6138, %v6137
  %v6197 = vpack.c.b16 %v6140, %v6139
  %v6198 = vpack.c.b16 %v6142, %v6141
  %v6199 = vpack.c.b16 %v6144, %v6143
  %v6200 = vpack.c.b16 %v6146, %v6145
  %v6201 = vpack.c.b16 %v6148, %v6147
  %v6202 = vpack.c.b16 %v6150, %v6149
  %v6203 = vpack.c.b16 %v6152, %v6151
  %v6204 = vpack.c.b16 %v6154, %v6153
  %v6205 = vpack.c.b16 %v6156, %v6155
  %v6206 = vpack.c.b16 %v6158, %v6157
  %v6207 = vpack.c.b16 %v6160, %v6159
  %v6208 = vpack.c.b16 %v6162, %v6161
  %v6209 = vpack.c.b16 %v6164, %v6163
  %v6210 = vpack.c.b16 %v6166, %v6165
  %v6211 = vpack.c.b16 %v6168, %v6167
  %v6212 = vpack.c.b16 %v6170, %v6169
  %v6213 = vpack.c.b16 %v6172, %v6171
  %v6214 = vpack.c.b16 %v6174, %v6173
  %v6215 = vpack.c.b16 %v6176, %v6175
  %v6216 = vpack.c.b16 %v6178, %v6177
  %v6217 = vpack.c.b16 %v6180, %v6179
  %v6218 = vpack.c.b16 %v6182, %v6181
  %v6219 = vpack.c.b16 %v6184, %v6183
  %v6220 = vpack.c.b16 %v6186, %v6185
  %v6221 = vpack.c.b16 %v6188, %v6187
  %v6222 = vpack.c.b16 %v6190, %v6189
  %vm6223 = vcmask 64512
  %v6226 = vsel %vm6223, %v6191, 1065369472
  %v6229 = vsel %vm6223, %v6192, 1065369472
  %v6232 = vsel %vm6223, %v6193, 1065369472
  %v6235 = vsel %vm6223, %v6194, 1065369472
  %v6238 = vsel %vm6223, %v6195, 1065369472
  %v6241 = vsel %vm6223, %v6196, 1065369472
  %v6244 = vsel %vm6223, %v6197, 1065369472
  %v6247 = vsel %vm6223, %v6198, 1065369472
  %v6250 = vsel %vm6223, %v6199, 1065369472
  %v6253 = vsel %vm6223, %v6200, 1065369472
  %v6256 = vsel %vm6223, %v6201, 1065369472
  %v6259 = vsel %vm6223, %v6202, 1065369472
  %v6262 = vsel %vm6223, %v6203, 1065369472
  %v6265 = vsel %vm6223, %v6204, 1065369472
  %v6268 = vsel %vm6223, %v6205, 1065369472
  %v6271 = vsel %vm6223, %v6206, 1065369472
  %v6274 = vsel %vm6223, %v6207, 1065369472
  %v6277 = vsel %vm6223, %v6208, 1065369472
  %v6280 = vsel %vm6223, %v6209, 1065369472
  %v6283 = vsel %vm6223, %v6210, 1065369472
  %v6286 = vsel %vm6223, %v6211, 1065369472
  %v6289 = vsel %vm6223, %v6212, 1065369472
  %v6292 = vsel %vm6223, %v6213, 1065369472
  %v6295 = vsel %vm6223, %v6214, 1065369472
  %v6298 = vsel %vm6223, %v6215, 1065369472
  %v6301 = vsel %vm6223, %v6216, 1065369472
  %v6304 = vsel %vm6223, %v6217, 1065369472
  %v6307 = vsel %vm6223, %v6218, 1065369472
  %v6310 = vsel %vm6223, %v6219, 1065369472
  %v6313 = vsel %vm6223, %v6220, 1065369472
  %v6316 = vsel %vm6223, %v6221, 1065369472
  %v6319 = vsel %vm6223, %v6222, 1065369472
  %v6321 = vunpack.c.l.b16 %v2049
  %v6322 = vunpack.c.l.b16 %v2061
  %v6323 = vunpack.c.l.b16 %v2073
  %v6324 = vunpack.c.l.b16 %v2085
  %v6325 = vunpack.c.l.b16 %v2097
  %v6326 = vunpack.c.l.b16 %v2109
  %v6327 = vunpack.c.l.b16 %v2121
  %v6328 = vunpack.c.l.b16 %v2133
  %v6329 = vunpack.c.l.b16 %v2145
  %v6330 = vunpack.c.l.b16 %v2157
  %v6331 = vunpack.c.l.b16 %v2169
  %v6332 = vunpack.c.l.b16 %v2181
  %v6333 = vunpack.c.l.b16 %v2193
  %v6334 = vunpack.c.l.b16 %v2205
  %v6335 = vunpack.c.l.b16 %v2217
  %v6336 = vunpack.c.l.b16 %v2229
  %v6337 = vpack.c.b16 %v6322, %v6321
  %v6338 = vpack.c.b16 %v6324, %v6323
  %v6339 = vpack.c.b16 %v6326, %v6325
  %v6340 = vpack.c.b16 %v6328, %v6327
  %v6341 = vpack.c.b16 %v6330, %v6329
  %v6342 = vpack.c.b16 %v6332, %v6331
  %v6343 = vpack.c.b16 %v6334, %v6333
  %v6344 = vpack.c.b16 %v6336, %v6335
  %v6345 = vunpack.c.l.b16 %v3985
  %v6346 = vunpack.c.l.b16 %v3997
  %v6347 = vunpack.c.l.b16 %v4009
  %v6348 = vunpack.c.l.b16 %v4021
  %v6349 = vunpack.c.l.b16 %v4033
  %v6350 = vunpack.c.l.b16 %v4045
  %v6351 = vunpack.c.l.b16 %v4057
  %v6352 = vunpack.c.l.b16 %v4069
  %v6353 = vunpack.c.l.b16 %v4081
  %v6354 = vunpack.c.l.b16 %v4093
  %v6355 = vunpack.c.l.b16 %v4105
  %v6356 = vunpack.c.l.b16 %v4117
  %v6357 = vunpack.c.l.b16 %v4129
  %v6358 = vunpack.c.l.b16 %v4141
  %v6359 = vunpack.c.l.b16 %v4153
  %v6360 = vunpack.c.l.b16 %v4165
  %v6361 = vpack.c.b16 %v6346, %v6345
  %v6362 = vpack.c.b16 %v6348, %v6347
  %v6363 = vpack.c.b16 %v6350, %v6349
  %v6364 = vpack.c.b16 %v6352, %v6351
  %v6365 = vpack.c.b16 %v6354, %v6353
  %v6366 = vpack.c.b16 %v6356, %v6355
  %v6367 = vpack.c.b16 %v6358, %v6357
  %v6368 = vpack.c.b16 %v6360, %v6359
  %v6370 = vsel %vm6223, %v6337, 0
  %v6373 = vsel %vm6223, %v6338, 0
  %v6376 = vsel %vm6223, %v6339, 0
  %v6379 = vsel %vm6223, %v6340, 0
  %v6382 = vsel %vm6223, %v6341, 0
  %v6385 = vsel %vm6223, %v6342, 0
  %v6388 = vsel %vm6223, %v6343, 0
  %v6391 = vsel %vm6223, %v6344, 0
  %v6394 = vsel %vm6223, %v6361, 0
  %v6397 = vsel %vm6223, %v6362, 0
  %v6400 = vsel %vm6223, %v6363, 0
  %v6403 = vsel %vm6223, %v6364, 0
  %v6406 = vsel %vm6223, %v6365, 0
  %v6409 = vsel %vm6223, %v6366, 0
  %v6412 = vsel %vm6223, %v6367, 0
  %v6415 = vsel %vm6223, %v6368, 0
  %6417 = vmatpush.bf16.xpose.msra.mxu0 %v6415
  %6418 = vmatpush.bf16.xpose.msra.mxu0 %v6412
  %6419 = vmatpush.bf16.xpose.msra.mxu0 %v6409
  %6420 = vmatpush.bf16.xpose.msra.mxu0 %v6406
  %6421 = vmatpush.bf16.xpose.msra.mxu0 %v6403
  %6422 = vmatpush.bf16.xpose.msra.mxu0 %v6400
  %6423 = vmatpush.bf16.xpose.msra.mxu0 %v6397
  %6424 = vmatpush.bf16.xpose.msra.mxu0 %v6394
  %6425 = vmatmul.bf16.gmra.mxu0 %v6370
  %v6426 = vpop.f32.mrf.mxu0
  %v6427 = vadd.f32 0.0, %v6426
  %v6428 = vpop.f32.mrf.mxu0
  %v6429 = vadd.f32 0.0, %v6428
  %6430 = vmatmul.bf16.gmra.mxu0 %v6373
  %v6431 = vpop.f32.mrf.mxu0
  %v6432 = vadd.f32 0.0, %v6431
  %v6433 = vpop.f32.mrf.mxu0
  %v6434 = vadd.f32 0.0, %v6433
  %6435 = vmatmul.bf16.gmra.mxu0 %v6376
  %v6436 = vpop.f32.mrf.mxu0
  %v6437 = vadd.f32 0.0, %v6436
  %v6438 = vpop.f32.mrf.mxu0
  %v6439 = vadd.f32 0.0, %v6438
  %6440 = vmatmul.bf16.gmra.mxu0 %v6379
  %v6441 = vpop.f32.mrf.mxu0
  %v6442 = vadd.f32 0.0, %v6441
  %v6443 = vpop.f32.mrf.mxu0
  %v6444 = vadd.f32 0.0, %v6443
  %6445 = vmatmul.bf16.gmra.mxu0 %v6382
  %v6446 = vpop.f32.mrf.mxu0
  %v6447 = vadd.f32 0.0, %v6446
  %v6448 = vpop.f32.mrf.mxu0
  %v6449 = vadd.f32 0.0, %v6448
  %6450 = vmatmul.bf16.gmra.mxu0 %v6385
  %v6451 = vpop.f32.mrf.mxu0
  %v6452 = vadd.f32 0.0, %v6451
  %v6453 = vpop.f32.mrf.mxu0
  %v6454 = vadd.f32 0.0, %v6453
  %6455 = vmatmul.bf16.gmra.mxu0 %v6388
  %v6456 = vpop.f32.mrf.mxu0
  %v6457 = vadd.f32 0.0, %v6456
  %v6458 = vpop.f32.mrf.mxu0
  %v6459 = vadd.f32 0.0, %v6458
  %6460 = vmatmul.bf16.gmra.mxu0 %v6391
  %v6461 = vpop.f32.mrf.mxu0
  %v6462 = vadd.f32 0.0, %v6461
  %v6463 = vpop.f32.mrf.mxu0
  %v6464 = vadd.f32 0.0, %v6463
  %6465 = vdwg.mxu0
  %v6466 = vunpack.c.l.b16 %v2052
  %v6467 = vunpack.c.l.b16 %v2064
  %v6468 = vunpack.c.l.b16 %v2076
  %v6469 = vunpack.c.l.b16 %v2088
  %v6470 = vunpack.c.l.b16 %v2100
  %v6471 = vunpack.c.l.b16 %v2112
  %v6472 = vunpack.c.l.b16 %v2124
  %v6473 = vunpack.c.l.b16 %v2136
  %v6474 = vunpack.c.l.b16 %v2148
  %v6475 = vunpack.c.l.b16 %v2160
  %v6476 = vunpack.c.l.b16 %v2172
  %v6477 = vunpack.c.l.b16 %v2184
  %v6478 = vunpack.c.l.b16 %v2196
  %v6479 = vunpack.c.l.b16 %v2208
  %v6480 = vunpack.c.l.b16 %v2220
  %v6481 = vunpack.c.l.b16 %v2232
  %v6482 = vpack.c.b16 %v6467, %v6466
  %v6483 = vpack.c.b16 %v6469, %v6468
  %v6484 = vpack.c.b16 %v6471, %v6470
  %v6485 = vpack.c.b16 %v6473, %v6472
  %v6486 = vpack.c.b16 %v6475, %v6474
  %v6487 = vpack.c.b16 %v6477, %v6476
  %v6488 = vpack.c.b16 %v6479, %v6478
  %v6489 = vpack.c.b16 %v6481, %v6480
  %v6490 = vunpack.c.l.b16 %v3988
  %v6491 = vunpack.c.l.b16 %v4000
  %v6492 = vunpack.c.l.b16 %v4012
  %v6493 = vunpack.c.l.b16 %v4024
  %v6494 = vunpack.c.l.b16 %v4036
  %v6495 = vunpack.c.l.b16 %v4048
  %v6496 = vunpack.c.l.b16 %v4060
  %v6497 = vunpack.c.l.b16 %v4072
  %v6498 = vunpack.c.l.b16 %v4084
  %v6499 = vunpack.c.l.b16 %v4096
  %v6500 = vunpack.c.l.b16 %v4108
  %v6501 = vunpack.c.l.b16 %v4120
  %v6502 = vunpack.c.l.b16 %v4132
  %v6503 = vunpack.c.l.b16 %v4144
  %v6504 = vunpack.c.l.b16 %v4156
  %v6505 = vunpack.c.l.b16 %v4168
  %v6506 = vpack.c.b16 %v6491, %v6490
  %v6507 = vpack.c.b16 %v6493, %v6492
  %v6508 = vpack.c.b16 %v6495, %v6494
  %v6509 = vpack.c.b16 %v6497, %v6496
  %v6510 = vpack.c.b16 %v6499, %v6498
  %v6511 = vpack.c.b16 %v6501, %v6500
  %v6512 = vpack.c.b16 %v6503, %v6502
  %v6513 = vpack.c.b16 %v6505, %v6504
  %v6515 = vsel %vm6223, %v6482, 0
  %v6518 = vsel %vm6223, %v6483, 0
  %v6521 = vsel %vm6223, %v6484, 0
  %v6524 = vsel %vm6223, %v6485, 0
  %v6527 = vsel %vm6223, %v6486, 0
  %v6530 = vsel %vm6223, %v6487, 0
  %v6533 = vsel %vm6223, %v6488, 0
  %v6536 = vsel %vm6223, %v6489, 0
  %v6539 = vsel %vm6223, %v6506, 0
  %v6542 = vsel %vm6223, %v6507, 0
  %v6545 = vsel %vm6223, %v6508, 0
  %v6548 = vsel %vm6223, %v6509, 0
  %v6551 = vsel %vm6223, %v6510, 0
  %v6554 = vsel %vm6223, %v6511, 0
  %v6557 = vsel %vm6223, %v6512, 0
  %v6560 = vsel %vm6223, %v6513, 0
  %6562 = vmatpush.bf16.xpose.msra.mxu0 %v6560
  %6563 = vmatpush.bf16.xpose.msra.mxu0 %v6557
  %6564 = vmatpush.bf16.xpose.msra.mxu0 %v6554
  %6565 = vmatpush.bf16.xpose.msra.mxu0 %v6551
  %6566 = vmatpush.bf16.xpose.msra.mxu0 %v6548
  %6567 = vmatpush.bf16.xpose.msra.mxu0 %v6545
  %6568 = vmatpush.bf16.xpose.msra.mxu0 %v6542
  %6569 = vmatpush.bf16.xpose.msra.mxu0 %v6539
  %6570 = vmatmul.bf16.gmra.mxu0 %v6515
  %v6571 = vpop.f32.mrf.mxu0
  %v6572 = vadd.f32 0.0, %v6571
  %v6573 = vpop.f32.mrf.mxu0
  %v6574 = vadd.f32 0.0, %v6573
  %6575 = vmatmul.bf16.gmra.mxu0 %v6518
  %v6576 = vpop.f32.mrf.mxu0
  %v6577 = vadd.f32 0.0, %v6576
  %v6578 = vpop.f32.mrf.mxu0
  %v6579 = vadd.f32 0.0, %v6578
  %6580 = vmatmul.bf16.gmra.mxu0 %v6521
  %v6581 = vpop.f32.mrf.mxu0
  %v6582 = vadd.f32 0.0, %v6581
  %v6583 = vpop.f32.mrf.mxu0
  %v6584 = vadd.f32 0.0, %v6583
  %6585 = vmatmul.bf16.gmra.mxu0 %v6524
  %v6586 = vpop.f32.mrf.mxu0
  %v6587 = vadd.f32 0.0, %v6586
  %v6588 = vpop.f32.mrf.mxu0
  %v6589 = vadd.f32 0.0, %v6588
  %6590 = vmatmul.bf16.gmra.mxu0 %v6527
  %v6591 = vpop.f32.mrf.mxu0
  %v6592 = vadd.f32 0.0, %v6591
  %v6593 = vpop.f32.mrf.mxu0
  %v6594 = vadd.f32 0.0, %v6593
  %6595 = vmatmul.bf16.gmra.mxu0 %v6530
  %v6596 = vpop.f32.mrf.mxu0
  %v6597 = vadd.f32 0.0, %v6596
  %v6598 = vpop.f32.mrf.mxu0
  %v6599 = vadd.f32 0.0, %v6598
  %6600 = vmatmul.bf16.gmra.mxu0 %v6533
  %v6601 = vpop.f32.mrf.mxu0
  %v6602 = vadd.f32 0.0, %v6601
  %v6603 = vpop.f32.mrf.mxu0
  %v6604 = vadd.f32 0.0, %v6603
  %6605 = vmatmul.bf16.gmra.mxu0 %v6536
  %v6606 = vpop.f32.mrf.mxu0
  %v6607 = vadd.f32 0.0, %v6606
  %v6608 = vpop.f32.mrf.mxu0
  %v6609 = vadd.f32 0.0, %v6608
  %6610 = vdwg.mxu0
  %v6611 = vunpack.c.l.b16 %v2055
  %v6612 = vunpack.c.l.b16 %v2067
  %v6613 = vunpack.c.l.b16 %v2079
  %v6614 = vunpack.c.l.b16 %v2091
  %v6615 = vunpack.c.l.b16 %v2103
  %v6616 = vunpack.c.l.b16 %v2115
  %v6617 = vunpack.c.l.b16 %v2127
  %v6618 = vunpack.c.l.b16 %v2139
  %v6619 = vunpack.c.l.b16 %v2151
  %v6620 = vunpack.c.l.b16 %v2163
  %v6621 = vunpack.c.l.b16 %v2175
  %v6622 = vunpack.c.l.b16 %v2187
  %v6623 = vunpack.c.l.b16 %v2199
  %v6624 = vunpack.c.l.b16 %v2211
  %v6625 = vunpack.c.l.b16 %v2223
  %v6626 = vunpack.c.l.b16 %v2235
  %v6627 = vpack.c.b16 %v6612, %v6611
  %v6628 = vpack.c.b16 %v6614, %v6613
  %v6629 = vpack.c.b16 %v6616, %v6615
  %v6630 = vpack.c.b16 %v6618, %v6617
  %v6631 = vpack.c.b16 %v6620, %v6619
  %v6632 = vpack.c.b16 %v6622, %v6621
  %v6633 = vpack.c.b16 %v6624, %v6623
  %v6634 = vpack.c.b16 %v6626, %v6625
  %v6635 = vunpack.c.l.b16 %v3991
  %v6636 = vunpack.c.l.b16 %v4003
  %v6637 = vunpack.c.l.b16 %v4015
  %v6638 = vunpack.c.l.b16 %v4027
  %v6639 = vunpack.c.l.b16 %v4039
  %v6640 = vunpack.c.l.b16 %v4051
  %v6641 = vunpack.c.l.b16 %v4063
  %v6642 = vunpack.c.l.b16 %v4075
  %v6643 = vunpack.c.l.b16 %v4087
  %v6644 = vunpack.c.l.b16 %v4099
  %v6645 = vunpack.c.l.b16 %v4111
  %v6646 = vunpack.c.l.b16 %v4123
  %v6647 = vunpack.c.l.b16 %v4135
  %v6648 = vunpack.c.l.b16 %v4147
  %v6649 = vunpack.c.l.b16 %v4159
  %v6650 = vunpack.c.l.b16 %v4171
  %v6651 = vpack.c.b16 %v6636, %v6635
  %v6652 = vpack.c.b16 %v6638, %v6637
  %v6653 = vpack.c.b16 %v6640, %v6639
  %v6654 = vpack.c.b16 %v6642, %v6641
  %v6655 = vpack.c.b16 %v6644, %v6643
  %v6656 = vpack.c.b16 %v6646, %v6645
  %v6657 = vpack.c.b16 %v6648, %v6647
  %v6658 = vpack.c.b16 %v6650, %v6649
  %v6660 = vsel %vm6223, %v6627, 0
  %v6663 = vsel %vm6223, %v6628, 0
  %v6666 = vsel %vm6223, %v6629, 0
  %v6669 = vsel %vm6223, %v6630, 0
  %v6672 = vsel %vm6223, %v6631, 0
  %v6675 = vsel %vm6223, %v6632, 0
  %v6678 = vsel %vm6223, %v6633, 0
  %v6681 = vsel %vm6223, %v6634, 0
  %v6684 = vsel %vm6223, %v6651, 0
  %v6687 = vsel %vm6223, %v6652, 0
  %v6690 = vsel %vm6223, %v6653, 0
  %v6693 = vsel %vm6223, %v6654, 0
  %v6696 = vsel %vm6223, %v6655, 0
  %v6699 = vsel %vm6223, %v6656, 0
  %v6702 = vsel %vm6223, %v6657, 0
  %v6705 = vsel %vm6223, %v6658, 0
  %6707 = vmatpush.bf16.xpose.msra.mxu0 %v6705
  %6708 = vmatpush.bf16.xpose.msra.mxu0 %v6702
  %6709 = vmatpush.bf16.xpose.msra.mxu0 %v6699
  %6710 = vmatpush.bf16.xpose.msra.mxu0 %v6696
  %6711 = vmatpush.bf16.xpose.msra.mxu0 %v6693
  %6712 = vmatpush.bf16.xpose.msra.mxu0 %v6690
  %6713 = vmatpush.bf16.xpose.msra.mxu0 %v6687
  %6714 = vmatpush.bf16.xpose.msra.mxu0 %v6684
  %6715 = vmatmul.bf16.gmra.mxu0 %v6660
  %v6716 = vpop.f32.mrf.mxu0
  %v6717 = vadd.f32 0.0, %v6716
  %v6718 = vpop.f32.mrf.mxu0
  %v6719 = vadd.f32 0.0, %v6718
  %6720 = vmatmul.bf16.gmra.mxu0 %v6663
  %v6721 = vpop.f32.mrf.mxu0
  %v6722 = vadd.f32 0.0, %v6721
  %v6723 = vpop.f32.mrf.mxu0
  %v6724 = vadd.f32 0.0, %v6723
  %6725 = vmatmul.bf16.gmra.mxu0 %v6666
  %v6726 = vpop.f32.mrf.mxu0
  %v6727 = vadd.f32 0.0, %v6726
  %v6728 = vpop.f32.mrf.mxu0
  %v6729 = vadd.f32 0.0, %v6728
  %6730 = vmatmul.bf16.gmra.mxu0 %v6669
  %v6731 = vpop.f32.mrf.mxu0
  %v6732 = vadd.f32 0.0, %v6731
  %v6733 = vpop.f32.mrf.mxu0
  %v6734 = vadd.f32 0.0, %v6733
  %6735 = vmatmul.bf16.gmra.mxu0 %v6672
  %v6736 = vpop.f32.mrf.mxu0
  %v6737 = vadd.f32 0.0, %v6736
  %v6738 = vpop.f32.mrf.mxu0
  %v6739 = vadd.f32 0.0, %v6738
  %6740 = vmatmul.bf16.gmra.mxu0 %v6675
  %v6741 = vpop.f32.mrf.mxu0
  %v6742 = vadd.f32 0.0, %v6741
  %v6743 = vpop.f32.mrf.mxu0
  %v6744 = vadd.f32 0.0, %v6743
  %6745 = vmatmul.bf16.gmra.mxu0 %v6678
  %v6746 = vpop.f32.mrf.mxu0
  %v6747 = vadd.f32 0.0, %v6746
  %v6748 = vpop.f32.mrf.mxu0
  %v6749 = vadd.f32 0.0, %v6748
  %6750 = vmatmul.bf16.gmra.mxu0 %v6681
  %v6751 = vpop.f32.mrf.mxu0
  %v6752 = vadd.f32 0.0, %v6751
  %v6753 = vpop.f32.mrf.mxu0
  %v6754 = vadd.f32 0.0, %v6753
  %6755 = vdwg.mxu0
  %v6756 = vunpack.c.l.b16 %v2058
  %v6757 = vunpack.c.l.b16 %v2070
  %v6758 = vunpack.c.l.b16 %v2082
  %v6759 = vunpack.c.l.b16 %v2094
  %v6760 = vunpack.c.l.b16 %v2106
  %v6761 = vunpack.c.l.b16 %v2118
  %v6762 = vunpack.c.l.b16 %v2130
  %v6763 = vunpack.c.l.b16 %v2142
  %v6764 = vunpack.c.l.b16 %v2154
  %v6765 = vunpack.c.l.b16 %v2166
  %v6766 = vunpack.c.l.b16 %v2178
  %v6767 = vunpack.c.l.b16 %v2190
  %v6768 = vunpack.c.l.b16 %v2202
  %v6769 = vunpack.c.l.b16 %v2214
  %v6770 = vunpack.c.l.b16 %v2226
  %v6771 = vunpack.c.l.b16 %v2238
  %v6772 = vpack.c.b16 %v6757, %v6756
  %v6773 = vpack.c.b16 %v6759, %v6758
  %v6774 = vpack.c.b16 %v6761, %v6760
  %v6775 = vpack.c.b16 %v6763, %v6762
  %v6776 = vpack.c.b16 %v6765, %v6764
  %v6777 = vpack.c.b16 %v6767, %v6766
  %v6778 = vpack.c.b16 %v6769, %v6768
  %v6779 = vpack.c.b16 %v6771, %v6770
  %v6780 = vunpack.c.l.b16 %v3994
  %v6781 = vunpack.c.l.b16 %v4006
  %v6782 = vunpack.c.l.b16 %v4018
  %v6783 = vunpack.c.l.b16 %v4030
  %v6784 = vunpack.c.l.b16 %v4042
  %v6785 = vunpack.c.l.b16 %v4054
  %v6786 = vunpack.c.l.b16 %v4066
  %v6787 = vunpack.c.l.b16 %v4078
  %v6788 = vunpack.c.l.b16 %v4090
  %v6789 = vunpack.c.l.b16 %v4102
  %v6790 = vunpack.c.l.b16 %v4114
  %v6791 = vunpack.c.l.b16 %v4126
  %v6792 = vunpack.c.l.b16 %v4138
  %v6793 = vunpack.c.l.b16 %v4150
  %v6794 = vunpack.c.l.b16 %v4162
  %v6795 = vunpack.c.l.b16 %v4174
  %v6796 = vpack.c.b16 %v6781, %v6780
  %v6797 = vpack.c.b16 %v6783, %v6782
  %v6798 = vpack.c.b16 %v6785, %v6784
  %v6799 = vpack.c.b16 %v6787, %v6786
  %v6800 = vpack.c.b16 %v6789, %v6788
  %v6801 = vpack.c.b16 %v6791, %v6790
  %v6802 = vpack.c.b16 %v6793, %v6792
  %v6803 = vpack.c.b16 %v6795, %v6794
  %v6805 = vsel %vm6223, %v6772, 0
  %v6808 = vsel %vm6223, %v6773, 0
  %v6811 = vsel %vm6223, %v6774, 0
  %v6814 = vsel %vm6223, %v6775, 0
  %v6817 = vsel %vm6223, %v6776, 0
  %v6820 = vsel %vm6223, %v6777, 0
  %v6823 = vsel %vm6223, %v6778, 0
  %v6826 = vsel %vm6223, %v6779, 0
  %v6829 = vsel %vm6223, %v6796, 0
  %v6832 = vsel %vm6223, %v6797, 0
  %v6835 = vsel %vm6223, %v6798, 0
  %v6838 = vsel %vm6223, %v6799, 0
  %v6841 = vsel %vm6223, %v6800, 0
  %v6844 = vsel %vm6223, %v6801, 0
  %v6847 = vsel %vm6223, %v6802, 0
  %v6850 = vsel %vm6223, %v6803, 0
  %6852 = vmatpush.bf16.xpose.msra.mxu0 %v6850
  %6853 = vmatpush.bf16.xpose.msra.mxu0 %v6847
  %6854 = vmatpush.bf16.xpose.msra.mxu0 %v6844
  %6855 = vmatpush.bf16.xpose.msra.mxu0 %v6841
  %6856 = vmatpush.bf16.xpose.msra.mxu0 %v6838
  %6857 = vmatpush.bf16.xpose.msra.mxu0 %v6835
  %6858 = vmatpush.bf16.xpose.msra.mxu0 %v6832
  %6859 = vmatpush.bf16.xpose.msra.mxu0 %v6829
  %6860 = vmatmul.bf16.gmra.mxu0 %v6805
  %v6861 = vpop.f32.mrf.mxu0
  %v6862 = vadd.f32 0.0, %v6861
  %v6863 = vpop.f32.mrf.mxu0
  %v6864 = vadd.f32 0.0, %v6863
  %6865 = vmatmul.bf16.gmra.mxu0 %v6808
  %v6866 = vpop.f32.mrf.mxu0
  %v6867 = vadd.f32 0.0, %v6866
  %v6868 = vpop.f32.mrf.mxu0
  %v6869 = vadd.f32 0.0, %v6868
  %6870 = vmatmul.bf16.gmra.mxu0 %v6811
  %v6871 = vpop.f32.mrf.mxu0
  %v6872 = vadd.f32 0.0, %v6871
  %v6873 = vpop.f32.mrf.mxu0
  %v6874 = vadd.f32 0.0, %v6873
  %6875 = vmatmul.bf16.gmra.mxu0 %v6814
  %v6876 = vpop.f32.mrf.mxu0
  %v6877 = vadd.f32 0.0, %v6876
  %v6878 = vpop.f32.mrf.mxu0
  %v6879 = vadd.f32 0.0, %v6878
  %6880 = vmatmul.bf16.gmra.mxu0 %v6817
  %v6881 = vpop.f32.mrf.mxu0
  %v6882 = vadd.f32 0.0, %v6881
  %v6883 = vpop.f32.mrf.mxu0
  %v6884 = vadd.f32 0.0, %v6883
  %6885 = vmatmul.bf16.gmra.mxu0 %v6820
  %v6886 = vpop.f32.mrf.mxu0
  %v6887 = vadd.f32 0.0, %v6886
  %v6888 = vpop.f32.mrf.mxu0
  %v6889 = vadd.f32 0.0, %v6888
  %6890 = vmatmul.bf16.gmra.mxu0 %v6823
  %v6891 = vpop.f32.mrf.mxu0
  %v6892 = vadd.f32 0.0, %v6891
  %v6893 = vpop.f32.mrf.mxu0
  %v6894 = vadd.f32 0.0, %v6893
  %6895 = vmatmul.bf16.gmra.mxu0 %v6826
  %v6896 = vpop.f32.mrf.mxu0
  %v6897 = vadd.f32 0.0, %v6896
  %v6898 = vpop.f32.mrf.mxu0
  %v6899 = vadd.f32 0.0, %v6898
  %6900 = vdwg.mxu0
  %v6901 = vld [vmem:[%s2] sm:$0xf]
  %v6902 = vld [vmem:[%s2 + $0x4] sm:$0xf]
  %v6903 = vld [vmem:[%s2 + $0x8] sm:$0xf]
  %v6904 = vld [vmem:[%s2 + $0xc] sm:$0xf]
  %v6905 = vld [vmem:[%s2 + $0x10] sm:$0xf]
  %v6906 = vld [vmem:[%s2 + $0x14] sm:$0xf]
  %v6907 = vld [vmem:[%s2 + $0x18] sm:$0xf]
  %v6908 = vld [vmem:[%s2 + $0x1c] sm:$0xf]
  %v6909 = vld [vmem:[%s2 + $0x20] sm:$0xf]
  %v6910 = vld [vmem:[%s2 + $0x24] sm:$0xf]
  %v6911 = vld [vmem:[%s2 + $0x28] sm:$0xf]
  %v6912 = vld [vmem:[%s2 + $0x2c] sm:$0xf]
  %v6913 = vld [vmem:[%s2 + $0x30] sm:$0xf]
  %v6914 = vld [vmem:[%s2 + $0x34] sm:$0xf]
  %v6915 = vld [vmem:[%s2 + $0x38] sm:$0xf]
  %v6916 = vld [vmem:[%s2 + $0x3c] sm:$0xf]
  %v6917 = vunpack.c.l.bf16 %v6901
  %v6918 = vunpack.c.l.bf16 %v6902
  %v6919 = vunpack.c.l.bf16 %v6903
  %v6920 = vunpack.c.l.bf16 %v6904
  %v6921 = vunpack.c.l.bf16 %v6905
  %v6922 = vunpack.c.l.bf16 %v6906
  %v6923 = vunpack.c.l.bf16 %v6907
  %v6924 = vunpack.c.l.bf16 %v6908
  %v6925 = vunpack.c.l.bf16 %v6909
  %v6926 = vunpack.c.l.bf16 %v6910
  %v6927 = vunpack.c.l.bf16 %v6911
  %v6928 = vunpack.c.l.bf16 %v6912
  %v6929 = vunpack.c.l.bf16 %v6913
  %v6930 = vunpack.c.l.bf16 %v6914
  %v6931 = vunpack.c.l.bf16 %v6915
  %v6932 = vunpack.c.l.bf16 %v6916
  %vm6933 = vcmp.ne.f32.partialorder %v6917, 0.0
  %vm6934 = vcmp.ne.f32.partialorder %v6918, 0.0
  %vm6935 = vcmp.ne.f32.partialorder %v6919, 0.0
  %vm6936 = vcmp.ne.f32.partialorder %v6920, 0.0
  %vm6937 = vcmp.ne.f32.partialorder %v6921, 0.0
  %vm6938 = vcmp.ne.f32.partialorder %v6922, 0.0
  %vm6939 = vcmp.ne.f32.partialorder %v6923, 0.0
  %vm6940 = vcmp.ne.f32.partialorder %v6924, 0.0
  %vm6941 = vcmp.ne.f32.partialorder %v6925, 0.0
  %vm6942 = vcmp.ne.f32.partialorder %v6926, 0.0
  %vm6943 = vcmp.ne.f32.partialorder %v6927, 0.0
  %vm6944 = vcmp.ne.f32.partialorder %v6928, 0.0
  %vm6945 = vcmp.ne.f32.partialorder %v6929, 0.0
  %vm6946 = vcmp.ne.f32.partialorder %v6930, 0.0
  %vm6947 = vcmp.ne.f32.partialorder %v6931, 0.0
  %vm6948 = vcmp.ne.f32.partialorder %v6932, 0.0
  %v6949 = vsel %vm6933, 1, 0
  %v6950 = vsel %vm6934, 1, 0
  %v6951 = vsel %vm6935, 1, 0
  %v6952 = vsel %vm6936, 1, 0
  %v6953 = vsel %vm6937, 1, 0
  %v6954 = vsel %vm6938, 1, 0
  %v6955 = vsel %vm6939, 1, 0
  %v6956 = vsel %vm6940, 1, 0
  %v6957 = vsel %vm6941, 1, 0
  %v6958 = vsel %vm6942, 1, 0
  %v6959 = vsel %vm6943, 1, 0
  %v6960 = vsel %vm6944, 1, 0
  %v6961 = vsel %vm6945, 1, 0
  %v6962 = vsel %vm6946, 1, 0
  %v6963 = vsel %vm6947, 1, 0
  %v6964 = vsel %vm6948, 1, 0
  %vm6965 = vcmp.eq.s32.totalorder %v6949, 1
  %vm6966 = vcmp.eq.s32.totalorder %v6950, 1
  %vm6967 = vcmp.eq.s32.totalorder %v6951, 1
  %vm6968 = vcmp.eq.s32.totalorder %v6952, 1
  %vm6969 = vcmp.eq.s32.totalorder %v6953, 1
  %vm6970 = vcmp.eq.s32.totalorder %v6954, 1
  %vm6971 = vcmp.eq.s32.totalorder %v6955, 1
  %vm6972 = vcmp.eq.s32.totalorder %v6956, 1
  %vm6973 = vcmp.eq.s32.totalorder %v6957, 1
  %vm6974 = vcmp.eq.s32.totalorder %v6958, 1
  %vm6975 = vcmp.eq.s32.totalorder %v6959, 1
  %vm6976 = vcmp.eq.s32.totalorder %v6960, 1
  %vm6977 = vcmp.eq.s32.totalorder %v6961, 1
  %vm6978 = vcmp.eq.s32.totalorder %v6962, 1
  %vm6979 = vcmp.eq.s32.totalorder %v6963, 1
  %vm6980 = vcmp.eq.s32.totalorder %v6964, 1
  %v6981 = vsel %vm6965, %v6427, -1e+30
  %v6982 = vsel %vm6966, %v6429, -1e+30
  %v6983 = vsel %vm6967, %v6432, -1e+30
  %v6984 = vsel %vm6968, %v6434, -1e+30
  %v6985 = vsel %vm6969, %v6437, -1e+30
  %v6986 = vsel %vm6970, %v6439, -1e+30
  %v6987 = vsel %vm6971, %v6442, -1e+30
  %v6988 = vsel %vm6972, %v6444, -1e+30
  %v6989 = vsel %vm6973, %v6447, -1e+30
  %v6990 = vsel %vm6974, %v6449, -1e+30
  %v6991 = vsel %vm6975, %v6452, -1e+30
  %v6992 = vsel %vm6976, %v6454, -1e+30
  %v6993 = vsel %vm6977, %v6457, -1e+30
  %v6994 = vsel %vm6978, %v6459, -1e+30
  %v6995 = vsel %vm6979, %v6462, -1e+30
  %v6996 = vsel %vm6980, %v6464, -1e+30
  %v6997 = vsel %vm6965, %v6572, -1e+30
  %v6998 = vsel %vm6966, %v6574, -1e+30
  %v6999 = vsel %vm6967, %v6577, -1e+30
  %v7000 = vsel %vm6968, %v6579, -1e+30
  %v7001 = vsel %vm6969, %v6582, -1e+30
  %v7002 = vsel %vm6970, %v6584, -1e+30
  %v7003 = vsel %vm6971, %v6587, -1e+30
  %v7004 = vsel %vm6972, %v6589, -1e+30
  %v7005 = vsel %vm6973, %v6592, -1e+30
  %v7006 = vsel %vm6974, %v6594, -1e+30
  %v7007 = vsel %vm6975, %v6597, -1e+30
  %v7008 = vsel %vm6976, %v6599, -1e+30
  %v7009 = vsel %vm6977, %v6602, -1e+30
  %v7010 = vsel %vm6978, %v6604, -1e+30
  %v7011 = vsel %vm6979, %v6607, -1e+30
  %v7012 = vsel %vm6980, %v6609, -1e+30
  %v7013 = vsel %vm6965, %v6717, -1e+30
  %v7014 = vsel %vm6966, %v6719, -1e+30
  %v7015 = vsel %vm6967, %v6722, -1e+30
  %v7016 = vsel %vm6968, %v6724, -1e+30
  %v7017 = vsel %vm6969, %v6727, -1e+30
  %v7018 = vsel %vm6970, %v6729, -1e+30
  %v7019 = vsel %vm6971, %v6732, -1e+30
  %v7020 = vsel %vm6972, %v6734, -1e+30
  %v7021 = vsel %vm6973, %v6737, -1e+30
  %v7022 = vsel %vm6974, %v6739, -1e+30
  %v7023 = vsel %vm6975, %v6742, -1e+30
  %v7024 = vsel %vm6976, %v6744, -1e+30
  %v7025 = vsel %vm6977, %v6747, -1e+30
  %v7026 = vsel %vm6978, %v6749, -1e+30
  %v7027 = vsel %vm6979, %v6752, -1e+30
  %v7028 = vsel %vm6980, %v6754, -1e+30
  %v7029 = vsel %vm6965, %v6862, -1e+30
  %v7030 = vsel %vm6966, %v6864, -1e+30
  %v7031 = vsel %vm6967, %v6867, -1e+30
  %v7032 = vsel %vm6968, %v6869, -1e+30
  %v7033 = vsel %vm6969, %v6872, -1e+30
  %v7034 = vsel %vm6970, %v6874, -1e+30
  %v7035 = vsel %vm6971, %v6877, -1e+30
  %v7036 = vsel %vm6972, %v6879, -1e+30
  %v7037 = vsel %vm6973, %v6882, -1e+30
  %v7038 = vsel %vm6974, %v6884, -1e+30
  %v7039 = vsel %vm6975, %v6887, -1e+30
  %v7040 = vsel %vm6976, %v6889, -1e+30
  %v7041 = vsel %vm6977, %v6892, -1e+30
  %v7042 = vsel %vm6978, %v6894, -1e+30
  %v7043 = vsel %vm6979, %v6897, -1e+30
  %v7044 = vsel %vm6980, %v6899, -1e+30
  %7045 = vmax.xlane.f32.xlu0 %v6981
  %v7046 = vpop.xlane.xlu0 %7045
  %7047 = vmax.xlane.f32.xlu0 %v6982
  %v7048 = vpop.xlane.xlu0 %7047
  %7049 = vmax.xlane.f32.xlu0 %v6983
  %v7050 = vpop.xlane.xlu0 %7049
  %7051 = vmax.xlane.f32.xlu0 %v6984
  %v7052 = vpop.xlane.xlu0 %7051
  %7053 = vmax.xlane.f32.xlu0 %v6985
  %v7054 = vpop.xlane.xlu0 %7053
  %7055 = vmax.xlane.f32.xlu0 %v6986
  %v7056 = vpop.xlane.xlu0 %7055
  %7057 = vmax.xlane.f32.xlu0 %v6987
  %v7058 = vpop.xlane.xlu0 %7057
  %7059 = vmax.xlane.f32.xlu0 %v6988
  %v7060 = vpop.xlane.xlu0 %7059
  %7061 = vmax.xlane.f32.xlu0 %v6989
  %v7062 = vpop.xlane.xlu0 %7061
  %7063 = vmax.xlane.f32.xlu0 %v6990
  %v7064 = vpop.xlane.xlu0 %7063
  %7065 = vmax.xlane.f32.xlu0 %v6991
  %v7066 = vpop.xlane.xlu0 %7065
  %7067 = vmax.xlane.f32.xlu0 %v6992
  %v7068 = vpop.xlane.xlu0 %7067
  %7069 = vmax.xlane.f32.xlu0 %v6993
  %v7070 = vpop.xlane.xlu0 %7069
  %7071 = vmax.xlane.f32.xlu0 %v6994
  %v7072 = vpop.xlane.xlu0 %7071
  %7073 = vmax.xlane.f32.xlu0 %v6995
  %v7074 = vpop.xlane.xlu0 %7073
  %7075 = vmax.xlane.f32.xlu0 %v6996
  %v7076 = vpop.xlane.xlu0 %7075
  %7077 = vmax.xlane.f32.xlu0 %v6997
  %v7078 = vpop.xlane.xlu0 %7077
  %7079 = vmax.xlane.f32.xlu0 %v6998
  %v7080 = vpop.xlane.xlu0 %7079
  %7081 = vmax.xlane.f32.xlu0 %v6999
  %v7082 = vpop.xlane.xlu0 %7081
  %7083 = vmax.xlane.f32.xlu0 %v7000
  %v7084 = vpop.xlane.xlu0 %7083
  %7085 = vmax.xlane.f32.xlu0 %v7001
  %v7086 = vpop.xlane.xlu0 %7085
  %7087 = vmax.xlane.f32.xlu0 %v7002
  %v7088 = vpop.xlane.xlu0 %7087
  %7089 = vmax.xlane.f32.xlu0 %v7003
  %v7090 = vpop.xlane.xlu0 %7089
  %7091 = vmax.xlane.f32.xlu0 %v7004
  %v7092 = vpop.xlane.xlu0 %7091
  %7093 = vmax.xlane.f32.xlu0 %v7005
  %v7094 = vpop.xlane.xlu0 %7093
  %7095 = vmax.xlane.f32.xlu0 %v7006
  %v7096 = vpop.xlane.xlu0 %7095
  %7097 = vmax.xlane.f32.xlu0 %v7007
  %v7098 = vpop.xlane.xlu0 %7097
  %7099 = vmax.xlane.f32.xlu0 %v7008
  %v7100 = vpop.xlane.xlu0 %7099
  %7101 = vmax.xlane.f32.xlu0 %v7009
  %v7102 = vpop.xlane.xlu0 %7101
  %7103 = vmax.xlane.f32.xlu0 %v7010
  %v7104 = vpop.xlane.xlu0 %7103
  %7105 = vmax.xlane.f32.xlu0 %v7011
  %v7106 = vpop.xlane.xlu0 %7105
  %7107 = vmax.xlane.f32.xlu0 %v7012
  %v7108 = vpop.xlane.xlu0 %7107
  %7109 = vmax.xlane.f32.xlu0 %v7013
  %v7110 = vpop.xlane.xlu0 %7109
  %7111 = vmax.xlane.f32.xlu0 %v7014
  %v7112 = vpop.xlane.xlu0 %7111
  %7113 = vmax.xlane.f32.xlu0 %v7015
  %v7114 = vpop.xlane.xlu0 %7113
  %7115 = vmax.xlane.f32.xlu0 %v7016
  %v7116 = vpop.xlane.xlu0 %7115
  %7117 = vmax.xlane.f32.xlu0 %v7017
  %v7118 = vpop.xlane.xlu0 %7117
  %7119 = vmax.xlane.f32.xlu0 %v7018
  %v7120 = vpop.xlane.xlu0 %7119
  %7121 = vmax.xlane.f32.xlu0 %v7019
  %v7122 = vpop.xlane.xlu0 %7121
  %7123 = vmax.xlane.f32.xlu0 %v7020
  %v7124 = vpop.xlane.xlu0 %7123
  %7125 = vmax.xlane.f32.xlu0 %v7021
  %v7126 = vpop.xlane.xlu0 %7125
  %7127 = vmax.xlane.f32.xlu0 %v7022
  %v7128 = vpop.xlane.xlu0 %7127
  %7129 = vmax.xlane.f32.xlu0 %v7023
  %v7130 = vpop.xlane.xlu0 %7129
  %7131 = vmax.xlane.f32.xlu0 %v7024
  %v7132 = vpop.xlane.xlu0 %7131
  %7133 = vmax.xlane.f32.xlu0 %v7025
  %v7134 = vpop.xlane.xlu0 %7133
  %7135 = vmax.xlane.f32.xlu0 %v7026
  %v7136 = vpop.xlane.xlu0 %7135
  %7137 = vmax.xlane.f32.xlu0 %v7027
  %v7138 = vpop.xlane.xlu0 %7137
  %7139 = vmax.xlane.f32.xlu0 %v7028
  %v7140 = vpop.xlane.xlu0 %7139
  %7141 = vmax.xlane.f32.xlu0 %v7029
  %v7142 = vpop.xlane.xlu0 %7141
  %7143 = vmax.xlane.f32.xlu0 %v7030
  %v7144 = vpop.xlane.xlu0 %7143
  %7145 = vmax.xlane.f32.xlu0 %v7031
  %v7146 = vpop.xlane.xlu0 %7145
  %7147 = vmax.xlane.f32.xlu0 %v7032
  %v7148 = vpop.xlane.xlu0 %7147
  %7149 = vmax.xlane.f32.xlu0 %v7033
  %v7150 = vpop.xlane.xlu0 %7149
  %7151 = vmax.xlane.f32.xlu0 %v7034
  %v7152 = vpop.xlane.xlu0 %7151
  %7153 = vmax.xlane.f32.xlu0 %v7035
  %v7154 = vpop.xlane.xlu0 %7153
  %7155 = vmax.xlane.f32.xlu0 %v7036
  %v7156 = vpop.xlane.xlu0 %7155
  %7157 = vmax.xlane.f32.xlu0 %v7037
  %v7158 = vpop.xlane.xlu0 %7157
  %7159 = vmax.xlane.f32.xlu0 %v7038
  %v7160 = vpop.xlane.xlu0 %7159
  %7161 = vmax.xlane.f32.xlu0 %v7039
  %v7162 = vpop.xlane.xlu0 %7161
  %7163 = vmax.xlane.f32.xlu0 %v7040
  %v7164 = vpop.xlane.xlu0 %7163
  %7165 = vmax.xlane.f32.xlu0 %v7041
  %v7166 = vpop.xlane.xlu0 %7165
  %7167 = vmax.xlane.f32.xlu0 %v7042
  %v7168 = vpop.xlane.xlu0 %7167
  %7169 = vmax.xlane.f32.xlu0 %v7043
  %v7170 = vpop.xlane.xlu0 %7169
  %7171 = vmax.xlane.f32.xlu0 %v7044
  %v7172 = vpop.xlane.xlu0 %7171
  %v7173 = vsub.f32 %v6981, %v7046
  %v7174 = vsub.f32 %v6982, %v7048
  %v7175 = vsub.f32 %v6983, %v7050
  %v7176 = vsub.f32 %v6984, %v7052
  %v7177 = vsub.f32 %v6985, %v7054
  %v7178 = vsub.f32 %v6986, %v7056
  %v7179 = vsub.f32 %v6987, %v7058
  %v7180 = vsub.f32 %v6988, %v7060
  %v7181 = vsub.f32 %v6989, %v7062
  %v7182 = vsub.f32 %v6990, %v7064
  %v7183 = vsub.f32 %v6991, %v7066
  %v7184 = vsub.f32 %v6992, %v7068
  %v7185 = vsub.f32 %v6993, %v7070
  %v7186 = vsub.f32 %v6994, %v7072
  %v7187 = vsub.f32 %v6995, %v7074
  %v7188 = vsub.f32 %v6996, %v7076
  %v7189 = vsub.f32 %v6997, %v7078
  %v7190 = vsub.f32 %v6998, %v7080
  %v7191 = vsub.f32 %v6999, %v7082
  %v7192 = vsub.f32 %v7000, %v7084
  %v7193 = vsub.f32 %v7001, %v7086
  %v7194 = vsub.f32 %v7002, %v7088
  %v7195 = vsub.f32 %v7003, %v7090
  %v7196 = vsub.f32 %v7004, %v7092
  %v7197 = vsub.f32 %v7005, %v7094
  %v7198 = vsub.f32 %v7006, %v7096
  %v7199 = vsub.f32 %v7007, %v7098
  %v7200 = vsub.f32 %v7008, %v7100
  %v7201 = vsub.f32 %v7009, %v7102
  %v7202 = vsub.f32 %v7010, %v7104
  %v7203 = vsub.f32 %v7011, %v7106
  %v7204 = vsub.f32 %v7012, %v7108
  %v7205 = vsub.f32 %v7013, %v7110
  %v7206 = vsub.f32 %v7014, %v7112
  %v7207 = vsub.f32 %v7015, %v7114
  %v7208 = vsub.f32 %v7016, %v7116
  %v7209 = vsub.f32 %v7017, %v7118
  %v7210 = vsub.f32 %v7018, %v7120
  %v7211 = vsub.f32 %v7019, %v7122
  %v7212 = vsub.f32 %v7020, %v7124
  %v7213 = vsub.f32 %v7021, %v7126
  %v7214 = vsub.f32 %v7022, %v7128
  %v7215 = vsub.f32 %v7023, %v7130
  %v7216 = vsub.f32 %v7024, %v7132
  %v7217 = vsub.f32 %v7025, %v7134
  %v7218 = vsub.f32 %v7026, %v7136
  %v7219 = vsub.f32 %v7027, %v7138
  %v7220 = vsub.f32 %v7028, %v7140
  %v7221 = vsub.f32 %v7029, %v7142
  %v7222 = vsub.f32 %v7030, %v7144
  %v7223 = vsub.f32 %v7031, %v7146
  %v7224 = vsub.f32 %v7032, %v7148
  %v7225 = vsub.f32 %v7033, %v7150
  %v7226 = vsub.f32 %v7034, %v7152
  %v7227 = vsub.f32 %v7035, %v7154
  %v7228 = vsub.f32 %v7036, %v7156
  %v7229 = vsub.f32 %v7037, %v7158
  %v7230 = vsub.f32 %v7038, %v7160
  %v7231 = vsub.f32 %v7039, %v7162
  %v7232 = vsub.f32 %v7040, %v7164
  %v7233 = vsub.f32 %v7041, %v7166
  %v7234 = vsub.f32 %v7042, %v7168
  %v7235 = vsub.f32 %v7043, %v7170
  %v7236 = vsub.f32 %v7044, %v7172
  %v7237 = vmul.f32 %v7173, 1.442695
  %v7238 = vpow.pop %v7237
  %v7239 = vmul.f32 %v7174, 1.442695
  %v7240 = vpow.pop %v7239
  %v7241 = vmul.f32 %v7175, 1.442695
  %v7242 = vpow.pop %v7241
  %v7243 = vmul.f32 %v7176, 1.442695
  %v7244 = vpow.pop %v7243
  %v7245 = vmul.f32 %v7177, 1.442695
  %v7246 = vpow.pop %v7245
  %v7247 = vmul.f32 %v7178, 1.442695
  %v7248 = vpow.pop %v7247
  %v7249 = vmul.f32 %v7179, 1.442695
  %v7250 = vpow.pop %v7249
  %v7251 = vmul.f32 %v7180, 1.442695
  %v7252 = vpow.pop %v7251
  %v7253 = vmul.f32 %v7181, 1.442695
  %v7254 = vpow.pop %v7253
  %v7255 = vmul.f32 %v7182, 1.442695
  %v7256 = vpow.pop %v7255
  %v7257 = vmul.f32 %v7183, 1.442695
  %v7258 = vpow.pop %v7257
  %v7259 = vmul.f32 %v7184, 1.442695
  %v7260 = vpow.pop %v7259
  %v7261 = vmul.f32 %v7185, 1.442695
  %v7262 = vpow.pop %v7261
  %v7263 = vmul.f32 %v7186, 1.442695
  %v7264 = vpow.pop %v7263
  %v7265 = vmul.f32 %v7187, 1.442695
  %v7266 = vpow.pop %v7265
  %v7267 = vmul.f32 %v7188, 1.442695
  %v7268 = vpow.pop %v7267
  %v7269 = vmul.f32 %v7189, 1.442695
  %v7270 = vpow.pop %v7269
  %v7271 = vmul.f32 %v7190, 1.442695
  %v7272 = vpow.pop %v7271
  %v7273 = vmul.f32 %v7191, 1.442695
  %v7274 = vpow.pop %v7273
  %v7275 = vmul.f32 %v7192, 1.442695
  %v7276 = vpow.pop %v7275
  %v7277 = vmul.f32 %v7193, 1.442695
  %v7278 = vpow.pop %v7277
  %v7279 = vmul.f32 %v7194, 1.442695
  %v7280 = vpow.pop %v7279
  %v7281 = vmul.f32 %v7195, 1.442695
  %v7282 = vpow.pop %v7281
  %v7283 = vmul.f32 %v7196, 1.442695
  %v7284 = vpow.pop %v7283
  %v7285 = vmul.f32 %v7197, 1.442695
  %v7286 = vpow.pop %v7285
  %v7287 = vmul.f32 %v7198, 1.442695
  %v7288 = vpow.pop %v7287
  %v7289 = vmul.f32 %v7199, 1.442695
  %v7290 = vpow.pop %v7289
  %v7291 = vmul.f32 %v7200, 1.442695
  %v7292 = vpow.pop %v7291
  %v7293 = vmul.f32 %v7201, 1.442695
  %v7294 = vpow.pop %v7293
  %v7295 = vmul.f32 %v7202, 1.442695
  %v7296 = vpow.pop %v7295
  %v7297 = vmul.f32 %v7203, 1.442695
  %v7298 = vpow.pop %v7297
  %v7299 = vmul.f32 %v7204, 1.442695
  %v7300 = vpow.pop %v7299
  %v7301 = vmul.f32 %v7205, 1.442695
  %v7302 = vpow.pop %v7301
  %v7303 = vmul.f32 %v7206, 1.442695
  %v7304 = vpow.pop %v7303
  %v7305 = vmul.f32 %v7207, 1.442695
  %v7306 = vpow.pop %v7305
  %v7307 = vmul.f32 %v7208, 1.442695
  %v7308 = vpow.pop %v7307
  %v7309 = vmul.f32 %v7209, 1.442695
  %v7310 = vpow.pop %v7309
  %v7311 = vmul.f32 %v7210, 1.442695
  %v7312 = vpow.pop %v7311
  %v7313 = vmul.f32 %v7211, 1.442695
  %v7314 = vpow.pop %v7313
  %v7315 = vmul.f32 %v7212, 1.442695
  %v7316 = vpow.pop %v7315
  %v7317 = vmul.f32 %v7213, 1.442695
  %v7318 = vpow.pop %v7317
  %v7319 = vmul.f32 %v7214, 1.442695
  %v7320 = vpow.pop %v7319
  %v7321 = vmul.f32 %v7215, 1.442695
  %v7322 = vpow.pop %v7321
  %v7323 = vmul.f32 %v7216, 1.442695
  %v7324 = vpow.pop %v7323
  %v7325 = vmul.f32 %v7217, 1.442695
  %v7326 = vpow.pop %v7325
  %v7327 = vmul.f32 %v7218, 1.442695
  %v7328 = vpow.pop %v7327
  %v7329 = vmul.f32 %v7219, 1.442695
  %v7330 = vpow.pop %v7329
  %v7331 = vmul.f32 %v7220, 1.442695
  %v7332 = vpow.pop %v7331
  %v7333 = vmul.f32 %v7221, 1.442695
  %v7334 = vpow.pop %v7333
  %v7335 = vmul.f32 %v7222, 1.442695
  %v7336 = vpow.pop %v7335
  %v7337 = vmul.f32 %v7223, 1.442695
  %v7338 = vpow.pop %v7337
  %v7339 = vmul.f32 %v7224, 1.442695
  %v7340 = vpow.pop %v7339
  %v7341 = vmul.f32 %v7225, 1.442695
  %v7342 = vpow.pop %v7341
  %v7343 = vmul.f32 %v7226, 1.442695
  %v7344 = vpow.pop %v7343
  %v7345 = vmul.f32 %v7227, 1.442695
  %v7346 = vpow.pop %v7345
  %v7347 = vmul.f32 %v7228, 1.442695
  %v7348 = vpow.pop %v7347
  %v7349 = vmul.f32 %v7229, 1.442695
  %v7350 = vpow.pop %v7349
  %v7351 = vmul.f32 %v7230, 1.442695
  %v7352 = vpow.pop %v7351
  %v7353 = vmul.f32 %v7231, 1.442695
  %v7354 = vpow.pop %v7353
  %v7355 = vmul.f32 %v7232, 1.442695
  %v7356 = vpow.pop %v7355
  %v7357 = vmul.f32 %v7233, 1.442695
  %v7358 = vpow.pop %v7357
  %v7359 = vmul.f32 %v7234, 1.442695
  %v7360 = vpow.pop %v7359
  %v7361 = vmul.f32 %v7235, 1.442695
  %v7362 = vpow.pop %v7361
  %v7363 = vmul.f32 %v7236, 1.442695
  %v7364 = vpow.pop %v7363
  %v7365 = vpack.c.bf16 %v7238, %v7238
  %v7366 = vpack.c.bf16 %v7240, %v7240
  %v7367 = vpack.c.bf16 %v7242, %v7242
  %v7368 = vpack.c.bf16 %v7244, %v7244
  %v7369 = vpack.c.bf16 %v7246, %v7246
  %v7370 = vpack.c.bf16 %v7248, %v7248
  %v7371 = vpack.c.bf16 %v7250, %v7250
  %v7372 = vpack.c.bf16 %v7252, %v7252
  %v7373 = vpack.c.bf16 %v7254, %v7254
  %v7374 = vpack.c.bf16 %v7256, %v7256
  %v7375 = vpack.c.bf16 %v7258, %v7258
  %v7376 = vpack.c.bf16 %v7260, %v7260
  %v7377 = vpack.c.bf16 %v7262, %v7262
  %v7378 = vpack.c.bf16 %v7264, %v7264
  %v7379 = vpack.c.bf16 %v7266, %v7266
  %v7380 = vpack.c.bf16 %v7268, %v7268
  %v7381 = vpack.c.bf16 %v7270, %v7270
  %v7382 = vpack.c.bf16 %v7272, %v7272
  %v7383 = vpack.c.bf16 %v7274, %v7274
  %v7384 = vpack.c.bf16 %v7276, %v7276
  %v7385 = vpack.c.bf16 %v7278, %v7278
  %v7386 = vpack.c.bf16 %v7280, %v7280
  %v7387 = vpack.c.bf16 %v7282, %v7282
  %v7388 = vpack.c.bf16 %v7284, %v7284
  %v7389 = vpack.c.bf16 %v7286, %v7286
  %v7390 = vpack.c.bf16 %v7288, %v7288
  %v7391 = vpack.c.bf16 %v7290, %v7290
  %v7392 = vpack.c.bf16 %v7292, %v7292
  %v7393 = vpack.c.bf16 %v7294, %v7294
  %v7394 = vpack.c.bf16 %v7296, %v7296
  %v7395 = vpack.c.bf16 %v7298, %v7298
  %v7396 = vpack.c.bf16 %v7300, %v7300
  %v7397 = vpack.c.bf16 %v7302, %v7302
  %v7398 = vpack.c.bf16 %v7304, %v7304
  %v7399 = vpack.c.bf16 %v7306, %v7306
  %v7400 = vpack.c.bf16 %v7308, %v7308
  %v7401 = vpack.c.bf16 %v7310, %v7310
  %v7402 = vpack.c.bf16 %v7312, %v7312
  %v7403 = vpack.c.bf16 %v7314, %v7314
  %v7404 = vpack.c.bf16 %v7316, %v7316
  %v7405 = vpack.c.bf16 %v7318, %v7318
  %v7406 = vpack.c.bf16 %v7320, %v7320
  %v7407 = vpack.c.bf16 %v7322, %v7322
  %v7408 = vpack.c.bf16 %v7324, %v7324
  %v7409 = vpack.c.bf16 %v7326, %v7326
  %v7410 = vpack.c.bf16 %v7328, %v7328
  %v7411 = vpack.c.bf16 %v7330, %v7330
  %v7412 = vpack.c.bf16 %v7332, %v7332
  %v7413 = vpack.c.bf16 %v7334, %v7334
  %v7414 = vpack.c.bf16 %v7336, %v7336
  %v7415 = vpack.c.bf16 %v7338, %v7338
  %v7416 = vpack.c.bf16 %v7340, %v7340
  %v7417 = vpack.c.bf16 %v7342, %v7342
  %v7418 = vpack.c.bf16 %v7344, %v7344
  %v7419 = vpack.c.bf16 %v7346, %v7346
  %v7420 = vpack.c.bf16 %v7348, %v7348
  %v7421 = vpack.c.bf16 %v7350, %v7350
  %v7422 = vpack.c.bf16 %v7352, %v7352
  %v7423 = vpack.c.bf16 %v7354, %v7354
  %v7424 = vpack.c.bf16 %v7356, %v7356
  %v7425 = vpack.c.bf16 %v7358, %v7358
  %v7426 = vpack.c.bf16 %v7360, %v7360
  %v7427 = vpack.c.bf16 %v7362, %v7362
  %v7428 = vpack.c.bf16 %v7364, %v7364
  %v7445 = vunpack.c.l.b16 %v7365
  %v7446 = vunpack.c.l.b16 %v7366
  %v7447 = vunpack.c.l.b16 %v7367
  %v7448 = vunpack.c.l.b16 %v7368
  %v7449 = vunpack.c.l.b16 %v7369
  %v7450 = vunpack.c.l.b16 %v7370
  %v7451 = vunpack.c.l.b16 %v7371
  %v7452 = vunpack.c.l.b16 %v7372
  %v7453 = vunpack.c.l.b16 %v7373
  %v7454 = vunpack.c.l.b16 %v7374
  %v7455 = vunpack.c.l.b16 %v7375
  %v7456 = vunpack.c.l.b16 %v7376
  %v7457 = vunpack.c.l.b16 %v7377
  %v7458 = vunpack.c.l.b16 %v7378
  %v7459 = vunpack.c.l.b16 %v7379
  %v7460 = vunpack.c.l.b16 %v7380
  %v7461 = vpack.c.b16 %v7446, %v7445
  %v7462 = vpack.c.b16 %v7448, %v7447
  %v7463 = vpack.c.b16 %v7450, %v7449
  %v7464 = vpack.c.b16 %v7452, %v7451
  %v7465 = vpack.c.b16 %v7454, %v7453
  %v7466 = vpack.c.b16 %v7456, %v7455
  %v7467 = vpack.c.b16 %v7458, %v7457
  %v7468 = vpack.c.b16 %v7460, %v7459
  %7477 = vmatpush.bf16.msra.mxu0 %v6247
  %7478 = vmatpush.bf16.msra.mxu0 %v6244
  %7479 = vmatpush.bf16.msra.mxu0 %v6241
  %7480 = vmatpush.bf16.msra.mxu0 %v6238
  %7481 = vmatpush.bf16.msra.mxu0 %v6235
  %7482 = vmatpush.bf16.msra.mxu0 %v6232
  %7483 = vmatpush.bf16.msra.mxu0 %v6229
  %7484 = vmatpush.bf16.msra.mxu0 %v6226
  %7485 = vmatmul.bf16.gmra.mxu0 %v7461
  %v7486 = vpop.f32.mrf.mxu0
  %v7487 = vadd.f32 0.0, %v7486
  %v7488 = vpop.f32.mrf.mxu0
  %v7489 = vadd.f32 0.0, %v7488
  %7490 = vmatmul.bf16.gmra.mxu0 %v7462
  %v7491 = vpop.f32.mrf.mxu0
  %v7492 = vadd.f32 0.0, %v7491
  %v7493 = vpop.f32.mrf.mxu0
  %v7494 = vadd.f32 0.0, %v7493
  %7495 = vmatmul.bf16.gmra.mxu0 %v7463
  %v7496 = vpop.f32.mrf.mxu0
  %v7497 = vadd.f32 0.0, %v7496
  %v7498 = vpop.f32.mrf.mxu0
  %v7499 = vadd.f32 0.0, %v7498
  %7500 = vmatmul.bf16.gmra.mxu0 %v7464
  %v7501 = vpop.f32.mrf.mxu0
  %v7502 = vadd.f32 0.0, %v7501
  %v7503 = vpop.f32.mrf.mxu0
  %v7504 = vadd.f32 0.0, %v7503
  %7505 = vmatmul.bf16.gmra.mxu0 %v7465
  %v7506 = vpop.f32.mrf.mxu0
  %v7507 = vadd.f32 0.0, %v7506
  %v7508 = vpop.f32.mrf.mxu0
  %v7509 = vadd.f32 0.0, %v7508
  %7510 = vmatmul.bf16.gmra.mxu0 %v7466
  %v7511 = vpop.f32.mrf.mxu0
  %v7512 = vadd.f32 0.0, %v7511
  %v7513 = vpop.f32.mrf.mxu0
  %v7514 = vadd.f32 0.0, %v7513
  %7515 = vmatmul.bf16.gmra.mxu0 %v7467
  %v7516 = vpop.f32.mrf.mxu0
  %v7517 = vadd.f32 0.0, %v7516
  %v7518 = vpop.f32.mrf.mxu0
  %v7519 = vadd.f32 0.0, %v7518
  %7520 = vmatmul.bf16.gmra.mxu0 %v7468
  %v7521 = vpop.f32.mrf.mxu0
  %v7522 = vadd.f32 0.0, %v7521
  %v7523 = vpop.f32.mrf.mxu0
  %v7524 = vadd.f32 0.0, %v7523
  %7525 = vdwg.mxu0
  %v7542 = vunpack.c.l.b16 %v7381
  %v7543 = vunpack.c.l.b16 %v7382
  %v7544 = vunpack.c.l.b16 %v7383
  %v7545 = vunpack.c.l.b16 %v7384
  %v7546 = vunpack.c.l.b16 %v7385
  %v7547 = vunpack.c.l.b16 %v7386
  %v7548 = vunpack.c.l.b16 %v7387
  %v7549 = vunpack.c.l.b16 %v7388
  %v7550 = vunpack.c.l.b16 %v7389
  %v7551 = vunpack.c.l.b16 %v7390
  %v7552 = vunpack.c.l.b16 %v7391
  %v7553 = vunpack.c.l.b16 %v7392
  %v7554 = vunpack.c.l.b16 %v7393
  %v7555 = vunpack.c.l.b16 %v7394
  %v7556 = vunpack.c.l.b16 %v7395
  %v7557 = vunpack.c.l.b16 %v7396
  %v7558 = vpack.c.b16 %v7543, %v7542
  %v7559 = vpack.c.b16 %v7545, %v7544
  %v7560 = vpack.c.b16 %v7547, %v7546
  %v7561 = vpack.c.b16 %v7549, %v7548
  %v7562 = vpack.c.b16 %v7551, %v7550
  %v7563 = vpack.c.b16 %v7553, %v7552
  %v7564 = vpack.c.b16 %v7555, %v7554
  %v7565 = vpack.c.b16 %v7557, %v7556
  %7574 = vmatpush.bf16.msra.mxu0 %v6271
  %7575 = vmatpush.bf16.msra.mxu0 %v6268
  %7576 = vmatpush.bf16.msra.mxu0 %v6265
  %7577 = vmatpush.bf16.msra.mxu0 %v6262
  %7578 = vmatpush.bf16.msra.mxu0 %v6259
  %7579 = vmatpush.bf16.msra.mxu0 %v6256
  %7580 = vmatpush.bf16.msra.mxu0 %v6253
  %7581 = vmatpush.bf16.msra.mxu0 %v6250
  %7582 = vmatmul.bf16.gmra.mxu0 %v7558
  %v7583 = vpop.f32.mrf.mxu0
  %v7584 = vadd.f32 0.0, %v7583
  %v7585 = vpop.f32.mrf.mxu0
  %v7586 = vadd.f32 0.0, %v7585
  %7587 = vmatmul.bf16.gmra.mxu0 %v7559
  %v7588 = vpop.f32.mrf.mxu0
  %v7589 = vadd.f32 0.0, %v7588
  %v7590 = vpop.f32.mrf.mxu0
  %v7591 = vadd.f32 0.0, %v7590
  %7592 = vmatmul.bf16.gmra.mxu0 %v7560
  %v7593 = vpop.f32.mrf.mxu0
  %v7594 = vadd.f32 0.0, %v7593
  %v7595 = vpop.f32.mrf.mxu0
  %v7596 = vadd.f32 0.0, %v7595
  %7597 = vmatmul.bf16.gmra.mxu0 %v7561
  %v7598 = vpop.f32.mrf.mxu0
  %v7599 = vadd.f32 0.0, %v7598
  %v7600 = vpop.f32.mrf.mxu0
  %v7601 = vadd.f32 0.0, %v7600
  %7602 = vmatmul.bf16.gmra.mxu0 %v7562
  %v7603 = vpop.f32.mrf.mxu0
  %v7604 = vadd.f32 0.0, %v7603
  %v7605 = vpop.f32.mrf.mxu0
  %v7606 = vadd.f32 0.0, %v7605
  %7607 = vmatmul.bf16.gmra.mxu0 %v7563
  %v7608 = vpop.f32.mrf.mxu0
  %v7609 = vadd.f32 0.0, %v7608
  %v7610 = vpop.f32.mrf.mxu0
  %v7611 = vadd.f32 0.0, %v7610
  %7612 = vmatmul.bf16.gmra.mxu0 %v7564
  %v7613 = vpop.f32.mrf.mxu0
  %v7614 = vadd.f32 0.0, %v7613
  %v7615 = vpop.f32.mrf.mxu0
  %v7616 = vadd.f32 0.0, %v7615
  %7617 = vmatmul.bf16.gmra.mxu0 %v7565
  %v7618 = vpop.f32.mrf.mxu0
  %v7619 = vadd.f32 0.0, %v7618
  %v7620 = vpop.f32.mrf.mxu0
  %v7621 = vadd.f32 0.0, %v7620
  %7622 = vdwg.mxu0
  %v7639 = vunpack.c.l.b16 %v7397
  %v7640 = vunpack.c.l.b16 %v7398
  %v7641 = vunpack.c.l.b16 %v7399
  %v7642 = vunpack.c.l.b16 %v7400
  %v7643 = vunpack.c.l.b16 %v7401
  %v7644 = vunpack.c.l.b16 %v7402
  %v7645 = vunpack.c.l.b16 %v7403
  %v7646 = vunpack.c.l.b16 %v7404
  %v7647 = vunpack.c.l.b16 %v7405
  %v7648 = vunpack.c.l.b16 %v7406
  %v7649 = vunpack.c.l.b16 %v7407
  %v7650 = vunpack.c.l.b16 %v7408
  %v7651 = vunpack.c.l.b16 %v7409
  %v7652 = vunpack.c.l.b16 %v7410
  %v7653 = vunpack.c.l.b16 %v7411
  %v7654 = vunpack.c.l.b16 %v7412
  %v7655 = vpack.c.b16 %v7640, %v7639
  %v7656 = vpack.c.b16 %v7642, %v7641
  %v7657 = vpack.c.b16 %v7644, %v7643
  %v7658 = vpack.c.b16 %v7646, %v7645
  %v7659 = vpack.c.b16 %v7648, %v7647
  %v7660 = vpack.c.b16 %v7650, %v7649
  %v7661 = vpack.c.b16 %v7652, %v7651
  %v7662 = vpack.c.b16 %v7654, %v7653
  %7671 = vmatpush.bf16.msra.mxu0 %v6295
  %7672 = vmatpush.bf16.msra.mxu0 %v6292
  %7673 = vmatpush.bf16.msra.mxu0 %v6289
  %7674 = vmatpush.bf16.msra.mxu0 %v6286
  %7675 = vmatpush.bf16.msra.mxu0 %v6283
  %7676 = vmatpush.bf16.msra.mxu0 %v6280
  %7677 = vmatpush.bf16.msra.mxu0 %v6277
  %7678 = vmatpush.bf16.msra.mxu0 %v6274
  %7679 = vmatmul.bf16.gmra.mxu0 %v7655
  %v7680 = vpop.f32.mrf.mxu0
  %v7681 = vadd.f32 0.0, %v7680
  %v7682 = vpop.f32.mrf.mxu0
  %v7683 = vadd.f32 0.0, %v7682
  %7684 = vmatmul.bf16.gmra.mxu0 %v7656
  %v7685 = vpop.f32.mrf.mxu0
  %v7686 = vadd.f32 0.0, %v7685
  %v7687 = vpop.f32.mrf.mxu0
  %v7688 = vadd.f32 0.0, %v7687
  %7689 = vmatmul.bf16.gmra.mxu0 %v7657
  %v7690 = vpop.f32.mrf.mxu0
  %v7691 = vadd.f32 0.0, %v7690
  %v7692 = vpop.f32.mrf.mxu0
  %v7693 = vadd.f32 0.0, %v7692
  %7694 = vmatmul.bf16.gmra.mxu0 %v7658
  %v7695 = vpop.f32.mrf.mxu0
  %v7696 = vadd.f32 0.0, %v7695
  %v7697 = vpop.f32.mrf.mxu0
  %v7698 = vadd.f32 0.0, %v7697
  %7699 = vmatmul.bf16.gmra.mxu0 %v7659
  %v7700 = vpop.f32.mrf.mxu0
  %v7701 = vadd.f32 0.0, %v7700
  %v7702 = vpop.f32.mrf.mxu0
  %v7703 = vadd.f32 0.0, %v7702
  %7704 = vmatmul.bf16.gmra.mxu0 %v7660
  %v7705 = vpop.f32.mrf.mxu0
  %v7706 = vadd.f32 0.0, %v7705
  %v7707 = vpop.f32.mrf.mxu0
  %v7708 = vadd.f32 0.0, %v7707
  %7709 = vmatmul.bf16.gmra.mxu0 %v7661
  %v7710 = vpop.f32.mrf.mxu0
  %v7711 = vadd.f32 0.0, %v7710
  %v7712 = vpop.f32.mrf.mxu0
  %v7713 = vadd.f32 0.0, %v7712
  %7714 = vmatmul.bf16.gmra.mxu0 %v7662
  %v7715 = vpop.f32.mrf.mxu0
  %v7716 = vadd.f32 0.0, %v7715
  %v7717 = vpop.f32.mrf.mxu0
  %v7718 = vadd.f32 0.0, %v7717
  %7719 = vdwg.mxu0
  %v7736 = vunpack.c.l.b16 %v7413
  %v7737 = vunpack.c.l.b16 %v7414
  %v7738 = vunpack.c.l.b16 %v7415
  %v7739 = vunpack.c.l.b16 %v7416
  %v7740 = vunpack.c.l.b16 %v7417
  %v7741 = vunpack.c.l.b16 %v7418
  %v7742 = vunpack.c.l.b16 %v7419
  %v7743 = vunpack.c.l.b16 %v7420
  %v7744 = vunpack.c.l.b16 %v7421
  %v7745 = vunpack.c.l.b16 %v7422
  %v7746 = vunpack.c.l.b16 %v7423
  %v7747 = vunpack.c.l.b16 %v7424
  %v7748 = vunpack.c.l.b16 %v7425
  %v7749 = vunpack.c.l.b16 %v7426
  %v7750 = vunpack.c.l.b16 %v7427
  %v7751 = vunpack.c.l.b16 %v7428
  %v7752 = vpack.c.b16 %v7737, %v7736
  %v7753 = vpack.c.b16 %v7739, %v7738
  %v7754 = vpack.c.b16 %v7741, %v7740
  %v7755 = vpack.c.b16 %v7743, %v7742
  %v7756 = vpack.c.b16 %v7745, %v7744
  %v7757 = vpack.c.b16 %v7747, %v7746
  %v7758 = vpack.c.b16 %v7749, %v7748
  %v7759 = vpack.c.b16 %v7751, %v7750
  %7768 = vmatpush.bf16.msra.mxu0 %v6319
  %7769 = vmatpush.bf16.msra.mxu0 %v6316
  %7770 = vmatpush.bf16.msra.mxu0 %v6313
  %7771 = vmatpush.bf16.msra.mxu0 %v6310
  %7772 = vmatpush.bf16.msra.mxu0 %v6307
  %7773 = vmatpush.bf16.msra.mxu0 %v6304
  %7774 = vmatpush.bf16.msra.mxu0 %v6301
  %7775 = vmatpush.bf16.msra.mxu0 %v6298
  %7776 = vmatmul.bf16.gmra.mxu0 %v7752
  %v7777 = vpop.f32.mrf.mxu0
  %v7778 = vadd.f32 0.0, %v7777
  %v7779 = vpop.f32.mrf.mxu0
  %v7780 = vadd.f32 0.0, %v7779
  %7781 = vmatmul.bf16.gmra.mxu0 %v7753
  %v7782 = vpop.f32.mrf.mxu0
  %v7783 = vadd.f32 0.0, %v7782
  %v7784 = vpop.f32.mrf.mxu0
  %v7785 = vadd.f32 0.0, %v7784
  %7786 = vmatmul.bf16.gmra.mxu0 %v7754
  %v7787 = vpop.f32.mrf.mxu0
  %v7788 = vadd.f32 0.0, %v7787
  %v7789 = vpop.f32.mrf.mxu0
  %v7790 = vadd.f32 0.0, %v7789
  %7791 = vmatmul.bf16.gmra.mxu0 %v7755
  %v7792 = vpop.f32.mrf.mxu0
  %v7793 = vadd.f32 0.0, %v7792
  %v7794 = vpop.f32.mrf.mxu0
  %v7795 = vadd.f32 0.0, %v7794
  %7796 = vmatmul.bf16.gmra.mxu0 %v7756
  %v7797 = vpop.f32.mrf.mxu0
  %v7798 = vadd.f32 0.0, %v7797
  %v7799 = vpop.f32.mrf.mxu0
  %v7800 = vadd.f32 0.0, %v7799
  %7801 = vmatmul.bf16.gmra.mxu0 %v7757
  %v7802 = vpop.f32.mrf.mxu0
  %v7803 = vadd.f32 0.0, %v7802
  %v7804 = vpop.f32.mrf.mxu0
  %v7805 = vadd.f32 0.0, %v7804
  %7806 = vmatmul.bf16.gmra.mxu0 %v7758
  %v7807 = vpop.f32.mrf.mxu0
  %v7808 = vadd.f32 0.0, %v7807
  %v7809 = vpop.f32.mrf.mxu0
  %v7810 = vadd.f32 0.0, %v7809
  %7811 = vmatmul.bf16.gmra.mxu0 %v7759
  %v7812 = vpop.f32.mrf.mxu0
  %v7813 = vadd.f32 0.0, %v7812
  %v7814 = vpop.f32.mrf.mxu0
  %v7815 = vadd.f32 0.0, %v7814
  %7816 = vdwg.mxu0
  %v7817 = vmax.f32 %v7487, 1e-30
  %v7818 = vmax.f32 %v7489, 1e-30
  %v7819 = vmax.f32 %v7492, 1e-30
  %v7820 = vmax.f32 %v7494, 1e-30
  %v7821 = vmax.f32 %v7497, 1e-30
  %v7822 = vmax.f32 %v7499, 1e-30
  %v7823 = vmax.f32 %v7502, 1e-30
  %v7824 = vmax.f32 %v7504, 1e-30
  %v7825 = vmax.f32 %v7507, 1e-30
  %v7826 = vmax.f32 %v7509, 1e-30
  %v7827 = vmax.f32 %v7512, 1e-30
  %v7828 = vmax.f32 %v7514, 1e-30
  %v7829 = vmax.f32 %v7517, 1e-30
  %v7830 = vmax.f32 %v7519, 1e-30
  %v7831 = vmax.f32 %v7522, 1e-30
  %v7832 = vmax.f32 %v7524, 1e-30
  %v7833 = vmax.f32 %v7584, 1e-30
  %v7834 = vmax.f32 %v7586, 1e-30
  %v7835 = vmax.f32 %v7589, 1e-30
  %v7836 = vmax.f32 %v7591, 1e-30
  %v7837 = vmax.f32 %v7594, 1e-30
  %v7838 = vmax.f32 %v7596, 1e-30
  %v7839 = vmax.f32 %v7599, 1e-30
  %v7840 = vmax.f32 %v7601, 1e-30
  %v7841 = vmax.f32 %v7604, 1e-30
  %v7842 = vmax.f32 %v7606, 1e-30
  %v7843 = vmax.f32 %v7609, 1e-30
  %v7844 = vmax.f32 %v7611, 1e-30
  %v7845 = vmax.f32 %v7614, 1e-30
  %v7846 = vmax.f32 %v7616, 1e-30
  %v7847 = vmax.f32 %v7619, 1e-30
  %v7848 = vmax.f32 %v7621, 1e-30
  %v7849 = vmax.f32 %v7681, 1e-30
  %v7850 = vmax.f32 %v7683, 1e-30
  %v7851 = vmax.f32 %v7686, 1e-30
  %v7852 = vmax.f32 %v7688, 1e-30
  %v7853 = vmax.f32 %v7691, 1e-30
  %v7854 = vmax.f32 %v7693, 1e-30
  %v7855 = vmax.f32 %v7696, 1e-30
  %v7856 = vmax.f32 %v7698, 1e-30
  %v7857 = vmax.f32 %v7701, 1e-30
  %v7858 = vmax.f32 %v7703, 1e-30
  %v7859 = vmax.f32 %v7706, 1e-30
  %v7860 = vmax.f32 %v7708, 1e-30
  %v7861 = vmax.f32 %v7711, 1e-30
  %v7862 = vmax.f32 %v7713, 1e-30
  %v7863 = vmax.f32 %v7716, 1e-30
  %v7864 = vmax.f32 %v7718, 1e-30
  %v7865 = vmax.f32 %v7778, 1e-30
  %v7866 = vmax.f32 %v7780, 1e-30
  %v7867 = vmax.f32 %v7783, 1e-30
  %v7868 = vmax.f32 %v7785, 1e-30
  %v7869 = vmax.f32 %v7788, 1e-30
  %v7870 = vmax.f32 %v7790, 1e-30
  %v7871 = vmax.f32 %v7793, 1e-30
  %v7872 = vmax.f32 %v7795, 1e-30
  %v7873 = vmax.f32 %v7798, 1e-30
  %v7874 = vmax.f32 %v7800, 1e-30
  %v7875 = vmax.f32 %v7803, 1e-30
  %v7876 = vmax.f32 %v7805, 1e-30
  %v7877 = vmax.f32 %v7808, 1e-30
  %v7878 = vmax.f32 %v7810, 1e-30
  %v7879 = vmax.f32 %v7813, 1e-30
  %v7880 = vmax.f32 %v7815, 1e-30
  %v7881 = vrcp.pop %v7817
  %v7882 = vrcp.pop %v7818
  %v7883 = vrcp.pop %v7819
  %v7884 = vrcp.pop %v7820
  %v7885 = vrcp.pop %v7821
  %v7886 = vrcp.pop %v7822
  %v7887 = vrcp.pop %v7823
  %v7888 = vrcp.pop %v7824
  %v7889 = vrcp.pop %v7825
  %v7890 = vrcp.pop %v7826
  %v7891 = vrcp.pop %v7827
  %v7892 = vrcp.pop %v7828
  %v7893 = vrcp.pop %v7829
  %v7894 = vrcp.pop %v7830
  %v7895 = vrcp.pop %v7831
  %v7896 = vrcp.pop %v7832
  %v7897 = vrcp.pop %v7833
  %v7898 = vrcp.pop %v7834
  %v7899 = vrcp.pop %v7835
  %v7900 = vrcp.pop %v7836
  %v7901 = vrcp.pop %v7837
  %v7902 = vrcp.pop %v7838
  %v7903 = vrcp.pop %v7839
  %v7904 = vrcp.pop %v7840
  %v7905 = vrcp.pop %v7841
  %v7906 = vrcp.pop %v7842
  %v7907 = vrcp.pop %v7843
  %v7908 = vrcp.pop %v7844
  %v7909 = vrcp.pop %v7845
  %v7910 = vrcp.pop %v7846
  %v7911 = vrcp.pop %v7847
  %v7912 = vrcp.pop %v7848
  %v7913 = vrcp.pop %v7849
  %v7914 = vrcp.pop %v7850
  %v7915 = vrcp.pop %v7851
  %v7916 = vrcp.pop %v7852
  %v7917 = vrcp.pop %v7853
  %v7918 = vrcp.pop %v7854
  %v7919 = vrcp.pop %v7855
  %v7920 = vrcp.pop %v7856
  %v7921 = vrcp.pop %v7857
  %v7922 = vrcp.pop %v7858
  %v7923 = vrcp.pop %v7859
  %v7924 = vrcp.pop %v7860
  %v7925 = vrcp.pop %v7861
  %v7926 = vrcp.pop %v7862
  %v7927 = vrcp.pop %v7863
  %v7928 = vrcp.pop %v7864
  %v7929 = vrcp.pop %v7865
  %v7930 = vrcp.pop %v7866
  %v7931 = vrcp.pop %v7867
  %v7932 = vrcp.pop %v7868
  %v7933 = vrcp.pop %v7869
  %v7934 = vrcp.pop %v7870
  %v7935 = vrcp.pop %v7871
  %v7936 = vrcp.pop %v7872
  %v7937 = vrcp.pop %v7873
  %v7938 = vrcp.pop %v7874
  %v7939 = vrcp.pop %v7875
  %v7940 = vrcp.pop %v7876
  %v7941 = vrcp.pop %v7877
  %v7942 = vrcp.pop %v7878
  %v7943 = vrcp.pop %v7879
  %v7944 = vrcp.pop %v7880
  %7946 = vset.pattern.permute.xlu0 8
  %7947 = vperm.xlu0 %7946, %v7881
  %v7948 = vpop.permute.xlu0 %7947
  %7951 = vset.pattern.permute.xlu0 8
  %7952 = vperm.xlu0 %7951, %v7882
  %v7953 = vpop.permute.xlu0 %7952
  %7956 = vset.pattern.permute.xlu0 8
  %7957 = vperm.xlu0 %7956, %v7883
  %v7958 = vpop.permute.xlu0 %7957
  %7961 = vset.pattern.permute.xlu0 8
  %7962 = vperm.xlu0 %7961, %v7884
  %v7963 = vpop.permute.xlu0 %7962
  %7966 = vset.pattern.permute.xlu0 8
  %7967 = vperm.xlu0 %7966, %v7885
  %v7968 = vpop.permute.xlu0 %7967
  %7971 = vset.pattern.permute.xlu0 8
  %7972 = vperm.xlu0 %7971, %v7886
  %v7973 = vpop.permute.xlu0 %7972
  %7976 = vset.pattern.permute.xlu0 8
  %7977 = vperm.xlu0 %7976, %v7887
  %v7978 = vpop.permute.xlu0 %7977
  %7981 = vset.pattern.permute.xlu0 8
  %7982 = vperm.xlu0 %7981, %v7888
  %v7983 = vpop.permute.xlu0 %7982
  %7986 = vset.pattern.permute.xlu0 8
  %7987 = vperm.xlu0 %7986, %v7889
  %v7988 = vpop.permute.xlu0 %7987
  %7991 = vset.pattern.permute.xlu0 8
  %7992 = vperm.xlu0 %7991, %v7890
  %v7993 = vpop.permute.xlu0 %7992
  %7996 = vset.pattern.permute.xlu0 8
  %7997 = vperm.xlu0 %7996, %v7891
  %v7998 = vpop.permute.xlu0 %7997
  %8001 = vset.pattern.permute.xlu0 8
  %8002 = vperm.xlu0 %8001, %v7892
  %v8003 = vpop.permute.xlu0 %8002
  %8006 = vset.pattern.permute.xlu0 8
  %8007 = vperm.xlu0 %8006, %v7893
  %v8008 = vpop.permute.xlu0 %8007
  %8011 = vset.pattern.permute.xlu0 8
  %8012 = vperm.xlu0 %8011, %v7894
  %v8013 = vpop.permute.xlu0 %8012
  %8016 = vset.pattern.permute.xlu0 8
  %8017 = vperm.xlu0 %8016, %v7895
  %v8018 = vpop.permute.xlu0 %8017
  %8021 = vset.pattern.permute.xlu0 8
  %8022 = vperm.xlu0 %8021, %v7896
  %v8023 = vpop.permute.xlu0 %8022
  %8026 = vset.pattern.permute.xlu0 8
  %8027 = vperm.xlu0 %8026, %v7897
  %v8028 = vpop.permute.xlu0 %8027
  %8031 = vset.pattern.permute.xlu0 8
  %8032 = vperm.xlu0 %8031, %v7898
  %v8033 = vpop.permute.xlu0 %8032
  %8036 = vset.pattern.permute.xlu0 8
  %8037 = vperm.xlu0 %8036, %v7899
  %v8038 = vpop.permute.xlu0 %8037
  %8041 = vset.pattern.permute.xlu0 8
  %8042 = vperm.xlu0 %8041, %v7900
  %v8043 = vpop.permute.xlu0 %8042
  %8046 = vset.pattern.permute.xlu0 8
  %8047 = vperm.xlu0 %8046, %v7901
  %v8048 = vpop.permute.xlu0 %8047
  %8051 = vset.pattern.permute.xlu0 8
  %8052 = vperm.xlu0 %8051, %v7902
  %v8053 = vpop.permute.xlu0 %8052
  %8056 = vset.pattern.permute.xlu0 8
  %8057 = vperm.xlu0 %8056, %v7903
  %v8058 = vpop.permute.xlu0 %8057
  %8061 = vset.pattern.permute.xlu0 8
  %8062 = vperm.xlu0 %8061, %v7904
  %v8063 = vpop.permute.xlu0 %8062
  %8066 = vset.pattern.permute.xlu0 8
  %8067 = vperm.xlu0 %8066, %v7905
  %v8068 = vpop.permute.xlu0 %8067
  %8071 = vset.pattern.permute.xlu0 8
  %8072 = vperm.xlu0 %8071, %v7906
  %v8073 = vpop.permute.xlu0 %8072
  %8076 = vset.pattern.permute.xlu0 8
  %8077 = vperm.xlu0 %8076, %v7907
  %v8078 = vpop.permute.xlu0 %8077
  %8081 = vset.pattern.permute.xlu0 8
  %8082 = vperm.xlu0 %8081, %v7908
  %v8083 = vpop.permute.xlu0 %8082
  %8086 = vset.pattern.permute.xlu0 8
  %8087 = vperm.xlu0 %8086, %v7909
  %v8088 = vpop.permute.xlu0 %8087
  %8091 = vset.pattern.permute.xlu0 8
  %8092 = vperm.xlu0 %8091, %v7910
  %v8093 = vpop.permute.xlu0 %8092
  %8096 = vset.pattern.permute.xlu0 8
  %8097 = vperm.xlu0 %8096, %v7911
  %v8098 = vpop.permute.xlu0 %8097
  %8101 = vset.pattern.permute.xlu0 8
  %8102 = vperm.xlu0 %8101, %v7912
  %v8103 = vpop.permute.xlu0 %8102
  %8106 = vset.pattern.permute.xlu0 8
  %8107 = vperm.xlu0 %8106, %v7913
  %v8108 = vpop.permute.xlu0 %8107
  %8111 = vset.pattern.permute.xlu0 8
  %8112 = vperm.xlu0 %8111, %v7914
  %v8113 = vpop.permute.xlu0 %8112
  %8116 = vset.pattern.permute.xlu0 8
  %8117 = vperm.xlu0 %8116, %v7915
  %v8118 = vpop.permute.xlu0 %8117
  %8121 = vset.pattern.permute.xlu0 8
  %8122 = vperm.xlu0 %8121, %v7916
  %v8123 = vpop.permute.xlu0 %8122
  %8126 = vset.pattern.permute.xlu0 8
  %8127 = vperm.xlu0 %8126, %v7917
  %v8128 = vpop.permute.xlu0 %8127
  %8131 = vset.pattern.permute.xlu0 8
  %8132 = vperm.xlu0 %8131, %v7918
  %v8133 = vpop.permute.xlu0 %8132
  %8136 = vset.pattern.permute.xlu0 8
  %8137 = vperm.xlu0 %8136, %v7919
  %v8138 = vpop.permute.xlu0 %8137
  %8141 = vset.pattern.permute.xlu0 8
  %8142 = vperm.xlu0 %8141, %v7920
  %v8143 = vpop.permute.xlu0 %8142
  %8146 = vset.pattern.permute.xlu0 8
  %8147 = vperm.xlu0 %8146, %v7921
  %v8148 = vpop.permute.xlu0 %8147
  %8151 = vset.pattern.permute.xlu0 8
  %8152 = vperm.xlu0 %8151, %v7922
  %v8153 = vpop.permute.xlu0 %8152
  %8156 = vset.pattern.permute.xlu0 8
  %8157 = vperm.xlu0 %8156, %v7923
  %v8158 = vpop.permute.xlu0 %8157
  %8161 = vset.pattern.permute.xlu0 8
  %8162 = vperm.xlu0 %8161, %v7924
  %v8163 = vpop.permute.xlu0 %8162
  %8166 = vset.pattern.permute.xlu0 8
  %8167 = vperm.xlu0 %8166, %v7925
  %v8168 = vpop.permute.xlu0 %8167
  %8171 = vset.pattern.permute.xlu0 8
  %8172 = vperm.xlu0 %8171, %v7926
  %v8173 = vpop.permute.xlu0 %8172
  %8176 = vset.pattern.permute.xlu0 8
  %8177 = vperm.xlu0 %8176, %v7927
  %v8178 = vpop.permute.xlu0 %8177
  %8181 = vset.pattern.permute.xlu0 8
  %8182 = vperm.xlu0 %8181, %v7928
  %v8183 = vpop.permute.xlu0 %8182
  %8186 = vset.pattern.permute.xlu0 8
  %8187 = vperm.xlu0 %8186, %v7929
  %v8188 = vpop.permute.xlu0 %8187
  %8191 = vset.pattern.permute.xlu0 8
  %8192 = vperm.xlu0 %8191, %v7930
  %v8193 = vpop.permute.xlu0 %8192
  %8196 = vset.pattern.permute.xlu0 8
  %8197 = vperm.xlu0 %8196, %v7931
  %v8198 = vpop.permute.xlu0 %8197
  %8201 = vset.pattern.permute.xlu0 8
  %8202 = vperm.xlu0 %8201, %v7932
  %v8203 = vpop.permute.xlu0 %8202
  %8206 = vset.pattern.permute.xlu0 8
  %8207 = vperm.xlu0 %8206, %v7933
  %v8208 = vpop.permute.xlu0 %8207
  %8211 = vset.pattern.permute.xlu0 8
  %8212 = vperm.xlu0 %8211, %v7934
  %v8213 = vpop.permute.xlu0 %8212
  %8216 = vset.pattern.permute.xlu0 8
  %8217 = vperm.xlu0 %8216, %v7935
  %v8218 = vpop.permute.xlu0 %8217
  %8221 = vset.pattern.permute.xlu0 8
  %8222 = vperm.xlu0 %8221, %v7936
  %v8223 = vpop.permute.xlu0 %8222
  %8226 = vset.pattern.permute.xlu0 8
  %8227 = vperm.xlu0 %8226, %v7937
  %v8228 = vpop.permute.xlu0 %8227
  %8231 = vset.pattern.permute.xlu0 8
  %8232 = vperm.xlu0 %8231, %v7938
  %v8233 = vpop.permute.xlu0 %8232
  %8236 = vset.pattern.permute.xlu0 8
  %8237 = vperm.xlu0 %8236, %v7939
  %v8238 = vpop.permute.xlu0 %8237
  %8241 = vset.pattern.permute.xlu0 8
  %8242 = vperm.xlu0 %8241, %v7940
  %v8243 = vpop.permute.xlu0 %8242
  %8246 = vset.pattern.permute.xlu0 8
  %8247 = vperm.xlu0 %8246, %v7941
  %v8248 = vpop.permute.xlu0 %8247
  %8251 = vset.pattern.permute.xlu0 8
  %8252 = vperm.xlu0 %8251, %v7942
  %v8253 = vpop.permute.xlu0 %8252
  %8256 = vset.pattern.permute.xlu0 8
  %8257 = vperm.xlu0 %8256, %v7943
  %v8258 = vpop.permute.xlu0 %8257
  %8261 = vset.pattern.permute.xlu0 8
  %8262 = vperm.xlu0 %8261, %v7944
  %v8263 = vpop.permute.xlu0 %8262
  %v8265 = vmul.f32 %v7487, %v7948
  %v8266 = vmul.f32 %v7489, %v7953
  %v8267 = vmul.f32 %v7492, %v7958
  %v8268 = vmul.f32 %v7494, %v7963
  %v8269 = vmul.f32 %v7497, %v7968
  %v8270 = vmul.f32 %v7499, %v7973
  %v8271 = vmul.f32 %v7502, %v7978
  %v8272 = vmul.f32 %v7504, %v7983
  %v8273 = vmul.f32 %v7507, %v7988
  %v8274 = vmul.f32 %v7509, %v7993
  %v8275 = vmul.f32 %v7512, %v7998
  %v8276 = vmul.f32 %v7514, %v8003
  %v8277 = vmul.f32 %v7517, %v8008
  %v8278 = vmul.f32 %v7519, %v8013
  %v8279 = vmul.f32 %v7522, %v8018
  %v8280 = vmul.f32 %v7524, %v8023
  %v8281 = vmul.f32 %v7584, %v8028
  %v8282 = vmul.f32 %v7586, %v8033
  %v8283 = vmul.f32 %v7589, %v8038
  %v8284 = vmul.f32 %v7591, %v8043
  %v8285 = vmul.f32 %v7594, %v8048
  %v8286 = vmul.f32 %v7596, %v8053
  %v8287 = vmul.f32 %v7599, %v8058
  %v8288 = vmul.f32 %v7601, %v8063
  %v8289 = vmul.f32 %v7604, %v8068
  %v8290 = vmul.f32 %v7606, %v8073
  %v8291 = vmul.f32 %v7609, %v8078
  %v8292 = vmul.f32 %v7611, %v8083
  %v8293 = vmul.f32 %v7614, %v8088
  %v8294 = vmul.f32 %v7616, %v8093
  %v8295 = vmul.f32 %v7619, %v8098
  %v8296 = vmul.f32 %v7621, %v8103
  %v8297 = vmul.f32 %v7681, %v8108
  %v8298 = vmul.f32 %v7683, %v8113
  %v8299 = vmul.f32 %v7686, %v8118
  %v8300 = vmul.f32 %v7688, %v8123
  %v8301 = vmul.f32 %v7691, %v8128
  %v8302 = vmul.f32 %v7693, %v8133
  %v8303 = vmul.f32 %v7696, %v8138
  %v8304 = vmul.f32 %v7698, %v8143
  %v8305 = vmul.f32 %v7701, %v8148
  %v8306 = vmul.f32 %v7703, %v8153
  %v8307 = vmul.f32 %v7706, %v8158
  %v8308 = vmul.f32 %v7708, %v8163
  %v8309 = vmul.f32 %v7711, %v8168
  %v8310 = vmul.f32 %v7713, %v8173
  %v8311 = vmul.f32 %v7716, %v8178
  %v8312 = vmul.f32 %v7718, %v8183
  %v8313 = vmul.f32 %v7778, %v8188
  %v8314 = vmul.f32 %v7780, %v8193
  %v8315 = vmul.f32 %v7783, %v8198
  %v8316 = vmul.f32 %v7785, %v8203
  %v8317 = vmul.f32 %v7788, %v8208
  %v8318 = vmul.f32 %v7790, %v8213
  %v8319 = vmul.f32 %v7793, %v8218
  %v8320 = vmul.f32 %v7795, %v8223
  %v8321 = vmul.f32 %v7798, %v8228
  %v8322 = vmul.f32 %v7800, %v8233
  %v8323 = vmul.f32 %v7803, %v8238
  %v8324 = vmul.f32 %v7805, %v8243
  %v8325 = vmul.f32 %v7808, %v8248
  %v8326 = vmul.f32 %v7810, %v8253
  %v8327 = vmul.f32 %v7813, %v8258
  %v8328 = vmul.f32 %v7815, %v8263
  %v8329 = vrot.slane %v8297, 4
  %vm8330 = vcmask 1047556
  %v8331 = vsel %vm8330, %v8329, %v8265
  %v8332 = vrot.slane %v8265, 4
  %v8333 = vsel %vm8330, %v8297, %v8332
  %v8335 = vunpack.c.l.s4 1983009808
  %v8336 = vunpack.c.0.s8 %v8335
  %v8337 = vperm.slane %v8331, %v8336
  %v8339 = vunpack.c.l.s4 1983009808
  %v8340 = vunpack.c.0.s8 %v8339
  %v8341 = vperm.slane %v8333, %v8340
  %v8342 = vrot.slane %v8313, 4
  %v8343 = vsel %vm8330, %v8342, %v8281
  %v8344 = vrot.slane %v8281, 4
  %v8345 = vsel %vm8330, %v8313, %v8344
  %v8347 = vunpack.c.l.s4 1983009808
  %v8348 = vunpack.c.0.s8 %v8347
  %v8349 = vperm.slane %v8343, %v8348
  %v8351 = vunpack.c.l.s4 1983009808
  %v8352 = vunpack.c.0.s8 %v8351
  %v8353 = vperm.slane %v8345, %v8352
  %v8354 = vrot.slane %v8349, 4
  %v8355 = vsel %vm8330, %v8354, %v8337
  %v8356 = vrot.slane %v8337, 4
  %v8357 = vsel %vm8330, %v8349, %v8356
  %v8359 = vunpack.c.l.s4 1934713408
  %v8360 = vunpack.c.0.s8 %v8359
  %v8361 = vperm.slane %v8355, %v8360
  %v8363 = vunpack.c.l.s4 1934713408
  %v8364 = vunpack.c.0.s8 %v8363
  %v8365 = vperm.slane %v8357, %v8364
  %v8366 = vrot.slane %v8353, 4
  %v8367 = vsel %vm8330, %v8366, %v8341
  %v8368 = vrot.slane %v8341, 4
  %v8369 = vsel %vm8330, %v8353, %v8368
  %v8371 = vunpack.c.l.s4 1934713408
  %v8372 = vunpack.c.0.s8 %v8371
  %v8373 = vperm.slane %v8367, %v8372
  %v8375 = vunpack.c.l.s4 1934713408
  %v8376 = vunpack.c.0.s8 %v8375
  %v8377 = vperm.slane %v8369, %v8376
  %v8378 = vrot.slane %v8361, 4
  %v8379 = vsel %vm8330, 0.0, %v8378
  %v8380 = vrot.slane %v8365, 4
  %v8381 = vsel %vm8330, 0.0, %v8380
  %v8382 = vrot.slane %v8373, 4
  %v8383 = vsel %vm8330, 0.0, %v8382
  %v8384 = vrot.slane %v8377, 4
  %v8385 = vsel %vm8330, 0.0, %v8384
  %v8386 = vrot.slane %v8298, 4
  %v8387 = vsel %vm8330, %v8386, %v8266
  %v8388 = vrot.slane %v8266, 4
  %v8389 = vsel %vm8330, %v8298, %v8388
  %v8391 = vunpack.c.l.s4 1983009808
  %v8392 = vunpack.c.0.s8 %v8391
  %v8393 = vperm.slane %v8387, %v8392
  %v8395 = vunpack.c.l.s4 1983009808
  %v8396 = vunpack.c.0.s8 %v8395
  %v8397 = vperm.slane %v8389, %v8396
  %v8398 = vrot.slane %v8314, 4
  %v8399 = vsel %vm8330, %v8398, %v8282
  %v8400 = vrot.slane %v8282, 4
  %v8401 = vsel %vm8330, %v8314, %v8400
  %v8403 = vunpack.c.l.s4 1983009808
  %v8404 = vunpack.c.0.s8 %v8403
  %v8405 = vperm.slane %v8399, %v8404
  %v8407 = vunpack.c.l.s4 1983009808
  %v8408 = vunpack.c.0.s8 %v8407
  %v8409 = vperm.slane %v8401, %v8408
  %v8410 = vrot.slane %v8405, 4
  %v8411 = vsel %vm8330, %v8410, %v8393
  %v8412 = vrot.slane %v8393, 4
  %v8413 = vsel %vm8330, %v8405, %v8412
  %v8415 = vunpack.c.l.s4 1934713408
  %v8416 = vunpack.c.0.s8 %v8415
  %v8417 = vperm.slane %v8411, %v8416
  %v8419 = vunpack.c.l.s4 1934713408
  %v8420 = vunpack.c.0.s8 %v8419
  %v8421 = vperm.slane %v8413, %v8420
  %v8422 = vrot.slane %v8409, 4
  %v8423 = vsel %vm8330, %v8422, %v8397
  %v8424 = vrot.slane %v8397, 4
  %v8425 = vsel %vm8330, %v8409, %v8424
  %v8427 = vunpack.c.l.s4 1934713408
  %v8428 = vunpack.c.0.s8 %v8427
  %v8429 = vperm.slane %v8423, %v8428
  %v8431 = vunpack.c.l.s4 1934713408
  %v8432 = vunpack.c.0.s8 %v8431
  %v8433 = vperm.slane %v8425, %v8432
  %v8434 = vrot.slane %v8417, 4
  %v8435 = vsel %vm8330, 0.0, %v8434
  %v8436 = vrot.slane %v8421, 4
  %v8437 = vsel %vm8330, 0.0, %v8436
  %v8438 = vrot.slane %v8429, 4
  %v8439 = vsel %vm8330, 0.0, %v8438
  %v8440 = vrot.slane %v8433, 4
  %v8441 = vsel %vm8330, 0.0, %v8440
  %v8442 = vrot.slane %v8299, 4
  %v8443 = vsel %vm8330, %v8442, %v8267
  %v8444 = vrot.slane %v8267, 4
  %v8445 = vsel %vm8330, %v8299, %v8444
  %v8447 = vunpack.c.l.s4 1983009808
  %v8448 = vunpack.c.0.s8 %v8447
  %v8449 = vperm.slane %v8443, %v8448
  %v8451 = vunpack.c.l.s4 1983009808
  %v8452 = vunpack.c.0.s8 %v8451
  %v8453 = vperm.slane %v8445, %v8452
  %v8454 = vrot.slane %v8315, 4
  %v8455 = vsel %vm8330, %v8454, %v8283
  %v8456 = vrot.slane %v8283, 4
  %v8457 = vsel %vm8330, %v8315, %v8456
  %v8459 = vunpack.c.l.s4 1983009808
  %v8460 = vunpack.c.0.s8 %v8459
  %v8461 = vperm.slane %v8455, %v8460
  %v8463 = vunpack.c.l.s4 1983009808
  %v8464 = vunpack.c.0.s8 %v8463
  %v8465 = vperm.slane %v8457, %v8464
  %v8466 = vrot.slane %v8461, 4
  %v8467 = vsel %vm8330, %v8466, %v8449
  %v8468 = vrot.slane %v8449, 4
  %v8469 = vsel %vm8330, %v8461, %v8468
  %v8471 = vunpack.c.l.s4 1934713408
  %v8472 = vunpack.c.0.s8 %v8471
  %v8473 = vperm.slane %v8467, %v8472
  %v8475 = vunpack.c.l.s4 1934713408
  %v8476 = vunpack.c.0.s8 %v8475
  %v8477 = vperm.slane %v8469, %v8476
  %v8478 = vrot.slane %v8465, 4
  %v8479 = vsel %vm8330, %v8478, %v8453
  %v8480 = vrot.slane %v8453, 4
  %v8481 = vsel %vm8330, %v8465, %v8480
  %v8483 = vunpack.c.l.s4 1934713408
  %v8484 = vunpack.c.0.s8 %v8483
  %v8485 = vperm.slane %v8479, %v8484
  %v8487 = vunpack.c.l.s4 1934713408
  %v8488 = vunpack.c.0.s8 %v8487
  %v8489 = vperm.slane %v8481, %v8488
  %v8490 = vrot.slane %v8473, 4
  %v8491 = vsel %vm8330, 0.0, %v8490
  %v8492 = vrot.slane %v8477, 4
  %v8493 = vsel %vm8330, 0.0, %v8492
  %v8494 = vrot.slane %v8485, 4
  %v8495 = vsel %vm8330, 0.0, %v8494
  %v8496 = vrot.slane %v8489, 4
  %v8497 = vsel %vm8330, 0.0, %v8496
  %v8498 = vrot.slane %v8300, 4
  %v8499 = vsel %vm8330, %v8498, %v8268
  %v8500 = vrot.slane %v8268, 4
  %v8501 = vsel %vm8330, %v8300, %v8500
  %v8503 = vunpack.c.l.s4 1983009808
  %v8504 = vunpack.c.0.s8 %v8503
  %v8505 = vperm.slane %v8499, %v8504
  %v8507 = vunpack.c.l.s4 1983009808
  %v8508 = vunpack.c.0.s8 %v8507
  %v8509 = vperm.slane %v8501, %v8508
  %v8510 = vrot.slane %v8316, 4
  %v8511 = vsel %vm8330, %v8510, %v8284
  %v8512 = vrot.slane %v8284, 4
  %v8513 = vsel %vm8330, %v8316, %v8512
  %v8515 = vunpack.c.l.s4 1983009808
  %v8516 = vunpack.c.0.s8 %v8515
  %v8517 = vperm.slane %v8511, %v8516
  %v8519 = vunpack.c.l.s4 1983009808
  %v8520 = vunpack.c.0.s8 %v8519
  %v8521 = vperm.slane %v8513, %v8520
  %v8522 = vrot.slane %v8517, 4
  %v8523 = vsel %vm8330, %v8522, %v8505
  %v8524 = vrot.slane %v8505, 4
  %v8525 = vsel %vm8330, %v8517, %v8524
  %v8527 = vunpack.c.l.s4 1934713408
  %v8528 = vunpack.c.0.s8 %v8527
  %v8529 = vperm.slane %v8523, %v8528
  %v8531 = vunpack.c.l.s4 1934713408
  %v8532 = vunpack.c.0.s8 %v8531
  %v8533 = vperm.slane %v8525, %v8532
  %v8534 = vrot.slane %v8521, 4
  %v8535 = vsel %vm8330, %v8534, %v8509
  %v8536 = vrot.slane %v8509, 4
  %v8537 = vsel %vm8330, %v8521, %v8536
  %v8539 = vunpack.c.l.s4 1934713408
  %v8540 = vunpack.c.0.s8 %v8539
  %v8541 = vperm.slane %v8535, %v8540
  %v8543 = vunpack.c.l.s4 1934713408
  %v8544 = vunpack.c.0.s8 %v8543
  %v8545 = vperm.slane %v8537, %v8544
  %v8546 = vrot.slane %v8529, 4
  %v8547 = vsel %vm8330, 0.0, %v8546
  %v8548 = vrot.slane %v8533, 4
  %v8549 = vsel %vm8330, 0.0, %v8548
  %v8550 = vrot.slane %v8541, 4
  %v8551 = vsel %vm8330, 0.0, %v8550
  %v8552 = vrot.slane %v8545, 4
  %v8553 = vsel %vm8330, 0.0, %v8552
  %v8554 = vrot.slane %v8301, 4
  %v8555 = vsel %vm8330, %v8554, %v8269
  %v8556 = vrot.slane %v8269, 4
  %v8557 = vsel %vm8330, %v8301, %v8556
  %v8559 = vunpack.c.l.s4 1983009808
  %v8560 = vunpack.c.0.s8 %v8559
  %v8561 = vperm.slane %v8555, %v8560
  %v8563 = vunpack.c.l.s4 1983009808
  %v8564 = vunpack.c.0.s8 %v8563
  %v8565 = vperm.slane %v8557, %v8564
  %v8566 = vrot.slane %v8317, 4
  %v8567 = vsel %vm8330, %v8566, %v8285
  %v8568 = vrot.slane %v8285, 4
  %v8569 = vsel %vm8330, %v8317, %v8568
  %v8571 = vunpack.c.l.s4 1983009808
  %v8572 = vunpack.c.0.s8 %v8571
  %v8573 = vperm.slane %v8567, %v8572
  %v8575 = vunpack.c.l.s4 1983009808
  %v8576 = vunpack.c.0.s8 %v8575
  %v8577 = vperm.slane %v8569, %v8576
  %v8578 = vrot.slane %v8573, 4
  %v8579 = vsel %vm8330, %v8578, %v8561
  %v8580 = vrot.slane %v8561, 4
  %v8581 = vsel %vm8330, %v8573, %v8580
  %v8583 = vunpack.c.l.s4 1934713408
  %v8584 = vunpack.c.0.s8 %v8583
  %v8585 = vperm.slane %v8579, %v8584
  %v8587 = vunpack.c.l.s4 1934713408
  %v8588 = vunpack.c.0.s8 %v8587
  %v8589 = vperm.slane %v8581, %v8588
  %v8590 = vrot.slane %v8577, 4
  %v8591 = vsel %vm8330, %v8590, %v8565
  %v8592 = vrot.slane %v8565, 4
  %v8593 = vsel %vm8330, %v8577, %v8592
  %v8595 = vunpack.c.l.s4 1934713408
  %v8596 = vunpack.c.0.s8 %v8595
  %v8597 = vperm.slane %v8591, %v8596
  %v8599 = vunpack.c.l.s4 1934713408
  %v8600 = vunpack.c.0.s8 %v8599
  %v8601 = vperm.slane %v8593, %v8600
  %v8602 = vrot.slane %v8585, 4
  %v8603 = vsel %vm8330, 0.0, %v8602
  %v8604 = vrot.slane %v8589, 4
  %v8605 = vsel %vm8330, 0.0, %v8604
  %v8606 = vrot.slane %v8597, 4
  %v8607 = vsel %vm8330, 0.0, %v8606
  %v8608 = vrot.slane %v8601, 4
  %v8609 = vsel %vm8330, 0.0, %v8608
  %v8610 = vrot.slane %v8302, 4
  %v8611 = vsel %vm8330, %v8610, %v8270
  %v8612 = vrot.slane %v8270, 4
  %v8613 = vsel %vm8330, %v8302, %v8612
  %v8615 = vunpack.c.l.s4 1983009808
  %v8616 = vunpack.c.0.s8 %v8615
  %v8617 = vperm.slane %v8611, %v8616
  %v8619 = vunpack.c.l.s4 1983009808
  %v8620 = vunpack.c.0.s8 %v8619
  %v8621 = vperm.slane %v8613, %v8620
  %v8622 = vrot.slane %v8318, 4
  %v8623 = vsel %vm8330, %v8622, %v8286
  %v8624 = vrot.slane %v8286, 4
  %v8625 = vsel %vm8330, %v8318, %v8624
  %v8627 = vunpack.c.l.s4 1983009808
  %v8628 = vunpack.c.0.s8 %v8627
  %v8629 = vperm.slane %v8623, %v8628
  %v8631 = vunpack.c.l.s4 1983009808
  %v8632 = vunpack.c.0.s8 %v8631
  %v8633 = vperm.slane %v8625, %v8632
  %v8634 = vrot.slane %v8629, 4
  %v8635 = vsel %vm8330, %v8634, %v8617
  %v8636 = vrot.slane %v8617, 4
  %v8637 = vsel %vm8330, %v8629, %v8636
  %v8639 = vunpack.c.l.s4 1934713408
  %v8640 = vunpack.c.0.s8 %v8639
  %v8641 = vperm.slane %v8635, %v8640
  %v8643 = vunpack.c.l.s4 1934713408
  %v8644 = vunpack.c.0.s8 %v8643
  %v8645 = vperm.slane %v8637, %v8644
  %v8646 = vrot.slane %v8633, 4
  %v8647 = vsel %vm8330, %v8646, %v8621
  %v8648 = vrot.slane %v8621, 4
  %v8649 = vsel %vm8330, %v8633, %v8648
  %v8651 = vunpack.c.l.s4 1934713408
  %v8652 = vunpack.c.0.s8 %v8651
  %v8653 = vperm.slane %v8647, %v8652
  %v8655 = vunpack.c.l.s4 1934713408
  %v8656 = vunpack.c.0.s8 %v8655
  %v8657 = vperm.slane %v8649, %v8656
  %v8658 = vrot.slane %v8641, 4
  %v8659 = vsel %vm8330, 0.0, %v8658
  %v8660 = vrot.slane %v8645, 4
  %v8661 = vsel %vm8330, 0.0, %v8660
  %v8662 = vrot.slane %v8653, 4
  %v8663 = vsel %vm8330, 0.0, %v8662
  %v8664 = vrot.slane %v8657, 4
  %v8665 = vsel %vm8330, 0.0, %v8664
  %v8666 = vrot.slane %v8303, 4
  %v8667 = vsel %vm8330, %v8666, %v8271
  %v8668 = vrot.slane %v8271, 4
  %v8669 = vsel %vm8330, %v8303, %v8668
  %v8671 = vunpack.c.l.s4 1983009808
  %v8672 = vunpack.c.0.s8 %v8671
  %v8673 = vperm.slane %v8667, %v8672
  %v8675 = vunpack.c.l.s4 1983009808
  %v8676 = vunpack.c.0.s8 %v8675
  %v8677 = vperm.slane %v8669, %v8676
  %v8678 = vrot.slane %v8319, 4
  %v8679 = vsel %vm8330, %v8678, %v8287
  %v8680 = vrot.slane %v8287, 4
  %v8681 = vsel %vm8330, %v8319, %v8680
  %v8683 = vunpack.c.l.s4 1983009808
  %v8684 = vunpack.c.0.s8 %v8683
  %v8685 = vperm.slane %v8679, %v8684
  %v8687 = vunpack.c.l.s4 1983009808
  %v8688 = vunpack.c.0.s8 %v8687
  %v8689 = vperm.slane %v8681, %v8688
  %v8690 = vrot.slane %v8685, 4
  %v8691 = vsel %vm8330, %v8690, %v8673
  %v8692 = vrot.slane %v8673, 4
  %v8693 = vsel %vm8330, %v8685, %v8692
  %v8695 = vunpack.c.l.s4 1934713408
  %v8696 = vunpack.c.0.s8 %v8695
  %v8697 = vperm.slane %v8691, %v8696
  %v8699 = vunpack.c.l.s4 1934713408
  %v8700 = vunpack.c.0.s8 %v8699
  %v8701 = vperm.slane %v8693, %v8700
  %v8702 = vrot.slane %v8689, 4
  %v8703 = vsel %vm8330, %v8702, %v8677
  %v8704 = vrot.slane %v8677, 4
  %v8705 = vsel %vm8330, %v8689, %v8704
  %v8707 = vunpack.c.l.s4 1934713408
  %v8708 = vunpack.c.0.s8 %v8707
  %v8709 = vperm.slane %v8703, %v8708
  %v8711 = vunpack.c.l.s4 1934713408
  %v8712 = vunpack.c.0.s8 %v8711
  %v8713 = vperm.slane %v8705, %v8712
  %v8714 = vrot.slane %v8697, 4
  %v8715 = vsel %vm8330, 0.0, %v8714
  %v8716 = vrot.slane %v8701, 4
  %v8717 = vsel %vm8330, 0.0, %v8716
  %v8718 = vrot.slane %v8709, 4
  %v8719 = vsel %vm8330, 0.0, %v8718
  %v8720 = vrot.slane %v8713, 4
  %v8721 = vsel %vm8330, 0.0, %v8720
  %v8722 = vrot.slane %v8304, 4
  %v8723 = vsel %vm8330, %v8722, %v8272
  %v8724 = vrot.slane %v8272, 4
  %v8725 = vsel %vm8330, %v8304, %v8724
  %v8727 = vunpack.c.l.s4 1983009808
  %v8728 = vunpack.c.0.s8 %v8727
  %v8729 = vperm.slane %v8723, %v8728
  %v8731 = vunpack.c.l.s4 1983009808
  %v8732 = vunpack.c.0.s8 %v8731
  %v8733 = vperm.slane %v8725, %v8732
  %v8734 = vrot.slane %v8320, 4
  %v8735 = vsel %vm8330, %v8734, %v8288
  %v8736 = vrot.slane %v8288, 4
  %v8737 = vsel %vm8330, %v8320, %v8736
  %v8739 = vunpack.c.l.s4 1983009808
  %v8740 = vunpack.c.0.s8 %v8739
  %v8741 = vperm.slane %v8735, %v8740
  %v8743 = vunpack.c.l.s4 1983009808
  %v8744 = vunpack.c.0.s8 %v8743
  %v8745 = vperm.slane %v8737, %v8744
  %v8746 = vrot.slane %v8741, 4
  %v8747 = vsel %vm8330, %v8746, %v8729
  %v8748 = vrot.slane %v8729, 4
  %v8749 = vsel %vm8330, %v8741, %v8748
  %v8751 = vunpack.c.l.s4 1934713408
  %v8752 = vunpack.c.0.s8 %v8751
  %v8753 = vperm.slane %v8747, %v8752
  %v8755 = vunpack.c.l.s4 1934713408
  %v8756 = vunpack.c.0.s8 %v8755
  %v8757 = vperm.slane %v8749, %v8756
  %v8758 = vrot.slane %v8745, 4
  %v8759 = vsel %vm8330, %v8758, %v8733
  %v8760 = vrot.slane %v8733, 4
  %v8761 = vsel %vm8330, %v8745, %v8760
  %v8763 = vunpack.c.l.s4 1934713408
  %v8764 = vunpack.c.0.s8 %v8763
  %v8765 = vperm.slane %v8759, %v8764
  %v8767 = vunpack.c.l.s4 1934713408
  %v8768 = vunpack.c.0.s8 %v8767
  %v8769 = vperm.slane %v8761, %v8768
  %v8770 = vrot.slane %v8753, 4
  %v8771 = vsel %vm8330, 0.0, %v8770
  %v8772 = vrot.slane %v8757, 4
  %v8773 = vsel %vm8330, 0.0, %v8772
  %v8774 = vrot.slane %v8765, 4
  %v8775 = vsel %vm8330, 0.0, %v8774
  %v8776 = vrot.slane %v8769, 4
  %v8777 = vsel %vm8330, 0.0, %v8776
  %v8778 = vrot.slane %v8305, 4
  %v8779 = vsel %vm8330, %v8778, %v8273
  %v8780 = vrot.slane %v8273, 4
  %v8781 = vsel %vm8330, %v8305, %v8780
  %v8783 = vunpack.c.l.s4 1983009808
  %v8784 = vunpack.c.0.s8 %v8783
  %v8785 = vperm.slane %v8779, %v8784
  %v8787 = vunpack.c.l.s4 1983009808
  %v8788 = vunpack.c.0.s8 %v8787
  %v8789 = vperm.slane %v8781, %v8788
  %v8790 = vrot.slane %v8321, 4
  %v8791 = vsel %vm8330, %v8790, %v8289
  %v8792 = vrot.slane %v8289, 4
  %v8793 = vsel %vm8330, %v8321, %v8792
  %v8795 = vunpack.c.l.s4 1983009808
  %v8796 = vunpack.c.0.s8 %v8795
  %v8797 = vperm.slane %v8791, %v8796
  %v8799 = vunpack.c.l.s4 1983009808
  %v8800 = vunpack.c.0.s8 %v8799
  %v8801 = vperm.slane %v8793, %v8800
  %v8802 = vrot.slane %v8797, 4
  %v8803 = vsel %vm8330, %v8802, %v8785
  %v8804 = vrot.slane %v8785, 4
  %v8805 = vsel %vm8330, %v8797, %v8804
  %v8807 = vunpack.c.l.s4 1934713408
  %v8808 = vunpack.c.0.s8 %v8807
  %v8809 = vperm.slane %v8803, %v8808
  %v8811 = vunpack.c.l.s4 1934713408
  %v8812 = vunpack.c.0.s8 %v8811
  %v8813 = vperm.slane %v8805, %v8812
  %v8814 = vrot.slane %v8801, 4
  %v8815 = vsel %vm8330, %v8814, %v8789
  %v8816 = vrot.slane %v8789, 4
  %v8817 = vsel %vm8330, %v8801, %v8816
  %v8819 = vunpack.c.l.s4 1934713408
  %v8820 = vunpack.c.0.s8 %v8819
  %v8821 = vperm.slane %v8815, %v8820
  %v8823 = vunpack.c.l.s4 1934713408
  %v8824 = vunpack.c.0.s8 %v8823
  %v8825 = vperm.slane %v8817, %v8824
  %v8826 = vrot.slane %v8809, 4
  %v8827 = vsel %vm8330, 0.0, %v8826
  %v8828 = vrot.slane %v8813, 4
  %v8829 = vsel %vm8330, 0.0, %v8828
  %v8830 = vrot.slane %v8821, 4
  %v8831 = vsel %vm8330, 0.0, %v8830
  %v8832 = vrot.slane %v8825, 4
  %v8833 = vsel %vm8330, 0.0, %v8832
  %v8834 = vrot.slane %v8306, 4
  %v8835 = vsel %vm8330, %v8834, %v8274
  %v8836 = vrot.slane %v8274, 4
  %v8837 = vsel %vm8330, %v8306, %v8836
  %v8839 = vunpack.c.l.s4 1983009808
  %v8840 = vunpack.c.0.s8 %v8839
  %v8841 = vperm.slane %v8835, %v8840
  %v8843 = vunpack.c.l.s4 1983009808
  %v8844 = vunpack.c.0.s8 %v8843
  %v8845 = vperm.slane %v8837, %v8844
  %v8846 = vrot.slane %v8322, 4
  %v8847 = vsel %vm8330, %v8846, %v8290
  %v8848 = vrot.slane %v8290, 4
  %v8849 = vsel %vm8330, %v8322, %v8848
  %v8851 = vunpack.c.l.s4 1983009808
  %v8852 = vunpack.c.0.s8 %v8851
  %v8853 = vperm.slane %v8847, %v8852
  %v8855 = vunpack.c.l.s4 1983009808
  %v8856 = vunpack.c.0.s8 %v8855
  %v8857 = vperm.slane %v8849, %v8856
  %v8858 = vrot.slane %v8853, 4
  %v8859 = vsel %vm8330, %v8858, %v8841
  %v8860 = vrot.slane %v8841, 4
  %v8861 = vsel %vm8330, %v8853, %v8860
  %v8863 = vunpack.c.l.s4 1934713408
  %v8864 = vunpack.c.0.s8 %v8863
  %v8865 = vperm.slane %v8859, %v8864
  %v8867 = vunpack.c.l.s4 1934713408
  %v8868 = vunpack.c.0.s8 %v8867
  %v8869 = vperm.slane %v8861, %v8868
  %v8870 = vrot.slane %v8857, 4
  %v8871 = vsel %vm8330, %v8870, %v8845
  %v8872 = vrot.slane %v8845, 4
  %v8873 = vsel %vm8330, %v8857, %v8872
  %v8875 = vunpack.c.l.s4 1934713408
  %v8876 = vunpack.c.0.s8 %v8875
  %v8877 = vperm.slane %v8871, %v8876
  %v8879 = vunpack.c.l.s4 1934713408
  %v8880 = vunpack.c.0.s8 %v8879
  %v8881 = vperm.slane %v8873, %v8880
  %v8882 = vrot.slane %v8865, 4
  %v8883 = vsel %vm8330, 0.0, %v8882
  %v8884 = vrot.slane %v8869, 4
  %v8885 = vsel %vm8330, 0.0, %v8884
  %v8886 = vrot.slane %v8877, 4
  %v8887 = vsel %vm8330, 0.0, %v8886
  %v8888 = vrot.slane %v8881, 4
  %v8889 = vsel %vm8330, 0.0, %v8888
  %v8890 = vrot.slane %v8307, 4
  %v8891 = vsel %vm8330, %v8890, %v8275
  %v8892 = vrot.slane %v8275, 4
  %v8893 = vsel %vm8330, %v8307, %v8892
  %v8895 = vunpack.c.l.s4 1983009808
  %v8896 = vunpack.c.0.s8 %v8895
  %v8897 = vperm.slane %v8891, %v8896
  %v8899 = vunpack.c.l.s4 1983009808
  %v8900 = vunpack.c.0.s8 %v8899
  %v8901 = vperm.slane %v8893, %v8900
  %v8902 = vrot.slane %v8323, 4
  %v8903 = vsel %vm8330, %v8902, %v8291
  %v8904 = vrot.slane %v8291, 4
  %v8905 = vsel %vm8330, %v8323, %v8904
  %v8907 = vunpack.c.l.s4 1983009808
  %v8908 = vunpack.c.0.s8 %v8907
  %v8909 = vperm.slane %v8903, %v8908
  %v8911 = vunpack.c.l.s4 1983009808
  %v8912 = vunpack.c.0.s8 %v8911
  %v8913 = vperm.slane %v8905, %v8912
  %v8914 = vrot.slane %v8909, 4
  %v8915 = vsel %vm8330, %v8914, %v8897
  %v8916 = vrot.slane %v8897, 4
  %v8917 = vsel %vm8330, %v8909, %v8916
  %v8919 = vunpack.c.l.s4 1934713408
  %v8920 = vunpack.c.0.s8 %v8919
  %v8921 = vperm.slane %v8915, %v8920
  %v8923 = vunpack.c.l.s4 1934713408
  %v8924 = vunpack.c.0.s8 %v8923
  %v8925 = vperm.slane %v8917, %v8924
  %v8926 = vrot.slane %v8913, 4
  %v8927 = vsel %vm8330, %v8926, %v8901
  %v8928 = vrot.slane %v8901, 4
  %v8929 = vsel %vm8330, %v8913, %v8928
  %v8931 = vunpack.c.l.s4 1934713408
  %v8932 = vunpack.c.0.s8 %v8931
  %v8933 = vperm.slane %v8927, %v8932
  %v8935 = vunpack.c.l.s4 1934713408
  %v8936 = vunpack.c.0.s8 %v8935
  %v8937 = vperm.slane %v8929, %v8936
  %v8938 = vrot.slane %v8921, 4
  %v8939 = vsel %vm8330, 0.0, %v8938
  %v8940 = vrot.slane %v8925, 4
  %v8941 = vsel %vm8330, 0.0, %v8940
  %v8942 = vrot.slane %v8933, 4
  %v8943 = vsel %vm8330, 0.0, %v8942
  %v8944 = vrot.slane %v8937, 4
  %v8945 = vsel %vm8330, 0.0, %v8944
  %v8946 = vrot.slane %v8308, 4
  %v8947 = vsel %vm8330, %v8946, %v8276
  %v8948 = vrot.slane %v8276, 4
  %v8949 = vsel %vm8330, %v8308, %v8948
  %v8951 = vunpack.c.l.s4 1983009808
  %v8952 = vunpack.c.0.s8 %v8951
  %v8953 = vperm.slane %v8947, %v8952
  %v8955 = vunpack.c.l.s4 1983009808
  %v8956 = vunpack.c.0.s8 %v8955
  %v8957 = vperm.slane %v8949, %v8956
  %v8958 = vrot.slane %v8324, 4
  %v8959 = vsel %vm8330, %v8958, %v8292
  %v8960 = vrot.slane %v8292, 4
  %v8961 = vsel %vm8330, %v8324, %v8960
  %v8963 = vunpack.c.l.s4 1983009808
  %v8964 = vunpack.c.0.s8 %v8963
  %v8965 = vperm.slane %v8959, %v8964
  %v8967 = vunpack.c.l.s4 1983009808
  %v8968 = vunpack.c.0.s8 %v8967
  %v8969 = vperm.slane %v8961, %v8968
  %v8970 = vrot.slane %v8965, 4
  %v8971 = vsel %vm8330, %v8970, %v8953
  %v8972 = vrot.slane %v8953, 4
  %v8973 = vsel %vm8330, %v8965, %v8972
  %v8975 = vunpack.c.l.s4 1934713408
  %v8976 = vunpack.c.0.s8 %v8975
  %v8977 = vperm.slane %v8971, %v8976
  %v8979 = vunpack.c.l.s4 1934713408
  %v8980 = vunpack.c.0.s8 %v8979
  %v8981 = vperm.slane %v8973, %v8980
  %v8982 = vrot.slane %v8969, 4
  %v8983 = vsel %vm8330, %v8982, %v8957
  %v8984 = vrot.slane %v8957, 4
  %v8985 = vsel %vm8330, %v8969, %v8984
  %v8987 = vunpack.c.l.s4 1934713408
  %v8988 = vunpack.c.0.s8 %v8987
  %v8989 = vperm.slane %v8983, %v8988
  %v8991 = vunpack.c.l.s4 1934713408
  %v8992 = vunpack.c.0.s8 %v8991
  %v8993 = vperm.slane %v8985, %v8992
  %v8994 = vrot.slane %v8977, 4
  %v8995 = vsel %vm8330, 0.0, %v8994
  %v8996 = vrot.slane %v8981, 4
  %v8997 = vsel %vm8330, 0.0, %v8996
  %v8998 = vrot.slane %v8989, 4
  %v8999 = vsel %vm8330, 0.0, %v8998
  %v9000 = vrot.slane %v8993, 4
  %v9001 = vsel %vm8330, 0.0, %v9000
  %v9002 = vrot.slane %v8309, 4
  %v9003 = vsel %vm8330, %v9002, %v8277
  %v9004 = vrot.slane %v8277, 4
  %v9005 = vsel %vm8330, %v8309, %v9004
  %v9007 = vunpack.c.l.s4 1983009808
  %v9008 = vunpack.c.0.s8 %v9007
  %v9009 = vperm.slane %v9003, %v9008
  %v9011 = vunpack.c.l.s4 1983009808
  %v9012 = vunpack.c.0.s8 %v9011
  %v9013 = vperm.slane %v9005, %v9012
  %v9014 = vrot.slane %v8325, 4
  %v9015 = vsel %vm8330, %v9014, %v8293
  %v9016 = vrot.slane %v8293, 4
  %v9017 = vsel %vm8330, %v8325, %v9016
  %v9019 = vunpack.c.l.s4 1983009808
  %v9020 = vunpack.c.0.s8 %v9019
  %v9021 = vperm.slane %v9015, %v9020
  %v9023 = vunpack.c.l.s4 1983009808
  %v9024 = vunpack.c.0.s8 %v9023
  %v9025 = vperm.slane %v9017, %v9024
  %v9026 = vrot.slane %v9021, 4
  %v9027 = vsel %vm8330, %v9026, %v9009
  %v9028 = vrot.slane %v9009, 4
  %v9029 = vsel %vm8330, %v9021, %v9028
  %v9031 = vunpack.c.l.s4 1934713408
  %v9032 = vunpack.c.0.s8 %v9031
  %v9033 = vperm.slane %v9027, %v9032
  %v9035 = vunpack.c.l.s4 1934713408
  %v9036 = vunpack.c.0.s8 %v9035
  %v9037 = vperm.slane %v9029, %v9036
  %v9038 = vrot.slane %v9025, 4
  %v9039 = vsel %vm8330, %v9038, %v9013
  %v9040 = vrot.slane %v9013, 4
  %v9041 = vsel %vm8330, %v9025, %v9040
  %v9043 = vunpack.c.l.s4 1934713408
  %v9044 = vunpack.c.0.s8 %v9043
  %v9045 = vperm.slane %v9039, %v9044
  %v9047 = vunpack.c.l.s4 1934713408
  %v9048 = vunpack.c.0.s8 %v9047
  %v9049 = vperm.slane %v9041, %v9048
  %v9050 = vrot.slane %v9033, 4
  %v9051 = vsel %vm8330, 0.0, %v9050
  %v9052 = vrot.slane %v9037, 4
  %v9053 = vsel %vm8330, 0.0, %v9052
  %v9054 = vrot.slane %v9045, 4
  %v9055 = vsel %vm8330, 0.0, %v9054
  %v9056 = vrot.slane %v9049, 4
  %v9057 = vsel %vm8330, 0.0, %v9056
  %v9058 = vrot.slane %v8310, 4
  %v9059 = vsel %vm8330, %v9058, %v8278
  %v9060 = vrot.slane %v8278, 4
  %v9061 = vsel %vm8330, %v8310, %v9060
  %v9063 = vunpack.c.l.s4 1983009808
  %v9064 = vunpack.c.0.s8 %v9063
  %v9065 = vperm.slane %v9059, %v9064
  %v9067 = vunpack.c.l.s4 1983009808
  %v9068 = vunpack.c.0.s8 %v9067
  %v9069 = vperm.slane %v9061, %v9068
  %v9070 = vrot.slane %v8326, 4
  %v9071 = vsel %vm8330, %v9070, %v8294
  %v9072 = vrot.slane %v8294, 4
  %v9073 = vsel %vm8330, %v8326, %v9072
  %v9075 = vunpack.c.l.s4 1983009808
  %v9076 = vunpack.c.0.s8 %v9075
  %v9077 = vperm.slane %v9071, %v9076
  %v9079 = vunpack.c.l.s4 1983009808
  %v9080 = vunpack.c.0.s8 %v9079
  %v9081 = vperm.slane %v9073, %v9080
  %v9082 = vrot.slane %v9077, 4
  %v9083 = vsel %vm8330, %v9082, %v9065
  %v9084 = vrot.slane %v9065, 4
  %v9085 = vsel %vm8330, %v9077, %v9084
  %v9087 = vunpack.c.l.s4 1934713408
  %v9088 = vunpack.c.0.s8 %v9087
  %v9089 = vperm.slane %v9083, %v9088
  %v9091 = vunpack.c.l.s4 1934713408
  %v9092 = vunpack.c.0.s8 %v9091
  %v9093 = vperm.slane %v9085, %v9092
  %v9094 = vrot.slane %v9081, 4
  %v9095 = vsel %vm8330, %v9094, %v9069
  %v9096 = vrot.slane %v9069, 4
  %v9097 = vsel %vm8330, %v9081, %v9096
  %v9099 = vunpack.c.l.s4 1934713408
  %v9100 = vunpack.c.0.s8 %v9099
  %v9101 = vperm.slane %v9095, %v9100
  %v9103 = vunpack.c.l.s4 1934713408
  %v9104 = vunpack.c.0.s8 %v9103
  %v9105 = vperm.slane %v9097, %v9104
  %v9106 = vrot.slane %v9089, 4
  %v9107 = vsel %vm8330, 0.0, %v9106
  %v9108 = vrot.slane %v9093, 4
  %v9109 = vsel %vm8330, 0.0, %v9108
  %v9110 = vrot.slane %v9101, 4
  %v9111 = vsel %vm8330, 0.0, %v9110
  %v9112 = vrot.slane %v9105, 4
  %v9113 = vsel %vm8330, 0.0, %v9112
  %v9114 = vrot.slane %v8311, 4
  %v9115 = vsel %vm8330, %v9114, %v8279
  %v9116 = vrot.slane %v8279, 4
  %v9117 = vsel %vm8330, %v8311, %v9116
  %v9119 = vunpack.c.l.s4 1983009808
  %v9120 = vunpack.c.0.s8 %v9119
  %v9121 = vperm.slane %v9115, %v9120
  %v9123 = vunpack.c.l.s4 1983009808
  %v9124 = vunpack.c.0.s8 %v9123
  %v9125 = vperm.slane %v9117, %v9124
  %v9126 = vrot.slane %v8327, 4
  %v9127 = vsel %vm8330, %v9126, %v8295
  %v9128 = vrot.slane %v8295, 4
  %v9129 = vsel %vm8330, %v8327, %v9128
  %v9131 = vunpack.c.l.s4 1983009808
  %v9132 = vunpack.c.0.s8 %v9131
  %v9133 = vperm.slane %v9127, %v9132
  %v9135 = vunpack.c.l.s4 1983009808
  %v9136 = vunpack.c.0.s8 %v9135
  %v9137 = vperm.slane %v9129, %v9136
  %v9138 = vrot.slane %v9133, 4
  %v9139 = vsel %vm8330, %v9138, %v9121
  %v9140 = vrot.slane %v9121, 4
  %v9141 = vsel %vm8330, %v9133, %v9140
  %v9143 = vunpack.c.l.s4 1934713408
  %v9144 = vunpack.c.0.s8 %v9143
  %v9145 = vperm.slane %v9139, %v9144
  %v9147 = vunpack.c.l.s4 1934713408
  %v9148 = vunpack.c.0.s8 %v9147
  %v9149 = vperm.slane %v9141, %v9148
  %v9150 = vrot.slane %v9137, 4
  %v9151 = vsel %vm8330, %v9150, %v9125
  %v9152 = vrot.slane %v9125, 4
  %v9153 = vsel %vm8330, %v9137, %v9152
  %v9155 = vunpack.c.l.s4 1934713408
  %v9156 = vunpack.c.0.s8 %v9155
  %v9157 = vperm.slane %v9151, %v9156
  %v9159 = vunpack.c.l.s4 1934713408
  %v9160 = vunpack.c.0.s8 %v9159
  %v9161 = vperm.slane %v9153, %v9160
  %v9162 = vrot.slane %v9145, 4
  %v9163 = vsel %vm8330, 0.0, %v9162
  %v9164 = vrot.slane %v9149, 4
  %v9165 = vsel %vm8330, 0.0, %v9164
  %v9166 = vrot.slane %v9157, 4
  %v9167 = vsel %vm8330, 0.0, %v9166
  %v9168 = vrot.slane %v9161, 4
  %v9169 = vsel %vm8330, 0.0, %v9168
  %v9170 = vrot.slane %v8312, 4
  %v9171 = vsel %vm8330, %v9170, %v8280
  %v9172 = vrot.slane %v8280, 4
  %v9173 = vsel %vm8330, %v8312, %v9172
  %v9175 = vunpack.c.l.s4 1983009808
  %v9176 = vunpack.c.0.s8 %v9175
  %v9177 = vperm.slane %v9171, %v9176
  %v9179 = vunpack.c.l.s4 1983009808
  %v9180 = vunpack.c.0.s8 %v9179
  %v9181 = vperm.slane %v9173, %v9180
  %v9182 = vrot.slane %v8328, 4
  %v9183 = vsel %vm8330, %v9182, %v8296
  %v9184 = vrot.slane %v8296, 4
  %v9185 = vsel %vm8330, %v8328, %v9184
  %v9187 = vunpack.c.l.s4 1983009808
  %v9188 = vunpack.c.0.s8 %v9187
  %v9189 = vperm.slane %v9183, %v9188
  %v9191 = vunpack.c.l.s4 1983009808
  %v9192 = vunpack.c.0.s8 %v9191
  %v9193 = vperm.slane %v9185, %v9192
  %v9194 = vrot.slane %v9189, 4
  %v9195 = vsel %vm8330, %v9194, %v9177
  %v9196 = vrot.slane %v9177, 4
  %v9197 = vsel %vm8330, %v9189, %v9196
  %v9199 = vunpack.c.l.s4 1934713408
  %v9200 = vunpack.c.0.s8 %v9199
  %v9201 = vperm.slane %v9195, %v9200
  %v9203 = vunpack.c.l.s4 1934713408
  %v9204 = vunpack.c.0.s8 %v9203
  %v9205 = vperm.slane %v9197, %v9204
  %v9206 = vrot.slane %v9193, 4
  %v9207 = vsel %vm8330, %v9206, %v9181
  %v9208 = vrot.slane %v9181, 4
  %v9209 = vsel %vm8330, %v9193, %v9208
  %v9211 = vunpack.c.l.s4 1934713408
  %v9212 = vunpack.c.0.s8 %v9211
  %v9213 = vperm.slane %v9207, %v9212
  %v9215 = vunpack.c.l.s4 1934713408
  %v9216 = vunpack.c.0.s8 %v9215
  %v9217 = vperm.slane %v9209, %v9216
  %v9218 = vrot.slane %v9201, 4
  %v9219 = vsel %vm8330, 0.0, %v9218
  %v9220 = vrot.slane %v9205, 4
  %v9221 = vsel %vm8330, 0.0, %v9220
  %v9222 = vrot.slane %v9213, 4
  %v9223 = vsel %vm8330, 0.0, %v9222
  %v9224 = vrot.slane %v9217, 4
  %v9225 = vsel %vm8330, 0.0, %v9224
  %v9226 = vsel %vm8330, %v8380, %v8361
  %v9228 = vunpack.c.l.s4 1983009808
  %v9229 = vunpack.c.0.s8 %v9228
  %v9230 = vperm.slane %v9226, %v9229
  %v9231 = vrot.slane %v8381, 4
  %v9232 = vsel %vm8330, %v9231, %v8379
  %v9234 = vunpack.c.l.s4 1983009808
  %v9235 = vunpack.c.0.s8 %v9234
  %v9236 = vperm.slane %v9232, %v9235
  %v9237 = vsel %vm8330, %v8384, %v8373
  %v9239 = vunpack.c.l.s4 1983009808
  %v9240 = vunpack.c.0.s8 %v9239
  %v9241 = vperm.slane %v9237, %v9240
  %v9242 = vrot.slane %v8385, 4
  %v9243 = vsel %vm8330, %v9242, %v8383
  %v9245 = vunpack.c.l.s4 1983009808
  %v9246 = vunpack.c.0.s8 %v9245
  %v9247 = vperm.slane %v9243, %v9246
  %v9248 = vrot.slane %v9236, 4
  %v9249 = vsel %vm8330, %v9248, %v9230
  %v9250 = vrot.slane %v9230, 4
  %v9251 = vsel %vm8330, %v9236, %v9250
  %v9253 = vunpack.c.l.s4 1934713408
  %v9254 = vunpack.c.0.s8 %v9253
  %v9255 = vperm.slane %v9249, %v9254
  %v9257 = vunpack.c.l.s4 1934713408
  %v9258 = vunpack.c.0.s8 %v9257
  %v9259 = vperm.slane %v9251, %v9258
  %v9260 = vrot.slane %v9247, 4
  %v9261 = vsel %vm8330, %v9260, %v9241
  %v9262 = vrot.slane %v9241, 4
  %v9263 = vsel %vm8330, %v9247, %v9262
  %v9265 = vunpack.c.l.s4 1934713408
  %v9266 = vunpack.c.0.s8 %v9265
  %v9267 = vperm.slane %v9261, %v9266
  %v9269 = vunpack.c.l.s4 1934713408
  %v9270 = vunpack.c.0.s8 %v9269
  %v9271 = vperm.slane %v9263, %v9270
  %v9272 = vrot.slane %v9267, 4
  %v9273 = vsel %vm8330, %v9272, %v9255
  %v9274 = vrot.slane %v9255, 4
  %v9275 = vsel %vm8330, %v9267, %v9274
  %v9276 = vrot.slane %v9271, 4
  %v9277 = vsel %vm8330, %v9276, %v9259
  %v9278 = vrot.slane %v9259, 4
  %v9279 = vsel %vm8330, %v9271, %v9278
  %v9280 = vsel %vm8330, %v8436, %v8417
  %v9282 = vunpack.c.l.s4 1983009808
  %v9283 = vunpack.c.0.s8 %v9282
  %v9284 = vperm.slane %v9280, %v9283
  %v9285 = vrot.slane %v8437, 4
  %v9286 = vsel %vm8330, %v9285, %v8435
  %v9288 = vunpack.c.l.s4 1983009808
  %v9289 = vunpack.c.0.s8 %v9288
  %v9290 = vperm.slane %v9286, %v9289
  %v9291 = vsel %vm8330, %v8440, %v8429
  %v9293 = vunpack.c.l.s4 1983009808
  %v9294 = vunpack.c.0.s8 %v9293
  %v9295 = vperm.slane %v9291, %v9294
  %v9296 = vrot.slane %v8441, 4
  %v9297 = vsel %vm8330, %v9296, %v8439
  %v9299 = vunpack.c.l.s4 1983009808
  %v9300 = vunpack.c.0.s8 %v9299
  %v9301 = vperm.slane %v9297, %v9300
  %v9302 = vrot.slane %v9290, 4
  %v9303 = vsel %vm8330, %v9302, %v9284
  %v9304 = vrot.slane %v9284, 4
  %v9305 = vsel %vm8330, %v9290, %v9304
  %v9307 = vunpack.c.l.s4 1934713408
  %v9308 = vunpack.c.0.s8 %v9307
  %v9309 = vperm.slane %v9303, %v9308
  %v9311 = vunpack.c.l.s4 1934713408
  %v9312 = vunpack.c.0.s8 %v9311
  %v9313 = vperm.slane %v9305, %v9312
  %v9314 = vrot.slane %v9301, 4
  %v9315 = vsel %vm8330, %v9314, %v9295
  %v9316 = vrot.slane %v9295, 4
  %v9317 = vsel %vm8330, %v9301, %v9316
  %v9319 = vunpack.c.l.s4 1934713408
  %v9320 = vunpack.c.0.s8 %v9319
  %v9321 = vperm.slane %v9315, %v9320
  %v9323 = vunpack.c.l.s4 1934713408
  %v9324 = vunpack.c.0.s8 %v9323
  %v9325 = vperm.slane %v9317, %v9324
  %v9326 = vrot.slane %v9321, 4
  %v9327 = vsel %vm8330, %v9326, %v9309
  %v9328 = vrot.slane %v9309, 4
  %v9329 = vsel %vm8330, %v9321, %v9328
  %v9330 = vrot.slane %v9325, 4
  %v9331 = vsel %vm8330, %v9330, %v9313
  %v9332 = vrot.slane %v9313, 4
  %v9333 = vsel %vm8330, %v9325, %v9332
  %v9334 = vsel %vm8330, %v8492, %v8473
  %v9336 = vunpack.c.l.s4 1983009808
  %v9337 = vunpack.c.0.s8 %v9336
  %v9338 = vperm.slane %v9334, %v9337
  %v9339 = vrot.slane %v8493, 4
  %v9340 = vsel %vm8330, %v9339, %v8491
  %v9342 = vunpack.c.l.s4 1983009808
  %v9343 = vunpack.c.0.s8 %v9342
  %v9344 = vperm.slane %v9340, %v9343
  %v9345 = vsel %vm8330, %v8496, %v8485
  %v9347 = vunpack.c.l.s4 1983009808
  %v9348 = vunpack.c.0.s8 %v9347
  %v9349 = vperm.slane %v9345, %v9348
  %v9350 = vrot.slane %v8497, 4
  %v9351 = vsel %vm8330, %v9350, %v8495
  %v9353 = vunpack.c.l.s4 1983009808
  %v9354 = vunpack.c.0.s8 %v9353
  %v9355 = vperm.slane %v9351, %v9354
  %v9356 = vrot.slane %v9344, 4
  %v9357 = vsel %vm8330, %v9356, %v9338
  %v9358 = vrot.slane %v9338, 4
  %v9359 = vsel %vm8330, %v9344, %v9358
  %v9361 = vunpack.c.l.s4 1934713408
  %v9362 = vunpack.c.0.s8 %v9361
  %v9363 = vperm.slane %v9357, %v9362
  %v9365 = vunpack.c.l.s4 1934713408
  %v9366 = vunpack.c.0.s8 %v9365
  %v9367 = vperm.slane %v9359, %v9366
  %v9368 = vrot.slane %v9355, 4
  %v9369 = vsel %vm8330, %v9368, %v9349
  %v9370 = vrot.slane %v9349, 4
  %v9371 = vsel %vm8330, %v9355, %v9370
  %v9373 = vunpack.c.l.s4 1934713408
  %v9374 = vunpack.c.0.s8 %v9373
  %v9375 = vperm.slane %v9369, %v9374
  %v9377 = vunpack.c.l.s4 1934713408
  %v9378 = vunpack.c.0.s8 %v9377
  %v9379 = vperm.slane %v9371, %v9378
  %v9380 = vrot.slane %v9375, 4
  %v9381 = vsel %vm8330, %v9380, %v9363
  %v9382 = vrot.slane %v9363, 4
  %v9383 = vsel %vm8330, %v9375, %v9382
  %v9384 = vrot.slane %v9379, 4
  %v9385 = vsel %vm8330, %v9384, %v9367
  %v9386 = vrot.slane %v9367, 4
  %v9387 = vsel %vm8330, %v9379, %v9386
  %v9388 = vsel %vm8330, %v8548, %v8529
  %v9390 = vunpack.c.l.s4 1983009808
  %v9391 = vunpack.c.0.s8 %v9390
  %v9392 = vperm.slane %v9388, %v9391
  %v9393 = vrot.slane %v8549, 4
  %v9394 = vsel %vm8330, %v9393, %v8547
  %v9396 = vunpack.c.l.s4 1983009808
  %v9397 = vunpack.c.0.s8 %v9396
  %v9398 = vperm.slane %v9394, %v9397
  %v9399 = vsel %vm8330, %v8552, %v8541
  %v9401 = vunpack.c.l.s4 1983009808
  %v9402 = vunpack.c.0.s8 %v9401
  %v9403 = vperm.slane %v9399, %v9402
  %v9404 = vrot.slane %v8553, 4
  %v9405 = vsel %vm8330, %v9404, %v8551
  %v9407 = vunpack.c.l.s4 1983009808
  %v9408 = vunpack.c.0.s8 %v9407
  %v9409 = vperm.slane %v9405, %v9408
  %v9410 = vrot.slane %v9398, 4
  %v9411 = vsel %vm8330, %v9410, %v9392
  %v9412 = vrot.slane %v9392, 4
  %v9413 = vsel %vm8330, %v9398, %v9412
  %v9415 = vunpack.c.l.s4 1934713408
  %v9416 = vunpack.c.0.s8 %v9415
  %v9417 = vperm.slane %v9411, %v9416
  %v9419 = vunpack.c.l.s4 1934713408
  %v9420 = vunpack.c.0.s8 %v9419
  %v9421 = vperm.slane %v9413, %v9420
  %v9422 = vrot.slane %v9409, 4
  %v9423 = vsel %vm8330, %v9422, %v9403
  %v9424 = vrot.slane %v9403, 4
  %v9425 = vsel %vm8330, %v9409, %v9424
  %v9427 = vunpack.c.l.s4 1934713408
  %v9428 = vunpack.c.0.s8 %v9427
  %v9429 = vperm.slane %v9423, %v9428
  %v9431 = vunpack.c.l.s4 1934713408
  %v9432 = vunpack.c.0.s8 %v9431
  %v9433 = vperm.slane %v9425, %v9432
  %v9434 = vrot.slane %v9429, 4
  %v9435 = vsel %vm8330, %v9434, %v9417
  %v9436 = vrot.slane %v9417, 4
  %v9437 = vsel %vm8330, %v9429, %v9436
  %v9438 = vrot.slane %v9433, 4
  %v9439 = vsel %vm8330, %v9438, %v9421
  %v9440 = vrot.slane %v9421, 4
  %v9441 = vsel %vm8330, %v9433, %v9440
  %v9442 = vsel %vm8330, %v8604, %v8585
  %v9444 = vunpack.c.l.s4 1983009808
  %v9445 = vunpack.c.0.s8 %v9444
  %v9446 = vperm.slane %v9442, %v9445
  %v9447 = vrot.slane %v8605, 4
  %v9448 = vsel %vm8330, %v9447, %v8603
  %v9450 = vunpack.c.l.s4 1983009808
  %v9451 = vunpack.c.0.s8 %v9450
  %v9452 = vperm.slane %v9448, %v9451
  %v9453 = vsel %vm8330, %v8608, %v8597
  %v9455 = vunpack.c.l.s4 1983009808
  %v9456 = vunpack.c.0.s8 %v9455
  %v9457 = vperm.slane %v9453, %v9456
  %v9458 = vrot.slane %v8609, 4
  %v9459 = vsel %vm8330, %v9458, %v8607
  %v9461 = vunpack.c.l.s4 1983009808
  %v9462 = vunpack.c.0.s8 %v9461
  %v9463 = vperm.slane %v9459, %v9462
  %v9464 = vrot.slane %v9452, 4
  %v9465 = vsel %vm8330, %v9464, %v9446
  %v9466 = vrot.slane %v9446, 4
  %v9467 = vsel %vm8330, %v9452, %v9466
  %v9469 = vunpack.c.l.s4 1934713408
  %v9470 = vunpack.c.0.s8 %v9469
  %v9471 = vperm.slane %v9465, %v9470
  %v9473 = vunpack.c.l.s4 1934713408
  %v9474 = vunpack.c.0.s8 %v9473
  %v9475 = vperm.slane %v9467, %v9474
  %v9476 = vrot.slane %v9463, 4
  %v9477 = vsel %vm8330, %v9476, %v9457
  %v9478 = vrot.slane %v9457, 4
  %v9479 = vsel %vm8330, %v9463, %v9478
  %v9481 = vunpack.c.l.s4 1934713408
  %v9482 = vunpack.c.0.s8 %v9481
  %v9483 = vperm.slane %v9477, %v9482
  %v9485 = vunpack.c.l.s4 1934713408
  %v9486 = vunpack.c.0.s8 %v9485
  %v9487 = vperm.slane %v9479, %v9486
  %v9488 = vrot.slane %v9483, 4
  %v9489 = vsel %vm8330, %v9488, %v9471
  %v9490 = vrot.slane %v9471, 4
  %v9491 = vsel %vm8330, %v9483, %v9490
  %v9492 = vrot.slane %v9487, 4
  %v9493 = vsel %vm8330, %v9492, %v9475
  %v9494 = vrot.slane %v9475, 4
  %v9495 = vsel %vm8330, %v9487, %v9494
  %v9496 = vsel %vm8330, %v8660, %v8641
  %v9498 = vunpack.c.l.s4 1983009808
  %v9499 = vunpack.c.0.s8 %v9498
  %v9500 = vperm.slane %v9496, %v9499
  %v9501 = vrot.slane %v8661, 4
  %v9502 = vsel %vm8330, %v9501, %v8659
  %v9504 = vunpack.c.l.s4 1983009808
  %v9505 = vunpack.c.0.s8 %v9504
  %v9506 = vperm.slane %v9502, %v9505
  %v9507 = vsel %vm8330, %v8664, %v8653
  %v9509 = vunpack.c.l.s4 1983009808
  %v9510 = vunpack.c.0.s8 %v9509
  %v9511 = vperm.slane %v9507, %v9510
  %v9512 = vrot.slane %v8665, 4
  %v9513 = vsel %vm8330, %v9512, %v8663
  %v9515 = vunpack.c.l.s4 1983009808
  %v9516 = vunpack.c.0.s8 %v9515
  %v9517 = vperm.slane %v9513, %v9516
  %v9518 = vrot.slane %v9506, 4
  %v9519 = vsel %vm8330, %v9518, %v9500
  %v9520 = vrot.slane %v9500, 4
  %v9521 = vsel %vm8330, %v9506, %v9520
  %v9523 = vunpack.c.l.s4 1934713408
  %v9524 = vunpack.c.0.s8 %v9523
  %v9525 = vperm.slane %v9519, %v9524
  %v9527 = vunpack.c.l.s4 1934713408
  %v9528 = vunpack.c.0.s8 %v9527
  %v9529 = vperm.slane %v9521, %v9528
  %v9530 = vrot.slane %v9517, 4
  %v9531 = vsel %vm8330, %v9530, %v9511
  %v9532 = vrot.slane %v9511, 4
  %v9533 = vsel %vm8330, %v9517, %v9532
  %v9535 = vunpack.c.l.s4 1934713408
  %v9536 = vunpack.c.0.s8 %v9535
  %v9537 = vperm.slane %v9531, %v9536
  %v9539 = vunpack.c.l.s4 1934713408
  %v9540 = vunpack.c.0.s8 %v9539
  %v9541 = vperm.slane %v9533, %v9540
  %v9542 = vrot.slane %v9537, 4
  %v9543 = vsel %vm8330, %v9542, %v9525
  %v9544 = vrot.slane %v9525, 4
  %v9545 = vsel %vm8330, %v9537, %v9544
  %v9546 = vrot.slane %v9541, 4
  %v9547 = vsel %vm8330, %v9546, %v9529
  %v9548 = vrot.slane %v9529, 4
  %v9549 = vsel %vm8330, %v9541, %v9548
  %v9550 = vsel %vm8330, %v8716, %v8697
  %v9552 = vunpack.c.l.s4 1983009808
  %v9553 = vunpack.c.0.s8 %v9552
  %v9554 = vperm.slane %v9550, %v9553
  %v9555 = vrot.slane %v8717, 4
  %v9556 = vsel %vm8330, %v9555, %v8715
  %v9558 = vunpack.c.l.s4 1983009808
  %v9559 = vunpack.c.0.s8 %v9558
  %v9560 = vperm.slane %v9556, %v9559
  %v9561 = vsel %vm8330, %v8720, %v8709
  %v9563 = vunpack.c.l.s4 1983009808
  %v9564 = vunpack.c.0.s8 %v9563
  %v9565 = vperm.slane %v9561, %v9564
  %v9566 = vrot.slane %v8721, 4
  %v9567 = vsel %vm8330, %v9566, %v8719
  %v9569 = vunpack.c.l.s4 1983009808
  %v9570 = vunpack.c.0.s8 %v9569
  %v9571 = vperm.slane %v9567, %v9570
  %v9572 = vrot.slane %v9560, 4
  %v9573 = vsel %vm8330, %v9572, %v9554
  %v9574 = vrot.slane %v9554, 4
  %v9575 = vsel %vm8330, %v9560, %v9574
  %v9577 = vunpack.c.l.s4 1934713408
  %v9578 = vunpack.c.0.s8 %v9577
  %v9579 = vperm.slane %v9573, %v9578
  %v9581 = vunpack.c.l.s4 1934713408
  %v9582 = vunpack.c.0.s8 %v9581
  %v9583 = vperm.slane %v9575, %v9582
  %v9584 = vrot.slane %v9571, 4
  %v9585 = vsel %vm8330, %v9584, %v9565
  %v9586 = vrot.slane %v9565, 4
  %v9587 = vsel %vm8330, %v9571, %v9586
  %v9589 = vunpack.c.l.s4 1934713408
  %v9590 = vunpack.c.0.s8 %v9589
  %v9591 = vperm.slane %v9585, %v9590
  %v9593 = vunpack.c.l.s4 1934713408
  %v9594 = vunpack.c.0.s8 %v9593
  %v9595 = vperm.slane %v9587, %v9594
  %v9596 = vrot.slane %v9591, 4
  %v9597 = vsel %vm8330, %v9596, %v9579
  %v9598 = vrot.slane %v9579, 4
  %v9599 = vsel %vm8330, %v9591, %v9598
  %v9600 = vrot.slane %v9595, 4
  %v9601 = vsel %vm8330, %v9600, %v9583
  %v9602 = vrot.slane %v9583, 4
  %v9603 = vsel %vm8330, %v9595, %v9602
  %v9604 = vsel %vm8330, %v8772, %v8753
  %v9606 = vunpack.c.l.s4 1983009808
  %v9607 = vunpack.c.0.s8 %v9606
  %v9608 = vperm.slane %v9604, %v9607
  %v9609 = vrot.slane %v8773, 4
  %v9610 = vsel %vm8330, %v9609, %v8771
  %v9612 = vunpack.c.l.s4 1983009808
  %v9613 = vunpack.c.0.s8 %v9612
  %v9614 = vperm.slane %v9610, %v9613
  %v9615 = vsel %vm8330, %v8776, %v8765
  %v9617 = vunpack.c.l.s4 1983009808
  %v9618 = vunpack.c.0.s8 %v9617
  %v9619 = vperm.slane %v9615, %v9618
  %v9620 = vrot.slane %v8777, 4
  %v9621 = vsel %vm8330, %v9620, %v8775
  %v9623 = vunpack.c.l.s4 1983009808
  %v9624 = vunpack.c.0.s8 %v9623
  %v9625 = vperm.slane %v9621, %v9624
  %v9626 = vrot.slane %v9614, 4
  %v9627 = vsel %vm8330, %v9626, %v9608
  %v9628 = vrot.slane %v9608, 4
  %v9629 = vsel %vm8330, %v9614, %v9628
  %v9631 = vunpack.c.l.s4 1934713408
  %v9632 = vunpack.c.0.s8 %v9631
  %v9633 = vperm.slane %v9627, %v9632
  %v9635 = vunpack.c.l.s4 1934713408
  %v9636 = vunpack.c.0.s8 %v9635
  %v9637 = vperm.slane %v9629, %v9636
  %v9638 = vrot.slane %v9625, 4
  %v9639 = vsel %vm8330, %v9638, %v9619
  %v9640 = vrot.slane %v9619, 4
  %v9641 = vsel %vm8330, %v9625, %v9640
  %v9643 = vunpack.c.l.s4 1934713408
  %v9644 = vunpack.c.0.s8 %v9643
  %v9645 = vperm.slane %v9639, %v9644
  %v9647 = vunpack.c.l.s4 1934713408
  %v9648 = vunpack.c.0.s8 %v9647
  %v9649 = vperm.slane %v9641, %v9648
  %v9650 = vrot.slane %v9645, 4
  %v9651 = vsel %vm8330, %v9650, %v9633
  %v9652 = vrot.slane %v9633, 4
  %v9653 = vsel %vm8330, %v9645, %v9652
  %v9654 = vrot.slane %v9649, 4
  %v9655 = vsel %vm8330, %v9654, %v9637
  %v9656 = vrot.slane %v9637, 4
  %v9657 = vsel %vm8330, %v9649, %v9656
  %v9658 = vsel %vm8330, %v8828, %v8809
  %v9660 = vunpack.c.l.s4 1983009808
  %v9661 = vunpack.c.0.s8 %v9660
  %v9662 = vperm.slane %v9658, %v9661
  %v9663 = vrot.slane %v8829, 4
  %v9664 = vsel %vm8330, %v9663, %v8827
  %v9666 = vunpack.c.l.s4 1983009808
  %v9667 = vunpack.c.0.s8 %v9666
  %v9668 = vperm.slane %v9664, %v9667
  %v9669 = vsel %vm8330, %v8832, %v8821
  %v9671 = vunpack.c.l.s4 1983009808
  %v9672 = vunpack.c.0.s8 %v9671
  %v9673 = vperm.slane %v9669, %v9672
  %v9674 = vrot.slane %v8833, 4
  %v9675 = vsel %vm8330, %v9674, %v8831
  %v9677 = vunpack.c.l.s4 1983009808
  %v9678 = vunpack.c.0.s8 %v9677
  %v9679 = vperm.slane %v9675, %v9678
  %v9680 = vrot.slane %v9668, 4
  %v9681 = vsel %vm8330, %v9680, %v9662
  %v9682 = vrot.slane %v9662, 4
  %v9683 = vsel %vm8330, %v9668, %v9682
  %v9685 = vunpack.c.l.s4 1934713408
  %v9686 = vunpack.c.0.s8 %v9685
  %v9687 = vperm.slane %v9681, %v9686
  %v9689 = vunpack.c.l.s4 1934713408
  %v9690 = vunpack.c.0.s8 %v9689
  %v9691 = vperm.slane %v9683, %v9690
  %v9692 = vrot.slane %v9679, 4
  %v9693 = vsel %vm8330, %v9692, %v9673
  %v9694 = vrot.slane %v9673, 4
  %v9695 = vsel %vm8330, %v9679, %v9694
  %v9697 = vunpack.c.l.s4 1934713408
  %v9698 = vunpack.c.0.s8 %v9697
  %v9699 = vperm.slane %v9693, %v9698
  %v9701 = vunpack.c.l.s4 1934713408
  %v9702 = vunpack.c.0.s8 %v9701
  %v9703 = vperm.slane %v9695, %v9702
  %v9704 = vrot.slane %v9699, 4
  %v9705 = vsel %vm8330, %v9704, %v9687
  %v9706 = vrot.slane %v9687, 4
  %v9707 = vsel %vm8330, %v9699, %v9706
  %v9708 = vrot.slane %v9703, 4
  %v9709 = vsel %vm8330, %v9708, %v9691
  %v9710 = vrot.slane %v9691, 4
  %v9711 = vsel %vm8330, %v9703, %v9710
  %v9712 = vsel %vm8330, %v8884, %v8865
  %v9714 = vunpack.c.l.s4 1983009808
  %v9715 = vunpack.c.0.s8 %v9714
  %v9716 = vperm.slane %v9712, %v9715
  %v9717 = vrot.slane %v8885, 4
  %v9718 = vsel %vm8330, %v9717, %v8883
  %v9720 = vunpack.c.l.s4 1983009808
  %v9721 = vunpack.c.0.s8 %v9720
  %v9722 = vperm.slane %v9718, %v9721
  %v9723 = vsel %vm8330, %v8888, %v8877
  %v9725 = vunpack.c.l.s4 1983009808
  %v9726 = vunpack.c.0.s8 %v9725
  %v9727 = vperm.slane %v9723, %v9726
  %v9728 = vrot.slane %v8889, 4
  %v9729 = vsel %vm8330, %v9728, %v8887
  %v9731 = vunpack.c.l.s4 1983009808
  %v9732 = vunpack.c.0.s8 %v9731
  %v9733 = vperm.slane %v9729, %v9732
  %v9734 = vrot.slane %v9722, 4
  %v9735 = vsel %vm8330, %v9734, %v9716
  %v9736 = vrot.slane %v9716, 4
  %v9737 = vsel %vm8330, %v9722, %v9736
  %v9739 = vunpack.c.l.s4 1934713408
  %v9740 = vunpack.c.0.s8 %v9739
  %v9741 = vperm.slane %v9735, %v9740
  %v9743 = vunpack.c.l.s4 1934713408
  %v9744 = vunpack.c.0.s8 %v9743
  %v9745 = vperm.slane %v9737, %v9744
  %v9746 = vrot.slane %v9733, 4
  %v9747 = vsel %vm8330, %v9746, %v9727
  %v9748 = vrot.slane %v9727, 4
  %v9749 = vsel %vm8330, %v9733, %v9748
  %v9751 = vunpack.c.l.s4 1934713408
  %v9752 = vunpack.c.0.s8 %v9751
  %v9753 = vperm.slane %v9747, %v9752
  %v9755 = vunpack.c.l.s4 1934713408
  %v9756 = vunpack.c.0.s8 %v9755
  %v9757 = vperm.slane %v9749, %v9756
  %v9758 = vrot.slane %v9753, 4
  %v9759 = vsel %vm8330, %v9758, %v9741
  %v9760 = vrot.slane %v9741, 4
  %v9761 = vsel %vm8330, %v9753, %v9760
  %v9762 = vrot.slane %v9757, 4
  %v9763 = vsel %vm8330, %v9762, %v9745
  %v9764 = vrot.slane %v9745, 4
  %v9765 = vsel %vm8330, %v9757, %v9764
  %v9766 = vsel %vm8330, %v8940, %v8921
  %v9768 = vunpack.c.l.s4 1983009808
  %v9769 = vunpack.c.0.s8 %v9768
  %v9770 = vperm.slane %v9766, %v9769
  %v9771 = vrot.slane %v8941, 4
  %v9772 = vsel %vm8330, %v9771, %v8939
  %v9774 = vunpack.c.l.s4 1983009808
  %v9775 = vunpack.c.0.s8 %v9774
  %v9776 = vperm.slane %v9772, %v9775
  %v9777 = vsel %vm8330, %v8944, %v8933
  %v9779 = vunpack.c.l.s4 1983009808
  %v9780 = vunpack.c.0.s8 %v9779
  %v9781 = vperm.slane %v9777, %v9780
  %v9782 = vrot.slane %v8945, 4
  %v9783 = vsel %vm8330, %v9782, %v8943
  %v9785 = vunpack.c.l.s4 1983009808
  %v9786 = vunpack.c.0.s8 %v9785
  %v9787 = vperm.slane %v9783, %v9786
  %v9788 = vrot.slane %v9776, 4
  %v9789 = vsel %vm8330, %v9788, %v9770
  %v9790 = vrot.slane %v9770, 4
  %v9791 = vsel %vm8330, %v9776, %v9790
  %v9793 = vunpack.c.l.s4 1934713408
  %v9794 = vunpack.c.0.s8 %v9793
  %v9795 = vperm.slane %v9789, %v9794
  %v9797 = vunpack.c.l.s4 1934713408
  %v9798 = vunpack.c.0.s8 %v9797
  %v9799 = vperm.slane %v9791, %v9798
  %v9800 = vrot.slane %v9787, 4
  %v9801 = vsel %vm8330, %v9800, %v9781
  %v9802 = vrot.slane %v9781, 4
  %v9803 = vsel %vm8330, %v9787, %v9802
  %v9805 = vunpack.c.l.s4 1934713408
  %v9806 = vunpack.c.0.s8 %v9805
  %v9807 = vperm.slane %v9801, %v9806
  %v9809 = vunpack.c.l.s4 1934713408
  %v9810 = vunpack.c.0.s8 %v9809
  %v9811 = vperm.slane %v9803, %v9810
  %v9812 = vrot.slane %v9807, 4
  %v9813 = vsel %vm8330, %v9812, %v9795
  %v9814 = vrot.slane %v9795, 4
  %v9815 = vsel %vm8330, %v9807, %v9814
  %v9816 = vrot.slane %v9811, 4
  %v9817 = vsel %vm8330, %v9816, %v9799
  %v9818 = vrot.slane %v9799, 4
  %v9819 = vsel %vm8330, %v9811, %v9818
  %v9820 = vsel %vm8330, %v8996, %v8977
  %v9822 = vunpack.c.l.s4 1983009808
  %v9823 = vunpack.c.0.s8 %v9822
  %v9824 = vperm.slane %v9820, %v9823
  %v9825 = vrot.slane %v8997, 4
  %v9826 = vsel %vm8330, %v9825, %v8995
  %v9828 = vunpack.c.l.s4 1983009808
  %v9829 = vunpack.c.0.s8 %v9828
  %v9830 = vperm.slane %v9826, %v9829
  %v9831 = vsel %vm8330, %v9000, %v8989
  %v9833 = vunpack.c.l.s4 1983009808
  %v9834 = vunpack.c.0.s8 %v9833
  %v9835 = vperm.slane %v9831, %v9834
  %v9836 = vrot.slane %v9001, 4
  %v9837 = vsel %vm8330, %v9836, %v8999
  %v9839 = vunpack.c.l.s4 1983009808
  %v9840 = vunpack.c.0.s8 %v9839
  %v9841 = vperm.slane %v9837, %v9840
  %v9842 = vrot.slane %v9830, 4
  %v9843 = vsel %vm8330, %v9842, %v9824
  %v9844 = vrot.slane %v9824, 4
  %v9845 = vsel %vm8330, %v9830, %v9844
  %v9847 = vunpack.c.l.s4 1934713408
  %v9848 = vunpack.c.0.s8 %v9847
  %v9849 = vperm.slane %v9843, %v9848
  %v9851 = vunpack.c.l.s4 1934713408
  %v9852 = vunpack.c.0.s8 %v9851
  %v9853 = vperm.slane %v9845, %v9852
  %v9854 = vrot.slane %v9841, 4
  %v9855 = vsel %vm8330, %v9854, %v9835
  %v9856 = vrot.slane %v9835, 4
  %v9857 = vsel %vm8330, %v9841, %v9856
  %v9859 = vunpack.c.l.s4 1934713408
  %v9860 = vunpack.c.0.s8 %v9859
  %v9861 = vperm.slane %v9855, %v9860
  %v9863 = vunpack.c.l.s4 1934713408
  %v9864 = vunpack.c.0.s8 %v9863
  %v9865 = vperm.slane %v9857, %v9864
  %v9866 = vrot.slane %v9861, 4
  %v9867 = vsel %vm8330, %v9866, %v9849
  %v9868 = vrot.slane %v9849, 4
  %v9869 = vsel %vm8330, %v9861, %v9868
  %v9870 = vrot.slane %v9865, 4
  %v9871 = vsel %vm8330, %v9870, %v9853
  %v9872 = vrot.slane %v9853, 4
  %v9873 = vsel %vm8330, %v9865, %v9872
  %v9874 = vsel %vm8330, %v9052, %v9033
  %v9876 = vunpack.c.l.s4 1983009808
  %v9877 = vunpack.c.0.s8 %v9876
  %v9878 = vperm.slane %v9874, %v9877
  %v9879 = vrot.slane %v9053, 4
  %v9880 = vsel %vm8330, %v9879, %v9051
  %v9882 = vunpack.c.l.s4 1983009808
  %v9883 = vunpack.c.0.s8 %v9882
  %v9884 = vperm.slane %v9880, %v9883
  %v9885 = vsel %vm8330, %v9056, %v9045
  %v9887 = vunpack.c.l.s4 1983009808
  %v9888 = vunpack.c.0.s8 %v9887
  %v9889 = vperm.slane %v9885, %v9888
  %v9890 = vrot.slane %v9057, 4
  %v9891 = vsel %vm8330, %v9890, %v9055
  %v9893 = vunpack.c.l.s4 1983009808
  %v9894 = vunpack.c.0.s8 %v9893
  %v9895 = vperm.slane %v9891, %v9894
  %v9896 = vrot.slane %v9884, 4
  %v9897 = vsel %vm8330, %v9896, %v9878
  %v9898 = vrot.slane %v9878, 4
  %v9899 = vsel %vm8330, %v9884, %v9898
  %v9901 = vunpack.c.l.s4 1934713408
  %v9902 = vunpack.c.0.s8 %v9901
  %v9903 = vperm.slane %v9897, %v9902
  %v9905 = vunpack.c.l.s4 1934713408
  %v9906 = vunpack.c.0.s8 %v9905
  %v9907 = vperm.slane %v9899, %v9906
  %v9908 = vrot.slane %v9895, 4
  %v9909 = vsel %vm8330, %v9908, %v9889
  %v9910 = vrot.slane %v9889, 4
  %v9911 = vsel %vm8330, %v9895, %v9910
  %v9913 = vunpack.c.l.s4 1934713408
  %v9914 = vunpack.c.0.s8 %v9913
  %v9915 = vperm.slane %v9909, %v9914
  %v9917 = vunpack.c.l.s4 1934713408
  %v9918 = vunpack.c.0.s8 %v9917
  %v9919 = vperm.slane %v9911, %v9918
  %v9920 = vrot.slane %v9915, 4
  %v9921 = vsel %vm8330, %v9920, %v9903
  %v9922 = vrot.slane %v9903, 4
  %v9923 = vsel %vm8330, %v9915, %v9922
  %v9924 = vrot.slane %v9919, 4
  %v9925 = vsel %vm8330, %v9924, %v9907
  %v9926 = vrot.slane %v9907, 4
  %v9927 = vsel %vm8330, %v9919, %v9926
  %v9928 = vsel %vm8330, %v9108, %v9089
  %v9930 = vunpack.c.l.s4 1983009808
  %v9931 = vunpack.c.0.s8 %v9930
  %v9932 = vperm.slane %v9928, %v9931
  %v9933 = vrot.slane %v9109, 4
  %v9934 = vsel %vm8330, %v9933, %v9107
  %v9936 = vunpack.c.l.s4 1983009808
  %v9937 = vunpack.c.0.s8 %v9936
  %v9938 = vperm.slane %v9934, %v9937
  %v9939 = vsel %vm8330, %v9112, %v9101
  %v9941 = vunpack.c.l.s4 1983009808
  %v9942 = vunpack.c.0.s8 %v9941
  %v9943 = vperm.slane %v9939, %v9942
  %v9944 = vrot.slane %v9113, 4
  %v9945 = vsel %vm8330, %v9944, %v9111
  %v9947 = vunpack.c.l.s4 1983009808
  %v9948 = vunpack.c.0.s8 %v9947
  %v9949 = vperm.slane %v9945, %v9948
  %v9950 = vrot.slane %v9938, 4
  %v9951 = vsel %vm8330, %v9950, %v9932
  %v9952 = vrot.slane %v9932, 4
  %v9953 = vsel %vm8330, %v9938, %v9952
  %v9955 = vunpack.c.l.s4 1934713408
  %v9956 = vunpack.c.0.s8 %v9955
  %v9957 = vperm.slane %v9951, %v9956
  %v9959 = vunpack.c.l.s4 1934713408
  %v9960 = vunpack.c.0.s8 %v9959
  %v9961 = vperm.slane %v9953, %v9960
  %v9962 = vrot.slane %v9949, 4
  %v9963 = vsel %vm8330, %v9962, %v9943
  %v9964 = vrot.slane %v9943, 4
  %v9965 = vsel %vm8330, %v9949, %v9964
  %v9967 = vunpack.c.l.s4 1934713408
  %v9968 = vunpack.c.0.s8 %v9967
  %v9969 = vperm.slane %v9963, %v9968
  %v9971 = vunpack.c.l.s4 1934713408
  %v9972 = vunpack.c.0.s8 %v9971
  %v9973 = vperm.slane %v9965, %v9972
  %v9974 = vrot.slane %v9969, 4
  %v9975 = vsel %vm8330, %v9974, %v9957
  %v9976 = vrot.slane %v9957, 4
  %v9977 = vsel %vm8330, %v9969, %v9976
  %v9978 = vrot.slane %v9973, 4
  %v9979 = vsel %vm8330, %v9978, %v9961
  %v9980 = vrot.slane %v9961, 4
  %v9981 = vsel %vm8330, %v9973, %v9980
  %v9982 = vsel %vm8330, %v9164, %v9145
  %v9984 = vunpack.c.l.s4 1983009808
  %v9985 = vunpack.c.0.s8 %v9984
  %v9986 = vperm.slane %v9982, %v9985
  %v9987 = vrot.slane %v9165, 4
  %v9988 = vsel %vm8330, %v9987, %v9163
  %v9990 = vunpack.c.l.s4 1983009808
  %v9991 = vunpack.c.0.s8 %v9990
  %v9992 = vperm.slane %v9988, %v9991
  %v9993 = vsel %vm8330, %v9168, %v9157
  %v9995 = vunpack.c.l.s4 1983009808
  %v9996 = vunpack.c.0.s8 %v9995
  %v9997 = vperm.slane %v9993, %v9996
  %v9998 = vrot.slane %v9169, 4
  %v9999 = vsel %vm8330, %v9998, %v9167
  %v10001 = vunpack.c.l.s4 1983009808
  %v10002 = vunpack.c.0.s8 %v10001
  %v10003 = vperm.slane %v9999, %v10002
  %v10004 = vrot.slane %v9992, 4
  %v10005 = vsel %vm8330, %v10004, %v9986
  %v10006 = vrot.slane %v9986, 4
  %v10007 = vsel %vm8330, %v9992, %v10006
  %v10009 = vunpack.c.l.s4 1934713408
  %v10010 = vunpack.c.0.s8 %v10009
  %v10011 = vperm.slane %v10005, %v10010
  %v10013 = vunpack.c.l.s4 1934713408
  %v10014 = vunpack.c.0.s8 %v10013
  %v10015 = vperm.slane %v10007, %v10014
  %v10016 = vrot.slane %v10003, 4
  %v10017 = vsel %vm8330, %v10016, %v9997
  %v10018 = vrot.slane %v9997, 4
  %v10019 = vsel %vm8330, %v10003, %v10018
  %v10021 = vunpack.c.l.s4 1934713408
  %v10022 = vunpack.c.0.s8 %v10021
  %v10023 = vperm.slane %v10017, %v10022
  %v10025 = vunpack.c.l.s4 1934713408
  %v10026 = vunpack.c.0.s8 %v10025
  %v10027 = vperm.slane %v10019, %v10026
  %v10028 = vrot.slane %v10023, 4
  %v10029 = vsel %vm8330, %v10028, %v10011
  %v10030 = vrot.slane %v10011, 4
  %v10031 = vsel %vm8330, %v10023, %v10030
  %v10032 = vrot.slane %v10027, 4
  %v10033 = vsel %vm8330, %v10032, %v10015
  %v10034 = vrot.slane %v10015, 4
  %v10035 = vsel %vm8330, %v10027, %v10034
  %v10036 = vsel %vm8330, %v9220, %v9201
  %v10038 = vunpack.c.l.s4 1983009808
  %v10039 = vunpack.c.0.s8 %v10038
  %v10040 = vperm.slane %v10036, %v10039
  %v10041 = vrot.slane %v9221, 4
  %v10042 = vsel %vm8330, %v10041, %v9219
  %v10044 = vunpack.c.l.s4 1983009808
  %v10045 = vunpack.c.0.s8 %v10044
  %v10046 = vperm.slane %v10042, %v10045
  %v10047 = vsel %vm8330, %v9224, %v9213
  %v10049 = vunpack.c.l.s4 1983009808
  %v10050 = vunpack.c.0.s8 %v10049
  %v10051 = vperm.slane %v10047, %v10050
  %v10052 = vrot.slane %v9225, 4
  %v10053 = vsel %vm8330, %v10052, %v9223
  %v10055 = vunpack.c.l.s4 1983009808
  %v10056 = vunpack.c.0.s8 %v10055
  %v10057 = vperm.slane %v10053, %v10056
  %v10058 = vrot.slane %v10046, 4
  %v10059 = vsel %vm8330, %v10058, %v10040
  %v10060 = vrot.slane %v10040, 4
  %v10061 = vsel %vm8330, %v10046, %v10060
  %v10063 = vunpack.c.l.s4 1934713408
  %v10064 = vunpack.c.0.s8 %v10063
  %v10065 = vperm.slane %v10059, %v10064
  %v10067 = vunpack.c.l.s4 1934713408
  %v10068 = vunpack.c.0.s8 %v10067
  %v10069 = vperm.slane %v10061, %v10068
  %v10070 = vrot.slane %v10057, 4
  %v10071 = vsel %vm8330, %v10070, %v10051
  %v10072 = vrot.slane %v10051, 4
  %v10073 = vsel %vm8330, %v10057, %v10072
  %v10075 = vunpack.c.l.s4 1934713408
  %v10076 = vunpack.c.0.s8 %v10075
  %v10077 = vperm.slane %v10071, %v10076
  %v10079 = vunpack.c.l.s4 1934713408
  %v10080 = vunpack.c.0.s8 %v10079
  %v10081 = vperm.slane %v10073, %v10080
  %v10082 = vrot.slane %v10077, 4
  %v10083 = vsel %vm8330, %v10082, %v10065
  %v10084 = vrot.slane %v10065, 4
  %v10085 = vsel %vm8330, %v10077, %v10084
  %v10086 = vrot.slane %v10081, 4
  %v10087 = vsel %vm8330, %v10086, %v10069
  %v10088 = vrot.slane %v10069, 4
  %v10089 = vsel %vm8330, %v10081, %v10088
  %10106 = vrot.lane.b32.xlu0 %v9275, 8
  %v10107 = vpop.permute.xlu0 %10106
  %10108 = vrot.lane.b32.xlu0 %v9329, 8
  %v10109 = vpop.permute.xlu0 %10108
  %10110 = vrot.lane.b32.xlu0 %v9383, 8
  %v10111 = vpop.permute.xlu0 %10110
  %10112 = vrot.lane.b32.xlu0 %v9437, 8
  %v10113 = vpop.permute.xlu0 %10112
  %10114 = vrot.lane.b32.xlu0 %v9491, 8
  %v10115 = vpop.permute.xlu0 %10114
  %10116 = vrot.lane.b32.xlu0 %v9545, 8
  %v10117 = vpop.permute.xlu0 %10116
  %10118 = vrot.lane.b32.xlu0 %v9599, 8
  %v10119 = vpop.permute.xlu0 %10118
  %10120 = vrot.lane.b32.xlu0 %v9653, 8
  %v10121 = vpop.permute.xlu0 %10120
  %10122 = vrot.lane.b32.xlu0 %v9707, 8
  %v10123 = vpop.permute.xlu0 %10122
  %10124 = vrot.lane.b32.xlu0 %v9761, 8
  %v10125 = vpop.permute.xlu0 %10124
  %10126 = vrot.lane.b32.xlu0 %v9815, 8
  %v10127 = vpop.permute.xlu0 %10126
  %10128 = vrot.lane.b32.xlu0 %v9869, 8
  %v10129 = vpop.permute.xlu0 %10128
  %10130 = vrot.lane.b32.xlu0 %v9923, 8
  %v10131 = vpop.permute.xlu0 %10130
  %10132 = vrot.lane.b32.xlu0 %v9977, 8
  %v10133 = vpop.permute.xlu0 %10132
  %10134 = vrot.lane.b32.xlu0 %v10031, 8
  %v10135 = vpop.permute.xlu0 %10134
  %10136 = vrot.lane.b32.xlu0 %v10085, 8
  %v10137 = vpop.permute.xlu0 %10136
  %10170 = vrot.lane.b32.xlu0 %v9277, 16
  %v10171 = vpop.permute.xlu0 %10170
  %10172 = vrot.lane.b32.xlu0 %v9331, 16
  %v10173 = vpop.permute.xlu0 %10172
  %10174 = vrot.lane.b32.xlu0 %v9385, 16
  %v10175 = vpop.permute.xlu0 %10174
  %10176 = vrot.lane.b32.xlu0 %v9439, 16
  %v10177 = vpop.permute.xlu0 %10176
  %10178 = vrot.lane.b32.xlu0 %v9493, 16
  %v10179 = vpop.permute.xlu0 %10178
  %10180 = vrot.lane.b32.xlu0 %v9547, 16
  %v10181 = vpop.permute.xlu0 %10180
  %10182 = vrot.lane.b32.xlu0 %v9601, 16
  %v10183 = vpop.permute.xlu0 %10182
  %10184 = vrot.lane.b32.xlu0 %v9655, 16
  %v10185 = vpop.permute.xlu0 %10184
  %10186 = vrot.lane.b32.xlu0 %v9709, 16
  %v10187 = vpop.permute.xlu0 %10186
  %10188 = vrot.lane.b32.xlu0 %v9763, 16
  %v10189 = vpop.permute.xlu0 %10188
  %10190 = vrot.lane.b32.xlu0 %v9817, 16
  %v10191 = vpop.permute.xlu0 %10190
  %10192 = vrot.lane.b32.xlu0 %v9871, 16
  %v10193 = vpop.permute.xlu0 %10192
  %10194 = vrot.lane.b32.xlu0 %v9925, 16
  %v10195 = vpop.permute.xlu0 %10194
  %10196 = vrot.lane.b32.xlu0 %v9979, 16
  %v10197 = vpop.permute.xlu0 %10196
  %10198 = vrot.lane.b32.xlu0 %v10033, 16
  %v10199 = vpop.permute.xlu0 %10198
  %10200 = vrot.lane.b32.xlu0 %v10087, 16
  %v10201 = vpop.permute.xlu0 %10200
  %10234 = vrot.lane.b32.xlu0 %v9279, 24
  %v10235 = vpop.permute.xlu0 %10234
  %10236 = vrot.lane.b32.xlu0 %v9333, 24
  %v10237 = vpop.permute.xlu0 %10236
  %10238 = vrot.lane.b32.xlu0 %v9387, 24
  %v10239 = vpop.permute.xlu0 %10238
  %10240 = vrot.lane.b32.xlu0 %v9441, 24
  %v10241 = vpop.permute.xlu0 %10240
  %10242 = vrot.lane.b32.xlu0 %v9495, 24
  %v10243 = vpop.permute.xlu0 %10242
  %10244 = vrot.lane.b32.xlu0 %v9549, 24
  %v10245 = vpop.permute.xlu0 %10244
  %10246 = vrot.lane.b32.xlu0 %v9603, 24
  %v10247 = vpop.permute.xlu0 %10246
  %10248 = vrot.lane.b32.xlu0 %v9657, 24
  %v10249 = vpop.permute.xlu0 %10248
  %10250 = vrot.lane.b32.xlu0 %v9711, 24
  %v10251 = vpop.permute.xlu0 %10250
  %10252 = vrot.lane.b32.xlu0 %v9765, 24
  %v10253 = vpop.permute.xlu0 %10252
  %10254 = vrot.lane.b32.xlu0 %v9819, 24
  %v10255 = vpop.permute.xlu0 %10254
  %10256 = vrot.lane.b32.xlu0 %v9873, 24
  %v10257 = vpop.permute.xlu0 %10256
  %10258 = vrot.lane.b32.xlu0 %v9927, 24
  %v10259 = vpop.permute.xlu0 %10258
  %10260 = vrot.lane.b32.xlu0 %v9981, 24
  %v10261 = vpop.permute.xlu0 %10260
  %10262 = vrot.lane.b32.xlu0 %v10035, 24
  %v10263 = vpop.permute.xlu0 %10262
  %10264 = vrot.lane.b32.xlu0 %v10089, 24
  %v10265 = vpop.permute.xlu0 %10264
  %v10282 = vsel %vm6223, %v9273, %v10107
  %v10283 = vsel %vm6223, %v9327, %v10109
  %v10284 = vsel %vm6223, %v9381, %v10111
  %v10285 = vsel %vm6223, %v9435, %v10113
  %v10286 = vsel %vm6223, %v9489, %v10115
  %v10287 = vsel %vm6223, %v9543, %v10117
  %v10288 = vsel %vm6223, %v9597, %v10119
  %v10289 = vsel %vm6223, %v9651, %v10121
  %v10290 = vsel %vm6223, %v9705, %v10123
  %v10291 = vsel %vm6223, %v9759, %v10125
  %v10292 = vsel %vm6223, %v9813, %v10127
  %v10293 = vsel %vm6223, %v9867, %v10129
  %v10294 = vsel %vm6223, %v9921, %v10131
  %v10295 = vsel %vm6223, %v9975, %v10133
  %v10296 = vsel %vm6223, %v10029, %v10135
  %v10297 = vsel %vm6223, %v10083, %v10137
  %vm10298 = vcmask 130048
  %v10299 = vsel %vm10298, %v10282, %v10171
  %v10300 = vsel %vm10298, %v10283, %v10173
  %v10301 = vsel %vm10298, %v10284, %v10175
  %v10302 = vsel %vm10298, %v10285, %v10177
  %v10303 = vsel %vm10298, %v10286, %v10179
  %v10304 = vsel %vm10298, %v10287, %v10181
  %v10305 = vsel %vm10298, %v10288, %v10183
  %v10306 = vsel %vm10298, %v10289, %v10185
  %v10307 = vsel %vm10298, %v10290, %v10187
  %v10308 = vsel %vm10298, %v10291, %v10189
  %v10309 = vsel %vm10298, %v10292, %v10191
  %v10310 = vsel %vm10298, %v10293, %v10193
  %v10311 = vsel %vm10298, %v10294, %v10195
  %v10312 = vsel %vm10298, %v10295, %v10197
  %v10313 = vsel %vm10298, %v10296, %v10199
  %v10314 = vsel %vm10298, %v10297, %v10201
  %vm10315 = vcmask 195584
  %v10316 = vsel %vm10315, %v10299, %v10235
  %v10317 = vsel %vm10315, %v10300, %v10237
  %v10318 = vsel %vm10315, %v10301, %v10239
  %v10319 = vsel %vm10315, %v10302, %v10241
  %v10320 = vsel %vm10315, %v10303, %v10243
  %v10321 = vsel %vm10315, %v10304, %v10245
  %v10322 = vsel %vm10315, %v10305, %v10247
  %v10323 = vsel %vm10315, %v10306, %v10249
  %v10324 = vsel %vm10315, %v10307, %v10251
  %v10325 = vsel %vm10315, %v10308, %v10253
  %v10326 = vsel %vm10315, %v10309, %v10255
  %v10327 = vsel %vm10315, %v10310, %v10257
  %v10328 = vsel %vm10315, %v10311, %v10259
  %v10329 = vsel %vm10315, %v10312, %v10261
  %v10330 = vsel %vm10315, %v10313, %v10263
  %v10331 = vsel %vm10315, %v10314, %v10265
  %v10332 = vadd.f32 %v10316, %v59
  %v10333 = vadd.f32 %v10317, %v60
  %v10334 = vadd.f32 %v10318, %v61
  %v10335 = vadd.f32 %v10319, %v62
  %v10336 = vadd.f32 %v10320, %v63
  %v10337 = vadd.f32 %v10321, %v64
  %v10338 = vadd.f32 %v10322, %v65
  %v10339 = vadd.f32 %v10323, %v66
  %v10340 = vadd.f32 %v10324, %v67
  %v10341 = vadd.f32 %v10325, %v68
  %v10342 = vadd.f32 %v10326, %v69
  %v10343 = vadd.f32 %v10327, %v70
  %v10344 = vadd.f32 %v10328, %v71
  %v10345 = vadd.f32 %v10329, %v72
  %v10346 = vadd.f32 %v10330, %v73
  %v10347 = vadd.f32 %v10331, %v74
  %v10348 = vld [vmem:[%s5] sm:$0x1]
  %v10349 = vld [vmem:[%s6] sm:$0x1]
  %v10350 = vsel %vm99, %v10332, 0.0
  %10351 = vadd.xlane.f32.xlu0 %v10350
  %v10352 = vpop.xlane.xlu0 %10351
  %v10353 = vsel %vm99, %v10333, 0.0
  %10354 = vadd.xlane.f32.xlu0 %v10353
  %v10355 = vpop.xlane.xlu0 %10354
  %v10356 = vsel %vm99, %v10334, 0.0
  %10357 = vadd.xlane.f32.xlu0 %v10356
  %v10358 = vpop.xlane.xlu0 %10357
  %v10359 = vsel %vm99, %v10335, 0.0
  %10360 = vadd.xlane.f32.xlu0 %v10359
  %v10361 = vpop.xlane.xlu0 %10360
  %v10362 = vsel %vm99, %v10336, 0.0
  %10363 = vadd.xlane.f32.xlu0 %v10362
  %v10364 = vpop.xlane.xlu0 %10363
  %v10365 = vsel %vm99, %v10337, 0.0
  %10366 = vadd.xlane.f32.xlu0 %v10365
  %v10367 = vpop.xlane.xlu0 %10366
  %v10368 = vsel %vm99, %v10338, 0.0
  %10369 = vadd.xlane.f32.xlu0 %v10368
  %v10370 = vpop.xlane.xlu0 %10369
  %v10371 = vsel %vm99, %v10339, 0.0
  %10372 = vadd.xlane.f32.xlu0 %v10371
  %v10373 = vpop.xlane.xlu0 %10372
  %v10374 = vsel %vm99, %v10340, 0.0
  %10375 = vadd.xlane.f32.xlu0 %v10374
  %v10376 = vpop.xlane.xlu0 %10375
  %v10377 = vsel %vm99, %v10341, 0.0
  %10378 = vadd.xlane.f32.xlu0 %v10377
  %v10379 = vpop.xlane.xlu0 %10378
  %v10380 = vsel %vm99, %v10342, 0.0
  %10381 = vadd.xlane.f32.xlu0 %v10380
  %v10382 = vpop.xlane.xlu0 %10381
  %v10383 = vsel %vm99, %v10343, 0.0
  %10384 = vadd.xlane.f32.xlu0 %v10383
  %v10385 = vpop.xlane.xlu0 %10384
  %v10386 = vsel %vm99, %v10344, 0.0
  %10387 = vadd.xlane.f32.xlu0 %v10386
  %v10388 = vpop.xlane.xlu0 %10387
  %v10389 = vsel %vm99, %v10345, 0.0
  %10390 = vadd.xlane.f32.xlu0 %v10389
  %v10391 = vpop.xlane.xlu0 %10390
  %v10392 = vsel %vm99, %v10346, 0.0
  %10393 = vadd.xlane.f32.xlu0 %v10392
  %v10394 = vpop.xlane.xlu0 %10393
  %v10395 = vsel %vm99, %v10347, 0.0
  %10396 = vadd.xlane.f32.xlu0 %v10395
  %v10397 = vpop.xlane.xlu0 %10396
  %v10398 = vrcp.pop 32.0
  %v10399 = vmul.f32 32.0, %v10398
  %v10400 = vsub.f32 1.0, %v10399
  %v10401 = vmul.f32 %v10398, %v10400
  %v10402 = vadd.f32 %v10398, %v10401
  %vm10403 = vweird.f32 %v10398
  %v10404 = vsel %vm10403, %v10398, %v10402
  %v10405 = vmul.f32 %v10352, %v10404
  %v10406 = vmul.f32 %v10355, %v10404
  %v10407 = vmul.f32 %v10358, %v10404
  %v10408 = vmul.f32 %v10361, %v10404
  %v10409 = vmul.f32 %v10364, %v10404
  %v10410 = vmul.f32 %v10367, %v10404
  %v10411 = vmul.f32 %v10370, %v10404
  %v10412 = vmul.f32 %v10373, %v10404
  %v10413 = vmul.f32 %v10376, %v10404
  %v10414 = vmul.f32 %v10379, %v10404
  %v10415 = vmul.f32 %v10382, %v10404
  %v10416 = vmul.f32 %v10385, %v10404
  %v10417 = vmul.f32 %v10388, %v10404
  %v10418 = vmul.f32 %v10391, %v10404
  %v10419 = vmul.f32 %v10394, %v10404
  %v10420 = vmul.f32 %v10397, %v10404
  %v10421 = vsub.f32 %v10332, %v10405
  %v10422 = vsub.f32 %v10333, %v10406
  %v10423 = vsub.f32 %v10334, %v10407
  %v10424 = vsub.f32 %v10335, %v10408
  %v10425 = vsub.f32 %v10336, %v10409
  %v10426 = vsub.f32 %v10337, %v10410
  %v10427 = vsub.f32 %v10338, %v10411
  %v10428 = vsub.f32 %v10339, %v10412
  %v10429 = vsub.f32 %v10340, %v10413
  %v10430 = vsub.f32 %v10341, %v10414
  %v10431 = vsub.f32 %v10342, %v10415
  %v10432 = vsub.f32 %v10343, %v10416
  %v10433 = vsub.f32 %v10344, %v10417
  %v10434 = vsub.f32 %v10345, %v10418
  %v10435 = vsub.f32 %v10346, %v10419
  %v10436 = vsub.f32 %v10347, %v10420
  %v10437 = vmul.f32 %v10421, %v10421
  %v10438 = vmul.f32 %v10422, %v10422
  %v10439 = vmul.f32 %v10423, %v10423
  %v10440 = vmul.f32 %v10424, %v10424
  %v10441 = vmul.f32 %v10425, %v10425
  %v10442 = vmul.f32 %v10426, %v10426
  %v10443 = vmul.f32 %v10427, %v10427
  %v10444 = vmul.f32 %v10428, %v10428
  %v10445 = vmul.f32 %v10429, %v10429
  %v10446 = vmul.f32 %v10430, %v10430
  %v10447 = vmul.f32 %v10431, %v10431
  %v10448 = vmul.f32 %v10432, %v10432
  %v10449 = vmul.f32 %v10433, %v10433
  %v10450 = vmul.f32 %v10434, %v10434
  %v10451 = vmul.f32 %v10435, %v10435
  %v10452 = vmul.f32 %v10436, %v10436
  %v10453 = vsel %vm99, %v10437, 0.0
  %10454 = vadd.xlane.f32.xlu0 %v10453
  %v10455 = vpop.xlane.xlu0 %10454
  %v10456 = vsel %vm99, %v10438, 0.0
  %10457 = vadd.xlane.f32.xlu0 %v10456
  %v10458 = vpop.xlane.xlu0 %10457
  %v10459 = vsel %vm99, %v10439, 0.0
  %10460 = vadd.xlane.f32.xlu0 %v10459
  %v10461 = vpop.xlane.xlu0 %10460
  %v10462 = vsel %vm99, %v10440, 0.0
  %10463 = vadd.xlane.f32.xlu0 %v10462
  %v10464 = vpop.xlane.xlu0 %10463
  %v10465 = vsel %vm99, %v10441, 0.0
  %10466 = vadd.xlane.f32.xlu0 %v10465
  %v10467 = vpop.xlane.xlu0 %10466
  %v10468 = vsel %vm99, %v10442, 0.0
  %10469 = vadd.xlane.f32.xlu0 %v10468
  %v10470 = vpop.xlane.xlu0 %10469
  %v10471 = vsel %vm99, %v10443, 0.0
  %10472 = vadd.xlane.f32.xlu0 %v10471
  %v10473 = vpop.xlane.xlu0 %10472
  %v10474 = vsel %vm99, %v10444, 0.0
  %10475 = vadd.xlane.f32.xlu0 %v10474
  %v10476 = vpop.xlane.xlu0 %10475
  %v10477 = vsel %vm99, %v10445, 0.0
  %10478 = vadd.xlane.f32.xlu0 %v10477
  %v10479 = vpop.xlane.xlu0 %10478
  %v10480 = vsel %vm99, %v10446, 0.0
  %10481 = vadd.xlane.f32.xlu0 %v10480
  %v10482 = vpop.xlane.xlu0 %10481
  %v10483 = vsel %vm99, %v10447, 0.0
  %10484 = vadd.xlane.f32.xlu0 %v10483
  %v10485 = vpop.xlane.xlu0 %10484
  %v10486 = vsel %vm99, %v10448, 0.0
  %10487 = vadd.xlane.f32.xlu0 %v10486
  %v10488 = vpop.xlane.xlu0 %10487
  %v10489 = vsel %vm99, %v10449, 0.0
  %10490 = vadd.xlane.f32.xlu0 %v10489
  %v10491 = vpop.xlane.xlu0 %10490
  %v10492 = vsel %vm99, %v10450, 0.0
  %10493 = vadd.xlane.f32.xlu0 %v10492
  %v10494 = vpop.xlane.xlu0 %10493
  %v10495 = vsel %vm99, %v10451, 0.0
  %10496 = vadd.xlane.f32.xlu0 %v10495
  %v10497 = vpop.xlane.xlu0 %10496
  %v10498 = vsel %vm99, %v10452, 0.0
  %10499 = vadd.xlane.f32.xlu0 %v10498
  %v10500 = vpop.xlane.xlu0 %10499
  %v10501 = vmul.f32 %v10455, %v10404
  %v10502 = vmul.f32 %v10458, %v10404
  %v10503 = vmul.f32 %v10461, %v10404
  %v10504 = vmul.f32 %v10464, %v10404
  %v10505 = vmul.f32 %v10467, %v10404
  %v10506 = vmul.f32 %v10470, %v10404
  %v10507 = vmul.f32 %v10473, %v10404
  %v10508 = vmul.f32 %v10476, %v10404
  %v10509 = vmul.f32 %v10479, %v10404
  %v10510 = vmul.f32 %v10482, %v10404
  %v10511 = vmul.f32 %v10485, %v10404
  %v10512 = vmul.f32 %v10488, %v10404
  %v10513 = vmul.f32 %v10491, %v10404
  %v10514 = vmul.f32 %v10494, %v10404
  %v10515 = vmul.f32 %v10497, %v10404
  %v10516 = vmul.f32 %v10500, %v10404
  %v10517 = vadd.f32 %v10501, 1e-05
  %v10518 = vadd.f32 %v10502, 1e-05
  %v10519 = vadd.f32 %v10503, 1e-05
  %v10520 = vadd.f32 %v10504, 1e-05
  %v10521 = vadd.f32 %v10505, 1e-05
  %v10522 = vadd.f32 %v10506, 1e-05
  %v10523 = vadd.f32 %v10507, 1e-05
  %v10524 = vadd.f32 %v10508, 1e-05
  %v10525 = vadd.f32 %v10509, 1e-05
  %v10526 = vadd.f32 %v10510, 1e-05
  %v10527 = vadd.f32 %v10511, 1e-05
  %v10528 = vadd.f32 %v10512, 1e-05
  %v10529 = vadd.f32 %v10513, 1e-05
  %v10530 = vadd.f32 %v10514, 1e-05
  %v10531 = vadd.f32 %v10515, 1e-05
  %v10532 = vadd.f32 %v10516, 1e-05
  %v10533 = vrsqrt.pop %v10517
  %v10534 = vmul.f32 %v10533, %v10517
  %v10535 = vmul.f32 %v10534, %v10533
  %v10536 = vmul.f32 0.5, %v10535
  %v10537 = vsub.f32 1.5, %v10536
  %v10538 = vmul.f32 %v10533, %v10537
  %vm10539 = vweird.f32 %v10517
  %vm10540 = vweird.f32 %v10533
  %vm10541 = vmor %vm10539, %vm10540
  %v10542 = vsel %vm10541, %v10533, %v10538
  %v10543 = vrsqrt.pop %v10518
  %v10544 = vmul.f32 %v10543, %v10518
  %v10545 = vmul.f32 %v10544, %v10543
  %v10546 = vmul.f32 0.5, %v10545
  %v10547 = vsub.f32 1.5, %v10546
  %v10548 = vmul.f32 %v10543, %v10547
  %vm10549 = vweird.f32 %v10518
  %vm10550 = vweird.f32 %v10543
  %vm10551 = vmor %vm10549, %vm10550
  %v10552 = vsel %vm10551, %v10543, %v10548
  %v10553 = vrsqrt.pop %v10519
  %v10554 = vmul.f32 %v10553, %v10519
  %v10555 = vmul.f32 %v10554, %v10553
  %v10556 = vmul.f32 0.5, %v10555
  %v10557 = vsub.f32 1.5, %v10556
  %v10558 = vmul.f32 %v10553, %v10557
  %vm10559 = vweird.f32 %v10519
  %vm10560 = vweird.f32 %v10553
  %vm10561 = vmor %vm10559, %vm10560
  %v10562 = vsel %vm10561, %v10553, %v10558
  %v10563 = vrsqrt.pop %v10520
  %v10564 = vmul.f32 %v10563, %v10520
  %v10565 = vmul.f32 %v10564, %v10563
  %v10566 = vmul.f32 0.5, %v10565
  %v10567 = vsub.f32 1.5, %v10566
  %v10568 = vmul.f32 %v10563, %v10567
  %vm10569 = vweird.f32 %v10520
  %vm10570 = vweird.f32 %v10563
  %vm10571 = vmor %vm10569, %vm10570
  %v10572 = vsel %vm10571, %v10563, %v10568
  %v10573 = vrsqrt.pop %v10521
  %v10574 = vmul.f32 %v10573, %v10521
  %v10575 = vmul.f32 %v10574, %v10573
  %v10576 = vmul.f32 0.5, %v10575
  %v10577 = vsub.f32 1.5, %v10576
  %v10578 = vmul.f32 %v10573, %v10577
  %vm10579 = vweird.f32 %v10521
  %vm10580 = vweird.f32 %v10573
  %vm10581 = vmor %vm10579, %vm10580
  %v10582 = vsel %vm10581, %v10573, %v10578
  %v10583 = vrsqrt.pop %v10522
  %v10584 = vmul.f32 %v10583, %v10522
  %v10585 = vmul.f32 %v10584, %v10583
  %v10586 = vmul.f32 0.5, %v10585
  %v10587 = vsub.f32 1.5, %v10586
  %v10588 = vmul.f32 %v10583, %v10587
  %vm10589 = vweird.f32 %v10522
  %vm10590 = vweird.f32 %v10583
  %vm10591 = vmor %vm10589, %vm10590
  %v10592 = vsel %vm10591, %v10583, %v10588
  %v10593 = vrsqrt.pop %v10523
  %v10594 = vmul.f32 %v10593, %v10523
  %v10595 = vmul.f32 %v10594, %v10593
  %v10596 = vmul.f32 0.5, %v10595
  %v10597 = vsub.f32 1.5, %v10596
  %v10598 = vmul.f32 %v10593, %v10597
  %vm10599 = vweird.f32 %v10523
  %vm10600 = vweird.f32 %v10593
  %vm10601 = vmor %vm10599, %vm10600
  %v10602 = vsel %vm10601, %v10593, %v10598
  %v10603 = vrsqrt.pop %v10524
  %v10604 = vmul.f32 %v10603, %v10524
  %v10605 = vmul.f32 %v10604, %v10603
  %v10606 = vmul.f32 0.5, %v10605
  %v10607 = vsub.f32 1.5, %v10606
  %v10608 = vmul.f32 %v10603, %v10607
  %vm10609 = vweird.f32 %v10524
  %vm10610 = vweird.f32 %v10603
  %vm10611 = vmor %vm10609, %vm10610
  %v10612 = vsel %vm10611, %v10603, %v10608
  %v10613 = vrsqrt.pop %v10525
  %v10614 = vmul.f32 %v10613, %v10525
  %v10615 = vmul.f32 %v10614, %v10613
  %v10616 = vmul.f32 0.5, %v10615
  %v10617 = vsub.f32 1.5, %v10616
  %v10618 = vmul.f32 %v10613, %v10617
  %vm10619 = vweird.f32 %v10525
  %vm10620 = vweird.f32 %v10613
  %vm10621 = vmor %vm10619, %vm10620
  %v10622 = vsel %vm10621, %v10613, %v10618
  %v10623 = vrsqrt.pop %v10526
  %v10624 = vmul.f32 %v10623, %v10526
  %v10625 = vmul.f32 %v10624, %v10623
  %v10626 = vmul.f32 0.5, %v10625
  %v10627 = vsub.f32 1.5, %v10626
  %v10628 = vmul.f32 %v10623, %v10627
  %vm10629 = vweird.f32 %v10526
  %vm10630 = vweird.f32 %v10623
  %vm10631 = vmor %vm10629, %vm10630
  %v10632 = vsel %vm10631, %v10623, %v10628
  %v10633 = vrsqrt.pop %v10527
  %v10634 = vmul.f32 %v10633, %v10527
  %v10635 = vmul.f32 %v10634, %v10633
  %v10636 = vmul.f32 0.5, %v10635
  %v10637 = vsub.f32 1.5, %v10636
  %v10638 = vmul.f32 %v10633, %v10637
  %vm10639 = vweird.f32 %v10527
  %vm10640 = vweird.f32 %v10633
  %vm10641 = vmor %vm10639, %vm10640
  %v10642 = vsel %vm10641, %v10633, %v10638
  %v10643 = vrsqrt.pop %v10528
  %v10644 = vmul.f32 %v10643, %v10528
  %v10645 = vmul.f32 %v10644, %v10643
  %v10646 = vmul.f32 0.5, %v10645
  %v10647 = vsub.f32 1.5, %v10646
  %v10648 = vmul.f32 %v10643, %v10647
  %vm10649 = vweird.f32 %v10528
  %vm10650 = vweird.f32 %v10643
  %vm10651 = vmor %vm10649, %vm10650
  %v10652 = vsel %vm10651, %v10643, %v10648
  %v10653 = vrsqrt.pop %v10529
  %v10654 = vmul.f32 %v10653, %v10529
  %v10655 = vmul.f32 %v10654, %v10653
  %v10656 = vmul.f32 0.5, %v10655
  %v10657 = vsub.f32 1.5, %v10656
  %v10658 = vmul.f32 %v10653, %v10657
  %vm10659 = vweird.f32 %v10529
  %vm10660 = vweird.f32 %v10653
  %vm10661 = vmor %vm10659, %vm10660
  %v10662 = vsel %vm10661, %v10653, %v10658
  %v10663 = vrsqrt.pop %v10530
  %v10664 = vmul.f32 %v10663, %v10530
  %v10665 = vmul.f32 %v10664, %v10663
  %v10666 = vmul.f32 0.5, %v10665
  %v10667 = vsub.f32 1.5, %v10666
  %v10668 = vmul.f32 %v10663, %v10667
  %vm10669 = vweird.f32 %v10530
  %vm10670 = vweird.f32 %v10663
  %vm10671 = vmor %vm10669, %vm10670
  %v10672 = vsel %vm10671, %v10663, %v10668
  %v10673 = vrsqrt.pop %v10531
  %v10674 = vmul.f32 %v10673, %v10531
  %v10675 = vmul.f32 %v10674, %v10673
  %v10676 = vmul.f32 0.5, %v10675
  %v10677 = vsub.f32 1.5, %v10676
  %v10678 = vmul.f32 %v10673, %v10677
  %vm10679 = vweird.f32 %v10531
  %vm10680 = vweird.f32 %v10673
  %vm10681 = vmor %vm10679, %vm10680
  %v10682 = vsel %vm10681, %v10673, %v10678
  %v10683 = vrsqrt.pop %v10532
  %v10684 = vmul.f32 %v10683, %v10532
  %v10685 = vmul.f32 %v10684, %v10683
  %v10686 = vmul.f32 0.5, %v10685
  %v10687 = vsub.f32 1.5, %v10686
  %v10688 = vmul.f32 %v10683, %v10687
  %vm10689 = vweird.f32 %v10532
  %vm10690 = vweird.f32 %v10683
  %vm10691 = vmor %vm10689, %vm10690
  %v10692 = vsel %vm10691, %v10683, %v10688
  %v10693 = vmul.f32 %v10421, %v10542
  %v10694 = vmul.f32 %v10422, %v10552
  %v10695 = vmul.f32 %v10423, %v10562
  %v10696 = vmul.f32 %v10424, %v10572
  %v10697 = vmul.f32 %v10425, %v10582
  %v10698 = vmul.f32 %v10426, %v10592
  %v10699 = vmul.f32 %v10427, %v10602
  %v10700 = vmul.f32 %v10428, %v10612
  %v10701 = vmul.f32 %v10429, %v10622
  %v10702 = vmul.f32 %v10430, %v10632
  %v10703 = vmul.f32 %v10431, %v10642
  %v10704 = vmul.f32 %v10432, %v10652
  %v10705 = vmul.f32 %v10433, %v10662
  %v10706 = vmul.f32 %v10434, %v10672
  %v10707 = vmul.f32 %v10435, %v10682
  %v10708 = vmul.f32 %v10436, %v10692
  %v10710 = vperm.slane %v10348, 0
  %v10712 = vmul.f32 %v10693, %v10710
  %v10713 = vmul.f32 %v10694, %v10710
  %v10714 = vmul.f32 %v10695, %v10710
  %v10715 = vmul.f32 %v10696, %v10710
  %v10716 = vmul.f32 %v10697, %v10710
  %v10717 = vmul.f32 %v10698, %v10710
  %v10718 = vmul.f32 %v10699, %v10710
  %v10719 = vmul.f32 %v10700, %v10710
  %v10720 = vmul.f32 %v10701, %v10710
  %v10721 = vmul.f32 %v10702, %v10710
  %v10722 = vmul.f32 %v10703, %v10710
  %v10723 = vmul.f32 %v10704, %v10710
  %v10724 = vmul.f32 %v10705, %v10710
  %v10725 = vmul.f32 %v10706, %v10710
  %v10726 = vmul.f32 %v10707, %v10710
  %v10727 = vmul.f32 %v10708, %v10710
  %v10729 = vperm.slane %v10349, 0
  %v10731 = vadd.f32 %v10712, %v10729
  %v10732 = vadd.f32 %v10713, %v10729
  %v10733 = vadd.f32 %v10714, %v10729
  %v10734 = vadd.f32 %v10715, %v10729
  %v10735 = vadd.f32 %v10716, %v10729
  %v10736 = vadd.f32 %v10717, %v10729
  %v10737 = vadd.f32 %v10718, %v10729
  %v10738 = vadd.f32 %v10719, %v10729
  %v10739 = vadd.f32 %v10720, %v10729
  %v10740 = vadd.f32 %v10721, %v10729
  %v10741 = vadd.f32 %v10722, %v10729
  %v10742 = vadd.f32 %v10723, %v10729
  %v10743 = vadd.f32 %v10724, %v10729
  %v10744 = vadd.f32 %v10725, %v10729
  %v10745 = vadd.f32 %v10726, %v10729
  %v10746 = vadd.f32 %v10727, %v10729
  %v10747 = vpack.c.bf16 %v10732, %v10731
  %v10748 = vpack.c.bf16 %v10734, %v10733
  %v10749 = vpack.c.bf16 %v10736, %v10735
  %v10750 = vpack.c.bf16 %v10738, %v10737
  %v10751 = vpack.c.bf16 %v10740, %v10739
  %v10752 = vpack.c.bf16 %v10742, %v10741
  %v10753 = vpack.c.bf16 %v10744, %v10743
  %v10754 = vpack.c.bf16 %v10746, %v10745
  %v10755 = vld [vmem:[%s7] sm:$0xf]
  %v10756 = vld [vmem:[%s7 + $0x4] sm:$0xf]
  %v10757 = vld [vmem:[%s7 + $0x8] sm:$0xf]
  %v10758 = vld [vmem:[%s7 + $0xc] sm:$0xf]
  %v10759 = vld [vmem:[%s8] sm:$0x1]
  %v10761 = vperm.slane %v10759, 0
  %v10767 = vunpack.c.l.b16 %v10755
  %v10768 = vunpack.c.l.b16 %v10756
  %v10769 = vunpack.c.l.b16 %v10757
  %v10770 = vunpack.c.l.b16 %v10758
  %v10771 = vpack.c.b16 %v10768, %v10767
  %v10772 = vpack.c.b16 %v10770, %v10769
  %v10776 = vsel %vm99, %v10747, 0
  %v10779 = vsel %vm99, %v10748, 0
  %v10782 = vsel %vm99, %v10749, 0
  %v10785 = vsel %vm99, %v10750, 0
  %v10788 = vsel %vm99, %v10751, 0
  %v10791 = vsel %vm99, %v10752, 0
  %v10794 = vsel %vm99, %v10753, 0
  %v10797 = vsel %vm99, %v10754, 0
  %10799 = vmatpush.bf16.msra.mxu0 0
  %10800 = vmatpush.bf16.msra.mxu0 0
  %10801 = vmatpush.bf16.msra.mxu0 0
  %10802 = vmatpush.bf16.msra.mxu0 0
  %10803 = vmatpush.bf16.msra.mxu0 0
  %10804 = vmatpush.bf16.msra.mxu0 0
  %10805 = vmatpush.bf16.msra.mxu0 %v10772
  %10806 = vmatpush.bf16.msra.mxu0 %v10771
  %10807 = vmatmul.bf16.gmra.mxu0 %v10776
  %v10808 = vpop.f32.mrf.mxu0
  %v10809 = vadd.f32 %v10761, %v10808
  %v10810 = vpop.f32.mrf.mxu0
  %v10811 = vadd.f32 %v10761, %v10810
  %10812 = vmatmul.bf16.gmra.mxu0 %v10779
  %v10813 = vpop.f32.mrf.mxu0
  %v10814 = vadd.f32 %v10761, %v10813
  %v10815 = vpop.f32.mrf.mxu0
  %v10816 = vadd.f32 %v10761, %v10815
  %10817 = vmatmul.bf16.gmra.mxu0 %v10782
  %v10818 = vpop.f32.mrf.mxu0
  %v10819 = vadd.f32 %v10761, %v10818
  %v10820 = vpop.f32.mrf.mxu0
  %v10821 = vadd.f32 %v10761, %v10820
  %10822 = vmatmul.bf16.gmra.mxu0 %v10785
  %v10823 = vpop.f32.mrf.mxu0
  %v10824 = vadd.f32 %v10761, %v10823
  %v10825 = vpop.f32.mrf.mxu0
  %v10826 = vadd.f32 %v10761, %v10825
  %10827 = vmatmul.bf16.gmra.mxu0 %v10788
  %v10828 = vpop.f32.mrf.mxu0
  %v10829 = vadd.f32 %v10761, %v10828
  %v10830 = vpop.f32.mrf.mxu0
  %v10831 = vadd.f32 %v10761, %v10830
  %10832 = vmatmul.bf16.gmra.mxu0 %v10791
  %v10833 = vpop.f32.mrf.mxu0
  %v10834 = vadd.f32 %v10761, %v10833
  %v10835 = vpop.f32.mrf.mxu0
  %v10836 = vadd.f32 %v10761, %v10835
  %10837 = vmatmul.bf16.gmra.mxu0 %v10794
  %v10838 = vpop.f32.mrf.mxu0
  %v10839 = vadd.f32 %v10761, %v10838
  %v10840 = vpop.f32.mrf.mxu0
  %v10841 = vadd.f32 %v10761, %v10840
  %10842 = vmatmul.bf16.gmra.mxu0 %v10797
  %v10843 = vpop.f32.mrf.mxu0
  %v10844 = vadd.f32 %v10761, %v10843
  %v10845 = vpop.f32.mrf.mxu0
  %v10846 = vadd.f32 %v10761, %v10845
  %10847 = vdwg.mxu0
  %vm10848 = vcmp.ge.f32.partialorder %v10809, 0.0
  %vm10849 = vcmp.ge.f32.partialorder %v10811, 0.0
  %vm10850 = vcmp.ge.f32.partialorder %v10814, 0.0
  %vm10851 = vcmp.ge.f32.partialorder %v10816, 0.0
  %vm10852 = vcmp.ge.f32.partialorder %v10819, 0.0
  %vm10853 = vcmp.ge.f32.partialorder %v10821, 0.0
  %vm10854 = vcmp.ge.f32.partialorder %v10824, 0.0
  %vm10855 = vcmp.ge.f32.partialorder %v10826, 0.0
  %vm10856 = vcmp.ge.f32.partialorder %v10829, 0.0
  %vm10857 = vcmp.ge.f32.partialorder %v10831, 0.0
  %vm10858 = vcmp.ge.f32.partialorder %v10834, 0.0
  %vm10859 = vcmp.ge.f32.partialorder %v10836, 0.0
  %vm10860 = vcmp.ge.f32.partialorder %v10839, 0.0
  %vm10861 = vcmp.ge.f32.partialorder %v10841, 0.0
  %vm10862 = vcmp.ge.f32.partialorder %v10844, 0.0
  %vm10863 = vcmp.ge.f32.partialorder %v10846, 0.0
  %v10864 = vld [vmem:[%s9] sm:$0x1]
  %v10866 = vperm.slane %v10864, 0
  %v10868 = vmul.f32 %v10866, %v10809
  %v10869 = vmul.f32 %v10866, %v10811
  %v10870 = vmul.f32 %v10866, %v10814
  %v10871 = vmul.f32 %v10866, %v10816
  %v10872 = vmul.f32 %v10866, %v10819
  %v10873 = vmul.f32 %v10866, %v10821
  %v10874 = vmul.f32 %v10866, %v10824
  %v10875 = vmul.f32 %v10866, %v10826
  %v10876 = vmul.f32 %v10866, %v10829
  %v10877 = vmul.f32 %v10866, %v10831
  %v10878 = vmul.f32 %v10866, %v10834
  %v10879 = vmul.f32 %v10866, %v10836
  %v10880 = vmul.f32 %v10866, %v10839
  %v10881 = vmul.f32 %v10866, %v10841
  %v10882 = vmul.f32 %v10866, %v10844
  %v10883 = vmul.f32 %v10866, %v10846
  %v10884 = vsel %vm10848, %v10809, %v10868
  %v10885 = vsel %vm10849, %v10811, %v10869
  %v10886 = vsel %vm10850, %v10814, %v10870
  %v10887 = vsel %vm10851, %v10816, %v10871
  %v10888 = vsel %vm10852, %v10819, %v10872
  %v10889 = vsel %vm10853, %v10821, %v10873
  %v10890 = vsel %vm10854, %v10824, %v10874
  %v10891 = vsel %vm10855, %v10826, %v10875
  %v10892 = vsel %vm10856, %v10829, %v10876
  %v10893 = vsel %vm10857, %v10831, %v10877
  %v10894 = vsel %vm10858, %v10834, %v10878
  %v10895 = vsel %vm10859, %v10836, %v10879
  %v10896 = vsel %vm10860, %v10839, %v10880
  %v10897 = vsel %vm10861, %v10841, %v10881
  %v10898 = vsel %vm10862, %v10844, %v10882
  %v10899 = vsel %vm10863, %v10846, %v10883
  %v10900 = vpack.c.bf16 %v10885, %v10884
  %v10901 = vpack.c.bf16 %v10887, %v10886
  %v10902 = vpack.c.bf16 %v10889, %v10888
  %v10903 = vpack.c.bf16 %v10891, %v10890
  %v10904 = vpack.c.bf16 %v10893, %v10892
  %v10905 = vpack.c.bf16 %v10895, %v10894
  %v10906 = vpack.c.bf16 %v10897, %v10896
  %v10907 = vpack.c.bf16 %v10899, %v10898
  %v10908 = vld [vmem:[%s10] sm:$0xf]
  %v10909 = vld [vmem:[%s10 + $0x4] sm:$0xf]
  %v10910 = vld [vmem:[%s10 + $0x8] sm:$0xf]
  %v10911 = vld [vmem:[%s10 + $0xc] sm:$0xf]
  %v10912 = vld [vmem:[%s10 + $0x10] sm:$0xf]
  %v10913 = vld [vmem:[%s10 + $0x14] sm:$0xf]
  %v10914 = vld [vmem:[%s10 + $0x18] sm:$0xf]
  %v10915 = vld [vmem:[%s10 + $0x1c] sm:$0xf]
  %v10916 = vld [vmem:[%s10 + $0x20] sm:$0xf]
  %v10917 = vld [vmem:[%s10 + $0x24] sm:$0xf]
  %v10918 = vld [vmem:[%s10 + $0x28] sm:$0xf]
  %v10919 = vld [vmem:[%s10 + $0x2c] sm:$0xf]
  %v10920 = vld [vmem:[%s10 + $0x30] sm:$0xf]
  %v10921 = vld [vmem:[%s10 + $0x34] sm:$0xf]
  %v10922 = vld [vmem:[%s10 + $0x38] sm:$0xf]
  %v10923 = vld [vmem:[%s10 + $0x3c] sm:$0xf]
  %v10924 = vld [vmem:[%s11] sm:$0x1]
  %v10926 = vperm.slane %v10924, 0
  %v10944 = vunpack.c.l.b16 %v10908
  %v10945 = vunpack.c.l.b16 %v10909
  %v10946 = vunpack.c.l.b16 %v10910
  %v10947 = vunpack.c.l.b16 %v10911
  %v10948 = vunpack.c.l.b16 %v10912
  %v10949 = vunpack.c.l.b16 %v10913
  %v10950 = vunpack.c.l.b16 %v10914
  %v10951 = vunpack.c.l.b16 %v10915
  %v10952 = vunpack.c.l.b16 %v10916
  %v10953 = vunpack.c.l.b16 %v10917
  %v10954 = vunpack.c.l.b16 %v10918
  %v10955 = vunpack.c.l.b16 %v10919
  %v10956 = vunpack.c.l.b16 %v10920
  %v10957 = vunpack.c.l.b16 %v10921
  %v10958 = vunpack.c.l.b16 %v10922
  %v10959 = vunpack.c.l.b16 %v10923
  %v10960 = vpack.c.b16 %v10945, %v10944
  %v10961 = vpack.c.b16 %v10947, %v10946
  %v10962 = vpack.c.b16 %v10949, %v10948
  %v10963 = vpack.c.b16 %v10951, %v10950
  %v10964 = vpack.c.b16 %v10953, %v10952
  %v10965 = vpack.c.b16 %v10955, %v10954
  %v10966 = vpack.c.b16 %v10957, %v10956
  %v10967 = vpack.c.b16 %v10959, %v10958
  %10976 = vmatpush.bf16.msra.mxu0 %v10967
  %10977 = vmatpush.bf16.msra.mxu0 %v10966
  %10978 = vmatpush.bf16.msra.mxu0 %v10965
  %10979 = vmatpush.bf16.msra.mxu0 %v10964
  %10980 = vmatpush.bf16.msra.mxu0 %v10963
  %10981 = vmatpush.bf16.msra.mxu0 %v10962
  %10982 = vmatpush.bf16.msra.mxu0 %v10961
  %10983 = vmatpush.bf16.msra.mxu0 %v10960
  %10984 = vmatmul.bf16.gmra.mxu0 %v10900
  %v10985 = vpop.f32.mrf.mxu0
  %v10986 = vadd.f32 %v10926, %v10985
  %v10987 = vpop.f32.mrf.mxu0
  %v10988 = vadd.f32 %v10926, %v10987
  %10989 = vmatmul.bf16.gmra.mxu0 %v10901
  %v10990 = vpop.f32.mrf.mxu0
  %v10991 = vadd.f32 %v10926, %v10990
  %v10992 = vpop.f32.mrf.mxu0
  %v10993 = vadd.f32 %v10926, %v10992
  %10994 = vmatmul.bf16.gmra.mxu0 %v10902
  %v10995 = vpop.f32.mrf.mxu0
  %v10996 = vadd.f32 %v10926, %v10995
  %v10997 = vpop.f32.mrf.mxu0
  %v10998 = vadd.f32 %v10926, %v10997
  %10999 = vmatmul.bf16.gmra.mxu0 %v10903
  %v11000 = vpop.f32.mrf.mxu0
  %v11001 = vadd.f32 %v10926, %v11000
  %v11002 = vpop.f32.mrf.mxu0
  %v11003 = vadd.f32 %v10926, %v11002
  %11004 = vmatmul.bf16.gmra.mxu0 %v10904
  %v11005 = vpop.f32.mrf.mxu0
  %v11006 = vadd.f32 %v10926, %v11005
  %v11007 = vpop.f32.mrf.mxu0
  %v11008 = vadd.f32 %v10926, %v11007
  %11009 = vmatmul.bf16.gmra.mxu0 %v10905
  %v11010 = vpop.f32.mrf.mxu0
  %v11011 = vadd.f32 %v10926, %v11010
  %v11012 = vpop.f32.mrf.mxu0
  %v11013 = vadd.f32 %v10926, %v11012
  %11014 = vmatmul.bf16.gmra.mxu0 %v10906
  %v11015 = vpop.f32.mrf.mxu0
  %v11016 = vadd.f32 %v10926, %v11015
  %v11017 = vpop.f32.mrf.mxu0
  %v11018 = vadd.f32 %v10926, %v11017
  %11019 = vmatmul.bf16.gmra.mxu0 %v10907
  %v11020 = vpop.f32.mrf.mxu0
  %v11021 = vadd.f32 %v10926, %v11020
  %v11022 = vpop.f32.mrf.mxu0
  %v11023 = vadd.f32 %v10926, %v11022
  %11024 = vdwg.mxu0
  %v11025 = vadd.f32 %v10731, %v10986
  %v11026 = vadd.f32 %v10732, %v10988
  %v11027 = vadd.f32 %v10733, %v10991
  %v11028 = vadd.f32 %v10734, %v10993
  %v11029 = vadd.f32 %v10735, %v10996
  %v11030 = vadd.f32 %v10736, %v10998
  %v11031 = vadd.f32 %v10737, %v11001
  %v11032 = vadd.f32 %v10738, %v11003
  %v11033 = vadd.f32 %v10739, %v11006
  %v11034 = vadd.f32 %v10740, %v11008
  %v11035 = vadd.f32 %v10741, %v11011
  %v11036 = vadd.f32 %v10742, %v11013
  %v11037 = vadd.f32 %v10743, %v11016
  %v11038 = vadd.f32 %v10744, %v11018
  %v11039 = vadd.f32 %v10745, %v11021
  %v11040 = vadd.f32 %v10746, %v11023
  %v11041 = vsel %vm99, %v11025, 0.0
  %11042 = vadd.xlane.f32.xlu0 %v11041
  %v11043 = vpop.xlane.xlu0 %11042
  %v11044 = vsel %vm99, %v11026, 0.0
  %11045 = vadd.xlane.f32.xlu0 %v11044
  %v11046 = vpop.xlane.xlu0 %11045
  %v11047 = vsel %vm99, %v11027, 0.0
  %11048 = vadd.xlane.f32.xlu0 %v11047
  %v11049 = vpop.xlane.xlu0 %11048
  %v11050 = vsel %vm99, %v11028, 0.0
  %11051 = vadd.xlane.f32.xlu0 %v11050
  %v11052 = vpop.xlane.xlu0 %11051
  %v11053 = vsel %vm99, %v11029, 0.0
  %11054 = vadd.xlane.f32.xlu0 %v11053
  %v11055 = vpop.xlane.xlu0 %11054
  %v11056 = vsel %vm99, %v11030, 0.0
  %11057 = vadd.xlane.f32.xlu0 %v11056
  %v11058 = vpop.xlane.xlu0 %11057
  %v11059 = vsel %vm99, %v11031, 0.0
  %11060 = vadd.xlane.f32.xlu0 %v11059
  %v11061 = vpop.xlane.xlu0 %11060
  %v11062 = vsel %vm99, %v11032, 0.0
  %11063 = vadd.xlane.f32.xlu0 %v11062
  %v11064 = vpop.xlane.xlu0 %11063
  %v11065 = vsel %vm99, %v11033, 0.0
  %11066 = vadd.xlane.f32.xlu0 %v11065
  %v11067 = vpop.xlane.xlu0 %11066
  %v11068 = vsel %vm99, %v11034, 0.0
  %11069 = vadd.xlane.f32.xlu0 %v11068
  %v11070 = vpop.xlane.xlu0 %11069
  %v11071 = vsel %vm99, %v11035, 0.0
  %11072 = vadd.xlane.f32.xlu0 %v11071
  %v11073 = vpop.xlane.xlu0 %11072
  %v11074 = vsel %vm99, %v11036, 0.0
  %11075 = vadd.xlane.f32.xlu0 %v11074
  %v11076 = vpop.xlane.xlu0 %11075
  %v11077 = vsel %vm99, %v11037, 0.0
  %11078 = vadd.xlane.f32.xlu0 %v11077
  %v11079 = vpop.xlane.xlu0 %11078
  %v11080 = vsel %vm99, %v11038, 0.0
  %11081 = vadd.xlane.f32.xlu0 %v11080
  %v11082 = vpop.xlane.xlu0 %11081
  %v11083 = vsel %vm99, %v11039, 0.0
  %11084 = vadd.xlane.f32.xlu0 %v11083
  %v11085 = vpop.xlane.xlu0 %11084
  %v11086 = vsel %vm99, %v11040, 0.0
  %11087 = vadd.xlane.f32.xlu0 %v11086
  %v11088 = vpop.xlane.xlu0 %11087
  %v11089 = vmul.f32 %v11043, %v10404
  %v11090 = vmul.f32 %v11046, %v10404
  %v11091 = vmul.f32 %v11049, %v10404
  %v11092 = vmul.f32 %v11052, %v10404
  %v11093 = vmul.f32 %v11055, %v10404
  %v11094 = vmul.f32 %v11058, %v10404
  %v11095 = vmul.f32 %v11061, %v10404
  %v11096 = vmul.f32 %v11064, %v10404
  %v11097 = vmul.f32 %v11067, %v10404
  %v11098 = vmul.f32 %v11070, %v10404
  %v11099 = vmul.f32 %v11073, %v10404
  %v11100 = vmul.f32 %v11076, %v10404
  %v11101 = vmul.f32 %v11079, %v10404
  %v11102 = vmul.f32 %v11082, %v10404
  %v11103 = vmul.f32 %v11085, %v10404
  %v11104 = vmul.f32 %v11088, %v10404
  %v11105 = vsub.f32 %v11025, %v11089
  %v11106 = vsub.f32 %v11026, %v11090
  %v11107 = vsub.f32 %v11027, %v11091
  %v11108 = vsub.f32 %v11028, %v11092
  %v11109 = vsub.f32 %v11029, %v11093
  %v11110 = vsub.f32 %v11030, %v11094
  %v11111 = vsub.f32 %v11031, %v11095
  %v11112 = vsub.f32 %v11032, %v11096
  %v11113 = vsub.f32 %v11033, %v11097
  %v11114 = vsub.f32 %v11034, %v11098
  %v11115 = vsub.f32 %v11035, %v11099
  %v11116 = vsub.f32 %v11036, %v11100
  %v11117 = vsub.f32 %v11037, %v11101
  %v11118 = vsub.f32 %v11038, %v11102
  %v11119 = vsub.f32 %v11039, %v11103
  %v11120 = vsub.f32 %v11040, %v11104
  %v11121 = vmul.f32 %v11105, %v11105
  %v11122 = vmul.f32 %v11106, %v11106
  %v11123 = vmul.f32 %v11107, %v11107
  %v11124 = vmul.f32 %v11108, %v11108
  %v11125 = vmul.f32 %v11109, %v11109
  %v11126 = vmul.f32 %v11110, %v11110
  %v11127 = vmul.f32 %v11111, %v11111
  %v11128 = vmul.f32 %v11112, %v11112
  %v11129 = vmul.f32 %v11113, %v11113
  %v11130 = vmul.f32 %v11114, %v11114
  %v11131 = vmul.f32 %v11115, %v11115
  %v11132 = vmul.f32 %v11116, %v11116
  %v11133 = vmul.f32 %v11117, %v11117
  %v11134 = vmul.f32 %v11118, %v11118
  %v11135 = vmul.f32 %v11119, %v11119
  %v11136 = vmul.f32 %v11120, %v11120
  %v11137 = vsel %vm99, %v11121, 0.0
  %11138 = vadd.xlane.f32.xlu0 %v11137
  %v11139 = vpop.xlane.xlu0 %11138
  %v11140 = vsel %vm99, %v11122, 0.0
  %11141 = vadd.xlane.f32.xlu0 %v11140
  %v11142 = vpop.xlane.xlu0 %11141
  %v11143 = vsel %vm99, %v11123, 0.0
  %11144 = vadd.xlane.f32.xlu0 %v11143
  %v11145 = vpop.xlane.xlu0 %11144
  %v11146 = vsel %vm99, %v11124, 0.0
  %11147 = vadd.xlane.f32.xlu0 %v11146
  %v11148 = vpop.xlane.xlu0 %11147
  %v11149 = vsel %vm99, %v11125, 0.0
  %11150 = vadd.xlane.f32.xlu0 %v11149
  %v11151 = vpop.xlane.xlu0 %11150
  %v11152 = vsel %vm99, %v11126, 0.0
  %11153 = vadd.xlane.f32.xlu0 %v11152
  %v11154 = vpop.xlane.xlu0 %11153
  %v11155 = vsel %vm99, %v11127, 0.0
  %11156 = vadd.xlane.f32.xlu0 %v11155
  %v11157 = vpop.xlane.xlu0 %11156
  %v11158 = vsel %vm99, %v11128, 0.0
  %11159 = vadd.xlane.f32.xlu0 %v11158
  %v11160 = vpop.xlane.xlu0 %11159
  %v11161 = vsel %vm99, %v11129, 0.0
  %11162 = vadd.xlane.f32.xlu0 %v11161
  %v11163 = vpop.xlane.xlu0 %11162
  %v11164 = vsel %vm99, %v11130, 0.0
  %11165 = vadd.xlane.f32.xlu0 %v11164
  %v11166 = vpop.xlane.xlu0 %11165
  %v11167 = vsel %vm99, %v11131, 0.0
  %11168 = vadd.xlane.f32.xlu0 %v11167
  %v11169 = vpop.xlane.xlu0 %11168
  %v11170 = vsel %vm99, %v11132, 0.0
  %11171 = vadd.xlane.f32.xlu0 %v11170
  %v11172 = vpop.xlane.xlu0 %11171
  %v11173 = vsel %vm99, %v11133, 0.0
  %11174 = vadd.xlane.f32.xlu0 %v11173
  %v11175 = vpop.xlane.xlu0 %11174
  %v11176 = vsel %vm99, %v11134, 0.0
  %11177 = vadd.xlane.f32.xlu0 %v11176
  %v11178 = vpop.xlane.xlu0 %11177
  %v11179 = vsel %vm99, %v11135, 0.0
  %11180 = vadd.xlane.f32.xlu0 %v11179
  %v11181 = vpop.xlane.xlu0 %11180
  %v11182 = vsel %vm99, %v11136, 0.0
  %11183 = vadd.xlane.f32.xlu0 %v11182
  %v11184 = vpop.xlane.xlu0 %11183
  %v11185 = vmul.f32 %v11139, %v10404
  %v11186 = vmul.f32 %v11142, %v10404
  %v11187 = vmul.f32 %v11145, %v10404
  %v11188 = vmul.f32 %v11148, %v10404
  %v11189 = vmul.f32 %v11151, %v10404
  %v11190 = vmul.f32 %v11154, %v10404
  %v11191 = vmul.f32 %v11157, %v10404
  %v11192 = vmul.f32 %v11160, %v10404
  %v11193 = vmul.f32 %v11163, %v10404
  %v11194 = vmul.f32 %v11166, %v10404
  %v11195 = vmul.f32 %v11169, %v10404
  %v11196 = vmul.f32 %v11172, %v10404
  %v11197 = vmul.f32 %v11175, %v10404
  %v11198 = vmul.f32 %v11178, %v10404
  %v11199 = vmul.f32 %v11181, %v10404
  %v11200 = vmul.f32 %v11184, %v10404
  %v11201 = vadd.f32 %v11185, 1e-05
  %v11202 = vadd.f32 %v11186, 1e-05
  %v11203 = vadd.f32 %v11187, 1e-05
  %v11204 = vadd.f32 %v11188, 1e-05
  %v11205 = vadd.f32 %v11189, 1e-05
  %v11206 = vadd.f32 %v11190, 1e-05
  %v11207 = vadd.f32 %v11191, 1e-05
  %v11208 = vadd.f32 %v11192, 1e-05
  %v11209 = vadd.f32 %v11193, 1e-05
  %v11210 = vadd.f32 %v11194, 1e-05
  %v11211 = vadd.f32 %v11195, 1e-05
  %v11212 = vadd.f32 %v11196, 1e-05
  %v11213 = vadd.f32 %v11197, 1e-05
  %v11214 = vadd.f32 %v11198, 1e-05
  %v11215 = vadd.f32 %v11199, 1e-05
  %v11216 = vadd.f32 %v11200, 1e-05
  %v11217 = vrsqrt.pop %v11201
  %v11218 = vmul.f32 %v11217, %v11201
  %v11219 = vmul.f32 %v11218, %v11217
  %v11220 = vmul.f32 0.5, %v11219
  %v11221 = vsub.f32 1.5, %v11220
  %v11222 = vmul.f32 %v11217, %v11221
  %vm11223 = vweird.f32 %v11201
  %vm11224 = vweird.f32 %v11217
  %vm11225 = vmor %vm11223, %vm11224
  %v11226 = vsel %vm11225, %v11217, %v11222
  %v11227 = vrsqrt.pop %v11202
  %v11228 = vmul.f32 %v11227, %v11202
  %v11229 = vmul.f32 %v11228, %v11227
  %v11230 = vmul.f32 0.5, %v11229
  %v11231 = vsub.f32 1.5, %v11230
  %v11232 = vmul.f32 %v11227, %v11231
  %vm11233 = vweird.f32 %v11202
  %vm11234 = vweird.f32 %v11227
  %vm11235 = vmor %vm11233, %vm11234
  %v11236 = vsel %vm11235, %v11227, %v11232
  %v11237 = vrsqrt.pop %v11203
  %v11238 = vmul.f32 %v11237, %v11203
  %v11239 = vmul.f32 %v11238, %v11237
  %v11240 = vmul.f32 0.5, %v11239
  %v11241 = vsub.f32 1.5, %v11240
  %v11242 = vmul.f32 %v11237, %v11241
  %vm11243 = vweird.f32 %v11203
  %vm11244 = vweird.f32 %v11237
  %vm11245 = vmor %vm11243, %vm11244
  %v11246 = vsel %vm11245, %v11237, %v11242
  %v11247 = vrsqrt.pop %v11204
  %v11248 = vmul.f32 %v11247, %v11204
  %v11249 = vmul.f32 %v11248, %v11247
  %v11250 = vmul.f32 0.5, %v11249
  %v11251 = vsub.f32 1.5, %v11250
  %v11252 = vmul.f32 %v11247, %v11251
  %vm11253 = vweird.f32 %v11204
  %vm11254 = vweird.f32 %v11247
  %vm11255 = vmor %vm11253, %vm11254
  %v11256 = vsel %vm11255, %v11247, %v11252
  %v11257 = vrsqrt.pop %v11205
  %v11258 = vmul.f32 %v11257, %v11205
  %v11259 = vmul.f32 %v11258, %v11257
  %v11260 = vmul.f32 0.5, %v11259
  %v11261 = vsub.f32 1.5, %v11260
  %v11262 = vmul.f32 %v11257, %v11261
  %vm11263 = vweird.f32 %v11205
  %vm11264 = vweird.f32 %v11257
  %vm11265 = vmor %vm11263, %vm11264
  %v11266 = vsel %vm11265, %v11257, %v11262
  %v11267 = vrsqrt.pop %v11206
  %v11268 = vmul.f32 %v11267, %v11206
  %v11269 = vmul.f32 %v11268, %v11267
  %v11270 = vmul.f32 0.5, %v11269
  %v11271 = vsub.f32 1.5, %v11270
  %v11272 = vmul.f32 %v11267, %v11271
  %vm11273 = vweird.f32 %v11206
  %vm11274 = vweird.f32 %v11267
  %vm11275 = vmor %vm11273, %vm11274
  %v11276 = vsel %vm11275, %v11267, %v11272
  %v11277 = vrsqrt.pop %v11207
  %v11278 = vmul.f32 %v11277, %v11207
  %v11279 = vmul.f32 %v11278, %v11277
  %v11280 = vmul.f32 0.5, %v11279
  %v11281 = vsub.f32 1.5, %v11280
  %v11282 = vmul.f32 %v11277, %v11281
  %vm11283 = vweird.f32 %v11207
  %vm11284 = vweird.f32 %v11277
  %vm11285 = vmor %vm11283, %vm11284
  %v11286 = vsel %vm11285, %v11277, %v11282
  %v11287 = vrsqrt.pop %v11208
  %v11288 = vmul.f32 %v11287, %v11208
  %v11289 = vmul.f32 %v11288, %v11287
  %v11290 = vmul.f32 0.5, %v11289
  %v11291 = vsub.f32 1.5, %v11290
  %v11292 = vmul.f32 %v11287, %v11291
  %vm11293 = vweird.f32 %v11208
  %vm11294 = vweird.f32 %v11287
  %vm11295 = vmor %vm11293, %vm11294
  %v11296 = vsel %vm11295, %v11287, %v11292
  %v11297 = vrsqrt.pop %v11209
  %v11298 = vmul.f32 %v11297, %v11209
  %v11299 = vmul.f32 %v11298, %v11297
  %v11300 = vmul.f32 0.5, %v11299
  %v11301 = vsub.f32 1.5, %v11300
  %v11302 = vmul.f32 %v11297, %v11301
  %vm11303 = vweird.f32 %v11209
  %vm11304 = vweird.f32 %v11297
  %vm11305 = vmor %vm11303, %vm11304
  %v11306 = vsel %vm11305, %v11297, %v11302
  %v11307 = vrsqrt.pop %v11210
  %v11308 = vmul.f32 %v11307, %v11210
  %v11309 = vmul.f32 %v11308, %v11307
  %v11310 = vmul.f32 0.5, %v11309
  %v11311 = vsub.f32 1.5, %v11310
  %v11312 = vmul.f32 %v11307, %v11311
  %vm11313 = vweird.f32 %v11210
  %vm11314 = vweird.f32 %v11307
  %vm11315 = vmor %vm11313, %vm11314
  %v11316 = vsel %vm11315, %v11307, %v11312
  %v11317 = vrsqrt.pop %v11211
  %v11318 = vmul.f32 %v11317, %v11211
  %v11319 = vmul.f32 %v11318, %v11317
  %v11320 = vmul.f32 0.5, %v11319
  %v11321 = vsub.f32 1.5, %v11320
  %v11322 = vmul.f32 %v11317, %v11321
  %vm11323 = vweird.f32 %v11211
  %vm11324 = vweird.f32 %v11317
  %vm11325 = vmor %vm11323, %vm11324
  %v11326 = vsel %vm11325, %v11317, %v11322
  %v11327 = vrsqrt.pop %v11212
  %v11328 = vmul.f32 %v11327, %v11212
  %v11329 = vmul.f32 %v11328, %v11327
  %v11330 = vmul.f32 0.5, %v11329
  %v11331 = vsub.f32 1.5, %v11330
  %v11332 = vmul.f32 %v11327, %v11331
  %vm11333 = vweird.f32 %v11212
  %vm11334 = vweird.f32 %v11327
  %vm11335 = vmor %vm11333, %vm11334
  %v11336 = vsel %vm11335, %v11327, %v11332
  %v11337 = vrsqrt.pop %v11213
  %v11338 = vmul.f32 %v11337, %v11213
  %v11339 = vmul.f32 %v11338, %v11337
  %v11340 = vmul.f32 0.5, %v11339
  %v11341 = vsub.f32 1.5, %v11340
  %v11342 = vmul.f32 %v11337, %v11341
  %vm11343 = vweird.f32 %v11213
  %vm11344 = vweird.f32 %v11337
  %vm11345 = vmor %vm11343, %vm11344
  %v11346 = vsel %vm11345, %v11337, %v11342
  %v11347 = vrsqrt.pop %v11214
  %v11348 = vmul.f32 %v11347, %v11214
  %v11349 = vmul.f32 %v11348, %v11347
  %v11350 = vmul.f32 0.5, %v11349
  %v11351 = vsub.f32 1.5, %v11350
  %v11352 = vmul.f32 %v11347, %v11351
  %vm11353 = vweird.f32 %v11214
  %vm11354 = vweird.f32 %v11347
  %vm11355 = vmor %vm11353, %vm11354
  %v11356 = vsel %vm11355, %v11347, %v11352
  %v11357 = vrsqrt.pop %v11215
  %v11358 = vmul.f32 %v11357, %v11215
  %v11359 = vmul.f32 %v11358, %v11357
  %v11360 = vmul.f32 0.5, %v11359
  %v11361 = vsub.f32 1.5, %v11360
  %v11362 = vmul.f32 %v11357, %v11361
  %vm11363 = vweird.f32 %v11215
  %vm11364 = vweird.f32 %v11357
  %vm11365 = vmor %vm11363, %vm11364
  %v11366 = vsel %vm11365, %v11357, %v11362
  %v11367 = vrsqrt.pop %v11216
  %v11368 = vmul.f32 %v11367, %v11216
  %v11369 = vmul.f32 %v11368, %v11367
  %v11370 = vmul.f32 0.5, %v11369
  %v11371 = vsub.f32 1.5, %v11370
  %v11372 = vmul.f32 %v11367, %v11371
  %vm11373 = vweird.f32 %v11216
  %vm11374 = vweird.f32 %v11367
  %vm11375 = vmor %vm11373, %vm11374
  %v11376 = vsel %vm11375, %v11367, %v11372
  %v11377 = vmul.f32 %v11105, %v11226
  %v11378 = vmul.f32 %v11106, %v11236
  %v11379 = vmul.f32 %v11107, %v11246
  %v11380 = vmul.f32 %v11108, %v11256
  %v11381 = vmul.f32 %v11109, %v11266
  %v11382 = vmul.f32 %v11110, %v11276
  %v11383 = vmul.f32 %v11111, %v11286
  %v11384 = vmul.f32 %v11112, %v11296
  %v11385 = vmul.f32 %v11113, %v11306
  %v11386 = vmul.f32 %v11114, %v11316
  %v11387 = vmul.f32 %v11115, %v11326
  %v11388 = vmul.f32 %v11116, %v11336
  %v11389 = vmul.f32 %v11117, %v11346
  %v11390 = vmul.f32 %v11118, %v11356
  %v11391 = vmul.f32 %v11119, %v11366
  %v11392 = vmul.f32 %v11120, %v11376
  %v11393 = vmul.f32 %v11377, %v10710
  %v11394 = vmul.f32 %v11378, %v10710
  %v11395 = vmul.f32 %v11379, %v10710
  %v11396 = vmul.f32 %v11380, %v10710
  %v11397 = vmul.f32 %v11381, %v10710
  %v11398 = vmul.f32 %v11382, %v10710
  %v11399 = vmul.f32 %v11383, %v10710
  %v11400 = vmul.f32 %v11384, %v10710
  %v11401 = vmul.f32 %v11385, %v10710
  %v11402 = vmul.f32 %v11386, %v10710
  %v11403 = vmul.f32 %v11387, %v10710
  %v11404 = vmul.f32 %v11388, %v10710
  %v11405 = vmul.f32 %v11389, %v10710
  %v11406 = vmul.f32 %v11390, %v10710
  %v11407 = vmul.f32 %v11391, %v10710
  %v11408 = vmul.f32 %v11392, %v10710
  %v11409 = vadd.f32 %v11393, %v10729
  %v11410 = vadd.f32 %v11394, %v10729
  %v11411 = vadd.f32 %v11395, %v10729
  %v11412 = vadd.f32 %v11396, %v10729
  %v11413 = vadd.f32 %v11397, %v10729
  %v11414 = vadd.f32 %v11398, %v10729
  %v11415 = vadd.f32 %v11399, %v10729
  %v11416 = vadd.f32 %v11400, %v10729
  %v11417 = vadd.f32 %v11401, %v10729
  %v11418 = vadd.f32 %v11402, %v10729
  %v11419 = vadd.f32 %v11403, %v10729
  %v11420 = vadd.f32 %v11404, %v10729
  %v11421 = vadd.f32 %v11405, %v10729
  %v11422 = vadd.f32 %v11406, %v10729
  %v11423 = vadd.f32 %v11407, %v10729
  %v11424 = vadd.f32 %v11408, %v10729
  %11425 = vst.msk [vmem:[%s12] sm:$0xff] %vm99, %v11409
  %11426 = vst.msk [vmem:[%s12 + $0x8] sm:$0xff] %vm99, %v11410
  %11427 = vst.msk [vmem:[%s12 + $0x10] sm:$0xff] %vm99, %v11411
  %11428 = vst.msk [vmem:[%s12 + $0x18] sm:$0xff] %vm99, %v11412
  %11429 = vst.msk [vmem:[%s12 + $0x20] sm:$0xff] %vm99, %v11413
  %11430 = vst.msk [vmem:[%s12 + $0x28] sm:$0xff] %vm99, %v11414
  %11431 = vst.msk [vmem:[%s12 + $0x30] sm:$0xff] %vm99, %v11415
  %11432 = vst.msk [vmem:[%s12 + $0x38] sm:$0xff] %vm99, %v11416
  %11433 = vst.msk [vmem:[%s12 + $0x40] sm:$0xff] %vm99, %v11417
  %11434 = vst.msk [vmem:[%s12 + $0x48] sm:$0xff] %vm99, %v11418
  %11435 = vst.msk [vmem:[%s12 + $0x50] sm:$0xff] %vm99, %v11419
  %11436 = vst.msk [vmem:[%s12 + $0x58] sm:$0xff] %vm99, %v11420
  %11437 = vst.msk [vmem:[%s12 + $0x60] sm:$0xff] %vm99, %v11421
  %11438 = vst.msk [vmem:[%s12 + $0x68] sm:$0xff] %vm99, %v11422
  %11439 = vst.msk [vmem:[%s12 + $0x70] sm:$0xff] %vm99, %v11423
  %11440 = vst.msk [vmem:[%s12 + $0x78] sm:$0xff] %vm99, %v11424
  // Predicated region
  $region50: #{tpu_custom_call.1} parent=0 // pred_check
    _
  $region51: #{tpu_custom_call.1} parent=0 // pred_check_branch
    %11442 = sbr.rel (0) target = $region53
  $region52: #{tpu_custom_call.1} parent=0 // pred_region
    _
  $region53: #{tpu_custom_call.1} parent=0 // pred_fallthru
    _
  // Predicated region
  $region54: #{tpu_custom_call.1} parent=0 // pred_check
    _
  $region55: #{tpu_custom_call.1} parent=0 // pred_check_branch
    %11444 = sbr.rel (0) target = $region57
  $region56: #{tpu_custom_call.1} parent=0 // pred_region
    _
  $region57: #{tpu_custom_call.1} parent=0 // pred_fallthru
    _

</llo_original>
